<compile_context>
chip_gen: v7x
topology: tpu7x:2x2x1
jax: 0.10.0
libtpu: 0.0.40
codegen_flags: <defaults>
</compile_context>

<pallas_src>
import numpy as np
import jax
import jax.numpy as jnp
from jax.experimental import pallas as pl
from jax.experimental.pallas import tpu as pltpu

LEAKY_SLOPE = 0.2
BN_EPS = 0.8          # nn.BatchNorm2d(out_filters, 0.8): 2nd positional arg is eps.
CPAD = 128            # lane width: every channel / per-tap K dim is padded to 128.

CHANNELS = 4
IMG_SIZE = 16
BATCH = 2


# --------------------------- static geometry plan ---------------------------

def _make_plan(channels, img_size):
    """Per-block geometry plus one-hot selection (G) / scatter (P) matrices.

    In-kernel activation layout (per sample): rows = zero-halo-padded spatial
    positions (hp, wp) in row-major order, lanes = channels padded to CPAD.
    For the 3x3 / stride-2 / pad-1 conv, the tap (ki, kj) contribution to
    output (ho, wo) reads padded row  base + d  with
        base = 2*ho*Wp + 2*wo ,   d = ki*Wp + kj ,
    so every tap is a *static contiguous row window* of the activation buffer
    and the stride-2 decimation collapses into one one-hot matmul (G) instead
    of a strided gather.  P scatters a block's output back into the next
    block's padded layout (its all-zero rows generate the zero halo).
    """
    cins, couts = [channels, 16, 32, 64], [16, 32, 64, 128]
    plan, h = [], img_size
    for blk in range(4):
        hp, ho = h + 2, h // 2
        wp, wo = hp, ho
        m = ho * wo
        base = (2 * np.arange(ho)[:, None] * wp
                + 2 * np.arange(wo)[None, :]).reshape(-1)
        rb = int(base.max()) + 1
        taps = tuple(ki * wp + kj for ki in range(3) for kj in range(3))
        if rb == m and np.array_equal(base, np.arange(m)):
            g = None                                   # selection is the identity
        else:
            g = np.zeros((m, rb), np.float32)
            g[np.arange(m), base] = 1.0
        if blk < 3:
            hp2, wp2 = ho + 2, wo + 2
            dst = ((np.arange(ho)[:, None] + 1) * wp2
                   + (np.arange(wo)[None, :] + 1)).reshape(-1)
            p = np.zeros((hp2 * wp2, m), np.float32)
            p[dst, np.arange(m)] = 1.0
        else:
            p = None
        plan.append(dict(cin=cins[blk], cout=couts[blk], bn=blk > 0,
                         hp=hp, wp=wp, ho=ho, wo=wo, m=m, rb=rb,
                         taps=taps, G=g, P=p))
        h = ho
    return plan


PLAN = _make_plan(CHANNELS, IMG_SIZE)


# ------------------------------ fused kernel --------------------------------

def _discriminator_kernel(*refs):
    """All four discriminator_blocks + Linear/Sigmoid head for one sample."""
    it = iter(refs)
    x_ref = next(it)                               # (Hp0*Wp0, CPAD) f32 input activation
    blocks = []
    for cfg in PLAN:
        w_ref = next(it)                           # (9, CPAD, CPAD) bf16 tap weights
        epi_ref = next(it)                         # (3, CPAD) f32: bias, bn-scale, bn-shift
        g_ref = next(it) if cfg["G"] is not None else None
        p_ref = next(it) if cfg["P"] is not None else None
        blocks.append((w_ref, epi_ref, g_ref, p_ref))
    wl_ref = next(it)                              # (Ho4*Wo4, CPAD) f32 head weight
    bl_ref = next(it)                              # (1, 1) f32 head bias
    o_ref = next(it)                               # (1, 1) f32 output
    act_refs = [x_ref] + list(it)                  # + 3 VMEM activation scratch refs

    feats = None
    for bi, (cfg, (w_ref, epi_ref, g_ref, p_ref)) in enumerate(zip(PLAN, blocks)):
        a_ref, rb = act_refs[bi], cfg["rb"]
        # Conv as 9 statically shifted bf16 MXU matmuls (K = CPAD), f32 accumulation.
        acc = jnp.zeros((rb, CPAD), jnp.float32)
        for t, d in enumerate(cfg["taps"]):
            acc = acc + jnp.dot(a_ref[d:d + rb, :].astype(jnp.bfloat16), w_ref[t],
                                preferred_element_type=jnp.float32)
        # Fold the stride-2 decimation / im2col row selection into one matmul.
        y = acc if g_ref is None else jnp.dot(g_ref[...], acc,
                                              preferred_element_type=jnp.float32)
        epi = epi_ref[...]
        y = y + epi[0:1, :]                                   # conv bias
        y = jnp.where(y >= 0.0, y, LEAKY_SLOPE * y)           # LeakyReLU(0.2)
        # TODO(synk): Dropout2d(0.25) is eval-mode identity here; training-mode
        # stochastic channel masking is not implemented.
        y = y * epi[1:2, :] + epi[2:3, :]                     # eval BatchNorm (folded)
        if p_ref is not None:
            # Scatter into the next block's zero-halo padded layout (stays in VMEM).
            act_refs[bi + 1][...] = jnp.dot(p_ref[...], y,
                                            preferred_element_type=jnp.float32)
        else:
            feats = y                                         # (Ho4*Wo4, CPAD) f32

    # adv_layer: Linear + Sigmoid, done as a VPU multiply + reduction.
    s = jnp.sum(feats * wl_ref[...], axis=1, keepdims=True)
    s = jnp.sum(s, axis=0, keepdims=True) + bl_ref[...]
    o_ref[...] = jax.nn.sigmoid(s)


def _build_forward_call(batch):
    hp0wp0 = PLAN[0]["hp"] * PLAN[0]["wp"]
    in_specs = [pl.BlockSpec((None, hp0wp0, CPAD), lambda n: (n, 0, 0))]
    for cfg in PLAN:
        in_specs.append(pl.BlockSpec((9, CPAD, CPAD), lambda n: (0, 0, 0)))
        in_specs.append(pl.BlockSpec((3, CPAD), lambda n: (0, 0)))
        if cfg["G"] is not None:
            in_specs.append(pl.BlockSpec(tuple(cfg["G"].shape), lambda n: (0, 0)))
        if cfg["P"] is not None:
            in_specs.append(pl.BlockSpec(tuple(cfg["P"].shape), lambda n: (0, 0)))
    in_specs.append(pl.BlockSpec((PLAN[-1]["m"], CPAD), lambda n: (0, 0)))  # head w
    in_specs.append(pl.BlockSpec((1, 1), lambda n: (0, 0)))                 # head b
    scratch = [pltpu.VMEM((PLAN[i]["hp"] * PLAN[i]["wp"], CPAD), jnp.float32)
               for i in range(1, len(PLAN))]
    return pl.pallas_call(
        _discriminator_kernel,
        out_shape=jax.ShapeDtypeStruct((batch, 1, 1), jnp.float32),
        grid_spec=pltpu.PrefetchScalarGridSpec(
            num_scalar_prefetch=0,
            grid=(batch,),
            in_specs=in_specs,
            out_specs=pl.BlockSpec((None, 1, 1), lambda n: (n, 0, 0)),
            scratch_shapes=scratch,
        ),
        compiler_params=pltpu.CompilerParams(
            dimension_semantics=("parallel",)),    # v7x: one sample per TensorCore
    )


_FORWARD_CALL = _build_forward_call(BATCH)


# ----------------------------- parameter setup ------------------------------

def init_params(key):
    """Deterministic params matching the module's shapes, pre-packed for the kernel.

    BatchNorm is eval-mode with default buffers/affine (mean=0, var=1, gamma=1,
    beta=0) and eps=0.8 (the module passes 0.8 positionally, i.e. as eps), so it
    folds into per-channel scale/shift.  Conv weights are reshaped to 9 per-tap
    (CPAD, CPAD) matrices, zero-padded on both Cin and Cout, cast to bf16.
    """
    blocks = []
    for cfg in PLAN:
        cin, cout = cfg["cin"], cfg["cout"]
        key, kw, kb = jax.random.split(key, 3)
        w = 0.02 * jax.random.normal(kw, (cout, cin, 3, 3), jnp.float32)
        b = 0.02 * jax.random.normal(kb, (cout,), jnp.float32)
        w_taps = jnp.transpose(w, (2, 3, 1, 0)).reshape(9, cin, cout)   # (ki*3+kj, cin, cout)
        w_pad = jnp.zeros((9, CPAD, CPAD), jnp.float32).at[:, :cin, :cout].set(w_taps)
        bias = jnp.zeros((CPAD,), jnp.float32).at[:cout].set(b)
        scale = jnp.ones((CPAD,), jnp.float32)
        shift = jnp.zeros((CPAD,), jnp.float32)
        if cfg["bn"]:
            gamma = jnp.ones((cout,), jnp.float32)
            beta = jnp.zeros((cout,), jnp.float32)
            rmean = jnp.zeros((cout,), jnp.float32)
            rvar = jnp.ones((cout,), jnp.float32)
            s = gamma / jnp.sqrt(rvar + BN_EPS)
            scale = scale.at[:cout].set(s)
            shift = shift.at[:cout].set(beta - rmean * s)
        blocks.append(dict(
            w=w_pad.astype(jnp.bfloat16),
            epi=jnp.stack([bias, scale, shift]),                  # (3, CPAD) f32
            g=None if cfg["G"] is None else jnp.asarray(cfg["G"]),
            p=None if cfg["P"] is None else jnp.asarray(cfg["P"]),
        ))

    ho4, wo4 = PLAN[-1]["ho"], PLAN[-1]["wo"]
    feat = 128 * ho4 * wo4                         # = 128 * (img_size // 16)**2
    key, kw, kb = jax.random.split(key, 3)
    lin_w = 0.02 * jax.random.normal(kw, (1, feat), jnp.float32)
    lin_b = 0.02 * jax.random.normal(kb, (1,), jnp.float32)
    # Rearrange to the kernel's (spatial, channel) feature order
    # (PyTorch .view(N, -1) on NCHW flattens channel-major).
    wl = lin_w.reshape(128, ho4, wo4).transpose(1, 2, 0).reshape(ho4 * wo4, 128)
    return dict(blocks=blocks, lin_w=wl, lin_b=lin_b.reshape(1, 1))


# ------------------------------- forward pass --------------------------------

@jax.jit
def discriminator_forward(img, params):
    n, c, h, w = img.shape
    hp, wp = h + 2, w + 2
    # One-time layout prep (not per block, not 9x): NCHW -> NHWC, zero spatial
    # halo, zero-pad channels to the 128-lane width, flatten spatial.
    x = jnp.transpose(img, (0, 2, 3, 1))
    x = jnp.pad(x, ((0, 0), (1, 1), (1, 1), (0, CPAD - c)))
    x = x.reshape(n, hp * wp, CPAD)

    operands = [x]
    for cfg, blk in zip(PLAN, params["blocks"]):
        operands += [blk["w"], blk["epi"]]
        if cfg["G"] is not None:
            operands.append(blk["g"])
        if cfg["P"] is not None:
            operands.append(blk["p"])
    operands += [params["lin_w"], params["lin_b"]]
    return _FORWARD_CALL(*operands).reshape(n, 1)


# ---------------------------------- main -------------------------------------

if __name__ == "__main__":
    key = jax.random.PRNGKey(0)
    key, kimg = jax.random.split(key)
    img = jax.random.normal(kimg, (BATCH, CHANNELS, IMG_SIZE, IMG_SIZE), jnp.float32)
    params = init_params(key)

    validity = discriminator_forward(img, params)
    jax.block_until_ready(validity)

    assert validity.shape == (BATCH, 1)
    assert bool(jnp.all(jnp.isfinite(validity)))
    print("KERNEL_OK")
</pallas_src>

<mosaic_0001>
module attributes {stable_mosaic.version = 11 : i64} {
  func.func @_discriminator_kernel(%arg0: i32, %arg1: memref<1x324x128xf32, #tpu.memory_space<vmem>>, %arg2: memref<9x128x128xbf16, #tpu.memory_space<vmem>>, %arg3: memref<3x128xf32, #tpu.memory_space<vmem>>, %arg4: memref<64x267xf32, #tpu.memory_space<vmem>>, %arg5: memref<100x64xf32, #tpu.memory_space<vmem>>, %arg6: memref<9x128x128xbf16, #tpu.memory_space<vmem>>, %arg7: memref<3x128xf32, #tpu.memory_space<vmem>>, %arg8: memref<16x67xf32, #tpu.memory_space<vmem>>, %arg9: memref<36x16xf32, #tpu.memory_space<vmem>>, %arg10: memref<9x128x128xbf16, #tpu.memory_space<vmem>>, %arg11: memref<3x128xf32, #tpu.memory_space<vmem>>, %arg12: memref<4x15xf32, #tpu.memory_space<vmem>>, %arg13: memref<16x4xf32, #tpu.memory_space<vmem>>, %arg14: memref<9x128x128xbf16, #tpu.memory_space<vmem>>, %arg15: memref<3x128xf32, #tpu.memory_space<vmem>>, %arg16: memref<1x128xf32, #tpu.memory_space<vmem>>, %arg17: memref<1x1xf32, #tpu.memory_space<vmem>>, %arg18: memref<1x1x1xf32, #tpu.memory_space<vmem>>, %arg19: memref<100x128xf32, #tpu.memory_space<vmem>>, %arg20: memref<36x128xf32, #tpu.memory_space<vmem>>, %arg21: memref<16x128xf32, #tpu.memory_space<vmem>>) attributes {dimension_semantics = [#tpu.dimension_semantics<parallel>], iteration_bounds = array<i64: 2>, scalar_prefetch = 0 : i64, scratch_operands = 3 : i64, tpu.core_type = #tpu.core_type<tc>, window_params = [{transform_indices = @transform_0, window_bounds = array<i64: 1, 324, 128>}, {pipeline_mode = #tpu.pipeline_mode<synchronous>, transform_indices = @transform_1, window_bounds = array<i64: 9, 128, 128>}, {pipeline_mode = #tpu.pipeline_mode<synchronous>, transform_indices = @transform_2, window_bounds = array<i64: 3, 128>}, {pipeline_mode = #tpu.pipeline_mode<synchronous>, transform_indices = @transform_3, window_bounds = array<i64: 64, 267>}, {pipeline_mode = #tpu.pipeline_mode<synchronous>, transform_indices = @transform_4, window_bounds = array<i64: 100, 64>}, {pipeline_mode = #tpu.pipeline_mode<synchronous>, transform_indices = @transform_5, window_bounds = array<i64: 9, 128, 128>}, {pipeline_mode = #tpu.pipeline_mode<synchronous>, transform_indices = @transform_6, window_bounds = array<i64: 3, 128>}, {pipeline_mode = #tpu.pipeline_mode<synchronous>, transform_indices = @transform_7, window_bounds = array<i64: 16, 67>}, {pipeline_mode = #tpu.pipeline_mode<synchronous>, transform_indices = @transform_8, window_bounds = array<i64: 36, 16>}, {pipeline_mode = #tpu.pipeline_mode<synchronous>, transform_indices = @transform_9, window_bounds = array<i64: 9, 128, 128>}, {pipeline_mode = #tpu.pipeline_mode<synchronous>, transform_indices = @transform_10, window_bounds = array<i64: 3, 128>}, {pipeline_mode = #tpu.pipeline_mode<synchronous>, transform_indices = @transform_11, window_bounds = array<i64: 4, 15>}, {pipeline_mode = #tpu.pipeline_mode<synchronous>, transform_indices = @transform_12, window_bounds = array<i64: 16, 4>}, {pipeline_mode = #tpu.pipeline_mode<synchronous>, transform_indices = @transform_13, window_bounds = array<i64: 9, 128, 128>}, {pipeline_mode = #tpu.pipeline_mode<synchronous>, transform_indices = @transform_14, window_bounds = array<i64: 3, 128>}, {pipeline_mode = #tpu.pipeline_mode<synchronous>, transform_indices = @transform_15, window_bounds = array<i64: 1, 128>}, {pipeline_mode = #tpu.pipeline_mode<synchronous>, transform_indices = @transform_16, window_bounds = array<i64: 1, 1>}, {transform_indices = @transform_17, window_bounds = array<i64: 1, 1, 1>}]} {
    %cst = arith.constant 0.000000e+00 : f32
    %0 = vector.broadcast %cst : f32 to vector<267x128xf32>
    %c0 = arith.constant 0 : index
    %c0_0 = arith.constant 0 : index
    %c0_1 = arith.constant 0 : index
    %1 = vector.load %arg1[%c0, %c0_0, %c0_1] : memref<1x324x128xf32, #tpu.memory_space<vmem>>, vector<1x267x128xf32>
    %2 = vector.shape_cast %1 : vector<1x267x128xf32> to vector<267x128xf32>
    %3 = arith.truncf %2 : vector<267x128xf32> to vector<267x128xbf16>
    %c0_2 = arith.constant 0 : index
    %c0_3 = arith.constant 0 : index
    %c0_4 = arith.constant 0 : index
    %4 = vector.load %arg2[%c0_2, %c0_3, %c0_4] : memref<9x128x128xbf16, #tpu.memory_space<vmem>>, vector<1x128x128xbf16>
    %5 = vector.shape_cast %4 : vector<1x128x128xbf16> to vector<128x128xbf16>
    %cst_5 = arith.constant dense<0.000000e+00> : vector<267x128xf32>
    %6 = tpu.matmul %3, %5, %cst_5 {dimension_numbers = #tpu.dot_dimension_numbers<[1], [0], [0], [1], [0, 0, 1, 1], [], []>} : vector<267x128xbf16>, vector<128x128xbf16>, vector<267x128xf32> -> vector<267x128xf32>
    %7 = arith.addf %0, %6 : vector<267x128xf32>
    %c0_6 = arith.constant 0 : index
    %c1 = arith.constant 1 : index
    %c0_7 = arith.constant 0 : index
    %8 = vector.load %arg1[%c0_6, %c1, %c0_7] : memref<1x324x128xf32, #tpu.memory_space<vmem>>, vector<1x267x128xf32>
    %9 = vector.shape_cast %8 : vector<1x267x128xf32> to vector<267x128xf32>
    %10 = arith.truncf %9 : vector<267x128xf32> to vector<267x128xbf16>
    %c1_8 = arith.constant 1 : index
    %c0_9 = arith.constant 0 : index
    %c0_10 = arith.constant 0 : index
    %11 = vector.load %arg2[%c1_8, %c0_9, %c0_10] : memref<9x128x128xbf16, #tpu.memory_space<vmem>>, vector<1x128x128xbf16>
    %12 = vector.shape_cast %11 : vector<1x128x128xbf16> to vector<128x128xbf16>
    %cst_11 = arith.constant dense<0.000000e+00> : vector<267x128xf32>
    %13 = tpu.matmul %10, %12, %cst_11 {dimension_numbers = #tpu.dot_dimension_numbers<[1], [0], [0], [1], [0, 0, 1, 1], [], []>} : vector<267x128xbf16>, vector<128x128xbf16>, vector<267x128xf32> -> vector<267x128xf32>
    %14 = arith.addf %7, %13 : vector<267x128xf32>
    %c0_12 = arith.constant 0 : index
    %c2 = arith.constant 2 : index
    %c0_13 = arith.constant 0 : index
    %15 = vector.load %arg1[%c0_12, %c2, %c0_13] : memref<1x324x128xf32, #tpu.memory_space<vmem>>, vector<1x267x128xf32>
    %16 = vector.shape_cast %15 : vector<1x267x128xf32> to vector<267x128xf32>
    %17 = arith.truncf %16 : vector<267x128xf32> to vector<267x128xbf16>
    %c2_14 = arith.constant 2 : index
    %c0_15 = arith.constant 0 : index
    %c0_16 = arith.constant 0 : index
    %18 = vector.load %arg2[%c2_14, %c0_15, %c0_16] : memref<9x128x128xbf16, #tpu.memory_space<vmem>>, vector<1x128x128xbf16>
    %19 = vector.shape_cast %18 : vector<1x128x128xbf16> to vector<128x128xbf16>
    %cst_17 = arith.constant dense<0.000000e+00> : vector<267x128xf32>
    %20 = tpu.matmul %17, %19, %cst_17 {dimension_numbers = #tpu.dot_dimension_numbers<[1], [0], [0], [1], [0, 0, 1, 1], [], []>} : vector<267x128xbf16>, vector<128x128xbf16>, vector<267x128xf32> -> vector<267x128xf32>
    %21 = arith.addf %14, %20 : vector<267x128xf32>
    %c0_18 = arith.constant 0 : index
    %c18 = arith.constant 18 : index
    %c0_19 = arith.constant 0 : index
    %22 = vector.load %arg1[%c0_18, %c18, %c0_19] : memref<1x324x128xf32, #tpu.memory_space<vmem>>, vector<1x267x128xf32>
    %23 = vector.shape_cast %22 : vector<1x267x128xf32> to vector<267x128xf32>
    %24 = arith.truncf %23 : vector<267x128xf32> to vector<267x128xbf16>
    %c3 = arith.constant 3 : index
    %c0_20 = arith.constant 0 : index
    %c0_21 = arith.constant 0 : index
    %25 = vector.load %arg2[%c3, %c0_20, %c0_21] : memref<9x128x128xbf16, #tpu.memory_space<vmem>>, vector<1x128x128xbf16>
    %26 = vector.shape_cast %25 : vector<1x128x128xbf16> to vector<128x128xbf16>
    %cst_22 = arith.constant dense<0.000000e+00> : vector<267x128xf32>
    %27 = tpu.matmul %24, %26, %cst_22 {dimension_numbers = #tpu.dot_dimension_numbers<[1], [0], [0], [1], [0, 0, 1, 1], [], []>} : vector<267x128xbf16>, vector<128x128xbf16>, vector<267x128xf32> -> vector<267x128xf32>
    %28 = arith.addf %21, %27 : vector<267x128xf32>
    %c0_23 = arith.constant 0 : index
    %c19 = arith.constant 19 : index
    %c0_24 = arith.constant 0 : index
    %29 = vector.load %arg1[%c0_23, %c19, %c0_24] : memref<1x324x128xf32, #tpu.memory_space<vmem>>, vector<1x267x128xf32>
    %30 = vector.shape_cast %29 : vector<1x267x128xf32> to vector<267x128xf32>
    %31 = arith.truncf %30 : vector<267x128xf32> to vector<267x128xbf16>
    %c4 = arith.constant 4 : index
    %c0_25 = arith.constant 0 : index
    %c0_26 = arith.constant 0 : index
    %32 = vector.load %arg2[%c4, %c0_25, %c0_26] : memref<9x128x128xbf16, #tpu.memory_space<vmem>>, vector<1x128x128xbf16>
    %33 = vector.shape_cast %32 : vector<1x128x128xbf16> to vector<128x128xbf16>
    %cst_27 = arith.constant dense<0.000000e+00> : vector<267x128xf32>
    %34 = tpu.matmul %31, %33, %cst_27 {dimension_numbers = #tpu.dot_dimension_numbers<[1], [0], [0], [1], [0, 0, 1, 1], [], []>} : vector<267x128xbf16>, vector<128x128xbf16>, vector<267x128xf32> -> vector<267x128xf32>
    %35 = arith.addf %28, %34 : vector<267x128xf32>
    %c0_28 = arith.constant 0 : index
    %c20 = arith.constant 20 : index
    %c0_29 = arith.constant 0 : index
    %36 = vector.load %arg1[%c0_28, %c20, %c0_29] : memref<1x324x128xf32, #tpu.memory_space<vmem>>, vector<1x267x128xf32>
    %37 = vector.shape_cast %36 : vector<1x267x128xf32> to vector<267x128xf32>
    %38 = arith.truncf %37 : vector<267x128xf32> to vector<267x128xbf16>
    %c5 = arith.constant 5 : index
    %c0_30 = arith.constant 0 : index
    %c0_31 = arith.constant 0 : index
    %39 = vector.load %arg2[%c5, %c0_30, %c0_31] : memref<9x128x128xbf16, #tpu.memory_space<vmem>>, vector<1x128x128xbf16>
    %40 = vector.shape_cast %39 : vector<1x128x128xbf16> to vector<128x128xbf16>
    %cst_32 = arith.constant dense<0.000000e+00> : vector<267x128xf32>
    %41 = tpu.matmul %38, %40, %cst_32 {dimension_numbers = #tpu.dot_dimension_numbers<[1], [0], [0], [1], [0, 0, 1, 1], [], []>} : vector<267x128xbf16>, vector<128x128xbf16>, vector<267x128xf32> -> vector<267x128xf32>
    %42 = arith.addf %35, %41 : vector<267x128xf32>
    %c0_33 = arith.constant 0 : index
    %c36 = arith.constant 36 : index
    %c0_34 = arith.constant 0 : index
    %43 = vector.load %arg1[%c0_33, %c36, %c0_34] : memref<1x324x128xf32, #tpu.memory_space<vmem>>, vector<1x267x128xf32>
    %44 = vector.shape_cast %43 : vector<1x267x128xf32> to vector<267x128xf32>
    %45 = arith.truncf %44 : vector<267x128xf32> to vector<267x128xbf16>
    %c6 = arith.constant 6 : index
    %c0_35 = arith.constant 0 : index
    %c0_36 = arith.constant 0 : index
    %46 = vector.load %arg2[%c6, %c0_35, %c0_36] : memref<9x128x128xbf16, #tpu.memory_space<vmem>>, vector<1x128x128xbf16>
    %47 = vector.shape_cast %46 : vector<1x128x128xbf16> to vector<128x128xbf16>
    %cst_37 = arith.constant dense<0.000000e+00> : vector<267x128xf32>
    %48 = tpu.matmul %45, %47, %cst_37 {dimension_numbers = #tpu.dot_dimension_numbers<[1], [0], [0], [1], [0, 0, 1, 1], [], []>} : vector<267x128xbf16>, vector<128x128xbf16>, vector<267x128xf32> -> vector<267x128xf32>
    %49 = arith.addf %42, %48 : vector<267x128xf32>
    %c0_38 = arith.constant 0 : index
    %c37 = arith.constant 37 : index
    %c0_39 = arith.constant 0 : index
    %50 = vector.load %arg1[%c0_38, %c37, %c0_39] : memref<1x324x128xf32, #tpu.memory_space<vmem>>, vector<1x267x128xf32>
    %51 = vector.shape_cast %50 : vector<1x267x128xf32> to vector<267x128xf32>
    %52 = arith.truncf %51 : vector<267x128xf32> to vector<267x128xbf16>
    %c7 = arith.constant 7 : index
    %c0_40 = arith.constant 0 : index
    %c0_41 = arith.constant 0 : index
    %53 = vector.load %arg2[%c7, %c0_40, %c0_41] : memref<9x128x128xbf16, #tpu.memory_space<vmem>>, vector<1x128x128xbf16>
    %54 = vector.shape_cast %53 : vector<1x128x128xbf16> to vector<128x128xbf16>
    %cst_42 = arith.constant dense<0.000000e+00> : vector<267x128xf32>
    %55 = tpu.matmul %52, %54, %cst_42 {dimension_numbers = #tpu.dot_dimension_numbers<[1], [0], [0], [1], [0, 0, 1, 1], [], []>} : vector<267x128xbf16>, vector<128x128xbf16>, vector<267x128xf32> -> vector<267x128xf32>
    %56 = arith.addf %49, %55 : vector<267x128xf32>
    %c0_43 = arith.constant 0 : index
    %c38 = arith.constant 38 : index
    %c0_44 = arith.constant 0 : index
    %57 = vector.load %arg1[%c0_43, %c38, %c0_44] : memref<1x324x128xf32, #tpu.memory_space<vmem>>, vector<1x267x128xf32>
    %58 = vector.shape_cast %57 : vector<1x267x128xf32> to vector<267x128xf32>
    %59 = arith.truncf %58 : vector<267x128xf32> to vector<267x128xbf16>
    %c8 = arith.constant 8 : index
    %c0_45 = arith.constant 0 : index
    %c0_46 = arith.constant 0 : index
    %60 = vector.load %arg2[%c8, %c0_45, %c0_46] : memref<9x128x128xbf16, #tpu.memory_space<vmem>>, vector<1x128x128xbf16>
    %61 = vector.shape_cast %60 : vector<1x128x128xbf16> to vector<128x128xbf16>
    %cst_47 = arith.constant dense<0.000000e+00> : vector<267x128xf32>
    %62 = tpu.matmul %59, %61, %cst_47 {dimension_numbers = #tpu.dot_dimension_numbers<[1], [0], [0], [1], [0, 0, 1, 1], [], []>} : vector<267x128xbf16>, vector<128x128xbf16>, vector<267x128xf32> -> vector<267x128xf32>
    %63 = arith.addf %56, %62 : vector<267x128xf32>
    %c0_48 = arith.constant 0 : index
    %c0_49 = arith.constant 0 : index
    %64 = vector.load %arg4[%c0_48, %c0_49] : memref<64x267xf32, #tpu.memory_space<vmem>>, vector<64x267xf32>
    %cst_50 = arith.constant dense<0.000000e+00> : vector<64x128xf32>
    %65 = tpu.matmul %64, %63, %cst_50 {dimension_numbers = #tpu.dot_dimension_numbers<[1], [0], [0], [1], [0, 0, 1, 1], [], []>} : vector<64x267xf32>, vector<267x128xf32>, vector<64x128xf32> -> vector<64x128xf32>
    %c0_51 = arith.constant 0 : index
    %c0_52 = arith.constant 0 : index
    %66 = vector.load %arg3[%c0_51, %c0_52] : memref<3x128xf32, #tpu.memory_space<vmem>>, vector<3x128xf32>
    %67 = vector.extract_strided_slice %66 {offsets = [0, 0], sizes = [1, 128], strides = [1, 1]} : vector<3x128xf32> to vector<1x128xf32>
    %68 = vector.broadcast %67 : vector<1x128xf32> to vector<64x128xf32>
    %69 = arith.addf %65, %68 : vector<64x128xf32>
    %cst_53 = arith.constant 0.000000e+00 : f32
    %70 = vector.broadcast %cst_53 : f32 to vector<64x128xf32>
    %71 = arith.cmpf oge, %69, %70 : vector<64x128xf32>
    %cst_54 = arith.constant 2.000000e-01 : f32
    %72 = vector.broadcast %cst_54 : f32 to vector<64x128xf32>
    %73 = arith.mulf %72, %69 : vector<64x128xf32>
    %74 = arith.select %71, %69, %73 : vector<64x128xi1>, vector<64x128xf32>
    %75 = vector.extract_strided_slice %66 {offsets = [1, 0], sizes = [1, 128], strides = [1, 1]} : vector<3x128xf32> to vector<1x128xf32>
    %76 = vector.broadcast %75 : vector<1x128xf32> to vector<64x128xf32>
    %77 = arith.mulf %74, %76 : vector<64x128xf32>
    %78 = vector.extract_strided_slice %66 {offsets = [2, 0], sizes = [1, 128], strides = [1, 1]} : vector<3x128xf32> to vector<1x128xf32>
    %79 = vector.broadcast %78 : vector<1x128xf32> to vector<64x128xf32>
    %80 = arith.addf %77, %79 : vector<64x128xf32>
    %c0_55 = arith.constant 0 : index
    %c0_56 = arith.constant 0 : index
    %81 = vector.load %arg5[%c0_55, %c0_56] : memref<100x64xf32, #tpu.memory_space<vmem>>, vector<100x64xf32>
    %cst_57 = arith.constant dense<0.000000e+00> : vector<100x128xf32>
    %82 = tpu.matmul %81, %80, %cst_57 {dimension_numbers = #tpu.dot_dimension_numbers<[1], [0], [0], [1], [0, 0, 1, 1], [], []>} : vector<100x64xf32>, vector<64x128xf32>, vector<100x128xf32> -> vector<100x128xf32>
    %c0_58 = arith.constant 0 : index
    %c0_59 = arith.constant 0 : index
    %83 = vector.load %arg19[%c0_58, %c0_59] : memref<100x128xf32, #tpu.memory_space<vmem>>, vector<100x128xf32>
    tpu.vector_store %arg19[%c0_58, %c0_59], %82 {strides = array<i32>} : memref<100x128xf32, #tpu.memory_space<vmem>>, vector<100x128xf32>,
    %cst_60 = arith.constant 0.000000e+00 : f32
    %84 = vector.broadcast %cst_60 : f32 to vector<67x128xf32>
    %c0_61 = arith.constant 0 : index
    %c0_62 = arith.constant 0 : index
    %85 = vector.load %arg19[%c0_61, %c0_62] : memref<100x128xf32, #tpu.memory_space<vmem>>, vector<67x128xf32>
    %86 = arith.truncf %85 : vector<67x128xf32> to vector<67x128xbf16>
    %c0_63 = arith.constant 0 : index
    %c0_64 = arith.constant 0 : index
    %c0_65 = arith.constant 0 : index
    %87 = vector.load %arg6[%c0_63, %c0_64, %c0_65] : memref<9x128x128xbf16, #tpu.memory_space<vmem>>, vector<1x128x128xbf16>
    %88 = vector.shape_cast %87 : vector<1x128x128xbf16> to vector<128x128xbf16>
    %cst_66 = arith.constant dense<0.000000e+00> : vector<67x128xf32>
    %89 = tpu.matmul %86, %88, %cst_66 {dimension_numbers = #tpu.dot_dimension_numbers<[1], [0], [0], [1], [0, 0, 1, 1], [], []>} : vector<67x128xbf16>, vector<128x128xbf16>, vector<67x128xf32> -> vector<67x128xf32>
    %90 = arith.addf %84, %89 : vector<67x128xf32>
    %c1_67 = arith.constant 1 : index
    %c0_68 = arith.constant 0 : index
    %91 = vector.load %arg19[%c1_67, %c0_68] : memref<100x128xf32, #tpu.memory_space<vmem>>, vector<67x128xf32>
    %92 = arith.truncf %91 : vector<67x128xf32> to vector<67x128xbf16>
    %c1_69 = arith.constant 1 : index
    %c0_70 = arith.constant 0 : index
    %c0_71 = arith.constant 0 : index
    %93 = vector.load %arg6[%c1_69, %c0_70, %c0_71] : memref<9x128x128xbf16, #tpu.memory_space<vmem>>, vector<1x128x128xbf16>
    %94 = vector.shape_cast %93 : vector<1x128x128xbf16> to vector<128x128xbf16>
    %cst_72 = arith.constant dense<0.000000e+00> : vector<67x128xf32>
    %95 = tpu.matmul %92, %94, %cst_72 {dimension_numbers = #tpu.dot_dimension_numbers<[1], [0], [0], [1], [0, 0, 1, 1], [], []>} : vector<67x128xbf16>, vector<128x128xbf16>, vector<67x128xf32> -> vector<67x128xf32>
    %96 = arith.addf %90, %95 : vector<67x128xf32>
    %c2_73 = arith.constant 2 : index
    %c0_74 = arith.constant 0 : index
    %97 = vector.load %arg19[%c2_73, %c0_74] : memref<100x128xf32, #tpu.memory_space<vmem>>, vector<67x128xf32>
    %98 = arith.truncf %97 : vector<67x128xf32> to vector<67x128xbf16>
    %c2_75 = arith.constant 2 : index
    %c0_76 = arith.constant 0 : index
    %c0_77 = arith.constant 0 : index
    %99 = vector.load %arg6[%c2_75, %c0_76, %c0_77] : memref<9x128x128xbf16, #tpu.memory_space<vmem>>, vector<1x128x128xbf16>
    %100 = vector.shape_cast %99 : vector<1x128x128xbf16> to vector<128x128xbf16>
    %cst_78 = arith.constant dense<0.000000e+00> : vector<67x128xf32>
    %101 = tpu.matmul %98, %100, %cst_78 {dimension_numbers = #tpu.dot_dimension_numbers<[1], [0], [0], [1], [0, 0, 1, 1], [], []>} : vector<67x128xbf16>, vector<128x128xbf16>, vector<67x128xf32> -> vector<67x128xf32>
    %102 = arith.addf %96, %101 : vector<67x128xf32>
    %c10 = arith.constant 10 : index
    %c0_79 = arith.constant 0 : index
    %103 = vector.load %arg19[%c10, %c0_79] : memref<100x128xf32, #tpu.memory_space<vmem>>, vector<67x128xf32>
    %104 = arith.truncf %103 : vector<67x128xf32> to vector<67x128xbf16>
    %c3_80 = arith.constant 3 : index
    %c0_81 = arith.constant 0 : index
    %c0_82 = arith.constant 0 : index
    %105 = vector.load %arg6[%c3_80, %c0_81, %c0_82] : memref<9x128x128xbf16, #tpu.memory_space<vmem>>, vector<1x128x128xbf16>
    %106 = vector.shape_cast %105 : vector<1x128x128xbf16> to vector<128x128xbf16>
    %cst_83 = arith.constant dense<0.000000e+00> : vector<67x128xf32>
    %107 = tpu.matmul %104, %106, %cst_83 {dimension_numbers = #tpu.dot_dimension_numbers<[1], [0], [0], [1], [0, 0, 1, 1], [], []>} : vector<67x128xbf16>, vector<128x128xbf16>, vector<67x128xf32> -> vector<67x128xf32>
    %108 = arith.addf %102, %107 : vector<67x128xf32>
    %c11 = arith.constant 11 : index
    %c0_84 = arith.constant 0 : index
    %109 = vector.load %arg19[%c11, %c0_84] : memref<100x128xf32, #tpu.memory_space<vmem>>, vector<67x128xf32>
    %110 = arith.truncf %109 : vector<67x128xf32> to vector<67x128xbf16>
    %c4_85 = arith.constant 4 : index
    %c0_86 = arith.constant 0 : index
    %c0_87 = arith.constant 0 : index
    %111 = vector.load %arg6[%c4_85, %c0_86, %c0_87] : memref<9x128x128xbf16, #tpu.memory_space<vmem>>, vector<1x128x128xbf16>
    %112 = vector.shape_cast %111 : vector<1x128x128xbf16> to vector<128x128xbf16>
    %cst_88 = arith.constant dense<0.000000e+00> : vector<67x128xf32>
    %113 = tpu.matmul %110, %112, %cst_88 {dimension_numbers = #tpu.dot_dimension_numbers<[1], [0], [0], [1], [0, 0, 1, 1], [], []>} : vector<67x128xbf16>, vector<128x128xbf16>, vector<67x128xf32> -> vector<67x128xf32>
    %114 = arith.addf %108, %113 : vector<67x128xf32>
    %c12 = arith.constant 12 : index
    %c0_89 = arith.constant 0 : index
    %115 = vector.load %arg19[%c12, %c0_89] : memref<100x128xf32, #tpu.memory_space<vmem>>, vector<67x128xf32>
    %116 = arith.truncf %115 : vector<67x128xf32> to vector<67x128xbf16>
    %c5_90 = arith.constant 5 : index
    %c0_91 = arith.constant 0 : index
    %c0_92 = arith.constant 0 : index
    %117 = vector.load %arg6[%c5_90, %c0_91, %c0_92] : memref<9x128x128xbf16, #tpu.memory_space<vmem>>, vector<1x128x128xbf16>
    %118 = vector.shape_cast %117 : vector<1x128x128xbf16> to vector<128x128xbf16>
    %cst_93 = arith.constant dense<0.000000e+00> : vector<67x128xf32>
    %119 = tpu.matmul %116, %118, %cst_93 {dimension_numbers = #tpu.dot_dimension_numbers<[1], [0], [0], [1], [0, 0, 1, 1], [], []>} : vector<67x128xbf16>, vector<128x128xbf16>, vector<67x128xf32> -> vector<67x128xf32>
    %120 = arith.addf %114, %119 : vector<67x128xf32>
    %c20_94 = arith.constant 20 : index
    %c0_95 = arith.constant 0 : index
    %121 = vector.load %arg19[%c20_94, %c0_95] : memref<100x128xf32, #tpu.memory_space<vmem>>, vector<67x128xf32>
    %122 = arith.truncf %121 : vector<67x128xf32> to vector<67x128xbf16>
    %c6_96 = arith.constant 6 : index
    %c0_97 = arith.constant 0 : index
    %c0_98 = arith.constant 0 : index
    %123 = vector.load %arg6[%c6_96, %c0_97, %c0_98] : memref<9x128x128xbf16, #tpu.memory_space<vmem>>, vector<1x128x128xbf16>
    %124 = vector.shape_cast %123 : vector<1x128x128xbf16> to vector<128x128xbf16>
    %cst_99 = arith.constant dense<0.000000e+00> : vector<67x128xf32>
    %125 = tpu.matmul %122, %124, %cst_99 {dimension_numbers = #tpu.dot_dimension_numbers<[1], [0], [0], [1], [0, 0, 1, 1], [], []>} : vector<67x128xbf16>, vector<128x128xbf16>, vector<67x128xf32> -> vector<67x128xf32>
    %126 = arith.addf %120, %125 : vector<67x128xf32>
    %c21 = arith.constant 21 : index
    %c0_100 = arith.constant 0 : index
    %127 = vector.load %arg19[%c21, %c0_100] : memref<100x128xf32, #tpu.memory_space<vmem>>, vector<67x128xf32>
    %128 = arith.truncf %127 : vector<67x128xf32> to vector<67x128xbf16>
    %c7_101 = arith.constant 7 : index
    %c0_102 = arith.constant 0 : index
    %c0_103 = arith.constant 0 : index
    %129 = vector.load %arg6[%c7_101, %c0_102, %c0_103] : memref<9x128x128xbf16, #tpu.memory_space<vmem>>, vector<1x128x128xbf16>
    %130 = vector.shape_cast %129 : vector<1x128x128xbf16> to vector<128x128xbf16>
    %cst_104 = arith.constant dense<0.000000e+00> : vector<67x128xf32>
    %131 = tpu.matmul %128, %130, %cst_104 {dimension_numbers = #tpu.dot_dimension_numbers<[1], [0], [0], [1], [0, 0, 1, 1], [], []>} : vector<67x128xbf16>, vector<128x128xbf16>, vector<67x128xf32> -> vector<67x128xf32>
    %132 = arith.addf %126, %131 : vector<67x128xf32>
    %c22 = arith.constant 22 : index
    %c0_105 = arith.constant 0 : index
    %133 = vector.load %arg19[%c22, %c0_105] : memref<100x128xf32, #tpu.memory_space<vmem>>, vector<67x128xf32>
    %134 = arith.truncf %133 : vector<67x128xf32> to vector<67x128xbf16>
    %c8_106 = arith.constant 8 : index
    %c0_107 = arith.constant 0 : index
    %c0_108 = arith.constant 0 : index
    %135 = vector.load %arg6[%c8_106, %c0_107, %c0_108] : memref<9x128x128xbf16, #tpu.memory_space<vmem>>, vector<1x128x128xbf16>
    %136 = vector.shape_cast %135 : vector<1x128x128xbf16> to vector<128x128xbf16>
    %cst_109 = arith.constant dense<0.000000e+00> : vector<67x128xf32>
    %137 = tpu.matmul %134, %136, %cst_109 {dimension_numbers = #tpu.dot_dimension_numbers<[1], [0], [0], [1], [0, 0, 1, 1], [], []>} : vector<67x128xbf16>, vector<128x128xbf16>, vector<67x128xf32> -> vector<67x128xf32>
    %138 = arith.addf %132, %137 : vector<67x128xf32>
    %c0_110 = arith.constant 0 : index
    %c0_111 = arith.constant 0 : index
    %139 = vector.load %arg8[%c0_110, %c0_111] : memref<16x67xf32, #tpu.memory_space<vmem>>, vector<16x67xf32>
    %cst_112 = arith.constant dense<0.000000e+00> : vector<16x128xf32>
    %140 = tpu.matmul %139, %138, %cst_112 {dimension_numbers = #tpu.dot_dimension_numbers<[1], [0], [0], [1], [0, 0, 1, 1], [], []>} : vector<16x67xf32>, vector<67x128xf32>, vector<16x128xf32> -> vector<16x128xf32>
    %c0_113 = arith.constant 0 : index
    %c0_114 = arith.constant 0 : index
    %141 = vector.load %arg7[%c0_113, %c0_114] : memref<3x128xf32, #tpu.memory_space<vmem>>, vector<3x128xf32>
    %142 = vector.extract_strided_slice %141 {offsets = [0, 0], sizes = [1, 128], strides = [1, 1]} : vector<3x128xf32> to vector<1x128xf32>
    %143 = vector.broadcast %142 : vector<1x128xf32> to vector<16x128xf32>
    %144 = arith.addf %140, %143 : vector<16x128xf32>
    %cst_115 = arith.constant 0.000000e+00 : f32
    %145 = vector.broadcast %cst_115 : f32 to vector<16x128xf32>
    %146 = arith.cmpf oge, %144, %145 : vector<16x128xf32>
    %cst_116 = arith.constant 2.000000e-01 : f32
    %147 = vector.broadcast %cst_116 : f32 to vector<16x128xf32>
    %148 = arith.mulf %147, %144 : vector<16x128xf32>
    %149 = arith.select %146, %144, %148 : vector<16x128xi1>, vector<16x128xf32>
    %150 = vector.extract_strided_slice %141 {offsets = [1, 0], sizes = [1, 128], strides = [1, 1]} : vector<3x128xf32> to vector<1x128xf32>
    %151 = vector.broadcast %150 : vector<1x128xf32> to vector<16x128xf32>
    %152 = arith.mulf %149, %151 : vector<16x128xf32>
    %153 = vector.extract_strided_slice %141 {offsets = [2, 0], sizes = [1, 128], strides = [1, 1]} : vector<3x128xf32> to vector<1x128xf32>
    %154 = vector.broadcast %153 : vector<1x128xf32> to vector<16x128xf32>
    %155 = arith.addf %152, %154 : vector<16x128xf32>
    %c0_117 = arith.constant 0 : index
    %c0_118 = arith.constant 0 : index
    %156 = vector.load %arg9[%c0_117, %c0_118] : memref<36x16xf32, #tpu.memory_space<vmem>>, vector<36x16xf32>
    %cst_119 = arith.constant dense<0.000000e+00> : vector<36x128xf32>
    %157 = tpu.matmul %156, %155, %cst_119 {dimension_numbers = #tpu.dot_dimension_numbers<[1], [0], [0], [1], [0, 0, 1, 1], [], []>} : vector<36x16xf32>, vector<16x128xf32>, vector<36x128xf32> -> vector<36x128xf32>
    %c0_120 = arith.constant 0 : index
    %c0_121 = arith.constant 0 : index
    %158 = vector.load %arg20[%c0_120, %c0_121] : memref<36x128xf32, #tpu.memory_space<vmem>>, vector<36x128xf32>
    tpu.vector_store %arg20[%c0_120, %c0_121], %157 {strides = array<i32>} : memref<36x128xf32, #tpu.memory_space<vmem>>, vector<36x128xf32>,
    %cst_122 = arith.constant 0.000000e+00 : f32
    %159 = vector.broadcast %cst_122 : f32 to vector<15x128xf32>
    %c0_123 = arith.constant 0 : index
    %c0_124 = arith.constant 0 : index
    %160 = vector.load %arg20[%c0_123, %c0_124] : memref<36x128xf32, #tpu.memory_space<vmem>>, vector<15x128xf32>
    %161 = arith.truncf %160 : vector<15x128xf32> to vector<15x128xbf16>
    %c0_125 = arith.constant 0 : index
    %c0_126 = arith.constant 0 : index
    %c0_127 = arith.constant 0 : index
    %162 = vector.load %arg10[%c0_125, %c0_126, %c0_127] : memref<9x128x128xbf16, #tpu.memory_space<vmem>>, vector<1x128x128xbf16>
    %163 = vector.shape_cast %162 : vector<1x128x128xbf16> to vector<128x128xbf16>
    %cst_128 = arith.constant dense<0.000000e+00> : vector<15x128xf32>
    %164 = tpu.matmul %161, %163, %cst_128 {dimension_numbers = #tpu.dot_dimension_numbers<[1], [0], [0], [1], [0, 0, 1, 1], [], []>} : vector<15x128xbf16>, vector<128x128xbf16>, vector<15x128xf32> -> vector<15x128xf32>
    %165 = arith.addf %159, %164 : vector<15x128xf32>
    %c1_129 = arith.constant 1 : index
    %c0_130 = arith.constant 0 : index
    %166 = vector.load %arg20[%c1_129, %c0_130] : memref<36x128xf32, #tpu.memory_space<vmem>>, vector<15x128xf32>
    %167 = arith.truncf %166 : vector<15x128xf32> to vector<15x128xbf16>
    %c1_131 = arith.constant 1 : index
    %c0_132 = arith.constant 0 : index
    %c0_133 = arith.constant 0 : index
    %168 = vector.load %arg10[%c1_131, %c0_132, %c0_133] : memref<9x128x128xbf16, #tpu.memory_space<vmem>>, vector<1x128x128xbf16>
    %169 = vector.shape_cast %168 : vector<1x128x128xbf16> to vector<128x128xbf16>
    %cst_134 = arith.constant dense<0.000000e+00> : vector<15x128xf32>
    %170 = tpu.matmul %167, %169, %cst_134 {dimension_numbers = #tpu.dot_dimension_numbers<[1], [0], [0], [1], [0, 0, 1, 1], [], []>} : vector<15x128xbf16>, vector<128x128xbf16>, vector<15x128xf32> -> vector<15x128xf32>
    %171 = arith.addf %165, %170 : vector<15x128xf32>
    %c2_135 = arith.constant 2 : index
    %c0_136 = arith.constant 0 : index
    %172 = vector.load %arg20[%c2_135, %c0_136] : memref<36x128xf32, #tpu.memory_space<vmem>>, vector<15x128xf32>
    %173 = arith.truncf %172 : vector<15x128xf32> to vector<15x128xbf16>
    %c2_137 = arith.constant 2 : index
    %c0_138 = arith.constant 0 : index
    %c0_139 = arith.constant 0 : index
    %174 = vector.load %arg10[%c2_137, %c0_138, %c0_139] : memref<9x128x128xbf16, #tpu.memory_space<vmem>>, vector<1x128x128xbf16>
    %175 = vector.shape_cast %174 : vector<1x128x128xbf16> to vector<128x128xbf16>
    %cst_140 = arith.constant dense<0.000000e+00> : vector<15x128xf32>
    %176 = tpu.matmul %173, %175, %cst_140 {dimension_numbers = #tpu.dot_dimension_numbers<[1], [0], [0], [1], [0, 0, 1, 1], [], []>} : vector<15x128xbf16>, vector<128x128xbf16>, vector<15x128xf32> -> vector<15x128xf32>
    %177 = arith.addf %171, %176 : vector<15x128xf32>
    %c6_141 = arith.constant 6 : index
    %c0_142 = arith.constant 0 : index
    %178 = vector.load %arg20[%c6_141, %c0_142] : memref<36x128xf32, #tpu.memory_space<vmem>>, vector<15x128xf32>
    %179 = arith.truncf %178 : vector<15x128xf32> to vector<15x128xbf16>
    %c3_143 = arith.constant 3 : index
    %c0_144 = arith.constant 0 : index
    %c0_145 = arith.constant 0 : index
    %180 = vector.load %arg10[%c3_143, %c0_144, %c0_145] : memref<9x128x128xbf16, #tpu.memory_space<vmem>>, vector<1x128x128xbf16>
    %181 = vector.shape_cast %180 : vector<1x128x128xbf16> to vector<128x128xbf16>
    %cst_146 = arith.constant dense<0.000000e+00> : vector<15x128xf32>
    %182 = tpu.matmul %179, %181, %cst_146 {dimension_numbers = #tpu.dot_dimension_numbers<[1], [0], [0], [1], [0, 0, 1, 1], [], []>} : vector<15x128xbf16>, vector<128x128xbf16>, vector<15x128xf32> -> vector<15x128xf32>
    %183 = arith.addf %177, %182 : vector<15x128xf32>
    %c7_147 = arith.constant 7 : index
    %c0_148 = arith.constant 0 : index
    %184 = vector.load %arg20[%c7_147, %c0_148] : memref<36x128xf32, #tpu.memory_space<vmem>>, vector<15x128xf32>
    %185 = arith.truncf %184 : vector<15x128xf32> to vector<15x128xbf16>
    %c4_149 = arith.constant 4 : index
    %c0_150 = arith.constant 0 : index
    %c0_151 = arith.constant 0 : index
    %186 = vector.load %arg10[%c4_149, %c0_150, %c0_151] : memref<9x128x128xbf16, #tpu.memory_space<vmem>>, vector<1x128x128xbf16>
    %187 = vector.shape_cast %186 : vector<1x128x128xbf16> to vector<128x128xbf16>
    %cst_152 = arith.constant dense<0.000000e+00> : vector<15x128xf32>
    %188 = tpu.matmul %185, %187, %cst_152 {dimension_numbers = #tpu.dot_dimension_numbers<[1], [0], [0], [1], [0, 0, 1, 1], [], []>} : vector<15x128xbf16>, vector<128x128xbf16>, vector<15x128xf32> -> vector<15x128xf32>
    %189 = arith.addf %183, %188 : vector<15x128xf32>
    %c8_153 = arith.constant 8 : index
    %c0_154 = arith.constant 0 : index
    %190 = vector.load %arg20[%c8_153, %c0_154] : memref<36x128xf32, #tpu.memory_space<vmem>>, vector<15x128xf32>
    %191 = arith.truncf %190 : vector<15x128xf32> to vector<15x128xbf16>
    %c5_155 = arith.constant 5 : index
    %c0_156 = arith.constant 0 : index
    %c0_157 = arith.constant 0 : index
    %192 = vector.load %arg10[%c5_155, %c0_156, %c0_157] : memref<9x128x128xbf16, #tpu.memory_space<vmem>>, vector<1x128x128xbf16>
    %193 = vector.shape_cast %192 : vector<1x128x128xbf16> to vector<128x128xbf16>
    %cst_158 = arith.constant dense<0.000000e+00> : vector<15x128xf32>
    %194 = tpu.matmul %191, %193, %cst_158 {dimension_numbers = #tpu.dot_dimension_numbers<[1], [0], [0], [1], [0, 0, 1, 1], [], []>} : vector<15x128xbf16>, vector<128x128xbf16>, vector<15x128xf32> -> vector<15x128xf32>
    %195 = arith.addf %189, %194 : vector<15x128xf32>
    %c12_159 = arith.constant 12 : index
    %c0_160 = arith.constant 0 : index
    %196 = vector.load %arg20[%c12_159, %c0_160] : memref<36x128xf32, #tpu.memory_space<vmem>>, vector<15x128xf32>
    %197 = arith.truncf %196 : vector<15x128xf32> to vector<15x128xbf16>
    %c6_161 = arith.constant 6 : index
    %c0_162 = arith.constant 0 : index
    %c0_163 = arith.constant 0 : index
    %198 = vector.load %arg10[%c6_161, %c0_162, %c0_163] : memref<9x128x128xbf16, #tpu.memory_space<vmem>>, vector<1x128x128xbf16>
    %199 = vector.shape_cast %198 : vector<1x128x128xbf16> to vector<128x128xbf16>
    %cst_164 = arith.constant dense<0.000000e+00> : vector<15x128xf32>
    %200 = tpu.matmul %197, %199, %cst_164 {dimension_numbers = #tpu.dot_dimension_numbers<[1], [0], [0], [1], [0, 0, 1, 1], [], []>} : vector<15x128xbf16>, vector<128x128xbf16>, vector<15x128xf32> -> vector<15x128xf32>
    %201 = arith.addf %195, %200 : vector<15x128xf32>
    %c13 = arith.constant 13 : index
    %c0_165 = arith.constant 0 : index
    %202 = vector.load %arg20[%c13, %c0_165] : memref<36x128xf32, #tpu.memory_space<vmem>>, vector<15x128xf32>
    %203 = arith.truncf %202 : vector<15x128xf32> to vector<15x128xbf16>
    %c7_166 = arith.constant 7 : index
    %c0_167 = arith.constant 0 : index
    %c0_168 = arith.constant 0 : index
    %204 = vector.load %arg10[%c7_166, %c0_167, %c0_168] : memref<9x128x128xbf16, #tpu.memory_space<vmem>>, vector<1x128x128xbf16>
    %205 = vector.shape_cast %204 : vector<1x128x128xbf16> to vector<128x128xbf16>
    %cst_169 = arith.constant dense<0.000000e+00> : vector<15x128xf32>
    %206 = tpu.matmul %203, %205, %cst_169 {dimension_numbers = #tpu.dot_dimension_numbers<[1], [0], [0], [1], [0, 0, 1, 1], [], []>} : vector<15x128xbf16>, vector<128x128xbf16>, vector<15x128xf32> -> vector<15x128xf32>
    %207 = arith.addf %201, %206 : vector<15x128xf32>
    %c14 = arith.constant 14 : index
    %c0_170 = arith.constant 0 : index
    %208 = vector.load %arg20[%c14, %c0_170] : memref<36x128xf32, #tpu.memory_space<vmem>>, vector<15x128xf32>
    %209 = arith.truncf %208 : vector<15x128xf32> to vector<15x128xbf16>
    %c8_171 = arith.constant 8 : index
    %c0_172 = arith.constant 0 : index
    %c0_173 = arith.constant 0 : index
    %210 = vector.load %arg10[%c8_171, %c0_172, %c0_173] : memref<9x128x128xbf16, #tpu.memory_space<vmem>>, vector<1x128x128xbf16>
    %211 = vector.shape_cast %210 : vector<1x128x128xbf16> to vector<128x128xbf16>
    %cst_174 = arith.constant dense<0.000000e+00> : vector<15x128xf32>
    %212 = tpu.matmul %209, %211, %cst_174 {dimension_numbers = #tpu.dot_dimension_numbers<[1], [0], [0], [1], [0, 0, 1, 1], [], []>} : vector<15x128xbf16>, vector<128x128xbf16>, vector<15x128xf32> -> vector<15x128xf32>
    %213 = arith.addf %207, %212 : vector<15x128xf32>
    %c0_175 = arith.constant 0 : index
    %c0_176 = arith.constant 0 : index
    %214 = vector.load %arg12[%c0_175, %c0_176] : memref<4x15xf32, #tpu.memory_space<vmem>>, vector<4x15xf32>
    %cst_177 = arith.constant dense<0.000000e+00> : vector<4x128xf32>
    %215 = tpu.matmul %214, %213, %cst_177 {dimension_numbers = #tpu.dot_dimension_numbers<[1], [0], [0], [1], [0, 0, 1, 1], [], []>} : vector<4x15xf32>, vector<15x128xf32>, vector<4x128xf32> -> vector<4x128xf32>
    %c0_178 = arith.constant 0 : index
    %c0_179 = arith.constant 0 : index
    %216 = vector.load %arg11[%c0_178, %c0_179] : memref<3x128xf32, #tpu.memory_space<vmem>>, vector<3x128xf32>
    %217 = vector.extract_strided_slice %216 {offsets = [0, 0], sizes = [1, 128], strides = [1, 1]} : vector<3x128xf32> to vector<1x128xf32>
    %218 = vector.broadcast %217 : vector<1x128xf32> to vector<4x128xf32>
    %219 = arith.addf %215, %218 : vector<4x128xf32>
    %cst_180 = arith.constant 0.000000e+00 : f32
    %220 = vector.broadcast %cst_180 : f32 to vector<4x128xf32>
    %221 = arith.cmpf oge, %219, %220 : vector<4x128xf32>
    %cst_181 = arith.constant 2.000000e-01 : f32
    %222 = vector.broadcast %cst_181 : f32 to vector<4x128xf32>
    %223 = arith.mulf %222, %219 : vector<4x128xf32>
    %224 = arith.select %221, %219, %223 : vector<4x128xi1>, vector<4x128xf32>
    %225 = vector.extract_strided_slice %216 {offsets = [1, 0], sizes = [1, 128], strides = [1, 1]} : vector<3x128xf32> to vector<1x128xf32>
    %226 = vector.broadcast %225 : vector<1x128xf32> to vector<4x128xf32>
    %227 = arith.mulf %224, %226 : vector<4x128xf32>
    %228 = vector.extract_strided_slice %216 {offsets = [2, 0], sizes = [1, 128], strides = [1, 1]} : vector<3x128xf32> to vector<1x128xf32>
    %229 = vector.broadcast %228 : vector<1x128xf32> to vector<4x128xf32>
    %230 = arith.addf %227, %229 : vector<4x128xf32>
    %c0_182 = arith.constant 0 : index
    %c0_183 = arith.constant 0 : index
    %231 = vector.load %arg13[%c0_182, %c0_183] : memref<16x4xf32, #tpu.memory_space<vmem>>, vector<16x4xf32>
    %cst_184 = arith.constant dense<0.000000e+00> : vector<16x128xf32>
    %232 = tpu.matmul %231, %230, %cst_184 {dimension_numbers = #tpu.dot_dimension_numbers<[1], [0], [0], [1], [0, 0, 1, 1], [], []>} : vector<16x4xf32>, vector<4x128xf32>, vector<16x128xf32> -> vector<16x128xf32>
    %c0_185 = arith.constant 0 : index
    %c0_186 = arith.constant 0 : index
    %233 = vector.load %arg21[%c0_185, %c0_186] : memref<16x128xf32, #tpu.memory_space<vmem>>, vector<16x128xf32>
    tpu.vector_store %arg21[%c0_185, %c0_186], %232 {strides = array<i32>} : memref<16x128xf32, #tpu.memory_space<vmem>>, vector<16x128xf32>,
    %cst_187 = arith.constant 0.000000e+00 : f32
    %234 = vector.broadcast %cst_187 : f32 to vector<1x128xf32>
    %c0_188 = arith.constant 0 : index
    %c0_189 = arith.constant 0 : index
    %235 = vector.load %arg21[%c0_188, %c0_189] : memref<16x128xf32, #tpu.memory_space<vmem>>, vector<1x128xf32>
    %236 = arith.truncf %235 : vector<1x128xf32> to vector<1x128xbf16>
    %c0_190 = arith.constant 0 : index
    %c0_191 = arith.constant 0 : index
    %c0_192 = arith.constant 0 : index
    %237 = vector.load %arg14[%c0_190, %c0_191, %c0_192] : memref<9x128x128xbf16, #tpu.memory_space<vmem>>, vector<1x128x128xbf16>
    %238 = vector.shape_cast %237 : vector<1x128x128xbf16> to vector<128x128xbf16>
    %cst_193 = arith.constant dense<0.000000e+00> : vector<1x128xf32>
    %239 = tpu.matmul %236, %238, %cst_193 {dimension_numbers = #tpu.dot_dimension_numbers<[1], [0], [0], [1], [0, 0, 1, 1], [], []>} : vector<1x128xbf16>, vector<128x128xbf16>, vector<1x128xf32> -> vector<1x128xf32>
    %240 = arith.addf %234, %239 : vector<1x128xf32>
    %c1_194 = arith.constant 1 : index
    %c0_195 = arith.constant 0 : index
    %241 = vector.load %arg21[%c1_194, %c0_195] : memref<16x128xf32, #tpu.memory_space<vmem>>, vector<1x128xf32>
    %242 = arith.truncf %241 : vector<1x128xf32> to vector<1x128xbf16>
    %c1_196 = arith.constant 1 : index
    %c0_197 = arith.constant 0 : index
    %c0_198 = arith.constant 0 : index
    %243 = vector.load %arg14[%c1_196, %c0_197, %c0_198] : memref<9x128x128xbf16, #tpu.memory_space<vmem>>, vector<1x128x128xbf16>
    %244 = vector.shape_cast %243 : vector<1x128x128xbf16> to vector<128x128xbf16>
    %cst_199 = arith.constant dense<0.000000e+00> : vector<1x128xf32>
    %245 = tpu.matmul %242, %244, %cst_199 {dimension_numbers = #tpu.dot_dimension_numbers<[1], [0], [0], [1], [0, 0, 1, 1], [], []>} : vector<1x128xbf16>, vector<128x128xbf16>, vector<1x128xf32> -> vector<1x128xf32>
    %246 = arith.addf %240, %245 : vector<1x128xf32>
    %c2_200 = arith.constant 2 : index
    %c0_201 = arith.constant 0 : index
    %247 = vector.load %arg21[%c2_200, %c0_201] : memref<16x128xf32, #tpu.memory_space<vmem>>, vector<1x128xf32>
    %248 = arith.truncf %247 : vector<1x128xf32> to vector<1x128xbf16>
    %c2_202 = arith.constant 2 : index
    %c0_203 = arith.constant 0 : index
    %c0_204 = arith.constant 0 : index
    %249 = vector.load %arg14[%c2_202, %c0_203, %c0_204] : memref<9x128x128xbf16, #tpu.memory_space<vmem>>, vector<1x128x128xbf16>
    %250 = vector.shape_cast %249 : vector<1x128x128xbf16> to vector<128x128xbf16>
    %cst_205 = arith.constant dense<0.000000e+00> : vector<1x128xf32>
    %251 = tpu.matmul %248, %250, %cst_205 {dimension_numbers = #tpu.dot_dimension_numbers<[1], [0], [0], [1], [0, 0, 1, 1], [], []>} : vector<1x128xbf16>, vector<128x128xbf16>, vector<1x128xf32> -> vector<1x128xf32>
    %252 = arith.addf %246, %251 : vector<1x128xf32>
    %c4_206 = arith.constant 4 : index
    %c0_207 = arith.constant 0 : index
    %253 = vector.load %arg21[%c4_206, %c0_207] : memref<16x128xf32, #tpu.memory_space<vmem>>, vector<1x128xf32>
    %254 = arith.truncf %253 : vector<1x128xf32> to vector<1x128xbf16>
    %c3_208 = arith.constant 3 : index
    %c0_209 = arith.constant 0 : index
    %c0_210 = arith.constant 0 : index
    %255 = vector.load %arg14[%c3_208, %c0_209, %c0_210] : memref<9x128x128xbf16, #tpu.memory_space<vmem>>, vector<1x128x128xbf16>
    %256 = vector.shape_cast %255 : vector<1x128x128xbf16> to vector<128x128xbf16>
    %cst_211 = arith.constant dense<0.000000e+00> : vector<1x128xf32>
    %257 = tpu.matmul %254, %256, %cst_211 {dimension_numbers = #tpu.dot_dimension_numbers<[1], [0], [0], [1], [0, 0, 1, 1], [], []>} : vector<1x128xbf16>, vector<128x128xbf16>, vector<1x128xf32> -> vector<1x128xf32>
    %258 = arith.addf %252, %257 : vector<1x128xf32>
    %c5_212 = arith.constant 5 : index
    %c0_213 = arith.constant 0 : index
    %259 = vector.load %arg21[%c5_212, %c0_213] : memref<16x128xf32, #tpu.memory_space<vmem>>, vector<1x128xf32>
    %260 = arith.truncf %259 : vector<1x128xf32> to vector<1x128xbf16>
    %c4_214 = arith.constant 4 : index
    %c0_215 = arith.constant 0 : index
    %c0_216 = arith.constant 0 : index
    %261 = vector.load %arg14[%c4_214, %c0_215, %c0_216] : memref<9x128x128xbf16, #tpu.memory_space<vmem>>, vector<1x128x128xbf16>
    %262 = vector.shape_cast %261 : vector<1x128x128xbf16> to vector<128x128xbf16>
    %cst_217 = arith.constant dense<0.000000e+00> : vector<1x128xf32>
    %263 = tpu.matmul %260, %262, %cst_217 {dimension_numbers = #tpu.dot_dimension_numbers<[1], [0], [0], [1], [0, 0, 1, 1], [], []>} : vector<1x128xbf16>, vector<128x128xbf16>, vector<1x128xf32> -> vector<1x128xf32>
    %264 = arith.addf %258, %263 : vector<1x128xf32>
    %c6_218 = arith.constant 6 : index
    %c0_219 = arith.constant 0 : index
    %265 = vector.load %arg21[%c6_218, %c0_219] : memref<16x128xf32, #tpu.memory_space<vmem>>, vector<1x128xf32>
    %266 = arith.truncf %265 : vector<1x128xf32> to vector<1x128xbf16>
    %c5_220 = arith.constant 5 : index
    %c0_221 = arith.constant 0 : index
    %c0_222 = arith.constant 0 : index
    %267 = vector.load %arg14[%c5_220, %c0_221, %c0_222] : memref<9x128x128xbf16, #tpu.memory_space<vmem>>, vector<1x128x128xbf16>
    %268 = vector.shape_cast %267 : vector<1x128x128xbf16> to vector<128x128xbf16>
    %cst_223 = arith.constant dense<0.000000e+00> : vector<1x128xf32>
    %269 = tpu.matmul %266, %268, %cst_223 {dimension_numbers = #tpu.dot_dimension_numbers<[1], [0], [0], [1], [0, 0, 1, 1], [], []>} : vector<1x128xbf16>, vector<128x128xbf16>, vector<1x128xf32> -> vector<1x128xf32>
    %270 = arith.addf %264, %269 : vector<1x128xf32>
    %c8_224 = arith.constant 8 : index
    %c0_225 = arith.constant 0 : index
    %271 = vector.load %arg21[%c8_224, %c0_225] : memref<16x128xf32, #tpu.memory_space<vmem>>, vector<1x128xf32>
    %272 = arith.truncf %271 : vector<1x128xf32> to vector<1x128xbf16>
    %c6_226 = arith.constant 6 : index
    %c0_227 = arith.constant 0 : index
    %c0_228 = arith.constant 0 : index
    %273 = vector.load %arg14[%c6_226, %c0_227, %c0_228] : memref<9x128x128xbf16, #tpu.memory_space<vmem>>, vector<1x128x128xbf16>
    %274 = vector.shape_cast %273 : vector<1x128x128xbf16> to vector<128x128xbf16>
    %cst_229 = arith.constant dense<0.000000e+00> : vector<1x128xf32>
    %275 = tpu.matmul %272, %274, %cst_229 {dimension_numbers = #tpu.dot_dimension_numbers<[1], [0], [0], [1], [0, 0, 1, 1], [], []>} : vector<1x128xbf16>, vector<128x128xbf16>, vector<1x128xf32> -> vector<1x128xf32>
    %276 = arith.addf %270, %275 : vector<1x128xf32>
    %c9 = arith.constant 9 : index
    %c0_230 = arith.constant 0 : index
    %277 = vector.load %arg21[%c9, %c0_230] : memref<16x128xf32, #tpu.memory_space<vmem>>, vector<1x128xf32>
    %278 = arith.truncf %277 : vector<1x128xf32> to vector<1x128xbf16>
    %c7_231 = arith.constant 7 : index
    %c0_232 = arith.constant 0 : index
    %c0_233 = arith.constant 0 : index
    %279 = vector.load %arg14[%c7_231, %c0_232, %c0_233] : memref<9x128x128xbf16, #tpu.memory_space<vmem>>, vector<1x128x128xbf16>
    %280 = vector.shape_cast %279 : vector<1x128x128xbf16> to vector<128x128xbf16>
    %cst_234 = arith.constant dense<0.000000e+00> : vector<1x128xf32>
    %281 = tpu.matmul %278, %280, %cst_234 {dimension_numbers = #tpu.dot_dimension_numbers<[1], [0], [0], [1], [0, 0, 1, 1], [], []>} : vector<1x128xbf16>, vector<128x128xbf16>, vector<1x128xf32> -> vector<1x128xf32>
    %282 = arith.addf %276, %281 : vector<1x128xf32>
    %c10_235 = arith.constant 10 : index
    %c0_236 = arith.constant 0 : index
    %283 = vector.load %arg21[%c10_235, %c0_236] : memref<16x128xf32, #tpu.memory_space<vmem>>, vector<1x128xf32>
    %284 = arith.truncf %283 : vector<1x128xf32> to vector<1x128xbf16>
    %c8_237 = arith.constant 8 : index
    %c0_238 = arith.constant 0 : index
    %c0_239 = arith.constant 0 : index
    %285 = vector.load %arg14[%c8_237, %c0_238, %c0_239] : memref<9x128x128xbf16, #tpu.memory_space<vmem>>, vector<1x128x128xbf16>
    %286 = vector.shape_cast %285 : vector<1x128x128xbf16> to vector<128x128xbf16>
    %cst_240 = arith.constant dense<0.000000e+00> : vector<1x128xf32>
    %287 = tpu.matmul %284, %286, %cst_240 {dimension_numbers = #tpu.dot_dimension_numbers<[1], [0], [0], [1], [0, 0, 1, 1], [], []>} : vector<1x128xbf16>, vector<128x128xbf16>, vector<1x128xf32> -> vector<1x128xf32>
    %288 = arith.addf %282, %287 : vector<1x128xf32>
    %c0_241 = arith.constant 0 : index
    %c0_242 = arith.constant 0 : index
    %289 = vector.load %arg15[%c0_241, %c0_242] : memref<3x128xf32, #tpu.memory_space<vmem>>, vector<3x128xf32>
    %290 = vector.extract_strided_slice %289 {offsets = [0, 0], sizes = [1, 128], strides = [1, 1]} : vector<3x128xf32> to vector<1x128xf32>
    %291 = arith.addf %288, %290 : vector<1x128xf32>
    %cst_243 = arith.constant 0.000000e+00 : f32
    %292 = vector.broadcast %cst_243 : f32 to vector<1x128xf32>
    %293 = arith.cmpf oge, %291, %292 : vector<1x128xf32>
    %cst_244 = arith.constant 2.000000e-01 : f32
    %294 = vector.broadcast %cst_244 : f32 to vector<1x128xf32>
    %295 = arith.mulf %294, %291 : vector<1x128xf32>
    %296 = arith.select %293, %291, %295 : vector<1x128xi1>, vector<1x128xf32>
    %297 = vector.extract_strided_slice %289 {offsets = [1, 0], sizes = [1, 128], strides = [1, 1]} : vector<3x128xf32> to vector<1x128xf32>
    %298 = arith.mulf %296, %297 : vector<1x128xf32>
    %299 = vector.extract_strided_slice %289 {offsets = [2, 0], sizes = [1, 128], strides = [1, 1]} : vector<3x128xf32> to vector<1x128xf32>
    %300 = arith.addf %298, %299 : vector<1x128xf32>
    %c0_245 = arith.constant 0 : index
    %c0_246 = arith.constant 0 : index
    %301 = vector.load %arg16[%c0_245, %c0_246] : memref<1x128xf32, #tpu.memory_space<vmem>>, vector<1x128xf32>
    %302 = arith.mulf %300, %301 : vector<1x128xf32>
    %cst_247 = arith.constant dense<0.000000e+00> : vector<1xf32>
    %303 = vector.multi_reduction <add>, %302, %cst_247 [1] : vector<1x128xf32> to vector<1xf32>
    %304 = vector.shape_cast %303 : vector<1xf32> to vector<1x1xf32>
    %cst_248 = arith.constant dense<0.000000e+00> : vector<1xf32>
    %305 = vector.multi_reduction <add>, %304, %cst_248 [0] : vector<1x1xf32> to vector<1xf32>
    %306 = vector.shape_cast %305 : vector<1xf32> to vector<1x1xf32>
    %c0_249 = arith.constant 0 : index
    %c0_250 = arith.constant 0 : index
    %307 = vector.load %arg17[%c0_249, %c0_250] : memref<1x1xf32, #tpu.memory_space<vmem>>, vector<1x1xf32>
    %308 = arith.addf %306, %307 : vector<1x1xf32>
    %309 = arith.negf %308 : vector<1x1xf32>
    %310 = math.exp %309 : vector<1x1xf32>
    %cst_251 = arith.constant 1.000000e+00 : f32
    %311 = vector.broadcast %cst_251 : f32 to vector<1x1xf32>
    %312 = arith.addf %311, %310 : vector<1x1xf32>
    %313 = arith.divf %311, %312 : vector<1x1xf32>
    %c0_252 = arith.constant 0 : index
    %c0_253 = arith.constant 0 : index
    %c0_254 = arith.constant 0 : index
    %314 = vector.load %arg18[%c0_252, %c0_253, %c0_254] : memref<1x1x1xf32, #tpu.memory_space<vmem>>, vector<1x1x1xf32>
    %315 = vector.shape_cast %314 : vector<1x1x1xf32> to vector<1x1xf32>
    %316 = vector.shape_cast %313 : vector<1x1xf32> to vector<1x1x1xf32>
    tpu.vector_store %arg18[%c0_252, %c0_253, %c0_254], %316 {strides = array<i32>} : memref<1x1x1xf32, #tpu.memory_space<vmem>>, vector<1x1x1xf32>,
    return
  }
  func.func @transform_0(%arg0: i32) -> (i32, i32, i32) {
    %c0_i32 = arith.constant 0 : i32
    %c0_i32_0 = arith.constant 0 : i32
    %c0_i32_1 = arith.constant 0 : i32
    return %arg0, %c0_i32, %c0_i32_0 : i32, i32, i32
  }
  func.func @transform_1(%arg0: i32) -> (i32, i32, i32) {
    %c0_i32 = arith.constant 0 : i32
    %c0_i32_0 = arith.constant 0 : i32
    %c0_i32_1 = arith.constant 0 : i32
    %c0_i32_2 = arith.constant 0 : i32
    return %c0_i32, %c0_i32_0, %c0_i32_1 : i32, i32, i32
  }
  func.func @transform_2(%arg0: i32) -> (i32, i32) {
    %c0_i32 = arith.constant 0 : i32
    %c0_i32_0 = arith.constant 0 : i32
    %c0_i32_1 = arith.constant 0 : i32
    return %c0_i32, %c0_i32_0 : i32, i32
  }
  func.func @transform_3(%arg0: i32) -> (i32, i32) {
    %c0_i32 = arith.constant 0 : i32
    %c0_i32_0 = arith.constant 0 : i32
    %c0_i32_1 = arith.constant 0 : i32
    return %c0_i32, %c0_i32_0 : i32, i32
  }
  func.func @transform_4(%arg0: i32) -> (i32, i32) {
    %c0_i32 = arith.constant 0 : i32
    %c0_i32_0 = arith.constant 0 : i32
    %c0_i32_1 = arith.constant 0 : i32
    return %c0_i32, %c0_i32_0 : i32, i32
  }
  func.func @transform_5(%arg0: i32) -> (i32, i32, i32) {
    %c0_i32 = arith.constant 0 : i32
    %c0_i32_0 = arith.constant 0 : i32
    %c0_i32_1 = arith.constant 0 : i32
    %c0_i32_2 = arith.constant 0 : i32
    return %c0_i32, %c0_i32_0, %c0_i32_1 : i32, i32, i32
  }
  func.func @transform_6(%arg0: i32) -> (i32, i32) {
    %c0_i32 = arith.constant 0 : i32
    %c0_i32_0 = arith.constant 0 : i32
    %c0_i32_1 = arith.constant 0 : i32
    return %c0_i32, %c0_i32_0 : i32, i32
  }
  func.func @transform_7(%arg0: i32) -> (i32, i32) {
    %c0_i32 = arith.constant 0 : i32
    %c0_i32_0 = arith.constant 0 : i32
    %c0_i32_1 = arith.constant 0 : i32
    return %c0_i32, %c0_i32_0 : i32, i32
  }
  func.func @transform_8(%arg0: i32) -> (i32, i32) {
    %c0_i32 = arith.constant 0 : i32
    %c0_i32_0 = arith.constant 0 : i32
    %c0_i32_1 = arith.constant 0 : i32
    return %c0_i32, %c0_i32_0 : i32, i32
  }
  func.func @transform_9(%arg0: i32) -> (i32, i32, i32) {
    %c0_i32 = arith.constant 0 : i32
    %c0_i32_0 = arith.constant 0 : i32
    %c0_i32_1 = arith.constant 0 : i32
    %c0_i32_2 = arith.constant 0 : i32
    return %c0_i32, %c0_i32_0, %c0_i32_1 : i32, i32, i32
  }
  func.func @transform_10(%arg0: i32) -> (i32, i32) {
    %c0_i32 = arith.constant 0 : i32
    %c0_i32_0 = arith.constant 0 : i32
    %c0_i32_1 = arith.constant 0 : i32
    return %c0_i32, %c0_i32_0 : i32, i32
  }
  func.func @transform_11(%arg0: i32) -> (i32, i32) {
    %c0_i32 = arith.constant 0 : i32
    %c0_i32_0 = arith.constant 0 : i32
    %c0_i32_1 = arith.constant 0 : i32
    return %c0_i32, %c0_i32_0 : i32, i32
  }
  func.func @transform_12(%arg0: i32) -> (i32, i32) {
    %c0_i32 = arith.constant 0 : i32
    %c0_i32_0 = arith.constant 0 : i32
    %c0_i32_1 = arith.constant 0 : i32
    return %c0_i32, %c0_i32_0 : i32, i32
  }
  func.func @transform_13(%arg0: i32) -> (i32, i32, i32) {
    %c0_i32 = arith.constant 0 : i32
    %c0_i32_0 = arith.constant 0 : i32
    %c0_i32_1 = arith.constant 0 : i32
    %c0_i32_2 = arith.constant 0 : i32
    return %c0_i32, %c0_i32_0, %c0_i32_1 : i32, i32, i32
  }
  func.func @transform_14(%arg0: i32) -> (i32, i32) {
    %c0_i32 = arith.constant 0 : i32
    %c0_i32_0 = arith.constant 0 : i32
    %c0_i32_1 = arith.constant 0 : i32
    return %c0_i32, %c0_i32_0 : i32, i32
  }
  func.func @transform_15(%arg0: i32) -> (i32, i32) {
    %c0_i32 = arith.constant 0 : i32
    %c0_i32_0 = arith.constant 0 : i32
    %c0_i32_1 = arith.constant 0 : i32
    return %c0_i32, %c0_i32_0 : i32, i32
  }
  func.func @transform_16(%arg0: i32) -> (i32, i32) {
    %c0_i32 = arith.constant 0 : i32
    %c0_i32_0 = arith.constant 0 : i32
    %c0_i32_1 = arith.constant 0 : i32
    return %c0_i32, %c0_i32_0 : i32, i32
  }
  func.func @transform_17(%arg0: i32) -> (i32, i32, i32) {
    %c0_i32 = arith.constant 0 : i32
    %c0_i32_0 = arith.constant 0 : i32
    %c0_i32_1 = arith.constant 0 : i32
    return %arg0, %c0_i32, %c0_i32_0 : i32, i32, i32
  }
}

</mosaic_0001>

<llo_original>
// kernel: discriminator_forward.1
$region0: #{discriminator_forward.1}
  #allocation0 [shape = 'u32[]', space=smem, size = 0x4, offset = 0x4, fixed_abs, tag = 'smem constant byte address 0x4 - core index']
  #allocation1 [shape = 'u32[144,128]{1,0:T(1,128)}', space=vmem, size = 0x12000, scoped, tag = 'internal scratch']
  #allocation2 [shape = 'f32[100,128]{1,0:T(8,128)}', space=vmem, size = 0xd000, scoped, tag = 'scratch operand']
  #allocation3 [shape = 'f32[36,128]{1,0:T(8,128)}', space=vmem, size = 0x5000, scoped, tag = 'scratch operand']
  #allocation4 [shape = 'f32[16,128]{1,0:T(8,128)}', space=vmem, size = 0x2000, scoped, tag = 'scratch operand']
  #allocation5 [shape = 'f32[1,1]{1,0:T(1,128)S(1)}', space=vmem, size = 0x200, scoped, tag = 'scoped memory for discriminator_forward.1']
  %s0 = inlined_call_operand.vmem [shape: f32[2,324,128], index: 0, kind: input, shape index: {}]
  %s1 = inlined_call_operand.vmem [shape: bf16[9,128,128], index: 1, kind: input, shape index: {}]
  %s2 = inlined_call_operand.vmem [shape: f32[3,128], index: 2, kind: input, shape index: {}]
  %s3 = inlined_call_operand.vmem [shape: f32[64,267], index: 3, kind: input, shape index: {}]
  %s4 = inlined_call_operand.vmem [shape: f32[100,64], index: 4, kind: input, shape index: {}]
  %s5 = inlined_call_operand.vmem [shape: bf16[9,128,128], index: 5, kind: input, shape index: {}]
  %s6 = inlined_call_operand.vmem [shape: f32[3,128], index: 6, kind: input, shape index: {}]
  %s7 = inlined_call_operand.vmem [shape: f32[16,67], index: 7, kind: input, shape index: {}]
  %s8 = inlined_call_operand.vmem [shape: f32[36,16], index: 8, kind: input, shape index: {}]
  %s9 = inlined_call_operand.vmem [shape: bf16[9,128,128], index: 9, kind: input, shape index: {}]
  %s10 = inlined_call_operand.vmem [shape: f32[3,128], index: 10, kind: input, shape index: {}]
  %s11 = inlined_call_operand.vmem [shape: f32[4,15], index: 11, kind: input, shape index: {}]
  %s12 = inlined_call_operand.vmem [shape: f32[16,4], index: 12, kind: input, shape index: {}]
  %s13 = inlined_call_operand.vmem [shape: bf16[9,128,128], index: 13, kind: input, shape index: {}]
  %s14 = inlined_call_operand.vmem [shape: f32[3,128], index: 14, kind: input, shape index: {}]
  %s15 = inlined_call_operand.vmem [shape: f32[1,128], index: 15, kind: input, shape index: {}]
  %s16 = inlined_call_operand.<no memory space> [shape: f32[1,1], index: 16, kind: input, shape index: {}]
  %s17 = inlined_call_operand.vmem [shape: f32[2,1,1], index: 17, kind: output, shape index: {}]
  %s18 = sld [smem:[#allocation0]]
  $region101: #{discriminator_forward.1} parent=0
    _
  %s20 = ssub.s32 1, %s18
  %s21 = scalar_select 0, %s20, %s18
  %v22 = vstv %s16
  %23 = vst [vmem:[#allocation5] sm:$0x1] %v22
  loop: start=0, step=1, limit=4
  $region2: #{discriminator_forward.1} parent=0 // loop_pre_header
    _
  $region3: #{discriminator_forward.1} parent=0 // loop_header
    %s25 = sphi 0, %s29
    %p26 = scmp.ge.s32.totalorder %s25, 4
    %s35 = sphi 0, %s37
    %s38 = sphi 0, %s35
    %s39 = sphi 0, %s38
    %s55 = sphi 0, %s39
    %s59 = sphi 0, %s59
    %s61 = sphi 0, %s59
    %s62 = sphi 0, %s61
    %s76 = sphi 0, %s62
    %s80 = sphi 0, %s80
    %s82 = sphi 0, %s80
    %s83 = sphi 0, %s82
    %s97 = sphi 0, %s83
    %s101 = sphi 0, %s101
    %s103 = sphi 0, %s101
    %s104 = sphi 0, %s103
    %s118 = sphi 0, %s104
    %s122 = sphi 0, %s122
    %s124 = sphi 0, %s122
    %s125 = sphi 0, %s124
    %s139 = sphi 0, %s125
    %s143 = sphi 0, %s143
    %s145 = sphi 0, %s143
    %s146 = sphi 0, %s145
    %s160 = sphi 0, %s146
    %s164 = sphi 0, %s164
    %s166 = sphi 0, %s164
    %s167 = sphi 0, %s166
    %s181 = sphi 0, %s167
    %s185 = sphi 0, %s185
    %s187 = sphi 0, %s185
    %s188 = sphi 0, %s187
    %s202 = sphi 0, %s188
    %s206 = sphi 0, %s206
    %s208 = sphi 0, %s206
    %s209 = sphi 0, %s208
    %s223 = sphi 0, %s209
    %s227 = sphi 0, %s227
    %s229 = sphi 0, %s227
    %s230 = sphi 0, %s229
    %s244 = sphi 0, %s230
    %s248 = sphi 0, %s248
    %s250 = sphi 0, %s248
    %s251 = sphi 0, %s250
    %s265 = sphi 0, %s251
    %s269 = sphi 0, %s269
    %s271 = sphi 0, %s269
    %s272 = sphi 0, %s271
    %s286 = sphi 0, %s272
    %s290 = sphi 0, %s290
    %s292 = sphi 0, %s290
    %s293 = sphi 0, %s292
    %s307 = sphi 0, %s293
    %s311 = sphi 0, %s311
    %s313 = sphi 0, %s311
    %s314 = sphi 0, %s313
    %s328 = sphi 0, %s314
    %s332 = sphi 0, %s332
    %s334 = sphi 0, %s332
    %s335 = sphi 0, %s334
    %s349 = sphi 0, %s335
    %s353 = sphi 0, %s353
    %s355 = sphi 0, %s353
    %s356 = sphi 0, %s355
    %s370 = sphi 0, %s356
    %s374 = sphi 0, %s374
    %s376 = sphi 0, %s374
    %s377 = sphi 0, %s376
    %s391 = sphi 0, %s377
    %s397 = sphi 0, %s399
    %s400 = sphi 0, %s397
    %s401 = sphi 0, %s400
    %s417 = sphi 0, %s401
  $region4: #{discriminator_forward.1} parent=0 // loop_header_branch
    %28 = sbr.rel (%p26) target = $region8
  $region5: #{discriminator_forward.1} parent=0 // loop_body
    %s30 = ssub.s32 %s25, 1
    %s31 = ssub.s32 %s25, 2
    %s32 = sadd.s32 %s25, 1
    %s33 = ssub.s32 %s25, %s32
    %p34 = scmp.eq.s32.totalorder %s33, 0
    %s36 = sadd.s32 %s35, 1
    %s37 = scalar_select %p34, %s35, %s36
    %p40 = pneg %p34
    %p41 = scmp.eq.s32.totalorder %s25, 1
    %p42 = por %p40, %p41
    %p43 = scmp.ne.s32.totalorder %s35, %s38
    %p44 = scmp.eq.s32.totalorder %s25, 0
    %p45 = por %p43, %p44
    %p46 = scmp.ne.s32.totalorder %s35, %s38
    %p47 = scmp.eq.s32.totalorder %s30, 1
    %p48 = por %p46, %p47
    %p49 = scmp.ne.s32.totalorder %s38, %s39
    %p50 = scmp.eq.s32.totalorder %s30, 0
    %p51 = por %p49, %p50
    %p52 = scmp.ne.s32.totalorder %s38, %s39
    %p53 = scmp.eq.s32.totalorder %s31, 1
    %p54 = por %p52, %p53
    %p56 = scmp.ne.s32.totalorder %s39, %s55
    %p57 = scmp.eq.s32.totalorder %s31, 0
    %p58 = por %p56, %p57
    %s60 = sadd.s32 %s59, 1
    %p63 = scmp.eq.s32.totalorder %s25, 1
    %p64 = scmp.ne.s32.totalorder %s59, %s61
    %p65 = scmp.eq.s32.totalorder %s25, 0
    %p66 = por %p64, %p65
    %p67 = scmp.ne.s32.totalorder %s59, %s61
    %p68 = scmp.eq.s32.totalorder %s30, 1
    %p69 = por %p67, %p68
    %p70 = scmp.ne.s32.totalorder %s61, %s62
    %p71 = scmp.eq.s32.totalorder %s30, 0
    %p72 = por %p70, %p71
    %p73 = scmp.ne.s32.totalorder %s61, %s62
    %p74 = scmp.eq.s32.totalorder %s31, 1
    %p75 = por %p73, %p74
    %p77 = scmp.ne.s32.totalorder %s62, %s76
    %p78 = scmp.eq.s32.totalorder %s31, 0
    %p79 = por %p77, %p78
    %s81 = sadd.s32 %s80, 1
    %p84 = scmp.eq.s32.totalorder %s25, 1
    %p85 = scmp.ne.s32.totalorder %s80, %s82
    %p86 = scmp.eq.s32.totalorder %s25, 0
    %p87 = por %p85, %p86
    %p88 = scmp.ne.s32.totalorder %s80, %s82
    %p89 = scmp.eq.s32.totalorder %s30, 1
    %p90 = por %p88, %p89
    %p91 = scmp.ne.s32.totalorder %s82, %s83
    %p92 = scmp.eq.s32.totalorder %s30, 0
    %p93 = por %p91, %p92
    %p94 = scmp.ne.s32.totalorder %s82, %s83
    %p95 = scmp.eq.s32.totalorder %s31, 1
    %p96 = por %p94, %p95
    %p98 = scmp.ne.s32.totalorder %s83, %s97
    %p99 = scmp.eq.s32.totalorder %s31, 0
    %p100 = por %p98, %p99
    %s102 = sadd.s32 %s101, 1
    %p105 = scmp.eq.s32.totalorder %s25, 1
    %p106 = scmp.ne.s32.totalorder %s101, %s103
    %p107 = scmp.eq.s32.totalorder %s25, 0
    %p108 = por %p106, %p107
    %p109 = scmp.ne.s32.totalorder %s101, %s103
    %p110 = scmp.eq.s32.totalorder %s30, 1
    %p111 = por %p109, %p110
    %p112 = scmp.ne.s32.totalorder %s103, %s104
    %p113 = scmp.eq.s32.totalorder %s30, 0
    %p114 = por %p112, %p113
    %p115 = scmp.ne.s32.totalorder %s103, %s104
    %p116 = scmp.eq.s32.totalorder %s31, 1
    %p117 = por %p115, %p116
    %p119 = scmp.ne.s32.totalorder %s104, %s118
    %p120 = scmp.eq.s32.totalorder %s31, 0
    %p121 = por %p119, %p120
    %s123 = sadd.s32 %s122, 1
    %p126 = scmp.eq.s32.totalorder %s25, 1
    %p127 = scmp.ne.s32.totalorder %s122, %s124
    %p128 = scmp.eq.s32.totalorder %s25, 0
    %p129 = por %p127, %p128
    %p130 = scmp.ne.s32.totalorder %s122, %s124
    %p131 = scmp.eq.s32.totalorder %s30, 1
    %p132 = por %p130, %p131
    %p133 = scmp.ne.s32.totalorder %s124, %s125
    %p134 = scmp.eq.s32.totalorder %s30, 0
    %p135 = por %p133, %p134
    %p136 = scmp.ne.s32.totalorder %s124, %s125
    %p137 = scmp.eq.s32.totalorder %s31, 1
    %p138 = por %p136, %p137
    %p140 = scmp.ne.s32.totalorder %s125, %s139
    %p141 = scmp.eq.s32.totalorder %s31, 0
    %p142 = por %p140, %p141
    %s144 = sadd.s32 %s143, 1
    %p147 = scmp.eq.s32.totalorder %s25, 1
    %p148 = scmp.ne.s32.totalorder %s143, %s145
    %p149 = scmp.eq.s32.totalorder %s25, 0
    %p150 = por %p148, %p149
    %p151 = scmp.ne.s32.totalorder %s143, %s145
    %p152 = scmp.eq.s32.totalorder %s30, 1
    %p153 = por %p151, %p152
    %p154 = scmp.ne.s32.totalorder %s145, %s146
    %p155 = scmp.eq.s32.totalorder %s30, 0
    %p156 = por %p154, %p155
    %p157 = scmp.ne.s32.totalorder %s145, %s146
    %p158 = scmp.eq.s32.totalorder %s31, 1
    %p159 = por %p157, %p158
    %p161 = scmp.ne.s32.totalorder %s146, %s160
    %p162 = scmp.eq.s32.totalorder %s31, 0
    %p163 = por %p161, %p162
    %s165 = sadd.s32 %s164, 1
    %p168 = scmp.eq.s32.totalorder %s25, 1
    %p169 = scmp.ne.s32.totalorder %s164, %s166
    %p170 = scmp.eq.s32.totalorder %s25, 0
    %p171 = por %p169, %p170
    %p172 = scmp.ne.s32.totalorder %s164, %s166
    %p173 = scmp.eq.s32.totalorder %s30, 1
    %p174 = por %p172, %p173
    %p175 = scmp.ne.s32.totalorder %s166, %s167
    %p176 = scmp.eq.s32.totalorder %s30, 0
    %p177 = por %p175, %p176
    %p178 = scmp.ne.s32.totalorder %s166, %s167
    %p179 = scmp.eq.s32.totalorder %s31, 1
    %p180 = por %p178, %p179
    %p182 = scmp.ne.s32.totalorder %s167, %s181
    %p183 = scmp.eq.s32.totalorder %s31, 0
    %p184 = por %p182, %p183
    %s186 = sadd.s32 %s185, 1
    %p189 = scmp.eq.s32.totalorder %s25, 1
    %p190 = scmp.ne.s32.totalorder %s185, %s187
    %p191 = scmp.eq.s32.totalorder %s25, 0
    %p192 = por %p190, %p191
    %p193 = scmp.ne.s32.totalorder %s185, %s187
    %p194 = scmp.eq.s32.totalorder %s30, 1
    %p195 = por %p193, %p194
    %p196 = scmp.ne.s32.totalorder %s187, %s188
    %p197 = scmp.eq.s32.totalorder %s30, 0
    %p198 = por %p196, %p197
    %p199 = scmp.ne.s32.totalorder %s187, %s188
    %p200 = scmp.eq.s32.totalorder %s31, 1
    %p201 = por %p199, %p200
    %p203 = scmp.ne.s32.totalorder %s188, %s202
    %p204 = scmp.eq.s32.totalorder %s31, 0
    %p205 = por %p203, %p204
    %s207 = sadd.s32 %s206, 1
    %p210 = scmp.eq.s32.totalorder %s25, 1
    %p211 = scmp.ne.s32.totalorder %s206, %s208
    %p212 = scmp.eq.s32.totalorder %s25, 0
    %p213 = por %p211, %p212
    %p214 = scmp.ne.s32.totalorder %s206, %s208
    %p215 = scmp.eq.s32.totalorder %s30, 1
    %p216 = por %p214, %p215
    %p217 = scmp.ne.s32.totalorder %s208, %s209
    %p218 = scmp.eq.s32.totalorder %s30, 0
    %p219 = por %p217, %p218
    %p220 = scmp.ne.s32.totalorder %s208, %s209
    %p221 = scmp.eq.s32.totalorder %s31, 1
    %p222 = por %p220, %p221
    %p224 = scmp.ne.s32.totalorder %s209, %s223
    %p225 = scmp.eq.s32.totalorder %s31, 0
    %p226 = por %p224, %p225
    %s228 = sadd.s32 %s227, 1
    %p231 = scmp.eq.s32.totalorder %s25, 1
    %p232 = scmp.ne.s32.totalorder %s227, %s229
    %p233 = scmp.eq.s32.totalorder %s25, 0
    %p234 = por %p232, %p233
    %p235 = scmp.ne.s32.totalorder %s227, %s229
    %p236 = scmp.eq.s32.totalorder %s30, 1
    %p237 = por %p235, %p236
    %p238 = scmp.ne.s32.totalorder %s229, %s230
    %p239 = scmp.eq.s32.totalorder %s30, 0
    %p240 = por %p238, %p239
    %p241 = scmp.ne.s32.totalorder %s229, %s230
    %p242 = scmp.eq.s32.totalorder %s31, 1
    %p243 = por %p241, %p242
    %p245 = scmp.ne.s32.totalorder %s230, %s244
    %p246 = scmp.eq.s32.totalorder %s31, 0
    %p247 = por %p245, %p246
    %s249 = sadd.s32 %s248, 1
    %p252 = scmp.eq.s32.totalorder %s25, 1
    %p253 = scmp.ne.s32.totalorder %s248, %s250
    %p254 = scmp.eq.s32.totalorder %s25, 0
    %p255 = por %p253, %p254
    %p256 = scmp.ne.s32.totalorder %s248, %s250
    %p257 = scmp.eq.s32.totalorder %s30, 1
    %p258 = por %p256, %p257
    %p259 = scmp.ne.s32.totalorder %s250, %s251
    %p260 = scmp.eq.s32.totalorder %s30, 0
    %p261 = por %p259, %p260
    %p262 = scmp.ne.s32.totalorder %s250, %s251
    %p263 = scmp.eq.s32.totalorder %s31, 1
    %p264 = por %p262, %p263
    %p266 = scmp.ne.s32.totalorder %s251, %s265
    %p267 = scmp.eq.s32.totalorder %s31, 0
    %p268 = por %p266, %p267
    %s270 = sadd.s32 %s269, 1
    %p273 = scmp.eq.s32.totalorder %s25, 1
    %p274 = scmp.ne.s32.totalorder %s269, %s271
    %p275 = scmp.eq.s32.totalorder %s25, 0
    %p276 = por %p274, %p275
    %p277 = scmp.ne.s32.totalorder %s269, %s271
    %p278 = scmp.eq.s32.totalorder %s30, 1
    %p279 = por %p277, %p278
    %p280 = scmp.ne.s32.totalorder %s271, %s272
    %p281 = scmp.eq.s32.totalorder %s30, 0
    %p282 = por %p280, %p281
    %p283 = scmp.ne.s32.totalorder %s271, %s272
    %p284 = scmp.eq.s32.totalorder %s31, 1
    %p285 = por %p283, %p284
    %p287 = scmp.ne.s32.totalorder %s272, %s286
    %p288 = scmp.eq.s32.totalorder %s31, 0
    %p289 = por %p287, %p288
    %s291 = sadd.s32 %s290, 1
    %p294 = scmp.eq.s32.totalorder %s25, 1
    %p295 = scmp.ne.s32.totalorder %s290, %s292
    %p296 = scmp.eq.s32.totalorder %s25, 0
    %p297 = por %p295, %p296
    %p298 = scmp.ne.s32.totalorder %s290, %s292
    %p299 = scmp.eq.s32.totalorder %s30, 1
    %p300 = por %p298, %p299
    %p301 = scmp.ne.s32.totalorder %s292, %s293
    %p302 = scmp.eq.s32.totalorder %s30, 0
    %p303 = por %p301, %p302
    %p304 = scmp.ne.s32.totalorder %s292, %s293
    %p305 = scmp.eq.s32.totalorder %s31, 1
    %p306 = por %p304, %p305
    %p308 = scmp.ne.s32.totalorder %s293, %s307
    %p309 = scmp.eq.s32.totalorder %s31, 0
    %p310 = por %p308, %p309
    %s312 = sadd.s32 %s311, 1
    %p315 = scmp.eq.s32.totalorder %s25, 1
    %p316 = scmp.ne.s32.totalorder %s311, %s313
    %p317 = scmp.eq.s32.totalorder %s25, 0
    %p318 = por %p316, %p317
    %p319 = scmp.ne.s32.totalorder %s311, %s313
    %p320 = scmp.eq.s32.totalorder %s30, 1
    %p321 = por %p319, %p320
    %p322 = scmp.ne.s32.totalorder %s313, %s314
    %p323 = scmp.eq.s32.totalorder %s30, 0
    %p324 = por %p322, %p323
    %p325 = scmp.ne.s32.totalorder %s313, %s314
    %p326 = scmp.eq.s32.totalorder %s31, 1
    %p327 = por %p325, %p326
    %p329 = scmp.ne.s32.totalorder %s314, %s328
    %p330 = scmp.eq.s32.totalorder %s31, 0
    %p331 = por %p329, %p330
    %s333 = sadd.s32 %s332, 1
    %p336 = scmp.eq.s32.totalorder %s25, 1
    %p337 = scmp.ne.s32.totalorder %s332, %s334
    %p338 = scmp.eq.s32.totalorder %s25, 0
    %p339 = por %p337, %p338
    %p340 = scmp.ne.s32.totalorder %s332, %s334
    %p341 = scmp.eq.s32.totalorder %s30, 1
    %p342 = por %p340, %p341
    %p343 = scmp.ne.s32.totalorder %s334, %s335
    %p344 = scmp.eq.s32.totalorder %s30, 0
    %p345 = por %p343, %p344
    %p346 = scmp.ne.s32.totalorder %s334, %s335
    %p347 = scmp.eq.s32.totalorder %s31, 1
    %p348 = por %p346, %p347
    %p350 = scmp.ne.s32.totalorder %s335, %s349
    %p351 = scmp.eq.s32.totalorder %s31, 0
    %p352 = por %p350, %p351
    %s354 = sadd.s32 %s353, 1
    %p357 = scmp.eq.s32.totalorder %s25, 1
    %p358 = scmp.ne.s32.totalorder %s353, %s355
    %p359 = scmp.eq.s32.totalorder %s25, 0
    %p360 = por %p358, %p359
    %p361 = scmp.ne.s32.totalorder %s353, %s355
    %p362 = scmp.eq.s32.totalorder %s30, 1
    %p363 = por %p361, %p362
    %p364 = scmp.ne.s32.totalorder %s355, %s356
    %p365 = scmp.eq.s32.totalorder %s30, 0
    %p366 = por %p364, %p365
    %p367 = scmp.ne.s32.totalorder %s355, %s356
    %p368 = scmp.eq.s32.totalorder %s31, 1
    %p369 = por %p367, %p368
    %p371 = scmp.ne.s32.totalorder %s356, %s370
    %p372 = scmp.eq.s32.totalorder %s31, 0
    %p373 = por %p371, %p372
    %s375 = sadd.s32 %s374, 1
    %p378 = scmp.eq.s32.totalorder %s25, 1
    %p379 = scmp.ne.s32.totalorder %s374, %s376
    %p380 = scmp.eq.s32.totalorder %s25, 0
    %p381 = por %p379, %p380
    %p382 = scmp.ne.s32.totalorder %s374, %s376
    %p383 = scmp.eq.s32.totalorder %s30, 1
    %p384 = por %p382, %p383
    %p385 = scmp.ne.s32.totalorder %s376, %s377
    %p386 = scmp.eq.s32.totalorder %s30, 0
    %p387 = por %p385, %p386
    %p388 = scmp.ne.s32.totalorder %s376, %s377
    %p389 = scmp.eq.s32.totalorder %s31, 1
    %p390 = por %p388, %p389
    %p392 = scmp.ne.s32.totalorder %s377, %s391
    %p393 = scmp.eq.s32.totalorder %s31, 0
    %p394 = por %p392, %p393
    %s395 = ssub.s32 %s25, %s32
    %p396 = scmp.eq.s32.totalorder %s395, 0
    %s398 = sadd.s32 %s397, 1
    %s399 = scalar_select %p396, %s397, %s398
    %p402 = pneg %p396
    %p403 = scmp.eq.s32.totalorder %s25, 1
    %p404 = por %p402, %p403
    %p405 = scmp.ne.s32.totalorder %s397, %s400
    %p406 = scmp.eq.s32.totalorder %s25, 0
    %p407 = por %p405, %p406
    %p408 = scmp.ne.s32.totalorder %s397, %s400
    %p409 = scmp.eq.s32.totalorder %s30, 1
    %p410 = por %p408, %p409
    %p411 = scmp.ne.s32.totalorder %s400, %s401
    %p412 = scmp.eq.s32.totalorder %s30, 0
    %p413 = por %p411, %p412
    %p414 = scmp.ne.s32.totalorder %s400, %s401
    %p415 = scmp.eq.s32.totalorder %s31, 1
    %p416 = por %p414, %p415
    %p418 = scmp.ne.s32.totalorder %s401, %s417
    %p419 = scmp.eq.s32.totalorder %s31, 0
    %p420 = por %p418, %p419
    %p421 = scmp.le.s32.totalorder 1, %s25
    %p422 = scmp.lt.s32.totalorder %s25, 3
    %p423 = pnand %p421, %p422
    %p424 = pneg %p423
    // Predicated region
    $region9: #{discriminator_forward.1} parent=5 // pred_check
      _
    $region10: #{discriminator_forward.1} parent=5 // pred_check_branch
      %426 = sbr.rel (%p423) target = $region12
    $region11: #{discriminator_forward.1} parent=5 // pred_region
      %s427 = ssub.s32 %s25, 1
      // Predicated region
      $region13: #{discriminator_forward.1} parent=11 // pred_check
        %p428 = pneg %p72
      $region14: #{discriminator_forward.1} parent=11 // pred_check_branch
        %430 = sbr.rel (%p428) target = $region16
      $region15: #{discriminator_forward.1} parent=11 // pred_region
        _
      $region16: #{discriminator_forward.1} parent=11 // pred_fallthru
        _
      // Predicated region
      $region17: #{discriminator_forward.1} parent=11 // pred_check
        %p431 = pneg %p93
      $region18: #{discriminator_forward.1} parent=11 // pred_check_branch
        %433 = sbr.rel (%p431) target = $region20
      $region19: #{discriminator_forward.1} parent=11 // pred_region
        _
      $region20: #{discriminator_forward.1} parent=11 // pred_fallthru
        _
      // Predicated region
      $region21: #{discriminator_forward.1} parent=11 // pred_check
        %p434 = pneg %p114
      $region22: #{discriminator_forward.1} parent=11 // pred_check_branch
        %436 = sbr.rel (%p434) target = $region24
      $region23: #{discriminator_forward.1} parent=11 // pred_region
        _
      $region24: #{discriminator_forward.1} parent=11 // pred_fallthru
        _
      // Predicated region
      $region25: #{discriminator_forward.1} parent=11 // pred_check
        %p437 = pneg %p135
      $region26: #{discriminator_forward.1} parent=11 // pred_check_branch
        %439 = sbr.rel (%p437) target = $region28
      $region27: #{discriminator_forward.1} parent=11 // pred_region
        _
      $region28: #{discriminator_forward.1} parent=11 // pred_fallthru
        _
      // Predicated region
      $region29: #{discriminator_forward.1} parent=11 // pred_check
        %p440 = pneg %p156
      $region30: #{discriminator_forward.1} parent=11 // pred_check_branch
        %442 = sbr.rel (%p440) target = $region32
      $region31: #{discriminator_forward.1} parent=11 // pred_region
        _
      $region32: #{discriminator_forward.1} parent=11 // pred_fallthru
        _
      // Predicated region
      $region33: #{discriminator_forward.1} parent=11 // pred_check
        %p443 = pneg %p177
      $region34: #{discriminator_forward.1} parent=11 // pred_check_branch
        %445 = sbr.rel (%p443) target = $region36
      $region35: #{discriminator_forward.1} parent=11 // pred_region
        _
      $region36: #{discriminator_forward.1} parent=11 // pred_fallthru
        _
      // Predicated region
      $region37: #{discriminator_forward.1} parent=11 // pred_check
        %p446 = pneg %p198
      $region38: #{discriminator_forward.1} parent=11 // pred_check_branch
        %448 = sbr.rel (%p446) target = $region40
      $region39: #{discriminator_forward.1} parent=11 // pred_region
        _
      $region40: #{discriminator_forward.1} parent=11 // pred_fallthru
        _
      // Predicated region
      $region41: #{discriminator_forward.1} parent=11 // pred_check
        %p449 = pneg %p219
      $region42: #{discriminator_forward.1} parent=11 // pred_check_branch
        %451 = sbr.rel (%p449) target = $region44
      $region43: #{discriminator_forward.1} parent=11 // pred_region
        _
      $region44: #{discriminator_forward.1} parent=11 // pred_fallthru
        _
      // Predicated region
      $region45: #{discriminator_forward.1} parent=11 // pred_check
        %p452 = pneg %p240
      $region46: #{discriminator_forward.1} parent=11 // pred_check_branch
        %454 = sbr.rel (%p452) target = $region48
      $region47: #{discriminator_forward.1} parent=11 // pred_region
        _
      $region48: #{discriminator_forward.1} parent=11 // pred_fallthru
        _
      // Predicated region
      $region49: #{discriminator_forward.1} parent=11 // pred_check
        %p455 = pneg %p261
      $region50: #{discriminator_forward.1} parent=11 // pred_check_branch
        %457 = sbr.rel (%p455) target = $region52
      $region51: #{discriminator_forward.1} parent=11 // pred_region
        _
      $region52: #{discriminator_forward.1} parent=11 // pred_fallthru
        _
      // Predicated region
      $region53: #{discriminator_forward.1} parent=11 // pred_check
        %p458 = pneg %p282
      $region54: #{discriminator_forward.1} parent=11 // pred_check_branch
        %460 = sbr.rel (%p458) target = $region56
      $region55: #{discriminator_forward.1} parent=11 // pred_region
        _
      $region56: #{discriminator_forward.1} parent=11 // pred_fallthru
        _
      // Predicated region
      $region57: #{discriminator_forward.1} parent=11 // pred_check
        %p461 = pneg %p303
      $region58: #{discriminator_forward.1} parent=11 // pred_check_branch
        %463 = sbr.rel (%p461) target = $region60
      $region59: #{discriminator_forward.1} parent=11 // pred_region
        _
      $region60: #{discriminator_forward.1} parent=11 // pred_fallthru
        _
      // Predicated region
      $region61: #{discriminator_forward.1} parent=11 // pred_check
        %p464 = pneg %p324
      $region62: #{discriminator_forward.1} parent=11 // pred_check_branch
        %466 = sbr.rel (%p464) target = $region64
      $region63: #{discriminator_forward.1} parent=11 // pred_region
        _
      $region64: #{discriminator_forward.1} parent=11 // pred_fallthru
        _
      // Predicated region
      $region65: #{discriminator_forward.1} parent=11 // pred_check
        %p467 = pneg %p345
      $region66: #{discriminator_forward.1} parent=11 // pred_check_branch
        %469 = sbr.rel (%p467) target = $region68
      $region67: #{discriminator_forward.1} parent=11 // pred_region
        _
      $region68: #{discriminator_forward.1} parent=11 // pred_fallthru
        _
      // Predicated region
      $region69: #{discriminator_forward.1} parent=11 // pred_check
        %p470 = pneg %p366
      $region70: #{discriminator_forward.1} parent=11 // pred_check_branch
        %472 = sbr.rel (%p470) target = $region72
      $region71: #{discriminator_forward.1} parent=11 // pred_region
        _
      $region72: #{discriminator_forward.1} parent=11 // pred_fallthru
        _
      // Predicated region
      $region73: #{discriminator_forward.1} parent=11 // pred_check
        %p473 = pneg %p387
      $region74: #{discriminator_forward.1} parent=11 // pred_check_branch
        %475 = sbr.rel (%p473) target = $region76
      $region75: #{discriminator_forward.1} parent=11 // pred_region
        _
      $region76: #{discriminator_forward.1} parent=11 // pred_fallthru
        _
    $region12: #{discriminator_forward.1} parent=5 // pred_fallthru
      _
    %p476 = scmp.lt.s32.totalorder %s25, 2
    // Predicated region
    $region77: #{discriminator_forward.1} parent=5 // pred_check
      %p477 = pneg %p476
    $region78: #{discriminator_forward.1} parent=5 // pred_check_branch
      %479 = sbr.rel (%p477) target = $region80
    $region79: #{discriminator_forward.1} parent=5 // pred_region
      // Predicated region
      $region81: #{discriminator_forward.1} parent=79 // pred_check
        %p480 = pneg %p45
      $region82: #{discriminator_forward.1} parent=79 // pred_check_branch
        %482 = sbr.rel (%p480) target = $region84
      $region83: #{discriminator_forward.1} parent=79 // pred_region
        %p483 = scmp.lt.s32.totalorder %s25, 1
        %s484 = scalar_select %p483, %s25, 1
        %s485 = smul.addr %s484, 41
        %s486 = smul.addr %s485, 8
        %s487 = scalar_lea.vmem %s0, %s486
      $region84: #{discriminator_forward.1} parent=79 // pred_fallthru
        _
    $region80: #{discriminator_forward.1} parent=5 // pred_fallthru
      _
    %p488 = scmp.le.s32.totalorder 1, %s25
    %p489 = scmp.lt.s32.totalorder %s25, 3
    %p490 = pnand %p488, %p489
    %p491 = pneg %p490
    // Predicated region
    $region85: #{discriminator_forward.1} parent=5 // pred_check
      _
    $region86: #{discriminator_forward.1} parent=5 // pred_check_branch
      %493 = sbr.rel (%p490) target = $region88
    $region87: #{discriminator_forward.1} parent=5 // pred_region
      %s494 = ssub.s32 %s25, 1
      %p495 = scmp.lt.s32.totalorder %s30, 1
      %s496 = scalar_select %p495, %s30, 1
      %s497 = smul.addr %s496, 41
      %s498 = smul.addr %s497, 8
      %s499 = scalar_lea.vmem %s0, %s498
      %p500 = pneg %p51
      %p501 = pneg %p48
      %p502 = pneg %p72
      %p503 = pneg %p69
      %p504 = pneg %p93
      %p505 = pneg %p90
      %p506 = pneg %p114
      %p507 = pneg %p111
      %p508 = pneg %p135
      %p509 = pneg %p132
      %p510 = pneg %p156
      %p511 = pneg %p153
      %p512 = pneg %p177
      %p513 = pneg %p174
      %p514 = pneg %p198
      %p515 = pneg %p195
      %p516 = pneg %p219
      %p517 = pneg %p216
      %p518 = pneg %p240
      %p519 = pneg %p237
      %p520 = pneg %p261
      %p521 = pneg %p258
      %p522 = pneg %p282
      %p523 = pneg %p279
      %p524 = pneg %p303
      %p525 = pneg %p300
      %p526 = pneg %p324
      %p527 = pneg %p321
      %p528 = pneg %p345
      %p529 = pneg %p342
      %p530 = pneg %p366
      %p531 = pneg %p363
      %p532 = pneg %p387
      %p533 = pneg %p384
      %p534 = pneg %p413
      %p535 = pneg %p410
      %p536 = scmp.lt.s32.totalorder %s30, 1
      %s537 = scalar_select %p536, %s30, 1
      %s538 = scalar_lea.vmem %s17, %s537
      %p539 = scmp.lt.s32.totalorder %s30, 1
      %s540 = scalar_select %p539, %s30, 1
      %s541 = smul.addr %s540, 41
      %s542 = smul.addr %s541, 8
      %s543 = scalar_lea.vmem %s0, %s542
      %p544 = scmp.lt.s32.totalorder %s30, 1
      %s545 = scalar_select %p544, %s30, 1
      %s546 = scalar_lea.vmem %s17, %s545
      %v548 = vld [vmem:[%s543] sm:$0xff]
      %v549 = vld [vmem:[%s543 + $0x8] sm:$0xff]
      %v550 = vld [vmem:[%s543 + $0x10] sm:$0xff]
      %v551 = vld [vmem:[%s543 + $0x18] sm:$0xff]
      %v552 = vld [vmem:[%s543 + $0x20] sm:$0xff]
      %v553 = vld [vmem:[%s543 + $0x28] sm:$0xff]
      %v554 = vld [vmem:[%s543 + $0x30] sm:$0xff]
      %v555 = vld [vmem:[%s543 + $0x38] sm:$0xff]
      %v556 = vld [vmem:[%s543 + $0x40] sm:$0xff]
      %v557 = vld [vmem:[%s543 + $0x48] sm:$0xff]
      %v558 = vld [vmem:[%s543 + $0x50] sm:$0xff]
      %v559 = vld [vmem:[%s543 + $0x58] sm:$0xff]
      %v560 = vld [vmem:[%s543 + $0x60] sm:$0xff]
      %v561 = vld [vmem:[%s543 + $0x68] sm:$0xff]
      %v562 = vld [vmem:[%s543 + $0x70] sm:$0xff]
      %v563 = vld [vmem:[%s543 + $0x78] sm:$0xff]
      %v564 = vld [vmem:[%s543 + $0x80] sm:$0xff]
      %v565 = vld [vmem:[%s543 + $0x88] sm:$0xff]
      %v566 = vld [vmem:[%s543 + $0x90] sm:$0xff]
      %v567 = vld [vmem:[%s543 + $0x98] sm:$0xff]
      %v568 = vld [vmem:[%s543 + $0xa0] sm:$0xff]
      %v569 = vld [vmem:[%s543 + $0xa8] sm:$0xff]
      %v570 = vld [vmem:[%s543 + $0xb0] sm:$0xff]
      %v571 = vld [vmem:[%s543 + $0xb8] sm:$0xff]
      %v572 = vld [vmem:[%s543 + $0xc0] sm:$0xff]
      %v573 = vld [vmem:[%s543 + $0xc8] sm:$0xff]
      %v574 = vld [vmem:[%s543 + $0xd0] sm:$0xff]
      %v575 = vld [vmem:[%s543 + $0xd8] sm:$0xff]
      %v576 = vld [vmem:[%s543 + $0xe0] sm:$0xff]
      %v577 = vld [vmem:[%s543 + $0xe8] sm:$0xff]
      %v578 = vld [vmem:[%s543 + $0xf0] sm:$0xff]
      %v579 = vld [vmem:[%s543 + $0xf8] sm:$0xff]
      %v580 = vld [vmem:[%s543 + $0x100] sm:$0xff]
      %v581 = vld [vmem:[%s543 + $0x108] sm:$0x7]
      %v582 = vpack.c.bf16 %v549, %v548
      %v583 = vpack.c.bf16 %v551, %v550
      %v584 = vpack.c.bf16 %v553, %v552
      %v585 = vpack.c.bf16 %v555, %v554
      %v586 = vpack.c.bf16 %v557, %v556
      %v587 = vpack.c.bf16 %v559, %v558
      %v588 = vpack.c.bf16 %v561, %v560
      %v589 = vpack.c.bf16 %v563, %v562
      %v590 = vpack.c.bf16 %v565, %v564
      %v591 = vpack.c.bf16 %v567, %v566
      %v592 = vpack.c.bf16 %v569, %v568
      %v593 = vpack.c.bf16 %v571, %v570
      %v594 = vpack.c.bf16 %v573, %v572
      %v595 = vpack.c.bf16 %v575, %v574
      %v596 = vpack.c.bf16 %v577, %v576
      %v597 = vpack.c.bf16 %v579, %v578
      %v598 = vpack.c.bf16 %v581, %v580
      %v599 = vld [vmem:[%s1] sm:$0xf]
      %v600 = vld [vmem:[%s1 + $0x4] sm:$0xf]
      %v601 = vld [vmem:[%s1 + $0x8] sm:$0xf]
      %v602 = vld [vmem:[%s1 + $0xc] sm:$0xf]
      %v603 = vld [vmem:[%s1 + $0x10] sm:$0xf]
      %v604 = vld [vmem:[%s1 + $0x14] sm:$0xf]
      %v605 = vld [vmem:[%s1 + $0x18] sm:$0xf]
      %v606 = vld [vmem:[%s1 + $0x1c] sm:$0xf]
      %v607 = vld [vmem:[%s1 + $0x20] sm:$0xf]
      %v608 = vld [vmem:[%s1 + $0x24] sm:$0xf]
      %v609 = vld [vmem:[%s1 + $0x28] sm:$0xf]
      %v610 = vld [vmem:[%s1 + $0x2c] sm:$0xf]
      %v611 = vld [vmem:[%s1 + $0x30] sm:$0xf]
      %v612 = vld [vmem:[%s1 + $0x34] sm:$0xf]
      %v613 = vld [vmem:[%s1 + $0x38] sm:$0xf]
      %v614 = vld [vmem:[%s1 + $0x3c] sm:$0xf]
      %v615 = vld [vmem:[%s543 + $0x1] sm:$0xff]
      %v616 = vld [vmem:[%s543 + $0x9] sm:$0xff]
      %v617 = vld [vmem:[%s543 + $0x11] sm:$0xff]
      %v618 = vld [vmem:[%s543 + $0x19] sm:$0xff]
      %v619 = vld [vmem:[%s543 + $0x21] sm:$0xff]
      %v620 = vld [vmem:[%s543 + $0x29] sm:$0xff]
      %v621 = vld [vmem:[%s543 + $0x31] sm:$0xff]
      %v622 = vld [vmem:[%s543 + $0x39] sm:$0xff]
      %v623 = vld [vmem:[%s543 + $0x41] sm:$0xff]
      %v624 = vld [vmem:[%s543 + $0x49] sm:$0xff]
      %v625 = vld [vmem:[%s543 + $0x51] sm:$0xff]
      %v626 = vld [vmem:[%s543 + $0x59] sm:$0xff]
      %v627 = vld [vmem:[%s543 + $0x61] sm:$0xff]
      %v628 = vld [vmem:[%s543 + $0x69] sm:$0xff]
      %v629 = vld [vmem:[%s543 + $0x71] sm:$0xff]
      %v630 = vld [vmem:[%s543 + $0x79] sm:$0xff]
      %v631 = vld [vmem:[%s543 + $0x81] sm:$0xff]
      %v632 = vld [vmem:[%s543 + $0x89] sm:$0xff]
      %v633 = vld [vmem:[%s543 + $0x91] sm:$0xff]
      %v634 = vld [vmem:[%s543 + $0x99] sm:$0xff]
      %v635 = vld [vmem:[%s543 + $0xa1] sm:$0xff]
      %v636 = vld [vmem:[%s543 + $0xa9] sm:$0xff]
      %v637 = vld [vmem:[%s543 + $0xb1] sm:$0xff]
      %v638 = vld [vmem:[%s543 + $0xb9] sm:$0xff]
      %v639 = vld [vmem:[%s543 + $0xc1] sm:$0xff]
      %v640 = vld [vmem:[%s543 + $0xc9] sm:$0xff]
      %v641 = vld [vmem:[%s543 + $0xd1] sm:$0xff]
      %v642 = vld [vmem:[%s543 + $0xd9] sm:$0xff]
      %v643 = vld [vmem:[%s543 + $0xe1] sm:$0xff]
      %v644 = vld [vmem:[%s543 + $0xe9] sm:$0xff]
      %v645 = vld [vmem:[%s543 + $0xf1] sm:$0xff]
      %v646 = vld [vmem:[%s543 + $0xf9] sm:$0xff]
      %v647 = vld [vmem:[%s543 + $0x101] sm:$0xff]
      %v648 = vld [vmem:[%s543 + $0x109] sm:$0x7]
      %v649 = vpack.c.bf16 %v616, %v615
      %v650 = vpack.c.bf16 %v618, %v617
      %v651 = vpack.c.bf16 %v620, %v619
      %v652 = vpack.c.bf16 %v622, %v621
      %v653 = vpack.c.bf16 %v624, %v623
      %v654 = vpack.c.bf16 %v626, %v625
      %v655 = vpack.c.bf16 %v628, %v627
      %v656 = vpack.c.bf16 %v630, %v629
      %v657 = vpack.c.bf16 %v632, %v631
      %v658 = vpack.c.bf16 %v634, %v633
      %v659 = vpack.c.bf16 %v636, %v635
      %v660 = vpack.c.bf16 %v638, %v637
      %v661 = vpack.c.bf16 %v640, %v639
      %v662 = vpack.c.bf16 %v642, %v641
      %v663 = vpack.c.bf16 %v644, %v643
      %v664 = vpack.c.bf16 %v646, %v645
      %v665 = vpack.c.bf16 %v648, %v647
      %s666 = scalar_lea.vmem %s1, 64
      %v667 = vld [vmem:[%s666] sm:$0xf]
      %v668 = vld [vmem:[%s666 + $0x4] sm:$0xf]
      %v669 = vld [vmem:[%s666 + $0x8] sm:$0xf]
      %v670 = vld [vmem:[%s666 + $0xc] sm:$0xf]
      %v671 = vld [vmem:[%s666 + $0x10] sm:$0xf]
      %v672 = vld [vmem:[%s666 + $0x14] sm:$0xf]
      %v673 = vld [vmem:[%s666 + $0x18] sm:$0xf]
      %v674 = vld [vmem:[%s666 + $0x1c] sm:$0xf]
      %v675 = vld [vmem:[%s666 + $0x20] sm:$0xf]
      %v676 = vld [vmem:[%s666 + $0x24] sm:$0xf]
      %v677 = vld [vmem:[%s666 + $0x28] sm:$0xf]
      %v678 = vld [vmem:[%s666 + $0x2c] sm:$0xf]
      %v679 = vld [vmem:[%s666 + $0x30] sm:$0xf]
      %v680 = vld [vmem:[%s666 + $0x34] sm:$0xf]
      %v681 = vld [vmem:[%s666 + $0x38] sm:$0xf]
      %v682 = vld [vmem:[%s666 + $0x3c] sm:$0xf]
      %v699 = vunpack.c.l.b16 %v667
      %v700 = vunpack.c.l.b16 %v668
      %v701 = vunpack.c.l.b16 %v669
      %v702 = vunpack.c.l.b16 %v670
      %v703 = vunpack.c.l.b16 %v671
      %v704 = vunpack.c.l.b16 %v672
      %v705 = vunpack.c.l.b16 %v673
      %v706 = vunpack.c.l.b16 %v674
      %v707 = vunpack.c.l.b16 %v675
      %v708 = vunpack.c.l.b16 %v676
      %v709 = vunpack.c.l.b16 %v677
      %v710 = vunpack.c.l.b16 %v678
      %v711 = vunpack.c.l.b16 %v679
      %v712 = vunpack.c.l.b16 %v680
      %v713 = vunpack.c.l.b16 %v681
      %v714 = vunpack.c.l.b16 %v682
      %v715 = vpack.c.b16 %v700, %v699
      %v716 = vpack.c.b16 %v702, %v701
      %v717 = vpack.c.b16 %v704, %v703
      %v718 = vpack.c.b16 %v706, %v705
      %v719 = vpack.c.b16 %v708, %v707
      %v720 = vpack.c.b16 %v710, %v709
      %v721 = vpack.c.b16 %v712, %v711
      %v722 = vpack.c.b16 %v714, %v713
      %731 = vmatprep.subr.bf16.mxu0 0
      %732 = vmatpush1.bf16.msra.mxu0 %v715
      %733 = vmatprep.subr.bf16.mxu0 0
      %734 = vmatpush1.bf16.msra.mxu0 %v716
      %735 = vmatprep.subr.bf16.mxu0 0
      %736 = vmatpush1.bf16.msra.mxu0 %v717
      %737 = vmatprep.subr.bf16.mxu0 0
      %738 = vmatpush1.bf16.msra.mxu0 %v718
      %739 = vmatprep.subr.bf16.mxu0 0
      %740 = vmatpush1.bf16.msra.mxu0 %v719
      %741 = vmatprep.subr.bf16.mxu0 0
      %742 = vmatpush1.bf16.msra.mxu0 %v720
      %743 = vmatprep.subr.bf16.mxu0 0
      %744 = vmatpush1.bf16.msra.mxu0 %v721
      %745 = vmatprep.subr.bf16.mxu0 0
      %746 = vmatpush1.bf16.msra.mxu0 %v722
      %747 = vmatprep.subr.bf16.mxu0 0
      %748 = vmatpush1.bf16.msra.mxu0 0
      %749 = vmatprep.subr.bf16.mxu0 0
      %750 = vmatpush1.bf16.msra.mxu0 0
      %751 = vmatprep.subr.bf16.mxu0 0
      %752 = vmatpush1.bf16.msra.mxu0 0
      %753 = vmatprep.subr.bf16.mxu0 0
      %754 = vmatpush1.bf16.msra.mxu0 0
      %755 = vmatprep.subr.bf16.mxu0 0
      %756 = vmatpush1.bf16.msra.mxu0 0
      %757 = vmatprep.subr.bf16.mxu0 0
      %758 = vmatpush1.bf16.msra.mxu0 0
      %759 = vmatprep.subr.bf16.mxu0 0
      %760 = vmatpush1.bf16.msra.mxu0 0
      %761 = vmatprep.subr.bf16.mxu0 0
      %762 = vmatpush1.bf16.msra.mxu0 0
      %763 = vmatprep.mubr.bf16.mxu0 0
      %764 = vmatmul.mubr.bf16.gmra.mrb[0].mxu0 %v649
      %v765 = vpop.f32.mrb[0].mxu0
      %v766 = vadd.f32 0.0, %v765
      %v767 = vpop.f32.mrb[0].mxu0
      %v768 = vpop.f32.mrb[0].mxu0
      %v769 = vadd.f32 0.0, %v768
      %v770 = vpop.f32.mrb[0].mxu0
      %771 = vmatprep.mubr.bf16.mxu0 0
      %772 = vmatmul.mubr.bf16.gmra.mrb[0].mxu0 %v650
      %v773 = vpop.f32.mrb[0].mxu0
      %v774 = vadd.f32 0.0, %v773
      %v775 = vpop.f32.mrb[0].mxu0
      %v776 = vpop.f32.mrb[0].mxu0
      %v777 = vadd.f32 0.0, %v776
      %v778 = vpop.f32.mrb[0].mxu0
      %779 = vmatprep.mubr.bf16.mxu0 0
      %780 = vmatmul.mubr.bf16.gmra.mrb[0].mxu0 %v651
      %v781 = vpop.f32.mrb[0].mxu0
      %v782 = vadd.f32 0.0, %v781
      %v783 = vpop.f32.mrb[0].mxu0
      %v784 = vpop.f32.mrb[0].mxu0
      %v785 = vadd.f32 0.0, %v784
      %v786 = vpop.f32.mrb[0].mxu0
      %787 = vmatprep.mubr.bf16.mxu0 0
      %788 = vmatmul.mubr.bf16.gmra.mrb[0].mxu0 %v652
      %v789 = vpop.f32.mrb[0].mxu0
      %v790 = vadd.f32 0.0, %v789
      %v791 = vpop.f32.mrb[0].mxu0
      %v792 = vpop.f32.mrb[0].mxu0
      %v793 = vadd.f32 0.0, %v792
      %v794 = vpop.f32.mrb[0].mxu0
      %795 = vmatprep.mubr.bf16.mxu0 0
      %796 = vmatmul.mubr.bf16.gmra.mrb[0].mxu0 %v653
      %v797 = vpop.f32.mrb[0].mxu0
      %v798 = vadd.f32 0.0, %v797
      %v799 = vpop.f32.mrb[0].mxu0
      %v800 = vpop.f32.mrb[0].mxu0
      %v801 = vadd.f32 0.0, %v800
      %v802 = vpop.f32.mrb[0].mxu0
      %803 = vmatprep.mubr.bf16.mxu0 0
      %804 = vmatmul.mubr.bf16.gmra.mrb[0].mxu0 %v654
      %v805 = vpop.f32.mrb[0].mxu0
      %v806 = vadd.f32 0.0, %v805
      %v807 = vpop.f32.mrb[0].mxu0
      %v808 = vpop.f32.mrb[0].mxu0
      %v809 = vadd.f32 0.0, %v808
      %v810 = vpop.f32.mrb[0].mxu0
      %811 = vmatprep.mubr.bf16.mxu0 0
      %812 = vmatmul.mubr.bf16.gmra.mrb[0].mxu0 %v655
      %v813 = vpop.f32.mrb[0].mxu0
      %v814 = vadd.f32 0.0, %v813
      %v815 = vpop.f32.mrb[0].mxu0
      %v816 = vpop.f32.mrb[0].mxu0
      %v817 = vadd.f32 0.0, %v816
      %v818 = vpop.f32.mrb[0].mxu0
      %819 = vmatprep.mubr.bf16.mxu0 0
      %820 = vmatmul.mubr.bf16.gmra.mrb[0].mxu0 %v656
      %v821 = vpop.f32.mrb[0].mxu0
      %v822 = vadd.f32 0.0, %v821
      %v823 = vpop.f32.mrb[0].mxu0
      %v824 = vpop.f32.mrb[0].mxu0
      %v825 = vadd.f32 0.0, %v824
      %v826 = vpop.f32.mrb[0].mxu0
      %827 = vmatprep.mubr.bf16.mxu0 0
      %828 = vmatmul.mubr.bf16.gmra.mrb[0].mxu0 %v657
      %v829 = vpop.f32.mrb[0].mxu0
      %v830 = vadd.f32 0.0, %v829
      %v831 = vpop.f32.mrb[0].mxu0
      %v832 = vpop.f32.mrb[0].mxu0
      %v833 = vadd.f32 0.0, %v832
      %v834 = vpop.f32.mrb[0].mxu0
      %835 = vmatprep.mubr.bf16.mxu0 0
      %836 = vmatmul.mubr.bf16.gmra.mrb[0].mxu0 %v658
      %v837 = vpop.f32.mrb[0].mxu0
      %v838 = vadd.f32 0.0, %v837
      %v839 = vpop.f32.mrb[0].mxu0
      %v840 = vpop.f32.mrb[0].mxu0
      %v841 = vadd.f32 0.0, %v840
      %v842 = vpop.f32.mrb[0].mxu0
      %843 = vmatprep.mubr.bf16.mxu0 0
      %844 = vmatmul.mubr.bf16.gmra.mrb[0].mxu0 %v659
      %v845 = vpop.f32.mrb[0].mxu0
      %v846 = vadd.f32 0.0, %v845
      %v847 = vpop.f32.mrb[0].mxu0
      %v848 = vpop.f32.mrb[0].mxu0
      %v849 = vadd.f32 0.0, %v848
      %v850 = vpop.f32.mrb[0].mxu0
      %851 = vmatprep.mubr.bf16.mxu0 0
      %852 = vmatmul.mubr.bf16.gmra.mrb[0].mxu0 %v660
      %v853 = vpop.f32.mrb[0].mxu0
      %v854 = vadd.f32 0.0, %v853
      %v855 = vpop.f32.mrb[0].mxu0
      %v856 = vpop.f32.mrb[0].mxu0
      %v857 = vadd.f32 0.0, %v856
      %v858 = vpop.f32.mrb[0].mxu0
      %859 = vmatprep.mubr.bf16.mxu0 0
      %860 = vmatmul.mubr.bf16.gmra.mrb[0].mxu0 %v661
      %v861 = vpop.f32.mrb[0].mxu0
      %v862 = vadd.f32 0.0, %v861
      %v863 = vpop.f32.mrb[0].mxu0
      %v864 = vpop.f32.mrb[0].mxu0
      %v865 = vadd.f32 0.0, %v864
      %v866 = vpop.f32.mrb[0].mxu0
      %867 = vmatprep.mubr.bf16.mxu0 0
      %868 = vmatmul.mubr.bf16.gmra.mrb[0].mxu0 %v662
      %v869 = vpop.f32.mrb[0].mxu0
      %v870 = vadd.f32 0.0, %v869
      %v871 = vpop.f32.mrb[0].mxu0
      %v872 = vpop.f32.mrb[0].mxu0
      %v873 = vadd.f32 0.0, %v872
      %v874 = vpop.f32.mrb[0].mxu0
      %875 = vmatprep.mubr.bf16.mxu0 0
      %876 = vmatmul.mubr.bf16.gmra.mrb[0].mxu0 %v663
      %v877 = vpop.f32.mrb[0].mxu0
      %v878 = vadd.f32 0.0, %v877
      %v879 = vpop.f32.mrb[0].mxu0
      %v880 = vpop.f32.mrb[0].mxu0
      %v881 = vadd.f32 0.0, %v880
      %v882 = vpop.f32.mrb[0].mxu0
      %883 = vmatprep.mubr.bf16.mxu0 0
      %884 = vmatmul.mubr.bf16.gmra.mrb[0].mxu0 %v664
      %v885 = vpop.f32.mrb[0].mxu0
      %v886 = vadd.f32 0.0, %v885
      %v887 = vpop.f32.mrb[0].mxu0
      %v888 = vpop.f32.mrb[0].mxu0
      %v889 = vadd.f32 0.0, %v888
      %v890 = vpop.f32.mrb[0].mxu0
      %891 = vmatprep.mubr.bf16.mxu0 0
      %892 = vmatmul.mubr.bf16.gmra.mrb[0].mxu0 %v665
      %v893 = vpop.f32.mrb[0].mxu0
      %v894 = vadd.f32 0.0, %v893
      %v895 = vpop.f32.mrb[0].mxu0
      %v896 = vpop.f32.mrb[0].mxu0
      %v897 = vadd.f32 0.0, %v896
      %v898 = vpop.f32.mrb[0].mxu0
      %899 = vdwg.mxu0
      %v916 = vunpack.c.l.b16 %v599
      %v917 = vunpack.c.l.b16 %v600
      %v918 = vunpack.c.l.b16 %v601
      %v919 = vunpack.c.l.b16 %v602
      %v920 = vunpack.c.l.b16 %v603
      %v921 = vunpack.c.l.b16 %v604
      %v922 = vunpack.c.l.b16 %v605
      %v923 = vunpack.c.l.b16 %v606
      %v924 = vunpack.c.l.b16 %v607
      %v925 = vunpack.c.l.b16 %v608
      %v926 = vunpack.c.l.b16 %v609
      %v927 = vunpack.c.l.b16 %v610
      %v928 = vunpack.c.l.b16 %v611
      %v929 = vunpack.c.l.b16 %v612
      %v930 = vunpack.c.l.b16 %v613
      %v931 = vunpack.c.l.b16 %v614
      %v932 = vpack.c.b16 %v917, %v916
      %v933 = vpack.c.b16 %v919, %v918
      %v934 = vpack.c.b16 %v921, %v920
      %v935 = vpack.c.b16 %v923, %v922
      %v936 = vpack.c.b16 %v925, %v924
      %v937 = vpack.c.b16 %v927, %v926
      %v938 = vpack.c.b16 %v929, %v928
      %v939 = vpack.c.b16 %v931, %v930
      %948 = vmatprep.subr.bf16.mxu0 0
      %949 = vmatpush1.bf16.msra.mxu0 %v932
      %950 = vmatprep.subr.bf16.mxu0 0
      %951 = vmatpush1.bf16.msra.mxu0 %v933
      %952 = vmatprep.subr.bf16.mxu0 0
      %953 = vmatpush1.bf16.msra.mxu0 %v934
      %954 = vmatprep.subr.bf16.mxu0 0
      %955 = vmatpush1.bf16.msra.mxu0 %v935
      %956 = vmatprep.subr.bf16.mxu0 0
      %957 = vmatpush1.bf16.msra.mxu0 %v936
      %958 = vmatprep.subr.bf16.mxu0 0
      %959 = vmatpush1.bf16.msra.mxu0 %v937
      %960 = vmatprep.subr.bf16.mxu0 0
      %961 = vmatpush1.bf16.msra.mxu0 %v938
      %962 = vmatprep.subr.bf16.mxu0 0
      %963 = vmatpush1.bf16.msra.mxu0 %v939
      %964 = vmatprep.subr.bf16.mxu0 0
      %965 = vmatpush1.bf16.msra.mxu0 0
      %966 = vmatprep.subr.bf16.mxu0 0
      %967 = vmatpush1.bf16.msra.mxu0 0
      %968 = vmatprep.subr.bf16.mxu0 0
      %969 = vmatpush1.bf16.msra.mxu0 0
      %970 = vmatprep.subr.bf16.mxu0 0
      %971 = vmatpush1.bf16.msra.mxu0 0
      %972 = vmatprep.subr.bf16.mxu0 0
      %973 = vmatpush1.bf16.msra.mxu0 0
      %974 = vmatprep.subr.bf16.mxu0 0
      %975 = vmatpush1.bf16.msra.mxu0 0
      %976 = vmatprep.subr.bf16.mxu0 0
      %977 = vmatpush1.bf16.msra.mxu0 0
      %978 = vmatprep.subr.bf16.mxu0 0
      %979 = vmatpush1.bf16.msra.mxu0 0
      %980 = vmatprep.mubr.bf16.mxu0 0
      %981 = vmatmul.mubr.bf16.gmra.mrb[0].mxu0 %v582
      %v982 = vpop.f32.mrb[0].mxu0
      %v983 = vadd.f32 %v766, %v982
      %v984 = vpop.f32.mrb[0].mxu0
      %v985 = vpop.f32.mrb[0].mxu0
      %v986 = vadd.f32 %v769, %v985
      %v987 = vpop.f32.mrb[0].mxu0
      %988 = vmatprep.mubr.bf16.mxu0 0
      %989 = vmatmul.mubr.bf16.gmra.mrb[0].mxu0 %v583
      %v990 = vpop.f32.mrb[0].mxu0
      %v991 = vadd.f32 %v774, %v990
      %v992 = vpop.f32.mrb[0].mxu0
      %v993 = vpop.f32.mrb[0].mxu0
      %v994 = vadd.f32 %v777, %v993
      %v995 = vpop.f32.mrb[0].mxu0
      %996 = vmatprep.mubr.bf16.mxu0 0
      %997 = vmatmul.mubr.bf16.gmra.mrb[0].mxu0 %v584
      %v998 = vpop.f32.mrb[0].mxu0
      %v999 = vadd.f32 %v782, %v998
      %v1000 = vpop.f32.mrb[0].mxu0
      %v1001 = vpop.f32.mrb[0].mxu0
      %v1002 = vadd.f32 %v785, %v1001
      %v1003 = vpop.f32.mrb[0].mxu0
      %1004 = vmatprep.mubr.bf16.mxu0 0
      %1005 = vmatmul.mubr.bf16.gmra.mrb[0].mxu0 %v585
      %v1006 = vpop.f32.mrb[0].mxu0
      %v1007 = vadd.f32 %v790, %v1006
      %v1008 = vpop.f32.mrb[0].mxu0
      %v1009 = vpop.f32.mrb[0].mxu0
      %v1010 = vadd.f32 %v793, %v1009
      %v1011 = vpop.f32.mrb[0].mxu0
      %1012 = vmatprep.mubr.bf16.mxu0 0
      %1013 = vmatmul.mubr.bf16.gmra.mrb[0].mxu0 %v586
      %v1014 = vpop.f32.mrb[0].mxu0
      %v1015 = vadd.f32 %v798, %v1014
      %v1016 = vpop.f32.mrb[0].mxu0
      %v1017 = vpop.f32.mrb[0].mxu0
      %v1018 = vadd.f32 %v801, %v1017
      %v1019 = vpop.f32.mrb[0].mxu0
      %1020 = vmatprep.mubr.bf16.mxu0 0
      %1021 = vmatmul.mubr.bf16.gmra.mrb[0].mxu0 %v587
      %v1022 = vpop.f32.mrb[0].mxu0
      %v1023 = vadd.f32 %v806, %v1022
      %v1024 = vpop.f32.mrb[0].mxu0
      %v1025 = vpop.f32.mrb[0].mxu0
      %v1026 = vadd.f32 %v809, %v1025
      %v1027 = vpop.f32.mrb[0].mxu0
      %1028 = vmatprep.mubr.bf16.mxu0 0
      %1029 = vmatmul.mubr.bf16.gmra.mrb[0].mxu0 %v588
      %v1030 = vpop.f32.mrb[0].mxu0
      %v1031 = vadd.f32 %v814, %v1030
      %v1032 = vpop.f32.mrb[0].mxu0
      %v1033 = vpop.f32.mrb[0].mxu0
      %v1034 = vadd.f32 %v817, %v1033
      %v1035 = vpop.f32.mrb[0].mxu0
      %1036 = vmatprep.mubr.bf16.mxu0 0
      %1037 = vmatmul.mubr.bf16.gmra.mrb[0].mxu0 %v589
      %v1038 = vpop.f32.mrb[0].mxu0
      %v1039 = vadd.f32 %v822, %v1038
      %v1040 = vpop.f32.mrb[0].mxu0
      %v1041 = vpop.f32.mrb[0].mxu0
      %v1042 = vadd.f32 %v825, %v1041
      %v1043 = vpop.f32.mrb[0].mxu0
      %1044 = vmatprep.mubr.bf16.mxu0 0
      %1045 = vmatmul.mubr.bf16.gmra.mrb[0].mxu0 %v590
      %v1046 = vpop.f32.mrb[0].mxu0
      %v1047 = vadd.f32 %v830, %v1046
      %v1048 = vpop.f32.mrb[0].mxu0
      %v1049 = vpop.f32.mrb[0].mxu0
      %v1050 = vadd.f32 %v833, %v1049
      %v1051 = vpop.f32.mrb[0].mxu0
      %1052 = vmatprep.mubr.bf16.mxu0 0
      %1053 = vmatmul.mubr.bf16.gmra.mrb[0].mxu0 %v591
      %v1054 = vpop.f32.mrb[0].mxu0
      %v1055 = vadd.f32 %v838, %v1054
      %v1056 = vpop.f32.mrb[0].mxu0
      %v1057 = vpop.f32.mrb[0].mxu0
      %v1058 = vadd.f32 %v841, %v1057
      %v1059 = vpop.f32.mrb[0].mxu0
      %1060 = vmatprep.mubr.bf16.mxu0 0
      %1061 = vmatmul.mubr.bf16.gmra.mrb[0].mxu0 %v592
      %v1062 = vpop.f32.mrb[0].mxu0
      %v1063 = vadd.f32 %v846, %v1062
      %v1064 = vpop.f32.mrb[0].mxu0
      %v1065 = vpop.f32.mrb[0].mxu0
      %v1066 = vadd.f32 %v849, %v1065
      %v1067 = vpop.f32.mrb[0].mxu0
      %1068 = vmatprep.mubr.bf16.mxu0 0
      %1069 = vmatmul.mubr.bf16.gmra.mrb[0].mxu0 %v593
      %v1070 = vpop.f32.mrb[0].mxu0
      %v1071 = vadd.f32 %v854, %v1070
      %v1072 = vpop.f32.mrb[0].mxu0
      %v1073 = vpop.f32.mrb[0].mxu0
      %v1074 = vadd.f32 %v857, %v1073
      %v1075 = vpop.f32.mrb[0].mxu0
      %1076 = vmatprep.mubr.bf16.mxu0 0
      %1077 = vmatmul.mubr.bf16.gmra.mrb[0].mxu0 %v594
      %v1078 = vpop.f32.mrb[0].mxu0
      %v1079 = vadd.f32 %v862, %v1078
      %v1080 = vpop.f32.mrb[0].mxu0
      %v1081 = vpop.f32.mrb[0].mxu0
      %v1082 = vadd.f32 %v865, %v1081
      %v1083 = vpop.f32.mrb[0].mxu0
      %1084 = vmatprep.mubr.bf16.mxu0 0
      %1085 = vmatmul.mubr.bf16.gmra.mrb[0].mxu0 %v595
      %v1086 = vpop.f32.mrb[0].mxu0
      %v1087 = vadd.f32 %v870, %v1086
      %v1088 = vpop.f32.mrb[0].mxu0
      %v1089 = vpop.f32.mrb[0].mxu0
      %v1090 = vadd.f32 %v873, %v1089
      %v1091 = vpop.f32.mrb[0].mxu0
      %1092 = vmatprep.mubr.bf16.mxu0 0
      %1093 = vmatmul.mubr.bf16.gmra.mrb[0].mxu0 %v596
      %v1094 = vpop.f32.mrb[0].mxu0
      %v1095 = vadd.f32 %v878, %v1094
      %v1096 = vpop.f32.mrb[0].mxu0
      %v1097 = vpop.f32.mrb[0].mxu0
      %v1098 = vadd.f32 %v881, %v1097
      %v1099 = vpop.f32.mrb[0].mxu0
      %1100 = vmatprep.mubr.bf16.mxu0 0
      %1101 = vmatmul.mubr.bf16.gmra.mrb[0].mxu0 %v597
      %v1102 = vpop.f32.mrb[0].mxu0
      %v1103 = vadd.f32 %v886, %v1102
      %v1104 = vpop.f32.mrb[0].mxu0
      %v1105 = vpop.f32.mrb[0].mxu0
      %v1106 = vadd.f32 %v889, %v1105
      %v1107 = vpop.f32.mrb[0].mxu0
      %1108 = vmatprep.mubr.bf16.mxu0 0
      %1109 = vmatmul.mubr.bf16.gmra.mrb[0].mxu0 %v598
      %v1110 = vpop.f32.mrb[0].mxu0
      %v1111 = vadd.f32 %v894, %v1110
      %v1112 = vpop.f32.mrb[0].mxu0
      %v1113 = vpop.f32.mrb[0].mxu0
      %v1114 = vadd.f32 %v897, %v1113
      %v1115 = vpop.f32.mrb[0].mxu0
      %1116 = vdwg.mxu0
      %v1117 = vld [vmem:[%s543 + $0x2] sm:$0xff]
      %v1118 = vld [vmem:[%s543 + $0xa] sm:$0xff]
      %v1119 = vld [vmem:[%s543 + $0x12] sm:$0xff]
      %v1120 = vld [vmem:[%s543 + $0x1a] sm:$0xff]
      %v1121 = vld [vmem:[%s543 + $0x22] sm:$0xff]
      %v1122 = vld [vmem:[%s543 + $0x2a] sm:$0xff]
      %v1123 = vld [vmem:[%s543 + $0x32] sm:$0xff]
      %v1124 = vld [vmem:[%s543 + $0x3a] sm:$0xff]
      %v1125 = vld [vmem:[%s543 + $0x42] sm:$0xff]
      %v1126 = vld [vmem:[%s543 + $0x4a] sm:$0xff]
      %v1127 = vld [vmem:[%s543 + $0x52] sm:$0xff]
      %v1128 = vld [vmem:[%s543 + $0x5a] sm:$0xff]
      %v1129 = vld [vmem:[%s543 + $0x62] sm:$0xff]
      %v1130 = vld [vmem:[%s543 + $0x6a] sm:$0xff]
      %v1131 = vld [vmem:[%s543 + $0x72] sm:$0xff]
      %v1132 = vld [vmem:[%s543 + $0x7a] sm:$0xff]
      %v1133 = vld [vmem:[%s543 + $0x82] sm:$0xff]
      %v1134 = vld [vmem:[%s543 + $0x8a] sm:$0xff]
      %v1135 = vld [vmem:[%s543 + $0x92] sm:$0xff]
      %v1136 = vld [vmem:[%s543 + $0x9a] sm:$0xff]
      %v1137 = vld [vmem:[%s543 + $0xa2] sm:$0xff]
      %v1138 = vld [vmem:[%s543 + $0xaa] sm:$0xff]
      %v1139 = vld [vmem:[%s543 + $0xb2] sm:$0xff]
      %v1140 = vld [vmem:[%s543 + $0xba] sm:$0xff]
      %v1141 = vld [vmem:[%s543 + $0xc2] sm:$0xff]
      %v1142 = vld [vmem:[%s543 + $0xca] sm:$0xff]
      %v1143 = vld [vmem:[%s543 + $0xd2] sm:$0xff]
      %v1144 = vld [vmem:[%s543 + $0xda] sm:$0xff]
      %v1145 = vld [vmem:[%s543 + $0xe2] sm:$0xff]
      %v1146 = vld [vmem:[%s543 + $0xea] sm:$0xff]
      %v1147 = vld [vmem:[%s543 + $0xf2] sm:$0xff]
      %v1148 = vld [vmem:[%s543 + $0xfa] sm:$0xff]
      %v1149 = vld [vmem:[%s543 + $0x102] sm:$0xff]
      %v1150 = vld [vmem:[%s543 + $0x10a] sm:$0x7]
      %v1151 = vpack.c.bf16 %v1118, %v1117
      %v1152 = vpack.c.bf16 %v1120, %v1119
      %v1153 = vpack.c.bf16 %v1122, %v1121
      %v1154 = vpack.c.bf16 %v1124, %v1123
      %v1155 = vpack.c.bf16 %v1126, %v1125
      %v1156 = vpack.c.bf16 %v1128, %v1127
      %v1157 = vpack.c.bf16 %v1130, %v1129
      %v1158 = vpack.c.bf16 %v1132, %v1131
      %v1159 = vpack.c.bf16 %v1134, %v1133
      %v1160 = vpack.c.bf16 %v1136, %v1135
      %v1161 = vpack.c.bf16 %v1138, %v1137
      %v1162 = vpack.c.bf16 %v1140, %v1139
      %v1163 = vpack.c.bf16 %v1142, %v1141
      %v1164 = vpack.c.bf16 %v1144, %v1143
      %v1165 = vpack.c.bf16 %v1146, %v1145
      %v1166 = vpack.c.bf16 %v1148, %v1147
      %v1167 = vpack.c.bf16 %v1150, %v1149
      %s1168 = scalar_lea.vmem %s1, 128
      %v1169 = vld [vmem:[%s1168] sm:$0xf]
      %v1170 = vld [vmem:[%s1168 + $0x4] sm:$0xf]
      %v1171 = vld [vmem:[%s1168 + $0x8] sm:$0xf]
      %v1172 = vld [vmem:[%s1168 + $0xc] sm:$0xf]
      %v1173 = vld [vmem:[%s1168 + $0x10] sm:$0xf]
      %v1174 = vld [vmem:[%s1168 + $0x14] sm:$0xf]
      %v1175 = vld [vmem:[%s1168 + $0x18] sm:$0xf]
      %v1176 = vld [vmem:[%s1168 + $0x1c] sm:$0xf]
      %v1177 = vld [vmem:[%s1168 + $0x20] sm:$0xf]
      %v1178 = vld [vmem:[%s1168 + $0x24] sm:$0xf]
      %v1179 = vld [vmem:[%s1168 + $0x28] sm:$0xf]
      %v1180 = vld [vmem:[%s1168 + $0x2c] sm:$0xf]
      %v1181 = vld [vmem:[%s1168 + $0x30] sm:$0xf]
      %v1182 = vld [vmem:[%s1168 + $0x34] sm:$0xf]
      %v1183 = vld [vmem:[%s1168 + $0x38] sm:$0xf]
      %v1184 = vld [vmem:[%s1168 + $0x3c] sm:$0xf]
      %v1201 = vunpack.c.l.b16 %v1169
      %v1202 = vunpack.c.l.b16 %v1170
      %v1203 = vunpack.c.l.b16 %v1171
      %v1204 = vunpack.c.l.b16 %v1172
      %v1205 = vunpack.c.l.b16 %v1173
      %v1206 = vunpack.c.l.b16 %v1174
      %v1207 = vunpack.c.l.b16 %v1175
      %v1208 = vunpack.c.l.b16 %v1176
      %v1209 = vunpack.c.l.b16 %v1177
      %v1210 = vunpack.c.l.b16 %v1178
      %v1211 = vunpack.c.l.b16 %v1179
      %v1212 = vunpack.c.l.b16 %v1180
      %v1213 = vunpack.c.l.b16 %v1181
      %v1214 = vunpack.c.l.b16 %v1182
      %v1215 = vunpack.c.l.b16 %v1183
      %v1216 = vunpack.c.l.b16 %v1184
      %v1217 = vpack.c.b16 %v1202, %v1201
      %v1218 = vpack.c.b16 %v1204, %v1203
      %v1219 = vpack.c.b16 %v1206, %v1205
      %v1220 = vpack.c.b16 %v1208, %v1207
      %v1221 = vpack.c.b16 %v1210, %v1209
      %v1222 = vpack.c.b16 %v1212, %v1211
      %v1223 = vpack.c.b16 %v1214, %v1213
      %v1224 = vpack.c.b16 %v1216, %v1215
      %1233 = vmatprep.subr.bf16.mxu0 0
      %1234 = vmatpush1.bf16.msra.mxu0 %v1217
      %1235 = vmatprep.subr.bf16.mxu0 0
      %1236 = vmatpush1.bf16.msra.mxu0 %v1218
      %1237 = vmatprep.subr.bf16.mxu0 0
      %1238 = vmatpush1.bf16.msra.mxu0 %v1219
      %1239 = vmatprep.subr.bf16.mxu0 0
      %1240 = vmatpush1.bf16.msra.mxu0 %v1220
      %1241 = vmatprep.subr.bf16.mxu0 0
      %1242 = vmatpush1.bf16.msra.mxu0 %v1221
      %1243 = vmatprep.subr.bf16.mxu0 0
      %1244 = vmatpush1.bf16.msra.mxu0 %v1222
      %1245 = vmatprep.subr.bf16.mxu0 0
      %1246 = vmatpush1.bf16.msra.mxu0 %v1223
      %1247 = vmatprep.subr.bf16.mxu0 0
      %1248 = vmatpush1.bf16.msra.mxu0 %v1224
      %1249 = vmatprep.subr.bf16.mxu0 0
      %1250 = vmatpush1.bf16.msra.mxu0 0
      %1251 = vmatprep.subr.bf16.mxu0 0
      %1252 = vmatpush1.bf16.msra.mxu0 0
      %1253 = vmatprep.subr.bf16.mxu0 0
      %1254 = vmatpush1.bf16.msra.mxu0 0
      %1255 = vmatprep.subr.bf16.mxu0 0
      %1256 = vmatpush1.bf16.msra.mxu0 0
      %1257 = vmatprep.subr.bf16.mxu0 0
      %1258 = vmatpush1.bf16.msra.mxu0 0
      %1259 = vmatprep.subr.bf16.mxu0 0
      %1260 = vmatpush1.bf16.msra.mxu0 0
      %1261 = vmatprep.subr.bf16.mxu0 0
      %1262 = vmatpush1.bf16.msra.mxu0 0
      %1263 = vmatprep.subr.bf16.mxu0 0
      %1264 = vmatpush1.bf16.msra.mxu0 0
      %1265 = vmatprep.mubr.bf16.mxu0 0
      %1266 = vmatmul.mubr.bf16.gmra.mrb[0].mxu0 %v1151
      %v1267 = vpop.f32.mrb[0].mxu0
      %v1268 = vadd.f32 0.0, %v1267
      %v1269 = vpop.f32.mrb[0].mxu0
      %v1270 = vpop.f32.mrb[0].mxu0
      %v1271 = vadd.f32 0.0, %v1270
      %v1272 = vpop.f32.mrb[0].mxu0
      %1273 = vmatprep.mubr.bf16.mxu0 0
      %1274 = vmatmul.mubr.bf16.gmra.mrb[0].mxu0 %v1152
      %v1275 = vpop.f32.mrb[0].mxu0
      %v1276 = vadd.f32 0.0, %v1275
      %v1277 = vpop.f32.mrb[0].mxu0
      %v1278 = vpop.f32.mrb[0].mxu0
      %v1279 = vadd.f32 0.0, %v1278
      %v1280 = vpop.f32.mrb[0].mxu0
      %1281 = vmatprep.mubr.bf16.mxu0 0
      %1282 = vmatmul.mubr.bf16.gmra.mrb[0].mxu0 %v1153
      %v1283 = vpop.f32.mrb[0].mxu0
      %v1284 = vadd.f32 0.0, %v1283
      %v1285 = vpop.f32.mrb[0].mxu0
      %v1286 = vpop.f32.mrb[0].mxu0
      %v1287 = vadd.f32 0.0, %v1286
      %v1288 = vpop.f32.mrb[0].mxu0
      %1289 = vmatprep.mubr.bf16.mxu0 0
      %1290 = vmatmul.mubr.bf16.gmra.mrb[0].mxu0 %v1154
      %v1291 = vpop.f32.mrb[0].mxu0
      %v1292 = vadd.f32 0.0, %v1291
      %v1293 = vpop.f32.mrb[0].mxu0
      %v1294 = vpop.f32.mrb[0].mxu0
      %v1295 = vadd.f32 0.0, %v1294
      %v1296 = vpop.f32.mrb[0].mxu0
      %1297 = vmatprep.mubr.bf16.mxu0 0
      %1298 = vmatmul.mubr.bf16.gmra.mrb[0].mxu0 %v1155
      %v1299 = vpop.f32.mrb[0].mxu0
      %v1300 = vadd.f32 0.0, %v1299
      %v1301 = vpop.f32.mrb[0].mxu0
      %v1302 = vpop.f32.mrb[0].mxu0
      %v1303 = vadd.f32 0.0, %v1302
      %v1304 = vpop.f32.mrb[0].mxu0
      %1305 = vmatprep.mubr.bf16.mxu0 0
      %1306 = vmatmul.mubr.bf16.gmra.mrb[0].mxu0 %v1156
      %v1307 = vpop.f32.mrb[0].mxu0
      %v1308 = vadd.f32 0.0, %v1307
      %v1309 = vpop.f32.mrb[0].mxu0
      %v1310 = vpop.f32.mrb[0].mxu0
      %v1311 = vadd.f32 0.0, %v1310
      %v1312 = vpop.f32.mrb[0].mxu0
      %1313 = vmatprep.mubr.bf16.mxu0 0
      %1314 = vmatmul.mubr.bf16.gmra.mrb[0].mxu0 %v1157
      %v1315 = vpop.f32.mrb[0].mxu0
      %v1316 = vadd.f32 0.0, %v1315
      %v1317 = vpop.f32.mrb[0].mxu0
      %v1318 = vpop.f32.mrb[0].mxu0
      %v1319 = vadd.f32 0.0, %v1318
      %v1320 = vpop.f32.mrb[0].mxu0
      %1321 = vmatprep.mubr.bf16.mxu0 0
      %1322 = vmatmul.mubr.bf16.gmra.mrb[0].mxu0 %v1158
      %v1323 = vpop.f32.mrb[0].mxu0
      %v1324 = vadd.f32 0.0, %v1323
      %v1325 = vpop.f32.mrb[0].mxu0
      %v1326 = vpop.f32.mrb[0].mxu0
      %v1327 = vadd.f32 0.0, %v1326
      %v1328 = vpop.f32.mrb[0].mxu0
      %1329 = vmatprep.mubr.bf16.mxu0 0
      %1330 = vmatmul.mubr.bf16.gmra.mrb[0].mxu0 %v1159
      %v1331 = vpop.f32.mrb[0].mxu0
      %v1332 = vadd.f32 0.0, %v1331
      %v1333 = vpop.f32.mrb[0].mxu0
      %v1334 = vpop.f32.mrb[0].mxu0
      %v1335 = vadd.f32 0.0, %v1334
      %v1336 = vpop.f32.mrb[0].mxu0
      %1337 = vmatprep.mubr.bf16.mxu0 0
      %1338 = vmatmul.mubr.bf16.gmra.mrb[0].mxu0 %v1160
      %v1339 = vpop.f32.mrb[0].mxu0
      %v1340 = vadd.f32 0.0, %v1339
      %v1341 = vpop.f32.mrb[0].mxu0
      %v1342 = vpop.f32.mrb[0].mxu0
      %v1343 = vadd.f32 0.0, %v1342
      %v1344 = vpop.f32.mrb[0].mxu0
      %1345 = vmatprep.mubr.bf16.mxu0 0
      %1346 = vmatmul.mubr.bf16.gmra.mrb[0].mxu0 %v1161
      %v1347 = vpop.f32.mrb[0].mxu0
      %v1348 = vadd.f32 0.0, %v1347
      %v1349 = vpop.f32.mrb[0].mxu0
      %v1350 = vpop.f32.mrb[0].mxu0
      %v1351 = vadd.f32 0.0, %v1350
      %v1352 = vpop.f32.mrb[0].mxu0
      %1353 = vmatprep.mubr.bf16.mxu0 0
      %1354 = vmatmul.mubr.bf16.gmra.mrb[0].mxu0 %v1162
      %v1355 = vpop.f32.mrb[0].mxu0
      %v1356 = vadd.f32 0.0, %v1355
      %v1357 = vpop.f32.mrb[0].mxu0
      %v1358 = vpop.f32.mrb[0].mxu0
      %v1359 = vadd.f32 0.0, %v1358
      %v1360 = vpop.f32.mrb[0].mxu0
      %1361 = vmatprep.mubr.bf16.mxu0 0
      %1362 = vmatmul.mubr.bf16.gmra.mrb[0].mxu0 %v1163
      %v1363 = vpop.f32.mrb[0].mxu0
      %v1364 = vadd.f32 0.0, %v1363
      %v1365 = vpop.f32.mrb[0].mxu0
      %v1366 = vpop.f32.mrb[0].mxu0
      %v1367 = vadd.f32 0.0, %v1366
      %v1368 = vpop.f32.mrb[0].mxu0
      %1369 = vmatprep.mubr.bf16.mxu0 0
      %1370 = vmatmul.mubr.bf16.gmra.mrb[0].mxu0 %v1164
      %v1371 = vpop.f32.mrb[0].mxu0
      %v1372 = vadd.f32 0.0, %v1371
      %v1373 = vpop.f32.mrb[0].mxu0
      %v1374 = vpop.f32.mrb[0].mxu0
      %v1375 = vadd.f32 0.0, %v1374
      %v1376 = vpop.f32.mrb[0].mxu0
      %1377 = vmatprep.mubr.bf16.mxu0 0
      %1378 = vmatmul.mubr.bf16.gmra.mrb[0].mxu0 %v1165
      %v1379 = vpop.f32.mrb[0].mxu0
      %v1380 = vadd.f32 0.0, %v1379
      %v1381 = vpop.f32.mrb[0].mxu0
      %v1382 = vpop.f32.mrb[0].mxu0
      %v1383 = vadd.f32 0.0, %v1382
      %v1384 = vpop.f32.mrb[0].mxu0
      %1385 = vmatprep.mubr.bf16.mxu0 0
      %1386 = vmatmul.mubr.bf16.gmra.mrb[0].mxu0 %v1166
      %v1387 = vpop.f32.mrb[0].mxu0
      %v1388 = vadd.f32 0.0, %v1387
      %v1389 = vpop.f32.mrb[0].mxu0
      %v1390 = vpop.f32.mrb[0].mxu0
      %v1391 = vadd.f32 0.0, %v1390
      %v1392 = vpop.f32.mrb[0].mxu0
      %1393 = vmatprep.mubr.bf16.mxu0 0
      %1394 = vmatmul.mubr.bf16.gmra.mrb[0].mxu0 %v1167
      %v1395 = vpop.f32.mrb[0].mxu0
      %v1396 = vadd.f32 0.0, %v1395
      %v1397 = vpop.f32.mrb[0].mxu0
      %v1398 = vpop.f32.mrb[0].mxu0
      %v1399 = vadd.f32 0.0, %v1398
      %v1400 = vpop.f32.mrb[0].mxu0
      %1401 = vdwg.mxu0
      %v1402 = vadd.f32 %v983, %v1268
      %v1403 = vadd.f32 %v986, %v1271
      %v1404 = vadd.f32 %v991, %v1276
      %v1405 = vadd.f32 %v994, %v1279
      %v1406 = vadd.f32 %v999, %v1284
      %v1407 = vadd.f32 %v1002, %v1287
      %v1408 = vadd.f32 %v1007, %v1292
      %v1409 = vadd.f32 %v1010, %v1295
      %v1410 = vadd.f32 %v1015, %v1300
      %v1411 = vadd.f32 %v1018, %v1303
      %v1412 = vadd.f32 %v1023, %v1308
      %v1413 = vadd.f32 %v1026, %v1311
      %v1414 = vadd.f32 %v1031, %v1316
      %v1415 = vadd.f32 %v1034, %v1319
      %v1416 = vadd.f32 %v1039, %v1324
      %v1417 = vadd.f32 %v1042, %v1327
      %v1418 = vadd.f32 %v1047, %v1332
      %v1419 = vadd.f32 %v1050, %v1335
      %v1420 = vadd.f32 %v1055, %v1340
      %v1421 = vadd.f32 %v1058, %v1343
      %v1422 = vadd.f32 %v1063, %v1348
      %v1423 = vadd.f32 %v1066, %v1351
      %v1424 = vadd.f32 %v1071, %v1356
      %v1425 = vadd.f32 %v1074, %v1359
      %v1426 = vadd.f32 %v1079, %v1364
      %v1427 = vadd.f32 %v1082, %v1367
      %v1428 = vadd.f32 %v1087, %v1372
      %v1429 = vadd.f32 %v1090, %v1375
      %v1430 = vadd.f32 %v1095, %v1380
      %v1431 = vadd.f32 %v1098, %v1383
      %v1432 = vadd.f32 %v1103, %v1388
      %v1433 = vadd.f32 %v1106, %v1391
      %v1434 = vadd.f32 %v1111, %v1396
      %v1435 = vadd.f32 %v1114, %v1399
      %v1436 = vld [vmem:[%s543 + $0x12] sm:$0xff]
      %v1437 = vld [vmem:[%s543 + $0x1a] sm:$0xff]
      %v1438 = vld [vmem:[%s543 + $0x22] sm:$0xff]
      %v1439 = vld [vmem:[%s543 + $0x2a] sm:$0xff]
      %v1440 = vld [vmem:[%s543 + $0x32] sm:$0xff]
      %v1441 = vld [vmem:[%s543 + $0x3a] sm:$0xff]
      %v1442 = vld [vmem:[%s543 + $0x42] sm:$0xff]
      %v1443 = vld [vmem:[%s543 + $0x4a] sm:$0xff]
      %v1444 = vld [vmem:[%s543 + $0x52] sm:$0xff]
      %v1445 = vld [vmem:[%s543 + $0x5a] sm:$0xff]
      %v1446 = vld [vmem:[%s543 + $0x62] sm:$0xff]
      %v1447 = vld [vmem:[%s543 + $0x6a] sm:$0xff]
      %v1448 = vld [vmem:[%s543 + $0x72] sm:$0xff]
      %v1449 = vld [vmem:[%s543 + $0x7a] sm:$0xff]
      %v1450 = vld [vmem:[%s543 + $0x82] sm:$0xff]
      %v1451 = vld [vmem:[%s543 + $0x8a] sm:$0xff]
      %v1452 = vld [vmem:[%s543 + $0x92] sm:$0xff]
      %v1453 = vld [vmem:[%s543 + $0x9a] sm:$0xff]
      %v1454 = vld [vmem:[%s543 + $0xa2] sm:$0xff]
      %v1455 = vld [vmem:[%s543 + $0xaa] sm:$0xff]
      %v1456 = vld [vmem:[%s543 + $0xb2] sm:$0xff]
      %v1457 = vld [vmem:[%s543 + $0xba] sm:$0xff]
      %v1458 = vld [vmem:[%s543 + $0xc2] sm:$0xff]
      %v1459 = vld [vmem:[%s543 + $0xca] sm:$0xff]
      %v1460 = vld [vmem:[%s543 + $0xd2] sm:$0xff]
      %v1461 = vld [vmem:[%s543 + $0xda] sm:$0xff]
      %v1462 = vld [vmem:[%s543 + $0xe2] sm:$0xff]
      %v1463 = vld [vmem:[%s543 + $0xea] sm:$0xff]
      %v1464 = vld [vmem:[%s543 + $0xf2] sm:$0xff]
      %v1465 = vld [vmem:[%s543 + $0xfa] sm:$0xff]
      %v1466 = vld [vmem:[%s543 + $0x102] sm:$0xff]
      %v1467 = vld [vmem:[%s543 + $0x10a] sm:$0xff]
      %v1468 = vld [vmem:[%s543 + $0x112] sm:$0xff]
      %v1469 = vld [vmem:[%s543 + $0x11a] sm:$0x7]
      %v1470 = vpack.c.bf16 %v1437, %v1436
      %v1471 = vpack.c.bf16 %v1439, %v1438
      %v1472 = vpack.c.bf16 %v1441, %v1440
      %v1473 = vpack.c.bf16 %v1443, %v1442
      %v1474 = vpack.c.bf16 %v1445, %v1444
      %v1475 = vpack.c.bf16 %v1447, %v1446
      %v1476 = vpack.c.bf16 %v1449, %v1448
      %v1477 = vpack.c.bf16 %v1451, %v1450
      %v1478 = vpack.c.bf16 %v1453, %v1452
      %v1479 = vpack.c.bf16 %v1455, %v1454
      %v1480 = vpack.c.bf16 %v1457, %v1456
      %v1481 = vpack.c.bf16 %v1459, %v1458
      %v1482 = vpack.c.bf16 %v1461, %v1460
      %v1483 = vpack.c.bf16 %v1463, %v1462
      %v1484 = vpack.c.bf16 %v1465, %v1464
      %v1485 = vpack.c.bf16 %v1467, %v1466
      %v1486 = vpack.c.bf16 %v1469, %v1468
      %s1487 = scalar_lea.vmem %s1, 192
      %v1488 = vld [vmem:[%s1487] sm:$0xf]
      %v1489 = vld [vmem:[%s1487 + $0x4] sm:$0xf]
      %v1490 = vld [vmem:[%s1487 + $0x8] sm:$0xf]
      %v1491 = vld [vmem:[%s1487 + $0xc] sm:$0xf]
      %v1492 = vld [vmem:[%s1487 + $0x10] sm:$0xf]
      %v1493 = vld [vmem:[%s1487 + $0x14] sm:$0xf]
      %v1494 = vld [vmem:[%s1487 + $0x18] sm:$0xf]
      %v1495 = vld [vmem:[%s1487 + $0x1c] sm:$0xf]
      %v1496 = vld [vmem:[%s1487 + $0x20] sm:$0xf]
      %v1497 = vld [vmem:[%s1487 + $0x24] sm:$0xf]
      %v1498 = vld [vmem:[%s1487 + $0x28] sm:$0xf]
      %v1499 = vld [vmem:[%s1487 + $0x2c] sm:$0xf]
      %v1500 = vld [vmem:[%s1487 + $0x30] sm:$0xf]
      %v1501 = vld [vmem:[%s1487 + $0x34] sm:$0xf]
      %v1502 = vld [vmem:[%s1487 + $0x38] sm:$0xf]
      %v1503 = vld [vmem:[%s1487 + $0x3c] sm:$0xf]
      %v1520 = vunpack.c.l.b16 %v1488
      %v1521 = vunpack.c.l.b16 %v1489
      %v1522 = vunpack.c.l.b16 %v1490
      %v1523 = vunpack.c.l.b16 %v1491
      %v1524 = vunpack.c.l.b16 %v1492
      %v1525 = vunpack.c.l.b16 %v1493
      %v1526 = vunpack.c.l.b16 %v1494
      %v1527 = vunpack.c.l.b16 %v1495
      %v1528 = vunpack.c.l.b16 %v1496
      %v1529 = vunpack.c.l.b16 %v1497
      %v1530 = vunpack.c.l.b16 %v1498
      %v1531 = vunpack.c.l.b16 %v1499
      %v1532 = vunpack.c.l.b16 %v1500
      %v1533 = vunpack.c.l.b16 %v1501
      %v1534 = vunpack.c.l.b16 %v1502
      %v1535 = vunpack.c.l.b16 %v1503
      %v1536 = vpack.c.b16 %v1521, %v1520
      %v1537 = vpack.c.b16 %v1523, %v1522
      %v1538 = vpack.c.b16 %v1525, %v1524
      %v1539 = vpack.c.b16 %v1527, %v1526
      %v1540 = vpack.c.b16 %v1529, %v1528
      %v1541 = vpack.c.b16 %v1531, %v1530
      %v1542 = vpack.c.b16 %v1533, %v1532
      %v1543 = vpack.c.b16 %v1535, %v1534
      %1552 = vmatprep.subr.bf16.mxu0 0
      %1553 = vmatpush1.bf16.msra.mxu0 %v1536
      %1554 = vmatprep.subr.bf16.mxu0 0
      %1555 = vmatpush1.bf16.msra.mxu0 %v1537
      %1556 = vmatprep.subr.bf16.mxu0 0
      %1557 = vmatpush1.bf16.msra.mxu0 %v1538
      %1558 = vmatprep.subr.bf16.mxu0 0
      %1559 = vmatpush1.bf16.msra.mxu0 %v1539
      %1560 = vmatprep.subr.bf16.mxu0 0
      %1561 = vmatpush1.bf16.msra.mxu0 %v1540
      %1562 = vmatprep.subr.bf16.mxu0 0
      %1563 = vmatpush1.bf16.msra.mxu0 %v1541
      %1564 = vmatprep.subr.bf16.mxu0 0
      %1565 = vmatpush1.bf16.msra.mxu0 %v1542
      %1566 = vmatprep.subr.bf16.mxu0 0
      %1567 = vmatpush1.bf16.msra.mxu0 %v1543
      %1568 = vmatprep.subr.bf16.mxu0 0
      %1569 = vmatpush1.bf16.msra.mxu0 0
      %1570 = vmatprep.subr.bf16.mxu0 0
      %1571 = vmatpush1.bf16.msra.mxu0 0
      %1572 = vmatprep.subr.bf16.mxu0 0
      %1573 = vmatpush1.bf16.msra.mxu0 0
      %1574 = vmatprep.subr.bf16.mxu0 0
      %1575 = vmatpush1.bf16.msra.mxu0 0
      %1576 = vmatprep.subr.bf16.mxu0 0
      %1577 = vmatpush1.bf16.msra.mxu0 0
      %1578 = vmatprep.subr.bf16.mxu0 0
      %1579 = vmatpush1.bf16.msra.mxu0 0
      %1580 = vmatprep.subr.bf16.mxu0 0
      %1581 = vmatpush1.bf16.msra.mxu0 0
      %1582 = vmatprep.subr.bf16.mxu0 0
      %1583 = vmatpush1.bf16.msra.mxu0 0
      %1584 = vmatprep.mubr.bf16.mxu0 0
      %1585 = vmatmul.mubr.bf16.gmra.mrb[0].mxu0 %v1470
      %v1586 = vpop.f32.mrb[0].mxu0
      %v1587 = vadd.f32 0.0, %v1586
      %v1588 = vpop.f32.mrb[0].mxu0
      %v1589 = vpop.f32.mrb[0].mxu0
      %v1590 = vadd.f32 0.0, %v1589
      %v1591 = vpop.f32.mrb[0].mxu0
      %1592 = vmatprep.mubr.bf16.mxu0 0
      %1593 = vmatmul.mubr.bf16.gmra.mrb[0].mxu0 %v1471
      %v1594 = vpop.f32.mrb[0].mxu0
      %v1595 = vadd.f32 0.0, %v1594
      %v1596 = vpop.f32.mrb[0].mxu0
      %v1597 = vpop.f32.mrb[0].mxu0
      %v1598 = vadd.f32 0.0, %v1597
      %v1599 = vpop.f32.mrb[0].mxu0
      %1600 = vmatprep.mubr.bf16.mxu0 0
      %1601 = vmatmul.mubr.bf16.gmra.mrb[0].mxu0 %v1472
      %v1602 = vpop.f32.mrb[0].mxu0
      %v1603 = vadd.f32 0.0, %v1602
      %v1604 = vpop.f32.mrb[0].mxu0
      %v1605 = vpop.f32.mrb[0].mxu0
      %v1606 = vadd.f32 0.0, %v1605
      %v1607 = vpop.f32.mrb[0].mxu0
      %1608 = vmatprep.mubr.bf16.mxu0 0
      %1609 = vmatmul.mubr.bf16.gmra.mrb[0].mxu0 %v1473
      %v1610 = vpop.f32.mrb[0].mxu0
      %v1611 = vadd.f32 0.0, %v1610
      %v1612 = vpop.f32.mrb[0].mxu0
      %v1613 = vpop.f32.mrb[0].mxu0
      %v1614 = vadd.f32 0.0, %v1613
      %v1615 = vpop.f32.mrb[0].mxu0
      %1616 = vmatprep.mubr.bf16.mxu0 0
      %1617 = vmatmul.mubr.bf16.gmra.mrb[0].mxu0 %v1474
      %v1618 = vpop.f32.mrb[0].mxu0
      %v1619 = vadd.f32 0.0, %v1618
      %v1620 = vpop.f32.mrb[0].mxu0
      %v1621 = vpop.f32.mrb[0].mxu0
      %v1622 = vadd.f32 0.0, %v1621
      %v1623 = vpop.f32.mrb[0].mxu0
      %1624 = vmatprep.mubr.bf16.mxu0 0
      %1625 = vmatmul.mubr.bf16.gmra.mrb[0].mxu0 %v1475
      %v1626 = vpop.f32.mrb[0].mxu0
      %v1627 = vadd.f32 0.0, %v1626
      %v1628 = vpop.f32.mrb[0].mxu0
      %v1629 = vpop.f32.mrb[0].mxu0
      %v1630 = vadd.f32 0.0, %v1629
      %v1631 = vpop.f32.mrb[0].mxu0
      %1632 = vmatprep.mubr.bf16.mxu0 0
      %1633 = vmatmul.mubr.bf16.gmra.mrb[0].mxu0 %v1476
      %v1634 = vpop.f32.mrb[0].mxu0
      %v1635 = vadd.f32 0.0, %v1634
      %v1636 = vpop.f32.mrb[0].mxu0
      %v1637 = vpop.f32.mrb[0].mxu0
      %v1638 = vadd.f32 0.0, %v1637
      %v1639 = vpop.f32.mrb[0].mxu0
      %1640 = vmatprep.mubr.bf16.mxu0 0
      %1641 = vmatmul.mubr.bf16.gmra.mrb[0].mxu0 %v1477
      %v1642 = vpop.f32.mrb[0].mxu0
      %v1643 = vadd.f32 0.0, %v1642
      %v1644 = vpop.f32.mrb[0].mxu0
      %v1645 = vpop.f32.mrb[0].mxu0
      %v1646 = vadd.f32 0.0, %v1645
      %v1647 = vpop.f32.mrb[0].mxu0
      %1648 = vmatprep.mubr.bf16.mxu0 0
      %1649 = vmatmul.mubr.bf16.gmra.mrb[0].mxu0 %v1478
      %v1650 = vpop.f32.mrb[0].mxu0
      %v1651 = vadd.f32 0.0, %v1650
      %v1652 = vpop.f32.mrb[0].mxu0
      %v1653 = vpop.f32.mrb[0].mxu0
      %v1654 = vadd.f32 0.0, %v1653
      %v1655 = vpop.f32.mrb[0].mxu0
      %1656 = vmatprep.mubr.bf16.mxu0 0
      %1657 = vmatmul.mubr.bf16.gmra.mrb[0].mxu0 %v1479
      %v1658 = vpop.f32.mrb[0].mxu0
      %v1659 = vadd.f32 0.0, %v1658
      %v1660 = vpop.f32.mrb[0].mxu0
      %v1661 = vpop.f32.mrb[0].mxu0
      %v1662 = vadd.f32 0.0, %v1661
      %v1663 = vpop.f32.mrb[0].mxu0
      %1664 = vmatprep.mubr.bf16.mxu0 0
      %1665 = vmatmul.mubr.bf16.gmra.mrb[0].mxu0 %v1480
      %v1666 = vpop.f32.mrb[0].mxu0
      %v1667 = vadd.f32 0.0, %v1666
      %v1668 = vpop.f32.mrb[0].mxu0
      %v1669 = vpop.f32.mrb[0].mxu0
      %v1670 = vadd.f32 0.0, %v1669
      %v1671 = vpop.f32.mrb[0].mxu0
      %1672 = vmatprep.mubr.bf16.mxu0 0
      %1673 = vmatmul.mubr.bf16.gmra.mrb[0].mxu0 %v1481
      %v1674 = vpop.f32.mrb[0].mxu0
      %v1675 = vadd.f32 0.0, %v1674
      %v1676 = vpop.f32.mrb[0].mxu0
      %v1677 = vpop.f32.mrb[0].mxu0
      %v1678 = vadd.f32 0.0, %v1677
      %v1679 = vpop.f32.mrb[0].mxu0
      %1680 = vmatprep.mubr.bf16.mxu0 0
      %1681 = vmatmul.mubr.bf16.gmra.mrb[0].mxu0 %v1482
      %v1682 = vpop.f32.mrb[0].mxu0
      %v1683 = vadd.f32 0.0, %v1682
      %v1684 = vpop.f32.mrb[0].mxu0
      %v1685 = vpop.f32.mrb[0].mxu0
      %v1686 = vadd.f32 0.0, %v1685
      %v1687 = vpop.f32.mrb[0].mxu0
      %1688 = vmatprep.mubr.bf16.mxu0 0
      %1689 = vmatmul.mubr.bf16.gmra.mrb[0].mxu0 %v1483
      %v1690 = vpop.f32.mrb[0].mxu0
      %v1691 = vadd.f32 0.0, %v1690
      %v1692 = vpop.f32.mrb[0].mxu0
      %v1693 = vpop.f32.mrb[0].mxu0
      %v1694 = vadd.f32 0.0, %v1693
      %v1695 = vpop.f32.mrb[0].mxu0
      %1696 = vmatprep.mubr.bf16.mxu0 0
      %1697 = vmatmul.mubr.bf16.gmra.mrb[0].mxu0 %v1484
      %v1698 = vpop.f32.mrb[0].mxu0
      %v1699 = vadd.f32 0.0, %v1698
      %v1700 = vpop.f32.mrb[0].mxu0
      %v1701 = vpop.f32.mrb[0].mxu0
      %v1702 = vadd.f32 0.0, %v1701
      %v1703 = vpop.f32.mrb[0].mxu0
      %1704 = vmatprep.mubr.bf16.mxu0 0
      %1705 = vmatmul.mubr.bf16.gmra.mrb[0].mxu0 %v1485
      %v1706 = vpop.f32.mrb[0].mxu0
      %v1707 = vadd.f32 0.0, %v1706
      %v1708 = vpop.f32.mrb[0].mxu0
      %v1709 = vpop.f32.mrb[0].mxu0
      %v1710 = vadd.f32 0.0, %v1709
      %v1711 = vpop.f32.mrb[0].mxu0
      %1712 = vmatprep.mubr.bf16.mxu0 0
      %1713 = vmatmul.mubr.bf16.gmra.mrb[0].mxu0 %v1486
      %v1714 = vpop.f32.mrb[0].mxu0
      %v1715 = vadd.f32 0.0, %v1714
      %v1716 = vpop.f32.mrb[0].mxu0
      %v1717 = vpop.f32.mrb[0].mxu0
      %v1718 = vadd.f32 0.0, %v1717
      %v1719 = vpop.f32.mrb[0].mxu0
      %1720 = vdwg.mxu0
      %v1721 = vadd.f32 %v1402, %v1587
      %v1722 = vadd.f32 %v1403, %v1590
      %v1723 = vadd.f32 %v1404, %v1595
      %v1724 = vadd.f32 %v1405, %v1598
      %v1725 = vadd.f32 %v1406, %v1603
      %v1726 = vadd.f32 %v1407, %v1606
      %v1727 = vadd.f32 %v1408, %v1611
      %v1728 = vadd.f32 %v1409, %v1614
      %v1729 = vadd.f32 %v1410, %v1619
      %v1730 = vadd.f32 %v1411, %v1622
      %v1731 = vadd.f32 %v1412, %v1627
      %v1732 = vadd.f32 %v1413, %v1630
      %v1733 = vadd.f32 %v1414, %v1635
      %v1734 = vadd.f32 %v1415, %v1638
      %v1735 = vadd.f32 %v1416, %v1643
      %v1736 = vadd.f32 %v1417, %v1646
      %v1737 = vadd.f32 %v1418, %v1651
      %v1738 = vadd.f32 %v1419, %v1654
      %v1739 = vadd.f32 %v1420, %v1659
      %v1740 = vadd.f32 %v1421, %v1662
      %v1741 = vadd.f32 %v1422, %v1667
      %v1742 = vadd.f32 %v1423, %v1670
      %v1743 = vadd.f32 %v1424, %v1675
      %v1744 = vadd.f32 %v1425, %v1678
      %v1745 = vadd.f32 %v1426, %v1683
      %v1746 = vadd.f32 %v1427, %v1686
      %v1747 = vadd.f32 %v1428, %v1691
      %v1748 = vadd.f32 %v1429, %v1694
      %v1749 = vadd.f32 %v1430, %v1699
      %v1750 = vadd.f32 %v1431, %v1702
      %v1751 = vadd.f32 %v1432, %v1707
      %v1752 = vadd.f32 %v1433, %v1710
      %v1753 = vadd.f32 %v1434, %v1715
      %v1754 = vadd.f32 %v1435, %v1718
      %v1755 = vld [vmem:[%s543 + $0x13] sm:$0xff]
      %v1756 = vld [vmem:[%s543 + $0x1b] sm:$0xff]
      %v1757 = vld [vmem:[%s543 + $0x23] sm:$0xff]
      %v1758 = vld [vmem:[%s543 + $0x2b] sm:$0xff]
      %v1759 = vld [vmem:[%s543 + $0x33] sm:$0xff]
      %v1760 = vld [vmem:[%s543 + $0x3b] sm:$0xff]
      %v1761 = vld [vmem:[%s543 + $0x43] sm:$0xff]
      %v1762 = vld [vmem:[%s543 + $0x4b] sm:$0xff]
      %v1763 = vld [vmem:[%s543 + $0x53] sm:$0xff]
      %v1764 = vld [vmem:[%s543 + $0x5b] sm:$0xff]
      %v1765 = vld [vmem:[%s543 + $0x63] sm:$0xff]
      %v1766 = vld [vmem:[%s543 + $0x6b] sm:$0xff]
      %v1767 = vld [vmem:[%s543 + $0x73] sm:$0xff]
      %v1768 = vld [vmem:[%s543 + $0x7b] sm:$0xff]
      %v1769 = vld [vmem:[%s543 + $0x83] sm:$0xff]
      %v1770 = vld [vmem:[%s543 + $0x8b] sm:$0xff]
      %v1771 = vld [vmem:[%s543 + $0x93] sm:$0xff]
      %v1772 = vld [vmem:[%s543 + $0x9b] sm:$0xff]
      %v1773 = vld [vmem:[%s543 + $0xa3] sm:$0xff]
      %v1774 = vld [vmem:[%s543 + $0xab] sm:$0xff]
      %v1775 = vld [vmem:[%s543 + $0xb3] sm:$0xff]
      %v1776 = vld [vmem:[%s543 + $0xbb] sm:$0xff]
      %v1777 = vld [vmem:[%s543 + $0xc3] sm:$0xff]
      %v1778 = vld [vmem:[%s543 + $0xcb] sm:$0xff]
      %v1779 = vld [vmem:[%s543 + $0xd3] sm:$0xff]
      %v1780 = vld [vmem:[%s543 + $0xdb] sm:$0xff]
      %v1781 = vld [vmem:[%s543 + $0xe3] sm:$0xff]
      %v1782 = vld [vmem:[%s543 + $0xeb] sm:$0xff]
      %v1783 = vld [vmem:[%s543 + $0xf3] sm:$0xff]
      %v1784 = vld [vmem:[%s543 + $0xfb] sm:$0xff]
      %v1785 = vld [vmem:[%s543 + $0x103] sm:$0xff]
      %v1786 = vld [vmem:[%s543 + $0x10b] sm:$0xff]
      %v1787 = vld [vmem:[%s543 + $0x113] sm:$0xff]
      %v1788 = vld [vmem:[%s543 + $0x11b] sm:$0x7]
      %v1789 = vpack.c.bf16 %v1756, %v1755
      %v1790 = vpack.c.bf16 %v1758, %v1757
      %v1791 = vpack.c.bf16 %v1760, %v1759
      %v1792 = vpack.c.bf16 %v1762, %v1761
      %v1793 = vpack.c.bf16 %v1764, %v1763
      %v1794 = vpack.c.bf16 %v1766, %v1765
      %v1795 = vpack.c.bf16 %v1768, %v1767
      %v1796 = vpack.c.bf16 %v1770, %v1769
      %v1797 = vpack.c.bf16 %v1772, %v1771
      %v1798 = vpack.c.bf16 %v1774, %v1773
      %v1799 = vpack.c.bf16 %v1776, %v1775
      %v1800 = vpack.c.bf16 %v1778, %v1777
      %v1801 = vpack.c.bf16 %v1780, %v1779
      %v1802 = vpack.c.bf16 %v1782, %v1781
      %v1803 = vpack.c.bf16 %v1784, %v1783
      %v1804 = vpack.c.bf16 %v1786, %v1785
      %v1805 = vpack.c.bf16 %v1788, %v1787
      %s1806 = scalar_lea.vmem %s1, 256
      %v1807 = vld [vmem:[%s1806] sm:$0xf]
      %v1808 = vld [vmem:[%s1806 + $0x4] sm:$0xf]
      %v1809 = vld [vmem:[%s1806 + $0x8] sm:$0xf]
      %v1810 = vld [vmem:[%s1806 + $0xc] sm:$0xf]
      %v1811 = vld [vmem:[%s1806 + $0x10] sm:$0xf]
      %v1812 = vld [vmem:[%s1806 + $0x14] sm:$0xf]
      %v1813 = vld [vmem:[%s1806 + $0x18] sm:$0xf]
      %v1814 = vld [vmem:[%s1806 + $0x1c] sm:$0xf]
      %v1815 = vld [vmem:[%s1806 + $0x20] sm:$0xf]
      %v1816 = vld [vmem:[%s1806 + $0x24] sm:$0xf]
      %v1817 = vld [vmem:[%s1806 + $0x28] sm:$0xf]
      %v1818 = vld [vmem:[%s1806 + $0x2c] sm:$0xf]
      %v1819 = vld [vmem:[%s1806 + $0x30] sm:$0xf]
      %v1820 = vld [vmem:[%s1806 + $0x34] sm:$0xf]
      %v1821 = vld [vmem:[%s1806 + $0x38] sm:$0xf]
      %v1822 = vld [vmem:[%s1806 + $0x3c] sm:$0xf]
      %v1839 = vunpack.c.l.b16 %v1807
      %v1840 = vunpack.c.l.b16 %v1808
      %v1841 = vunpack.c.l.b16 %v1809
      %v1842 = vunpack.c.l.b16 %v1810
      %v1843 = vunpack.c.l.b16 %v1811
      %v1844 = vunpack.c.l.b16 %v1812
      %v1845 = vunpack.c.l.b16 %v1813
      %v1846 = vunpack.c.l.b16 %v1814
      %v1847 = vunpack.c.l.b16 %v1815
      %v1848 = vunpack.c.l.b16 %v1816
      %v1849 = vunpack.c.l.b16 %v1817
      %v1850 = vunpack.c.l.b16 %v1818
      %v1851 = vunpack.c.l.b16 %v1819
      %v1852 = vunpack.c.l.b16 %v1820
      %v1853 = vunpack.c.l.b16 %v1821
      %v1854 = vunpack.c.l.b16 %v1822
      %v1855 = vpack.c.b16 %v1840, %v1839
      %v1856 = vpack.c.b16 %v1842, %v1841
      %v1857 = vpack.c.b16 %v1844, %v1843
      %v1858 = vpack.c.b16 %v1846, %v1845
      %v1859 = vpack.c.b16 %v1848, %v1847
      %v1860 = vpack.c.b16 %v1850, %v1849
      %v1861 = vpack.c.b16 %v1852, %v1851
      %v1862 = vpack.c.b16 %v1854, %v1853
      %1871 = vmatprep.subr.bf16.mxu0 0
      %1872 = vmatpush1.bf16.msra.mxu0 %v1855
      %1873 = vmatprep.subr.bf16.mxu0 0
      %1874 = vmatpush1.bf16.msra.mxu0 %v1856
      %1875 = vmatprep.subr.bf16.mxu0 0
      %1876 = vmatpush1.bf16.msra.mxu0 %v1857
      %1877 = vmatprep.subr.bf16.mxu0 0
      %1878 = vmatpush1.bf16.msra.mxu0 %v1858
      %1879 = vmatprep.subr.bf16.mxu0 0
      %1880 = vmatpush1.bf16.msra.mxu0 %v1859
      %1881 = vmatprep.subr.bf16.mxu0 0
      %1882 = vmatpush1.bf16.msra.mxu0 %v1860
      %1883 = vmatprep.subr.bf16.mxu0 0
      %1884 = vmatpush1.bf16.msra.mxu0 %v1861
      %1885 = vmatprep.subr.bf16.mxu0 0
      %1886 = vmatpush1.bf16.msra.mxu0 %v1862
      %1887 = vmatprep.subr.bf16.mxu0 0
      %1888 = vmatpush1.bf16.msra.mxu0 0
      %1889 = vmatprep.subr.bf16.mxu0 0
      %1890 = vmatpush1.bf16.msra.mxu0 0
      %1891 = vmatprep.subr.bf16.mxu0 0
      %1892 = vmatpush1.bf16.msra.mxu0 0
      %1893 = vmatprep.subr.bf16.mxu0 0
      %1894 = vmatpush1.bf16.msra.mxu0 0
      %1895 = vmatprep.subr.bf16.mxu0 0
      %1896 = vmatpush1.bf16.msra.mxu0 0
      %1897 = vmatprep.subr.bf16.mxu0 0
      %1898 = vmatpush1.bf16.msra.mxu0 0
      %1899 = vmatprep.subr.bf16.mxu0 0
      %1900 = vmatpush1.bf16.msra.mxu0 0
      %1901 = vmatprep.subr.bf16.mxu0 0
      %1902 = vmatpush1.bf16.msra.mxu0 0
      %1903 = vmatprep.mubr.bf16.mxu0 0
      %1904 = vmatmul.mubr.bf16.gmra.mrb[0].mxu0 %v1789
      %v1905 = vpop.f32.mrb[0].mxu0
      %v1906 = vadd.f32 0.0, %v1905
      %v1907 = vpop.f32.mrb[0].mxu0
      %v1908 = vpop.f32.mrb[0].mxu0
      %v1909 = vadd.f32 0.0, %v1908
      %v1910 = vpop.f32.mrb[0].mxu0
      %1911 = vmatprep.mubr.bf16.mxu0 0
      %1912 = vmatmul.mubr.bf16.gmra.mrb[0].mxu0 %v1790
      %v1913 = vpop.f32.mrb[0].mxu0
      %v1914 = vadd.f32 0.0, %v1913
      %v1915 = vpop.f32.mrb[0].mxu0
      %v1916 = vpop.f32.mrb[0].mxu0
      %v1917 = vadd.f32 0.0, %v1916
      %v1918 = vpop.f32.mrb[0].mxu0
      %1919 = vmatprep.mubr.bf16.mxu0 0
      %1920 = vmatmul.mubr.bf16.gmra.mrb[0].mxu0 %v1791
      %v1921 = vpop.f32.mrb[0].mxu0
      %v1922 = vadd.f32 0.0, %v1921
      %v1923 = vpop.f32.mrb[0].mxu0
      %v1924 = vpop.f32.mrb[0].mxu0
      %v1925 = vadd.f32 0.0, %v1924
      %v1926 = vpop.f32.mrb[0].mxu0
      %1927 = vmatprep.mubr.bf16.mxu0 0
      %1928 = vmatmul.mubr.bf16.gmra.mrb[0].mxu0 %v1792
      %v1929 = vpop.f32.mrb[0].mxu0
      %v1930 = vadd.f32 0.0, %v1929
      %v1931 = vpop.f32.mrb[0].mxu0
      %v1932 = vpop.f32.mrb[0].mxu0
      %v1933 = vadd.f32 0.0, %v1932
      %v1934 = vpop.f32.mrb[0].mxu0
      %1935 = vmatprep.mubr.bf16.mxu0 0
      %1936 = vmatmul.mubr.bf16.gmra.mrb[0].mxu0 %v1793
      %v1937 = vpop.f32.mrb[0].mxu0
      %v1938 = vadd.f32 0.0, %v1937
      %v1939 = vpop.f32.mrb[0].mxu0
      %v1940 = vpop.f32.mrb[0].mxu0
      %v1941 = vadd.f32 0.0, %v1940
      %v1942 = vpop.f32.mrb[0].mxu0
      %1943 = vmatprep.mubr.bf16.mxu0 0
      %1944 = vmatmul.mubr.bf16.gmra.mrb[0].mxu0 %v1794
      %v1945 = vpop.f32.mrb[0].mxu0
      %v1946 = vadd.f32 0.0, %v1945
      %v1947 = vpop.f32.mrb[0].mxu0
      %v1948 = vpop.f32.mrb[0].mxu0
      %v1949 = vadd.f32 0.0, %v1948
      %v1950 = vpop.f32.mrb[0].mxu0
      %1951 = vmatprep.mubr.bf16.mxu0 0
      %1952 = vmatmul.mubr.bf16.gmra.mrb[0].mxu0 %v1795
      %v1953 = vpop.f32.mrb[0].mxu0
      %v1954 = vadd.f32 0.0, %v1953
      %v1955 = vpop.f32.mrb[0].mxu0
      %v1956 = vpop.f32.mrb[0].mxu0
      %v1957 = vadd.f32 0.0, %v1956
      %v1958 = vpop.f32.mrb[0].mxu0
      %1959 = vmatprep.mubr.bf16.mxu0 0
      %1960 = vmatmul.mubr.bf16.gmra.mrb[0].mxu0 %v1796
      %v1961 = vpop.f32.mrb[0].mxu0
      %v1962 = vadd.f32 0.0, %v1961
      %v1963 = vpop.f32.mrb[0].mxu0
      %v1964 = vpop.f32.mrb[0].mxu0
      %v1965 = vadd.f32 0.0, %v1964
      %v1966 = vpop.f32.mrb[0].mxu0
      %1967 = vmatprep.mubr.bf16.mxu0 0
      %1968 = vmatmul.mubr.bf16.gmra.mrb[0].mxu0 %v1797
      %v1969 = vpop.f32.mrb[0].mxu0
      %v1970 = vadd.f32 0.0, %v1969
      %v1971 = vpop.f32.mrb[0].mxu0
      %v1972 = vpop.f32.mrb[0].mxu0
      %v1973 = vadd.f32 0.0, %v1972
      %v1974 = vpop.f32.mrb[0].mxu0
      %1975 = vmatprep.mubr.bf16.mxu0 0
      %1976 = vmatmul.mubr.bf16.gmra.mrb[0].mxu0 %v1798
      %v1977 = vpop.f32.mrb[0].mxu0
      %v1978 = vadd.f32 0.0, %v1977
      %v1979 = vpop.f32.mrb[0].mxu0
      %v1980 = vpop.f32.mrb[0].mxu0
      %v1981 = vadd.f32 0.0, %v1980
      %v1982 = vpop.f32.mrb[0].mxu0
      %1983 = vmatprep.mubr.bf16.mxu0 0
      %1984 = vmatmul.mubr.bf16.gmra.mrb[0].mxu0 %v1799
      %v1985 = vpop.f32.mrb[0].mxu0
      %v1986 = vadd.f32 0.0, %v1985
      %v1987 = vpop.f32.mrb[0].mxu0
      %v1988 = vpop.f32.mrb[0].mxu0
      %v1989 = vadd.f32 0.0, %v1988
      %v1990 = vpop.f32.mrb[0].mxu0
      %1991 = vmatprep.mubr.bf16.mxu0 0
      %1992 = vmatmul.mubr.bf16.gmra.mrb[0].mxu0 %v1800
      %v1993 = vpop.f32.mrb[0].mxu0
      %v1994 = vadd.f32 0.0, %v1993
      %v1995 = vpop.f32.mrb[0].mxu0
      %v1996 = vpop.f32.mrb[0].mxu0
      %v1997 = vadd.f32 0.0, %v1996
      %v1998 = vpop.f32.mrb[0].mxu0
      %1999 = vmatprep.mubr.bf16.mxu0 0
      %2000 = vmatmul.mubr.bf16.gmra.mrb[0].mxu0 %v1801
      %v2001 = vpop.f32.mrb[0].mxu0
      %v2002 = vadd.f32 0.0, %v2001
      %v2003 = vpop.f32.mrb[0].mxu0
      %v2004 = vpop.f32.mrb[0].mxu0
      %v2005 = vadd.f32 0.0, %v2004
      %v2006 = vpop.f32.mrb[0].mxu0
      %2007 = vmatprep.mubr.bf16.mxu0 0
      %2008 = vmatmul.mubr.bf16.gmra.mrb[0].mxu0 %v1802
      %v2009 = vpop.f32.mrb[0].mxu0
      %v2010 = vadd.f32 0.0, %v2009
      %v2011 = vpop.f32.mrb[0].mxu0
      %v2012 = vpop.f32.mrb[0].mxu0
      %v2013 = vadd.f32 0.0, %v2012
      %v2014 = vpop.f32.mrb[0].mxu0
      %2015 = vmatprep.mubr.bf16.mxu0 0
      %2016 = vmatmul.mubr.bf16.gmra.mrb[0].mxu0 %v1803
      %v2017 = vpop.f32.mrb[0].mxu0
      %v2018 = vadd.f32 0.0, %v2017
      %v2019 = vpop.f32.mrb[0].mxu0
      %v2020 = vpop.f32.mrb[0].mxu0
      %v2021 = vadd.f32 0.0, %v2020
      %v2022 = vpop.f32.mrb[0].mxu0
      %2023 = vmatprep.mubr.bf16.mxu0 0
      %2024 = vmatmul.mubr.bf16.gmra.mrb[0].mxu0 %v1804
      %v2025 = vpop.f32.mrb[0].mxu0
      %v2026 = vadd.f32 0.0, %v2025
      %v2027 = vpop.f32.mrb[0].mxu0
      %v2028 = vpop.f32.mrb[0].mxu0
      %v2029 = vadd.f32 0.0, %v2028
      %v2030 = vpop.f32.mrb[0].mxu0
      %2031 = vmatprep.mubr.bf16.mxu0 0
      %2032 = vmatmul.mubr.bf16.gmra.mrb[0].mxu0 %v1805
      %v2033 = vpop.f32.mrb[0].mxu0
      %v2034 = vadd.f32 0.0, %v2033
      %v2035 = vpop.f32.mrb[0].mxu0
      %v2036 = vpop.f32.mrb[0].mxu0
      %v2037 = vadd.f32 0.0, %v2036
      %v2038 = vpop.f32.mrb[0].mxu0
      %2039 = vdwg.mxu0
      %v2040 = vadd.f32 %v1721, %v1906
      %v2041 = vadd.f32 %v1722, %v1909
      %v2042 = vadd.f32 %v1723, %v1914
      %v2043 = vadd.f32 %v1724, %v1917
      %v2044 = vadd.f32 %v1725, %v1922
      %v2045 = vadd.f32 %v1726, %v1925
      %v2046 = vadd.f32 %v1727, %v1930
      %v2047 = vadd.f32 %v1728, %v1933
      %v2048 = vadd.f32 %v1729, %v1938
      %v2049 = vadd.f32 %v1730, %v1941
      %v2050 = vadd.f32 %v1731, %v1946
      %v2051 = vadd.f32 %v1732, %v1949
      %v2052 = vadd.f32 %v1733, %v1954
      %v2053 = vadd.f32 %v1734, %v1957
      %v2054 = vadd.f32 %v1735, %v1962
      %v2055 = vadd.f32 %v1736, %v1965
      %v2056 = vadd.f32 %v1737, %v1970
      %v2057 = vadd.f32 %v1738, %v1973
      %v2058 = vadd.f32 %v1739, %v1978
      %v2059 = vadd.f32 %v1740, %v1981
      %v2060 = vadd.f32 %v1741, %v1986
      %v2061 = vadd.f32 %v1742, %v1989
      %v2062 = vadd.f32 %v1743, %v1994
      %v2063 = vadd.f32 %v1744, %v1997
      %v2064 = vadd.f32 %v1745, %v2002
      %v2065 = vadd.f32 %v1746, %v2005
      %v2066 = vadd.f32 %v1747, %v2010
      %v2067 = vadd.f32 %v1748, %v2013
      %v2068 = vadd.f32 %v1749, %v2018
      %v2069 = vadd.f32 %v1750, %v2021
      %v2070 = vadd.f32 %v1751, %v2026
      %v2071 = vadd.f32 %v1752, %v2029
      %v2072 = vadd.f32 %v1753, %v2034
      %v2073 = vadd.f32 %v1754, %v2037
      %v2074 = vld [vmem:[%s543 + $0x14] sm:$0xff]
      %v2075 = vld [vmem:[%s543 + $0x1c] sm:$0xff]
      %v2076 = vld [vmem:[%s543 + $0x24] sm:$0xff]
      %v2077 = vld [vmem:[%s543 + $0x2c] sm:$0xff]
      %v2078 = vld [vmem:[%s543 + $0x34] sm:$0xff]
      %v2079 = vld [vmem:[%s543 + $0x3c] sm:$0xff]
      %v2080 = vld [vmem:[%s543 + $0x44] sm:$0xff]
      %v2081 = vld [vmem:[%s543 + $0x4c] sm:$0xff]
      %v2082 = vld [vmem:[%s543 + $0x54] sm:$0xff]
      %v2083 = vld [vmem:[%s543 + $0x5c] sm:$0xff]
      %v2084 = vld [vmem:[%s543 + $0x64] sm:$0xff]
      %v2085 = vld [vmem:[%s543 + $0x6c] sm:$0xff]
      %v2086 = vld [vmem:[%s543 + $0x74] sm:$0xff]
      %v2087 = vld [vmem:[%s543 + $0x7c] sm:$0xff]
      %v2088 = vld [vmem:[%s543 + $0x84] sm:$0xff]
      %v2089 = vld [vmem:[%s543 + $0x8c] sm:$0xff]
      %v2090 = vld [vmem:[%s543 + $0x94] sm:$0xff]
      %v2091 = vld [vmem:[%s543 + $0x9c] sm:$0xff]
      %v2092 = vld [vmem:[%s543 + $0xa4] sm:$0xff]
      %v2093 = vld [vmem:[%s543 + $0xac] sm:$0xff]
      %v2094 = vld [vmem:[%s543 + $0xb4] sm:$0xff]
      %v2095 = vld [vmem:[%s543 + $0xbc] sm:$0xff]
      %v2096 = vld [vmem:[%s543 + $0xc4] sm:$0xff]
      %v2097 = vld [vmem:[%s543 + $0xcc] sm:$0xff]
      %v2098 = vld [vmem:[%s543 + $0xd4] sm:$0xff]
      %v2099 = vld [vmem:[%s543 + $0xdc] sm:$0xff]
      %v2100 = vld [vmem:[%s543 + $0xe4] sm:$0xff]
      %v2101 = vld [vmem:[%s543 + $0xec] sm:$0xff]
      %v2102 = vld [vmem:[%s543 + $0xf4] sm:$0xff]
      %v2103 = vld [vmem:[%s543 + $0xfc] sm:$0xff]
      %v2104 = vld [vmem:[%s543 + $0x104] sm:$0xff]
      %v2105 = vld [vmem:[%s543 + $0x10c] sm:$0xff]
      %v2106 = vld [vmem:[%s543 + $0x114] sm:$0xff]
      %v2107 = vld [vmem:[%s543 + $0x11c] sm:$0x7]
      %v2108 = vpack.c.bf16 %v2075, %v2074
      %v2109 = vpack.c.bf16 %v2077, %v2076
      %v2110 = vpack.c.bf16 %v2079, %v2078
      %v2111 = vpack.c.bf16 %v2081, %v2080
      %v2112 = vpack.c.bf16 %v2083, %v2082
      %v2113 = vpack.c.bf16 %v2085, %v2084
      %v2114 = vpack.c.bf16 %v2087, %v2086
      %v2115 = vpack.c.bf16 %v2089, %v2088
      %v2116 = vpack.c.bf16 %v2091, %v2090
      %v2117 = vpack.c.bf16 %v2093, %v2092
      %v2118 = vpack.c.bf16 %v2095, %v2094
      %v2119 = vpack.c.bf16 %v2097, %v2096
      %v2120 = vpack.c.bf16 %v2099, %v2098
      %v2121 = vpack.c.bf16 %v2101, %v2100
      %v2122 = vpack.c.bf16 %v2103, %v2102
      %v2123 = vpack.c.bf16 %v2105, %v2104
      %v2124 = vpack.c.bf16 %v2107, %v2106
      %s2125 = scalar_lea.vmem %s1, 320
      %v2126 = vld [vmem:[%s2125] sm:$0xf]
      %v2127 = vld [vmem:[%s2125 + $0x4] sm:$0xf]
      %v2128 = vld [vmem:[%s2125 + $0x8] sm:$0xf]
      %v2129 = vld [vmem:[%s2125 + $0xc] sm:$0xf]
      %v2130 = vld [vmem:[%s2125 + $0x10] sm:$0xf]
      %v2131 = vld [vmem:[%s2125 + $0x14] sm:$0xf]
      %v2132 = vld [vmem:[%s2125 + $0x18] sm:$0xf]
      %v2133 = vld [vmem:[%s2125 + $0x1c] sm:$0xf]
      %v2134 = vld [vmem:[%s2125 + $0x20] sm:$0xf]
      %v2135 = vld [vmem:[%s2125 + $0x24] sm:$0xf]
      %v2136 = vld [vmem:[%s2125 + $0x28] sm:$0xf]
      %v2137 = vld [vmem:[%s2125 + $0x2c] sm:$0xf]
      %v2138 = vld [vmem:[%s2125 + $0x30] sm:$0xf]
      %v2139 = vld [vmem:[%s2125 + $0x34] sm:$0xf]
      %v2140 = vld [vmem:[%s2125 + $0x38] sm:$0xf]
      %v2141 = vld [vmem:[%s2125 + $0x3c] sm:$0xf]
      %v2158 = vunpack.c.l.b16 %v2126
      %v2159 = vunpack.c.l.b16 %v2127
      %v2160 = vunpack.c.l.b16 %v2128
      %v2161 = vunpack.c.l.b16 %v2129
      %v2162 = vunpack.c.l.b16 %v2130
      %v2163 = vunpack.c.l.b16 %v2131
      %v2164 = vunpack.c.l.b16 %v2132
      %v2165 = vunpack.c.l.b16 %v2133
      %v2166 = vunpack.c.l.b16 %v2134
      %v2167 = vunpack.c.l.b16 %v2135
      %v2168 = vunpack.c.l.b16 %v2136
      %v2169 = vunpack.c.l.b16 %v2137
      %v2170 = vunpack.c.l.b16 %v2138
      %v2171 = vunpack.c.l.b16 %v2139
      %v2172 = vunpack.c.l.b16 %v2140
      %v2173 = vunpack.c.l.b16 %v2141
      %v2174 = vpack.c.b16 %v2159, %v2158
      %v2175 = vpack.c.b16 %v2161, %v2160
      %v2176 = vpack.c.b16 %v2163, %v2162
      %v2177 = vpack.c.b16 %v2165, %v2164
      %v2178 = vpack.c.b16 %v2167, %v2166
      %v2179 = vpack.c.b16 %v2169, %v2168
      %v2180 = vpack.c.b16 %v2171, %v2170
      %v2181 = vpack.c.b16 %v2173, %v2172
      %2190 = vmatprep.subr.bf16.mxu0 0
      %2191 = vmatpush1.bf16.msra.mxu0 %v2174
      %2192 = vmatprep.subr.bf16.mxu0 0
      %2193 = vmatpush1.bf16.msra.mxu0 %v2175
      %2194 = vmatprep.subr.bf16.mxu0 0
      %2195 = vmatpush1.bf16.msra.mxu0 %v2176
      %2196 = vmatprep.subr.bf16.mxu0 0
      %2197 = vmatpush1.bf16.msra.mxu0 %v2177
      %2198 = vmatprep.subr.bf16.mxu0 0
      %2199 = vmatpush1.bf16.msra.mxu0 %v2178
      %2200 = vmatprep.subr.bf16.mxu0 0
      %2201 = vmatpush1.bf16.msra.mxu0 %v2179
      %2202 = vmatprep.subr.bf16.mxu0 0
      %2203 = vmatpush1.bf16.msra.mxu0 %v2180
      %2204 = vmatprep.subr.bf16.mxu0 0
      %2205 = vmatpush1.bf16.msra.mxu0 %v2181
      %2206 = vmatprep.subr.bf16.mxu0 0
      %2207 = vmatpush1.bf16.msra.mxu0 0
      %2208 = vmatprep.subr.bf16.mxu0 0
      %2209 = vmatpush1.bf16.msra.mxu0 0
      %2210 = vmatprep.subr.bf16.mxu0 0
      %2211 = vmatpush1.bf16.msra.mxu0 0
      %2212 = vmatprep.subr.bf16.mxu0 0
      %2213 = vmatpush1.bf16.msra.mxu0 0
      %2214 = vmatprep.subr.bf16.mxu0 0
      %2215 = vmatpush1.bf16.msra.mxu0 0
      %2216 = vmatprep.subr.bf16.mxu0 0
      %2217 = vmatpush1.bf16.msra.mxu0 0
      %2218 = vmatprep.subr.bf16.mxu0 0
      %2219 = vmatpush1.bf16.msra.mxu0 0
      %2220 = vmatprep.subr.bf16.mxu0 0
      %2221 = vmatpush1.bf16.msra.mxu0 0
      %2222 = vmatprep.mubr.bf16.mxu0 0
      %2223 = vmatmul.mubr.bf16.gmra.mrb[0].mxu0 %v2108
      %v2224 = vpop.f32.mrb[0].mxu0
      %v2225 = vadd.f32 0.0, %v2224
      %v2226 = vpop.f32.mrb[0].mxu0
      %v2227 = vpop.f32.mrb[0].mxu0
      %v2228 = vadd.f32 0.0, %v2227
      %v2229 = vpop.f32.mrb[0].mxu0
      %2230 = vmatprep.mubr.bf16.mxu0 0
      %2231 = vmatmul.mubr.bf16.gmra.mrb[0].mxu0 %v2109
      %v2232 = vpop.f32.mrb[0].mxu0
      %v2233 = vadd.f32 0.0, %v2232
      %v2234 = vpop.f32.mrb[0].mxu0
      %v2235 = vpop.f32.mrb[0].mxu0
      %v2236 = vadd.f32 0.0, %v2235
      %v2237 = vpop.f32.mrb[0].mxu0
      %2238 = vmatprep.mubr.bf16.mxu0 0
      %2239 = vmatmul.mubr.bf16.gmra.mrb[0].mxu0 %v2110
      %v2240 = vpop.f32.mrb[0].mxu0
      %v2241 = vadd.f32 0.0, %v2240
      %v2242 = vpop.f32.mrb[0].mxu0
      %v2243 = vpop.f32.mrb[0].mxu0
      %v2244 = vadd.f32 0.0, %v2243
      %v2245 = vpop.f32.mrb[0].mxu0
      %2246 = vmatprep.mubr.bf16.mxu0 0
      %2247 = vmatmul.mubr.bf16.gmra.mrb[0].mxu0 %v2111
      %v2248 = vpop.f32.mrb[0].mxu0
      %v2249 = vadd.f32 0.0, %v2248
      %v2250 = vpop.f32.mrb[0].mxu0
      %v2251 = vpop.f32.mrb[0].mxu0
      %v2252 = vadd.f32 0.0, %v2251
      %v2253 = vpop.f32.mrb[0].mxu0
      %2254 = vmatprep.mubr.bf16.mxu0 0
      %2255 = vmatmul.mubr.bf16.gmra.mrb[0].mxu0 %v2112
      %v2256 = vpop.f32.mrb[0].mxu0
      %v2257 = vadd.f32 0.0, %v2256
      %v2258 = vpop.f32.mrb[0].mxu0
      %v2259 = vpop.f32.mrb[0].mxu0
      %v2260 = vadd.f32 0.0, %v2259
      %v2261 = vpop.f32.mrb[0].mxu0
      %2262 = vmatprep.mubr.bf16.mxu0 0
      %2263 = vmatmul.mubr.bf16.gmra.mrb[0].mxu0 %v2113
      %v2264 = vpop.f32.mrb[0].mxu0
      %v2265 = vadd.f32 0.0, %v2264
      %v2266 = vpop.f32.mrb[0].mxu0
      %v2267 = vpop.f32.mrb[0].mxu0
      %v2268 = vadd.f32 0.0, %v2267
      %v2269 = vpop.f32.mrb[0].mxu0
      %2270 = vmatprep.mubr.bf16.mxu0 0
      %2271 = vmatmul.mubr.bf16.gmra.mrb[0].mxu0 %v2114
      %v2272 = vpop.f32.mrb[0].mxu0
      %v2273 = vadd.f32 0.0, %v2272
      %v2274 = vpop.f32.mrb[0].mxu0
      %v2275 = vpop.f32.mrb[0].mxu0
      %v2276 = vadd.f32 0.0, %v2275
      %v2277 = vpop.f32.mrb[0].mxu0
      %2278 = vmatprep.mubr.bf16.mxu0 0
      %2279 = vmatmul.mubr.bf16.gmra.mrb[0].mxu0 %v2115
      %v2280 = vpop.f32.mrb[0].mxu0
      %v2281 = vadd.f32 0.0, %v2280
      %v2282 = vpop.f32.mrb[0].mxu0
      %v2283 = vpop.f32.mrb[0].mxu0
      %v2284 = vadd.f32 0.0, %v2283
      %v2285 = vpop.f32.mrb[0].mxu0
      %2286 = vmatprep.mubr.bf16.mxu0 0
      %2287 = vmatmul.mubr.bf16.gmra.mrb[0].mxu0 %v2116
      %v2288 = vpop.f32.mrb[0].mxu0
      %v2289 = vadd.f32 0.0, %v2288
      %v2290 = vpop.f32.mrb[0].mxu0
      %v2291 = vpop.f32.mrb[0].mxu0
      %v2292 = vadd.f32 0.0, %v2291
      %v2293 = vpop.f32.mrb[0].mxu0
      %2294 = vmatprep.mubr.bf16.mxu0 0
      %2295 = vmatmul.mubr.bf16.gmra.mrb[0].mxu0 %v2117
      %v2296 = vpop.f32.mrb[0].mxu0
      %v2297 = vadd.f32 0.0, %v2296
      %v2298 = vpop.f32.mrb[0].mxu0
      %v2299 = vpop.f32.mrb[0].mxu0
      %v2300 = vadd.f32 0.0, %v2299
      %v2301 = vpop.f32.mrb[0].mxu0
      %2302 = vmatprep.mubr.bf16.mxu0 0
      %2303 = vmatmul.mubr.bf16.gmra.mrb[0].mxu0 %v2118
      %v2304 = vpop.f32.mrb[0].mxu0
      %v2305 = vadd.f32 0.0, %v2304
      %v2306 = vpop.f32.mrb[0].mxu0
      %v2307 = vpop.f32.mrb[0].mxu0
      %v2308 = vadd.f32 0.0, %v2307
      %v2309 = vpop.f32.mrb[0].mxu0
      %2310 = vmatprep.mubr.bf16.mxu0 0
      %2311 = vmatmul.mubr.bf16.gmra.mrb[0].mxu0 %v2119
      %v2312 = vpop.f32.mrb[0].mxu0
      %v2313 = vadd.f32 0.0, %v2312
      %v2314 = vpop.f32.mrb[0].mxu0
      %v2315 = vpop.f32.mrb[0].mxu0
      %v2316 = vadd.f32 0.0, %v2315
      %v2317 = vpop.f32.mrb[0].mxu0
      %2318 = vmatprep.mubr.bf16.mxu0 0
      %2319 = vmatmul.mubr.bf16.gmra.mrb[0].mxu0 %v2120
      %v2320 = vpop.f32.mrb[0].mxu0
      %v2321 = vadd.f32 0.0, %v2320
      %v2322 = vpop.f32.mrb[0].mxu0
      %v2323 = vpop.f32.mrb[0].mxu0
      %v2324 = vadd.f32 0.0, %v2323
      %v2325 = vpop.f32.mrb[0].mxu0
      %2326 = vmatprep.mubr.bf16.mxu0 0
      %2327 = vmatmul.mubr.bf16.gmra.mrb[0].mxu0 %v2121
      %v2328 = vpop.f32.mrb[0].mxu0
      %v2329 = vadd.f32 0.0, %v2328
      %v2330 = vpop.f32.mrb[0].mxu0
      %v2331 = vpop.f32.mrb[0].mxu0
      %v2332 = vadd.f32 0.0, %v2331
      %v2333 = vpop.f32.mrb[0].mxu0
      %2334 = vmatprep.mubr.bf16.mxu0 0
      %2335 = vmatmul.mubr.bf16.gmra.mrb[0].mxu0 %v2122
      %v2336 = vpop.f32.mrb[0].mxu0
      %v2337 = vadd.f32 0.0, %v2336
      %v2338 = vpop.f32.mrb[0].mxu0
      %v2339 = vpop.f32.mrb[0].mxu0
      %v2340 = vadd.f32 0.0, %v2339
      %v2341 = vpop.f32.mrb[0].mxu0
      %2342 = vmatprep.mubr.bf16.mxu0 0
      %2343 = vmatmul.mubr.bf16.gmra.mrb[0].mxu0 %v2123
      %v2344 = vpop.f32.mrb[0].mxu0
      %v2345 = vadd.f32 0.0, %v2344
      %v2346 = vpop.f32.mrb[0].mxu0
      %v2347 = vpop.f32.mrb[0].mxu0
      %v2348 = vadd.f32 0.0, %v2347
      %v2349 = vpop.f32.mrb[0].mxu0
      %2350 = vmatprep.mubr.bf16.mxu0 0
      %2351 = vmatmul.mubr.bf16.gmra.mrb[0].mxu0 %v2124
      %v2352 = vpop.f32.mrb[0].mxu0
      %v2353 = vadd.f32 0.0, %v2352
      %v2354 = vpop.f32.mrb[0].mxu0
      %v2355 = vpop.f32.mrb[0].mxu0
      %v2356 = vadd.f32 0.0, %v2355
      %v2357 = vpop.f32.mrb[0].mxu0
      %2358 = vdwg.mxu0
      %v2359 = vadd.f32 %v2040, %v2225
      %v2360 = vadd.f32 %v2041, %v2228
      %v2361 = vadd.f32 %v2042, %v2233
      %v2362 = vadd.f32 %v2043, %v2236
      %v2363 = vadd.f32 %v2044, %v2241
      %v2364 = vadd.f32 %v2045, %v2244
      %v2365 = vadd.f32 %v2046, %v2249
      %v2366 = vadd.f32 %v2047, %v2252
      %v2367 = vadd.f32 %v2048, %v2257
      %v2368 = vadd.f32 %v2049, %v2260
      %v2369 = vadd.f32 %v2050, %v2265
      %v2370 = vadd.f32 %v2051, %v2268
      %v2371 = vadd.f32 %v2052, %v2273
      %v2372 = vadd.f32 %v2053, %v2276
      %v2373 = vadd.f32 %v2054, %v2281
      %v2374 = vadd.f32 %v2055, %v2284
      %v2375 = vadd.f32 %v2056, %v2289
      %v2376 = vadd.f32 %v2057, %v2292
      %v2377 = vadd.f32 %v2058, %v2297
      %v2378 = vadd.f32 %v2059, %v2300
      %v2379 = vadd.f32 %v2060, %v2305
      %v2380 = vadd.f32 %v2061, %v2308
      %v2381 = vadd.f32 %v2062, %v2313
      %v2382 = vadd.f32 %v2063, %v2316
      %v2383 = vadd.f32 %v2064, %v2321
      %v2384 = vadd.f32 %v2065, %v2324
      %v2385 = vadd.f32 %v2066, %v2329
      %v2386 = vadd.f32 %v2067, %v2332
      %v2387 = vadd.f32 %v2068, %v2337
      %v2388 = vadd.f32 %v2069, %v2340
      %v2389 = vadd.f32 %v2070, %v2345
      %v2390 = vadd.f32 %v2071, %v2348
      %v2391 = vadd.f32 %v2072, %v2353
      %v2392 = vadd.f32 %v2073, %v2356
      %v2393 = vld [vmem:[%s543 + $0x24] sm:$0xff]
      %v2394 = vld [vmem:[%s543 + $0x2c] sm:$0xff]
      %v2395 = vld [vmem:[%s543 + $0x34] sm:$0xff]
      %v2396 = vld [vmem:[%s543 + $0x3c] sm:$0xff]
      %v2397 = vld [vmem:[%s543 + $0x44] sm:$0xff]
      %v2398 = vld [vmem:[%s543 + $0x4c] sm:$0xff]
      %v2399 = vld [vmem:[%s543 + $0x54] sm:$0xff]
      %v2400 = vld [vmem:[%s543 + $0x5c] sm:$0xff]
      %v2401 = vld [vmem:[%s543 + $0x64] sm:$0xff]
      %v2402 = vld [vmem:[%s543 + $0x6c] sm:$0xff]
      %v2403 = vld [vmem:[%s543 + $0x74] sm:$0xff]
      %v2404 = vld [vmem:[%s543 + $0x7c] sm:$0xff]
      %v2405 = vld [vmem:[%s543 + $0x84] sm:$0xff]
      %v2406 = vld [vmem:[%s543 + $0x8c] sm:$0xff]
      %v2407 = vld [vmem:[%s543 + $0x94] sm:$0xff]
      %v2408 = vld [vmem:[%s543 + $0x9c] sm:$0xff]
      %v2409 = vld [vmem:[%s543 + $0xa4] sm:$0xff]
      %v2410 = vld [vmem:[%s543 + $0xac] sm:$0xff]
      %v2411 = vld [vmem:[%s543 + $0xb4] sm:$0xff]
      %v2412 = vld [vmem:[%s543 + $0xbc] sm:$0xff]
      %v2413 = vld [vmem:[%s543 + $0xc4] sm:$0xff]
      %v2414 = vld [vmem:[%s543 + $0xcc] sm:$0xff]
      %v2415 = vld [vmem:[%s543 + $0xd4] sm:$0xff]
      %v2416 = vld [vmem:[%s543 + $0xdc] sm:$0xff]
      %v2417 = vld [vmem:[%s543 + $0xe4] sm:$0xff]
      %v2418 = vld [vmem:[%s543 + $0xec] sm:$0xff]
      %v2419 = vld [vmem:[%s543 + $0xf4] sm:$0xff]
      %v2420 = vld [vmem:[%s543 + $0xfc] sm:$0xff]
      %v2421 = vld [vmem:[%s543 + $0x104] sm:$0xff]
      %v2422 = vld [vmem:[%s543 + $0x10c] sm:$0xff]
      %v2423 = vld [vmem:[%s543 + $0x114] sm:$0xff]
      %v2424 = vld [vmem:[%s543 + $0x11c] sm:$0xff]
      %v2425 = vld [vmem:[%s543 + $0x124] sm:$0xff]
      %v2426 = vld [vmem:[%s543 + $0x12c] sm:$0x7]
      %v2427 = vpack.c.bf16 %v2394, %v2393
      %v2428 = vpack.c.bf16 %v2396, %v2395
      %v2429 = vpack.c.bf16 %v2398, %v2397
      %v2430 = vpack.c.bf16 %v2400, %v2399
      %v2431 = vpack.c.bf16 %v2402, %v2401
      %v2432 = vpack.c.bf16 %v2404, %v2403
      %v2433 = vpack.c.bf16 %v2406, %v2405
      %v2434 = vpack.c.bf16 %v2408, %v2407
      %v2435 = vpack.c.bf16 %v2410, %v2409
      %v2436 = vpack.c.bf16 %v2412, %v2411
      %v2437 = vpack.c.bf16 %v2414, %v2413
      %v2438 = vpack.c.bf16 %v2416, %v2415
      %v2439 = vpack.c.bf16 %v2418, %v2417
      %v2440 = vpack.c.bf16 %v2420, %v2419
      %v2441 = vpack.c.bf16 %v2422, %v2421
      %v2442 = vpack.c.bf16 %v2424, %v2423
      %v2443 = vpack.c.bf16 %v2426, %v2425
      %s2444 = scalar_lea.vmem %s1, 384
      %v2445 = vld [vmem:[%s2444] sm:$0xf]
      %v2446 = vld [vmem:[%s2444 + $0x4] sm:$0xf]
      %v2447 = vld [vmem:[%s2444 + $0x8] sm:$0xf]
      %v2448 = vld [vmem:[%s2444 + $0xc] sm:$0xf]
      %v2449 = vld [vmem:[%s2444 + $0x10] sm:$0xf]
      %v2450 = vld [vmem:[%s2444 + $0x14] sm:$0xf]
      %v2451 = vld [vmem:[%s2444 + $0x18] sm:$0xf]
      %v2452 = vld [vmem:[%s2444 + $0x1c] sm:$0xf]
      %v2453 = vld [vmem:[%s2444 + $0x20] sm:$0xf]
      %v2454 = vld [vmem:[%s2444 + $0x24] sm:$0xf]
      %v2455 = vld [vmem:[%s2444 + $0x28] sm:$0xf]
      %v2456 = vld [vmem:[%s2444 + $0x2c] sm:$0xf]
      %v2457 = vld [vmem:[%s2444 + $0x30] sm:$0xf]
      %v2458 = vld [vmem:[%s2444 + $0x34] sm:$0xf]
      %v2459 = vld [vmem:[%s2444 + $0x38] sm:$0xf]
      %v2460 = vld [vmem:[%s2444 + $0x3c] sm:$0xf]
      %v2477 = vunpack.c.l.b16 %v2445
      %v2478 = vunpack.c.l.b16 %v2446
      %v2479 = vunpack.c.l.b16 %v2447
      %v2480 = vunpack.c.l.b16 %v2448
      %v2481 = vunpack.c.l.b16 %v2449
      %v2482 = vunpack.c.l.b16 %v2450
      %v2483 = vunpack.c.l.b16 %v2451
      %v2484 = vunpack.c.l.b16 %v2452
      %v2485 = vunpack.c.l.b16 %v2453
      %v2486 = vunpack.c.l.b16 %v2454
      %v2487 = vunpack.c.l.b16 %v2455
      %v2488 = vunpack.c.l.b16 %v2456
      %v2489 = vunpack.c.l.b16 %v2457
      %v2490 = vunpack.c.l.b16 %v2458
      %v2491 = vunpack.c.l.b16 %v2459
      %v2492 = vunpack.c.l.b16 %v2460
      %v2493 = vpack.c.b16 %v2478, %v2477
      %v2494 = vpack.c.b16 %v2480, %v2479
      %v2495 = vpack.c.b16 %v2482, %v2481
      %v2496 = vpack.c.b16 %v2484, %v2483
      %v2497 = vpack.c.b16 %v2486, %v2485
      %v2498 = vpack.c.b16 %v2488, %v2487
      %v2499 = vpack.c.b16 %v2490, %v2489
      %v2500 = vpack.c.b16 %v2492, %v2491
      %2509 = vmatprep.subr.bf16.mxu0 0
      %2510 = vmatpush1.bf16.msra.mxu0 %v2493
      %2511 = vmatprep.subr.bf16.mxu0 0
      %2512 = vmatpush1.bf16.msra.mxu0 %v2494
      %2513 = vmatprep.subr.bf16.mxu0 0
      %2514 = vmatpush1.bf16.msra.mxu0 %v2495
      %2515 = vmatprep.subr.bf16.mxu0 0
      %2516 = vmatpush1.bf16.msra.mxu0 %v2496
      %2517 = vmatprep.subr.bf16.mxu0 0
      %2518 = vmatpush1.bf16.msra.mxu0 %v2497
      %2519 = vmatprep.subr.bf16.mxu0 0
      %2520 = vmatpush1.bf16.msra.mxu0 %v2498
      %2521 = vmatprep.subr.bf16.mxu0 0
      %2522 = vmatpush1.bf16.msra.mxu0 %v2499
      %2523 = vmatprep.subr.bf16.mxu0 0
      %2524 = vmatpush1.bf16.msra.mxu0 %v2500
      %2525 = vmatprep.subr.bf16.mxu0 0
      %2526 = vmatpush1.bf16.msra.mxu0 0
      %2527 = vmatprep.subr.bf16.mxu0 0
      %2528 = vmatpush1.bf16.msra.mxu0 0
      %2529 = vmatprep.subr.bf16.mxu0 0
      %2530 = vmatpush1.bf16.msra.mxu0 0
      %2531 = vmatprep.subr.bf16.mxu0 0
      %2532 = vmatpush1.bf16.msra.mxu0 0
      %2533 = vmatprep.subr.bf16.mxu0 0
      %2534 = vmatpush1.bf16.msra.mxu0 0
      %2535 = vmatprep.subr.bf16.mxu0 0
      %2536 = vmatpush1.bf16.msra.mxu0 0
      %2537 = vmatprep.subr.bf16.mxu0 0
      %2538 = vmatpush1.bf16.msra.mxu0 0
      %2539 = vmatprep.subr.bf16.mxu0 0
      %2540 = vmatpush1.bf16.msra.mxu0 0
      %2541 = vmatprep.mubr.bf16.mxu0 0
      %2542 = vmatmul.mubr.bf16.gmra.mrb[0].mxu0 %v2427
      %v2543 = vpop.f32.mrb[0].mxu0
      %v2544 = vadd.f32 0.0, %v2543
      %v2545 = vpop.f32.mrb[0].mxu0
      %v2546 = vpop.f32.mrb[0].mxu0
      %v2547 = vadd.f32 0.0, %v2546
      %v2548 = vpop.f32.mrb[0].mxu0
      %2549 = vmatprep.mubr.bf16.mxu0 0
      %2550 = vmatmul.mubr.bf16.gmra.mrb[0].mxu0 %v2428
      %v2551 = vpop.f32.mrb[0].mxu0
      %v2552 = vadd.f32 0.0, %v2551
      %v2553 = vpop.f32.mrb[0].mxu0
      %v2554 = vpop.f32.mrb[0].mxu0
      %v2555 = vadd.f32 0.0, %v2554
      %v2556 = vpop.f32.mrb[0].mxu0
      %2557 = vmatprep.mubr.bf16.mxu0 0
      %2558 = vmatmul.mubr.bf16.gmra.mrb[0].mxu0 %v2429
      %v2559 = vpop.f32.mrb[0].mxu0
      %v2560 = vadd.f32 0.0, %v2559
      %v2561 = vpop.f32.mrb[0].mxu0
      %v2562 = vpop.f32.mrb[0].mxu0
      %v2563 = vadd.f32 0.0, %v2562
      %v2564 = vpop.f32.mrb[0].mxu0
      %2565 = vmatprep.mubr.bf16.mxu0 0
      %2566 = vmatmul.mubr.bf16.gmra.mrb[0].mxu0 %v2430
      %v2567 = vpop.f32.mrb[0].mxu0
      %v2568 = vadd.f32 0.0, %v2567
      %v2569 = vpop.f32.mrb[0].mxu0
      %v2570 = vpop.f32.mrb[0].mxu0
      %v2571 = vadd.f32 0.0, %v2570
      %v2572 = vpop.f32.mrb[0].mxu0
      %2573 = vmatprep.mubr.bf16.mxu0 0
      %2574 = vmatmul.mubr.bf16.gmra.mrb[0].mxu0 %v2431
      %v2575 = vpop.f32.mrb[0].mxu0
      %v2576 = vadd.f32 0.0, %v2575
      %v2577 = vpop.f32.mrb[0].mxu0
      %v2578 = vpop.f32.mrb[0].mxu0
      %v2579 = vadd.f32 0.0, %v2578
      %v2580 = vpop.f32.mrb[0].mxu0
      %2581 = vmatprep.mubr.bf16.mxu0 0
      %2582 = vmatmul.mubr.bf16.gmra.mrb[0].mxu0 %v2432
      %v2583 = vpop.f32.mrb[0].mxu0
      %v2584 = vadd.f32 0.0, %v2583
      %v2585 = vpop.f32.mrb[0].mxu0
      %v2586 = vpop.f32.mrb[0].mxu0
      %v2587 = vadd.f32 0.0, %v2586
      %v2588 = vpop.f32.mrb[0].mxu0
      %2589 = vmatprep.mubr.bf16.mxu0 0
      %2590 = vmatmul.mubr.bf16.gmra.mrb[0].mxu0 %v2433
      %v2591 = vpop.f32.mrb[0].mxu0
      %v2592 = vadd.f32 0.0, %v2591
      %v2593 = vpop.f32.mrb[0].mxu0
      %v2594 = vpop.f32.mrb[0].mxu0
      %v2595 = vadd.f32 0.0, %v2594
      %v2596 = vpop.f32.mrb[0].mxu0
      %2597 = vmatprep.mubr.bf16.mxu0 0
      %2598 = vmatmul.mubr.bf16.gmra.mrb[0].mxu0 %v2434
      %v2599 = vpop.f32.mrb[0].mxu0
      %v2600 = vadd.f32 0.0, %v2599
      %v2601 = vpop.f32.mrb[0].mxu0
      %v2602 = vpop.f32.mrb[0].mxu0
      %v2603 = vadd.f32 0.0, %v2602
      %v2604 = vpop.f32.mrb[0].mxu0
      %2605 = vmatprep.mubr.bf16.mxu0 0
      %2606 = vmatmul.mubr.bf16.gmra.mrb[0].mxu0 %v2435
      %v2607 = vpop.f32.mrb[0].mxu0
      %v2608 = vadd.f32 0.0, %v2607
      %v2609 = vpop.f32.mrb[0].mxu0
      %v2610 = vpop.f32.mrb[0].mxu0
      %v2611 = vadd.f32 0.0, %v2610
      %v2612 = vpop.f32.mrb[0].mxu0
      %2613 = vmatprep.mubr.bf16.mxu0 0
      %2614 = vmatmul.mubr.bf16.gmra.mrb[0].mxu0 %v2436
      %v2615 = vpop.f32.mrb[0].mxu0
      %v2616 = vadd.f32 0.0, %v2615
      %v2617 = vpop.f32.mrb[0].mxu0
      %v2618 = vpop.f32.mrb[0].mxu0
      %v2619 = vadd.f32 0.0, %v2618
      %v2620 = vpop.f32.mrb[0].mxu0
      %2621 = vmatprep.mubr.bf16.mxu0 0
      %2622 = vmatmul.mubr.bf16.gmra.mrb[0].mxu0 %v2437
      %v2623 = vpop.f32.mrb[0].mxu0
      %v2624 = vadd.f32 0.0, %v2623
      %v2625 = vpop.f32.mrb[0].mxu0
      %v2626 = vpop.f32.mrb[0].mxu0
      %v2627 = vadd.f32 0.0, %v2626
      %v2628 = vpop.f32.mrb[0].mxu0
      %2629 = vmatprep.mubr.bf16.mxu0 0
      %2630 = vmatmul.mubr.bf16.gmra.mrb[0].mxu0 %v2438
      %v2631 = vpop.f32.mrb[0].mxu0
      %v2632 = vadd.f32 0.0, %v2631
      %v2633 = vpop.f32.mrb[0].mxu0
      %v2634 = vpop.f32.mrb[0].mxu0
      %v2635 = vadd.f32 0.0, %v2634
      %v2636 = vpop.f32.mrb[0].mxu0
      %2637 = vmatprep.mubr.bf16.mxu0 0
      %2638 = vmatmul.mubr.bf16.gmra.mrb[0].mxu0 %v2439
      %v2639 = vpop.f32.mrb[0].mxu0
      %v2640 = vadd.f32 0.0, %v2639
      %v2641 = vpop.f32.mrb[0].mxu0
      %v2642 = vpop.f32.mrb[0].mxu0
      %v2643 = vadd.f32 0.0, %v2642
      %v2644 = vpop.f32.mrb[0].mxu0
      %2645 = vmatprep.mubr.bf16.mxu0 0
      %2646 = vmatmul.mubr.bf16.gmra.mrb[0].mxu0 %v2440
      %v2647 = vpop.f32.mrb[0].mxu0
      %v2648 = vadd.f32 0.0, %v2647
      %v2649 = vpop.f32.mrb[0].mxu0
      %v2650 = vpop.f32.mrb[0].mxu0
      %v2651 = vadd.f32 0.0, %v2650
      %v2652 = vpop.f32.mrb[0].mxu0
      %2653 = vmatprep.mubr.bf16.mxu0 0
      %2654 = vmatmul.mubr.bf16.gmra.mrb[0].mxu0 %v2441
      %v2655 = vpop.f32.mrb[0].mxu0
      %v2656 = vadd.f32 0.0, %v2655
      %v2657 = vpop.f32.mrb[0].mxu0
      %v2658 = vpop.f32.mrb[0].mxu0
      %v2659 = vadd.f32 0.0, %v2658
      %v2660 = vpop.f32.mrb[0].mxu0
      %2661 = vmatprep.mubr.bf16.mxu0 0
      %2662 = vmatmul.mubr.bf16.gmra.mrb[0].mxu0 %v2442
      %v2663 = vpop.f32.mrb[0].mxu0
      %v2664 = vadd.f32 0.0, %v2663
      %v2665 = vpop.f32.mrb[0].mxu0
      %v2666 = vpop.f32.mrb[0].mxu0
      %v2667 = vadd.f32 0.0, %v2666
      %v2668 = vpop.f32.mrb[0].mxu0
      %2669 = vmatprep.mubr.bf16.mxu0 0
      %2670 = vmatmul.mubr.bf16.gmra.mrb[0].mxu0 %v2443
      %v2671 = vpop.f32.mrb[0].mxu0
      %v2672 = vadd.f32 0.0, %v2671
      %v2673 = vpop.f32.mrb[0].mxu0
      %v2674 = vpop.f32.mrb[0].mxu0
      %v2675 = vadd.f32 0.0, %v2674
      %v2676 = vpop.f32.mrb[0].mxu0
      %2677 = vdwg.mxu0
      %v2678 = vadd.f32 %v2359, %v2544
      %v2679 = vadd.f32 %v2360, %v2547
      %v2680 = vadd.f32 %v2361, %v2552
      %v2681 = vadd.f32 %v2362, %v2555
      %v2682 = vadd.f32 %v2363, %v2560
      %v2683 = vadd.f32 %v2364, %v2563
      %v2684 = vadd.f32 %v2365, %v2568
      %v2685 = vadd.f32 %v2366, %v2571
      %v2686 = vadd.f32 %v2367, %v2576
      %v2687 = vadd.f32 %v2368, %v2579
      %v2688 = vadd.f32 %v2369, %v2584
      %v2689 = vadd.f32 %v2370, %v2587
      %v2690 = vadd.f32 %v2371, %v2592
      %v2691 = vadd.f32 %v2372, %v2595
      %v2692 = vadd.f32 %v2373, %v2600
      %v2693 = vadd.f32 %v2374, %v2603
      %v2694 = vadd.f32 %v2375, %v2608
      %v2695 = vadd.f32 %v2376, %v2611
      %v2696 = vadd.f32 %v2377, %v2616
      %v2697 = vadd.f32 %v2378, %v2619
      %v2698 = vadd.f32 %v2379, %v2624
      %v2699 = vadd.f32 %v2380, %v2627
      %v2700 = vadd.f32 %v2381, %v2632
      %v2701 = vadd.f32 %v2382, %v2635
      %v2702 = vadd.f32 %v2383, %v2640
      %v2703 = vadd.f32 %v2384, %v2643
      %v2704 = vadd.f32 %v2385, %v2648
      %v2705 = vadd.f32 %v2386, %v2651
      %v2706 = vadd.f32 %v2387, %v2656
      %v2707 = vadd.f32 %v2388, %v2659
      %v2708 = vadd.f32 %v2389, %v2664
      %v2709 = vadd.f32 %v2390, %v2667
      %v2710 = vadd.f32 %v2391, %v2672
      %v2711 = vadd.f32 %v2392, %v2675
      %v2712 = vld [vmem:[%s543 + $0x25] sm:$0xff]
      %v2713 = vld [vmem:[%s543 + $0x2d] sm:$0xff]
      %v2714 = vld [vmem:[%s543 + $0x35] sm:$0xff]
      %v2715 = vld [vmem:[%s543 + $0x3d] sm:$0xff]
      %v2716 = vld [vmem:[%s543 + $0x45] sm:$0xff]
      %v2717 = vld [vmem:[%s543 + $0x4d] sm:$0xff]
      %v2718 = vld [vmem:[%s543 + $0x55] sm:$0xff]
      %v2719 = vld [vmem:[%s543 + $0x5d] sm:$0xff]
      %v2720 = vld [vmem:[%s543 + $0x65] sm:$0xff]
      %v2721 = vld [vmem:[%s543 + $0x6d] sm:$0xff]
      %v2722 = vld [vmem:[%s543 + $0x75] sm:$0xff]
      %v2723 = vld [vmem:[%s543 + $0x7d] sm:$0xff]
      %v2724 = vld [vmem:[%s543 + $0x85] sm:$0xff]
      %v2725 = vld [vmem:[%s543 + $0x8d] sm:$0xff]
      %v2726 = vld [vmem:[%s543 + $0x95] sm:$0xff]
      %v2727 = vld [vmem:[%s543 + $0x9d] sm:$0xff]
      %v2728 = vld [vmem:[%s543 + $0xa5] sm:$0xff]
      %v2729 = vld [vmem:[%s543 + $0xad] sm:$0xff]
      %v2730 = vld [vmem:[%s543 + $0xb5] sm:$0xff]
      %v2731 = vld [vmem:[%s543 + $0xbd] sm:$0xff]
      %v2732 = vld [vmem:[%s543 + $0xc5] sm:$0xff]
      %v2733 = vld [vmem:[%s543 + $0xcd] sm:$0xff]
      %v2734 = vld [vmem:[%s543 + $0xd5] sm:$0xff]
      %v2735 = vld [vmem:[%s543 + $0xdd] sm:$0xff]
      %v2736 = vld [vmem:[%s543 + $0xe5] sm:$0xff]
      %v2737 = vld [vmem:[%s543 + $0xed] sm:$0xff]
      %v2738 = vld [vmem:[%s543 + $0xf5] sm:$0xff]
      %v2739 = vld [vmem:[%s543 + $0xfd] sm:$0xff]
      %v2740 = vld [vmem:[%s543 + $0x105] sm:$0xff]
      %v2741 = vld [vmem:[%s543 + $0x10d] sm:$0xff]
      %v2742 = vld [vmem:[%s543 + $0x115] sm:$0xff]
      %v2743 = vld [vmem:[%s543 + $0x11d] sm:$0xff]
      %v2744 = vld [vmem:[%s543 + $0x125] sm:$0xff]
      %v2745 = vld [vmem:[%s543 + $0x12d] sm:$0x7]
      %v2746 = vpack.c.bf16 %v2713, %v2712
      %v2747 = vpack.c.bf16 %v2715, %v2714
      %v2748 = vpack.c.bf16 %v2717, %v2716
      %v2749 = vpack.c.bf16 %v2719, %v2718
      %v2750 = vpack.c.bf16 %v2721, %v2720
      %v2751 = vpack.c.bf16 %v2723, %v2722
      %v2752 = vpack.c.bf16 %v2725, %v2724
      %v2753 = vpack.c.bf16 %v2727, %v2726
      %v2754 = vpack.c.bf16 %v2729, %v2728
      %v2755 = vpack.c.bf16 %v2731, %v2730
      %v2756 = vpack.c.bf16 %v2733, %v2732
      %v2757 = vpack.c.bf16 %v2735, %v2734
      %v2758 = vpack.c.bf16 %v2737, %v2736
      %v2759 = vpack.c.bf16 %v2739, %v2738
      %v2760 = vpack.c.bf16 %v2741, %v2740
      %v2761 = vpack.c.bf16 %v2743, %v2742
      %v2762 = vpack.c.bf16 %v2745, %v2744
      %s2763 = scalar_lea.vmem %s1, 448
      %v2764 = vld [vmem:[%s2763] sm:$0xf]
      %v2765 = vld [vmem:[%s2763 + $0x4] sm:$0xf]
      %v2766 = vld [vmem:[%s2763 + $0x8] sm:$0xf]
      %v2767 = vld [vmem:[%s2763 + $0xc] sm:$0xf]
      %v2768 = vld [vmem:[%s2763 + $0x10] sm:$0xf]
      %v2769 = vld [vmem:[%s2763 + $0x14] sm:$0xf]
      %v2770 = vld [vmem:[%s2763 + $0x18] sm:$0xf]
      %v2771 = vld [vmem:[%s2763 + $0x1c] sm:$0xf]
      %v2772 = vld [vmem:[%s2763 + $0x20] sm:$0xf]
      %v2773 = vld [vmem:[%s2763 + $0x24] sm:$0xf]
      %v2774 = vld [vmem:[%s2763 + $0x28] sm:$0xf]
      %v2775 = vld [vmem:[%s2763 + $0x2c] sm:$0xf]
      %v2776 = vld [vmem:[%s2763 + $0x30] sm:$0xf]
      %v2777 = vld [vmem:[%s2763 + $0x34] sm:$0xf]
      %v2778 = vld [vmem:[%s2763 + $0x38] sm:$0xf]
      %v2779 = vld [vmem:[%s2763 + $0x3c] sm:$0xf]
      %v2796 = vunpack.c.l.b16 %v2764
      %v2797 = vunpack.c.l.b16 %v2765
      %v2798 = vunpack.c.l.b16 %v2766
      %v2799 = vunpack.c.l.b16 %v2767
      %v2800 = vunpack.c.l.b16 %v2768
      %v2801 = vunpack.c.l.b16 %v2769
      %v2802 = vunpack.c.l.b16 %v2770
      %v2803 = vunpack.c.l.b16 %v2771
      %v2804 = vunpack.c.l.b16 %v2772
      %v2805 = vunpack.c.l.b16 %v2773
      %v2806 = vunpack.c.l.b16 %v2774
      %v2807 = vunpack.c.l.b16 %v2775
      %v2808 = vunpack.c.l.b16 %v2776
      %v2809 = vunpack.c.l.b16 %v2777
      %v2810 = vunpack.c.l.b16 %v2778
      %v2811 = vunpack.c.l.b16 %v2779
      %v2812 = vpack.c.b16 %v2797, %v2796
      %v2813 = vpack.c.b16 %v2799, %v2798
      %v2814 = vpack.c.b16 %v2801, %v2800
      %v2815 = vpack.c.b16 %v2803, %v2802
      %v2816 = vpack.c.b16 %v2805, %v2804
      %v2817 = vpack.c.b16 %v2807, %v2806
      %v2818 = vpack.c.b16 %v2809, %v2808
      %v2819 = vpack.c.b16 %v2811, %v2810
      %2828 = vmatprep.subr.bf16.mxu0 0
      %2829 = vmatpush1.bf16.msra.mxu0 %v2812
      %2830 = vmatprep.subr.bf16.mxu0 0
      %2831 = vmatpush1.bf16.msra.mxu0 %v2813
      %2832 = vmatprep.subr.bf16.mxu0 0
      %2833 = vmatpush1.bf16.msra.mxu0 %v2814
      %2834 = vmatprep.subr.bf16.mxu0 0
      %2835 = vmatpush1.bf16.msra.mxu0 %v2815
      %2836 = vmatprep.subr.bf16.mxu0 0
      %2837 = vmatpush1.bf16.msra.mxu0 %v2816
      %2838 = vmatprep.subr.bf16.mxu0 0
      %2839 = vmatpush1.bf16.msra.mxu0 %v2817
      %2840 = vmatprep.subr.bf16.mxu0 0
      %2841 = vmatpush1.bf16.msra.mxu0 %v2818
      %2842 = vmatprep.subr.bf16.mxu0 0
      %2843 = vmatpush1.bf16.msra.mxu0 %v2819
      %2844 = vmatprep.subr.bf16.mxu0 0
      %2845 = vmatpush1.bf16.msra.mxu0 0
      %2846 = vmatprep.subr.bf16.mxu0 0
      %2847 = vmatpush1.bf16.msra.mxu0 0
      %2848 = vmatprep.subr.bf16.mxu0 0
      %2849 = vmatpush1.bf16.msra.mxu0 0
      %2850 = vmatprep.subr.bf16.mxu0 0
      %2851 = vmatpush1.bf16.msra.mxu0 0
      %2852 = vmatprep.subr.bf16.mxu0 0
      %2853 = vmatpush1.bf16.msra.mxu0 0
      %2854 = vmatprep.subr.bf16.mxu0 0
      %2855 = vmatpush1.bf16.msra.mxu0 0
      %2856 = vmatprep.subr.bf16.mxu0 0
      %2857 = vmatpush1.bf16.msra.mxu0 0
      %2858 = vmatprep.subr.bf16.mxu0 0
      %2859 = vmatpush1.bf16.msra.mxu0 0
      %2860 = vmatprep.mubr.bf16.mxu0 0
      %2861 = vmatmul.mubr.bf16.gmra.mrb[0].mxu0 %v2746
      %v2862 = vpop.f32.mrb[0].mxu0
      %v2863 = vadd.f32 0.0, %v2862
      %v2864 = vpop.f32.mrb[0].mxu0
      %v2865 = vpop.f32.mrb[0].mxu0
      %v2866 = vadd.f32 0.0, %v2865
      %v2867 = vpop.f32.mrb[0].mxu0
      %2868 = vmatprep.mubr.bf16.mxu0 0
      %2869 = vmatmul.mubr.bf16.gmra.mrb[0].mxu0 %v2747
      %v2870 = vpop.f32.mrb[0].mxu0
      %v2871 = vadd.f32 0.0, %v2870
      %v2872 = vpop.f32.mrb[0].mxu0
      %v2873 = vpop.f32.mrb[0].mxu0
      %v2874 = vadd.f32 0.0, %v2873
      %v2875 = vpop.f32.mrb[0].mxu0
      %2876 = vmatprep.mubr.bf16.mxu0 0
      %2877 = vmatmul.mubr.bf16.gmra.mrb[0].mxu0 %v2748
      %v2878 = vpop.f32.mrb[0].mxu0
      %v2879 = vadd.f32 0.0, %v2878
      %v2880 = vpop.f32.mrb[0].mxu0
      %v2881 = vpop.f32.mrb[0].mxu0
      %v2882 = vadd.f32 0.0, %v2881
      %v2883 = vpop.f32.mrb[0].mxu0
      %2884 = vmatprep.mubr.bf16.mxu0 0
      %2885 = vmatmul.mubr.bf16.gmra.mrb[0].mxu0 %v2749
      %v2886 = vpop.f32.mrb[0].mxu0
      %v2887 = vadd.f32 0.0, %v2886
      %v2888 = vpop.f32.mrb[0].mxu0
      %v2889 = vpop.f32.mrb[0].mxu0
      %v2890 = vadd.f32 0.0, %v2889
      %v2891 = vpop.f32.mrb[0].mxu0
      %2892 = vmatprep.mubr.bf16.mxu0 0
      %2893 = vmatmul.mubr.bf16.gmra.mrb[0].mxu0 %v2750
      %v2894 = vpop.f32.mrb[0].mxu0
      %v2895 = vadd.f32 0.0, %v2894
      %v2896 = vpop.f32.mrb[0].mxu0
      %v2897 = vpop.f32.mrb[0].mxu0
      %v2898 = vadd.f32 0.0, %v2897
      %v2899 = vpop.f32.mrb[0].mxu0
      %2900 = vmatprep.mubr.bf16.mxu0 0
      %2901 = vmatmul.mubr.bf16.gmra.mrb[0].mxu0 %v2751
      %v2902 = vpop.f32.mrb[0].mxu0
      %v2903 = vadd.f32 0.0, %v2902
      %v2904 = vpop.f32.mrb[0].mxu0
      %v2905 = vpop.f32.mrb[0].mxu0
      %v2906 = vadd.f32 0.0, %v2905
      %v2907 = vpop.f32.mrb[0].mxu0
      %2908 = vmatprep.mubr.bf16.mxu0 0
      %2909 = vmatmul.mubr.bf16.gmra.mrb[0].mxu0 %v2752
      %v2910 = vpop.f32.mrb[0].mxu0
      %v2911 = vadd.f32 0.0, %v2910
      %v2912 = vpop.f32.mrb[0].mxu0
      %v2913 = vpop.f32.mrb[0].mxu0
      %v2914 = vadd.f32 0.0, %v2913
      %v2915 = vpop.f32.mrb[0].mxu0
      %2916 = vmatprep.mubr.bf16.mxu0 0
      %2917 = vmatmul.mubr.bf16.gmra.mrb[0].mxu0 %v2753
      %v2918 = vpop.f32.mrb[0].mxu0
      %v2919 = vadd.f32 0.0, %v2918
      %v2920 = vpop.f32.mrb[0].mxu0
      %v2921 = vpop.f32.mrb[0].mxu0
      %v2922 = vadd.f32 0.0, %v2921
      %v2923 = vpop.f32.mrb[0].mxu0
      %2924 = vmatprep.mubr.bf16.mxu0 0
      %2925 = vmatmul.mubr.bf16.gmra.mrb[0].mxu0 %v2754
      %v2926 = vpop.f32.mrb[0].mxu0
      %v2927 = vadd.f32 0.0, %v2926
      %v2928 = vpop.f32.mrb[0].mxu0
      %v2929 = vpop.f32.mrb[0].mxu0
      %v2930 = vadd.f32 0.0, %v2929
      %v2931 = vpop.f32.mrb[0].mxu0
      %2932 = vmatprep.mubr.bf16.mxu0 0
      %2933 = vmatmul.mubr.bf16.gmra.mrb[0].mxu0 %v2755
      %v2934 = vpop.f32.mrb[0].mxu0
      %v2935 = vadd.f32 0.0, %v2934
      %v2936 = vpop.f32.mrb[0].mxu0
      %v2937 = vpop.f32.mrb[0].mxu0
      %v2938 = vadd.f32 0.0, %v2937
      %v2939 = vpop.f32.mrb[0].mxu0
      %2940 = vmatprep.mubr.bf16.mxu0 0
      %2941 = vmatmul.mubr.bf16.gmra.mrb[0].mxu0 %v2756
      %v2942 = vpop.f32.mrb[0].mxu0
      %v2943 = vadd.f32 0.0, %v2942
      %v2944 = vpop.f32.mrb[0].mxu0
      %v2945 = vpop.f32.mrb[0].mxu0
      %v2946 = vadd.f32 0.0, %v2945
      %v2947 = vpop.f32.mrb[0].mxu0
      %2948 = vmatprep.mubr.bf16.mxu0 0
      %2949 = vmatmul.mubr.bf16.gmra.mrb[0].mxu0 %v2757
      %v2950 = vpop.f32.mrb[0].mxu0
      %v2951 = vadd.f32 0.0, %v2950
      %v2952 = vpop.f32.mrb[0].mxu0
      %v2953 = vpop.f32.mrb[0].mxu0
      %v2954 = vadd.f32 0.0, %v2953
      %v2955 = vpop.f32.mrb[0].mxu0
      %2956 = vmatprep.mubr.bf16.mxu0 0
      %2957 = vmatmul.mubr.bf16.gmra.mrb[0].mxu0 %v2758
      %v2958 = vpop.f32.mrb[0].mxu0
      %v2959 = vadd.f32 0.0, %v2958
      %v2960 = vpop.f32.mrb[0].mxu0
      %v2961 = vpop.f32.mrb[0].mxu0
      %v2962 = vadd.f32 0.0, %v2961
      %v2963 = vpop.f32.mrb[0].mxu0
      %2964 = vmatprep.mubr.bf16.mxu0 0
      %2965 = vmatmul.mubr.bf16.gmra.mrb[0].mxu0 %v2759
      %v2966 = vpop.f32.mrb[0].mxu0
      %v2967 = vadd.f32 0.0, %v2966
      %v2968 = vpop.f32.mrb[0].mxu0
      %v2969 = vpop.f32.mrb[0].mxu0
      %v2970 = vadd.f32 0.0, %v2969
      %v2971 = vpop.f32.mrb[0].mxu0
      %2972 = vmatprep.mubr.bf16.mxu0 0
      %2973 = vmatmul.mubr.bf16.gmra.mrb[0].mxu0 %v2760
      %v2974 = vpop.f32.mrb[0].mxu0
      %v2975 = vadd.f32 0.0, %v2974
      %v2976 = vpop.f32.mrb[0].mxu0
      %v2977 = vpop.f32.mrb[0].mxu0
      %v2978 = vadd.f32 0.0, %v2977
      %v2979 = vpop.f32.mrb[0].mxu0
      %2980 = vmatprep.mubr.bf16.mxu0 0
      %2981 = vmatmul.mubr.bf16.gmra.mrb[0].mxu0 %v2761
      %v2982 = vpop.f32.mrb[0].mxu0
      %v2983 = vadd.f32 0.0, %v2982
      %v2984 = vpop.f32.mrb[0].mxu0
      %v2985 = vpop.f32.mrb[0].mxu0
      %v2986 = vadd.f32 0.0, %v2985
      %v2987 = vpop.f32.mrb[0].mxu0
      %2988 = vmatprep.mubr.bf16.mxu0 0
      %2989 = vmatmul.mubr.bf16.gmra.mrb[0].mxu0 %v2762
      %v2990 = vpop.f32.mrb[0].mxu0
      %v2991 = vadd.f32 0.0, %v2990
      %v2992 = vpop.f32.mrb[0].mxu0
      %v2993 = vpop.f32.mrb[0].mxu0
      %v2994 = vadd.f32 0.0, %v2993
      %v2995 = vpop.f32.mrb[0].mxu0
      %2996 = vdwg.mxu0
      %v2997 = vadd.f32 %v2678, %v2863
      %v2998 = vadd.f32 %v2679, %v2866
      %v2999 = vadd.f32 %v2680, %v2871
      %v3000 = vadd.f32 %v2681, %v2874
      %v3001 = vadd.f32 %v2682, %v2879
      %v3002 = vadd.f32 %v2683, %v2882
      %v3003 = vadd.f32 %v2684, %v2887
      %v3004 = vadd.f32 %v2685, %v2890
      %v3005 = vadd.f32 %v2686, %v2895
      %v3006 = vadd.f32 %v2687, %v2898
      %v3007 = vadd.f32 %v2688, %v2903
      %v3008 = vadd.f32 %v2689, %v2906
      %v3009 = vadd.f32 %v2690, %v2911
      %v3010 = vadd.f32 %v2691, %v2914
      %v3011 = vadd.f32 %v2692, %v2919
      %v3012 = vadd.f32 %v2693, %v2922
      %v3013 = vadd.f32 %v2694, %v2927
      %v3014 = vadd.f32 %v2695, %v2930
      %v3015 = vadd.f32 %v2696, %v2935
      %v3016 = vadd.f32 %v2697, %v2938
      %v3017 = vadd.f32 %v2698, %v2943
      %v3018 = vadd.f32 %v2699, %v2946
      %v3019 = vadd.f32 %v2700, %v2951
      %v3020 = vadd.f32 %v2701, %v2954
      %v3021 = vadd.f32 %v2702, %v2959
      %v3022 = vadd.f32 %v2703, %v2962
      %v3023 = vadd.f32 %v2704, %v2967
      %v3024 = vadd.f32 %v2705, %v2970
      %v3025 = vadd.f32 %v2706, %v2975
      %v3026 = vadd.f32 %v2707, %v2978
      %v3027 = vadd.f32 %v2708, %v2983
      %v3028 = vadd.f32 %v2709, %v2986
      %v3029 = vadd.f32 %v2710, %v2991
      %v3030 = vadd.f32 %v2711, %v2994
      %v3031 = vld [vmem:[%s543 + $0x26] sm:$0xff]
      %v3032 = vld [vmem:[%s543 + $0x2e] sm:$0xff]
      %v3033 = vld [vmem:[%s543 + $0x36] sm:$0xff]
      %v3034 = vld [vmem:[%s543 + $0x3e] sm:$0xff]
      %v3035 = vld [vmem:[%s543 + $0x46] sm:$0xff]
      %v3036 = vld [vmem:[%s543 + $0x4e] sm:$0xff]
      %v3037 = vld [vmem:[%s543 + $0x56] sm:$0xff]
      %v3038 = vld [vmem:[%s543 + $0x5e] sm:$0xff]
      %v3039 = vld [vmem:[%s543 + $0x66] sm:$0xff]
      %v3040 = vld [vmem:[%s543 + $0x6e] sm:$0xff]
      %v3041 = vld [vmem:[%s543 + $0x76] sm:$0xff]
      %v3042 = vld [vmem:[%s543 + $0x7e] sm:$0xff]
      %v3043 = vld [vmem:[%s543 + $0x86] sm:$0xff]
      %v3044 = vld [vmem:[%s543 + $0x8e] sm:$0xff]
      %v3045 = vld [vmem:[%s543 + $0x96] sm:$0xff]
      %v3046 = vld [vmem:[%s543 + $0x9e] sm:$0xff]
      %v3047 = vld [vmem:[%s543 + $0xa6] sm:$0xff]
      %v3048 = vld [vmem:[%s543 + $0xae] sm:$0xff]
      %v3049 = vld [vmem:[%s543 + $0xb6] sm:$0xff]
      %v3050 = vld [vmem:[%s543 + $0xbe] sm:$0xff]
      %v3051 = vld [vmem:[%s543 + $0xc6] sm:$0xff]
      %v3052 = vld [vmem:[%s543 + $0xce] sm:$0xff]
      %v3053 = vld [vmem:[%s543 + $0xd6] sm:$0xff]
      %v3054 = vld [vmem:[%s543 + $0xde] sm:$0xff]
      %v3055 = vld [vmem:[%s543 + $0xe6] sm:$0xff]
      %v3056 = vld [vmem:[%s543 + $0xee] sm:$0xff]
      %v3057 = vld [vmem:[%s543 + $0xf6] sm:$0xff]
      %v3058 = vld [vmem:[%s543 + $0xfe] sm:$0xff]
      %v3059 = vld [vmem:[%s543 + $0x106] sm:$0xff]
      %v3060 = vld [vmem:[%s543 + $0x10e] sm:$0xff]
      %v3061 = vld [vmem:[%s543 + $0x116] sm:$0xff]
      %v3062 = vld [vmem:[%s543 + $0x11e] sm:$0xff]
      %v3063 = vld [vmem:[%s543 + $0x126] sm:$0xff]
      %v3064 = vld [vmem:[%s543 + $0x12e] sm:$0x7]
      %v3065 = vpack.c.bf16 %v3032, %v3031
      %v3066 = vpack.c.bf16 %v3034, %v3033
      %v3067 = vpack.c.bf16 %v3036, %v3035
      %v3068 = vpack.c.bf16 %v3038, %v3037
      %v3069 = vpack.c.bf16 %v3040, %v3039
      %v3070 = vpack.c.bf16 %v3042, %v3041
      %v3071 = vpack.c.bf16 %v3044, %v3043
      %v3072 = vpack.c.bf16 %v3046, %v3045
      %v3073 = vpack.c.bf16 %v3048, %v3047
      %v3074 = vpack.c.bf16 %v3050, %v3049
      %v3075 = vpack.c.bf16 %v3052, %v3051
      %v3076 = vpack.c.bf16 %v3054, %v3053
      %v3077 = vpack.c.bf16 %v3056, %v3055
      %v3078 = vpack.c.bf16 %v3058, %v3057
      %v3079 = vpack.c.bf16 %v3060, %v3059
      %v3080 = vpack.c.bf16 %v3062, %v3061
      %v3081 = vpack.c.bf16 %v3064, %v3063
      %s3082 = scalar_lea.vmem %s1, 512
      %v3083 = vld [vmem:[%s3082] sm:$0xf]
      %v3084 = vld [vmem:[%s3082 + $0x4] sm:$0xf]
      %v3085 = vld [vmem:[%s3082 + $0x8] sm:$0xf]
      %v3086 = vld [vmem:[%s3082 + $0xc] sm:$0xf]
      %v3087 = vld [vmem:[%s3082 + $0x10] sm:$0xf]
      %v3088 = vld [vmem:[%s3082 + $0x14] sm:$0xf]
      %v3089 = vld [vmem:[%s3082 + $0x18] sm:$0xf]
      %v3090 = vld [vmem:[%s3082 + $0x1c] sm:$0xf]
      %v3091 = vld [vmem:[%s3082 + $0x20] sm:$0xf]
      %v3092 = vld [vmem:[%s3082 + $0x24] sm:$0xf]
      %v3093 = vld [vmem:[%s3082 + $0x28] sm:$0xf]
      %v3094 = vld [vmem:[%s3082 + $0x2c] sm:$0xf]
      %v3095 = vld [vmem:[%s3082 + $0x30] sm:$0xf]
      %v3096 = vld [vmem:[%s3082 + $0x34] sm:$0xf]
      %v3097 = vld [vmem:[%s3082 + $0x38] sm:$0xf]
      %v3098 = vld [vmem:[%s3082 + $0x3c] sm:$0xf]
      %v3115 = vunpack.c.l.b16 %v3083
      %v3116 = vunpack.c.l.b16 %v3084
      %v3117 = vunpack.c.l.b16 %v3085
      %v3118 = vunpack.c.l.b16 %v3086
      %v3119 = vunpack.c.l.b16 %v3087
      %v3120 = vunpack.c.l.b16 %v3088
      %v3121 = vunpack.c.l.b16 %v3089
      %v3122 = vunpack.c.l.b16 %v3090
      %v3123 = vunpack.c.l.b16 %v3091
      %v3124 = vunpack.c.l.b16 %v3092
      %v3125 = vunpack.c.l.b16 %v3093
      %v3126 = vunpack.c.l.b16 %v3094
      %v3127 = vunpack.c.l.b16 %v3095
      %v3128 = vunpack.c.l.b16 %v3096
      %v3129 = vunpack.c.l.b16 %v3097
      %v3130 = vunpack.c.l.b16 %v3098
      %v3131 = vpack.c.b16 %v3116, %v3115
      %v3132 = vpack.c.b16 %v3118, %v3117
      %v3133 = vpack.c.b16 %v3120, %v3119
      %v3134 = vpack.c.b16 %v3122, %v3121
      %v3135 = vpack.c.b16 %v3124, %v3123
      %v3136 = vpack.c.b16 %v3126, %v3125
      %v3137 = vpack.c.b16 %v3128, %v3127
      %v3138 = vpack.c.b16 %v3130, %v3129
      %3147 = vmatprep.subr.bf16.mxu0 0
      %3148 = vmatpush1.bf16.msra.mxu0 %v3131
      %3149 = vmatprep.subr.bf16.mxu0 0
      %3150 = vmatpush1.bf16.msra.mxu0 %v3132
      %3151 = vmatprep.subr.bf16.mxu0 0
      %3152 = vmatpush1.bf16.msra.mxu0 %v3133
      %3153 = vmatprep.subr.bf16.mxu0 0
      %3154 = vmatpush1.bf16.msra.mxu0 %v3134
      %3155 = vmatprep.subr.bf16.mxu0 0
      %3156 = vmatpush1.bf16.msra.mxu0 %v3135
      %3157 = vmatprep.subr.bf16.mxu0 0
      %3158 = vmatpush1.bf16.msra.mxu0 %v3136
      %3159 = vmatprep.subr.bf16.mxu0 0
      %3160 = vmatpush1.bf16.msra.mxu0 %v3137
      %3161 = vmatprep.subr.bf16.mxu0 0
      %3162 = vmatpush1.bf16.msra.mxu0 %v3138
      %3163 = vmatprep.subr.bf16.mxu0 0
      %3164 = vmatpush1.bf16.msra.mxu0 0
      %3165 = vmatprep.subr.bf16.mxu0 0
      %3166 = vmatpush1.bf16.msra.mxu0 0
      %3167 = vmatprep.subr.bf16.mxu0 0
      %3168 = vmatpush1.bf16.msra.mxu0 0
      %3169 = vmatprep.subr.bf16.mxu0 0
      %3170 = vmatpush1.bf16.msra.mxu0 0
      %3171 = vmatprep.subr.bf16.mxu0 0
      %3172 = vmatpush1.bf16.msra.mxu0 0
      %3173 = vmatprep.subr.bf16.mxu0 0
      %3174 = vmatpush1.bf16.msra.mxu0 0
      %3175 = vmatprep.subr.bf16.mxu0 0
      %3176 = vmatpush1.bf16.msra.mxu0 0
      %3177 = vmatprep.subr.bf16.mxu0 0
      %3178 = vmatpush1.bf16.msra.mxu0 0
      %3179 = vmatprep.mubr.bf16.mxu0 0
      %3180 = vmatmul.mubr.bf16.gmra.mrb[0].mxu0 %v3065
      %v3181 = vpop.f32.mrb[0].mxu0
      %v3182 = vadd.f32 0.0, %v3181
      %v3183 = vpop.f32.mrb[0].mxu0
      %v3184 = vpop.f32.mrb[0].mxu0
      %v3185 = vadd.f32 0.0, %v3184
      %v3186 = vpop.f32.mrb[0].mxu0
      %3187 = vmatprep.mubr.bf16.mxu0 0
      %3188 = vmatmul.mubr.bf16.gmra.mrb[0].mxu0 %v3066
      %v3189 = vpop.f32.mrb[0].mxu0
      %v3190 = vadd.f32 0.0, %v3189
      %v3191 = vpop.f32.mrb[0].mxu0
      %v3192 = vpop.f32.mrb[0].mxu0
      %v3193 = vadd.f32 0.0, %v3192
      %v3194 = vpop.f32.mrb[0].mxu0
      %3195 = vmatprep.mubr.bf16.mxu0 0
      %3196 = vmatmul.mubr.bf16.gmra.mrb[0].mxu0 %v3067
      %v3197 = vpop.f32.mrb[0].mxu0
      %v3198 = vadd.f32 0.0, %v3197
      %v3199 = vpop.f32.mrb[0].mxu0
      %v3200 = vpop.f32.mrb[0].mxu0
      %v3201 = vadd.f32 0.0, %v3200
      %v3202 = vpop.f32.mrb[0].mxu0
      %3203 = vmatprep.mubr.bf16.mxu0 0
      %3204 = vmatmul.mubr.bf16.gmra.mrb[0].mxu0 %v3068
      %v3205 = vpop.f32.mrb[0].mxu0
      %v3206 = vadd.f32 0.0, %v3205
      %v3207 = vpop.f32.mrb[0].mxu0
      %v3208 = vpop.f32.mrb[0].mxu0
      %v3209 = vadd.f32 0.0, %v3208
      %v3210 = vpop.f32.mrb[0].mxu0
      %3211 = vmatprep.mubr.bf16.mxu0 0
      %3212 = vmatmul.mubr.bf16.gmra.mrb[0].mxu0 %v3069
      %v3213 = vpop.f32.mrb[0].mxu0
      %v3214 = vadd.f32 0.0, %v3213
      %v3215 = vpop.f32.mrb[0].mxu0
      %v3216 = vpop.f32.mrb[0].mxu0
      %v3217 = vadd.f32 0.0, %v3216
      %v3218 = vpop.f32.mrb[0].mxu0
      %3219 = vmatprep.mubr.bf16.mxu0 0
      %3220 = vmatmul.mubr.bf16.gmra.mrb[0].mxu0 %v3070
      %v3221 = vpop.f32.mrb[0].mxu0
      %v3222 = vadd.f32 0.0, %v3221
      %v3223 = vpop.f32.mrb[0].mxu0
      %v3224 = vpop.f32.mrb[0].mxu0
      %v3225 = vadd.f32 0.0, %v3224
      %v3226 = vpop.f32.mrb[0].mxu0
      %3227 = vmatprep.mubr.bf16.mxu0 0
      %3228 = vmatmul.mubr.bf16.gmra.mrb[0].mxu0 %v3071
      %v3229 = vpop.f32.mrb[0].mxu0
      %v3230 = vadd.f32 0.0, %v3229
      %v3231 = vpop.f32.mrb[0].mxu0
      %v3232 = vpop.f32.mrb[0].mxu0
      %v3233 = vadd.f32 0.0, %v3232
      %v3234 = vpop.f32.mrb[0].mxu0
      %3235 = vmatprep.mubr.bf16.mxu0 0
      %3236 = vmatmul.mubr.bf16.gmra.mrb[0].mxu0 %v3072
      %v3237 = vpop.f32.mrb[0].mxu0
      %v3238 = vadd.f32 0.0, %v3237
      %v3239 = vpop.f32.mrb[0].mxu0
      %v3240 = vpop.f32.mrb[0].mxu0
      %v3241 = vadd.f32 0.0, %v3240
      %v3242 = vpop.f32.mrb[0].mxu0
      %3243 = vmatprep.mubr.bf16.mxu0 0
      %3244 = vmatmul.mubr.bf16.gmra.mrb[0].mxu0 %v3073
      %v3245 = vpop.f32.mrb[0].mxu0
      %v3246 = vadd.f32 0.0, %v3245
      %v3247 = vpop.f32.mrb[0].mxu0
      %v3248 = vpop.f32.mrb[0].mxu0
      %v3249 = vadd.f32 0.0, %v3248
      %v3250 = vpop.f32.mrb[0].mxu0
      %3251 = vmatprep.mubr.bf16.mxu0 0
      %3252 = vmatmul.mubr.bf16.gmra.mrb[0].mxu0 %v3074
      %v3253 = vpop.f32.mrb[0].mxu0
      %v3254 = vadd.f32 0.0, %v3253
      %v3255 = vpop.f32.mrb[0].mxu0
      %v3256 = vpop.f32.mrb[0].mxu0
      %v3257 = vadd.f32 0.0, %v3256
      %v3258 = vpop.f32.mrb[0].mxu0
      %3259 = vmatprep.mubr.bf16.mxu0 0
      %3260 = vmatmul.mubr.bf16.gmra.mrb[0].mxu0 %v3075
      %v3261 = vpop.f32.mrb[0].mxu0
      %v3262 = vadd.f32 0.0, %v3261
      %v3263 = vpop.f32.mrb[0].mxu0
      %v3264 = vpop.f32.mrb[0].mxu0
      %v3265 = vadd.f32 0.0, %v3264
      %v3266 = vpop.f32.mrb[0].mxu0
      %3267 = vmatprep.mubr.bf16.mxu0 0
      %3268 = vmatmul.mubr.bf16.gmra.mrb[0].mxu0 %v3076
      %v3269 = vpop.f32.mrb[0].mxu0
      %v3270 = vadd.f32 0.0, %v3269
      %v3271 = vpop.f32.mrb[0].mxu0
      %v3272 = vpop.f32.mrb[0].mxu0
      %v3273 = vadd.f32 0.0, %v3272
      %v3274 = vpop.f32.mrb[0].mxu0
      %3275 = vmatprep.mubr.bf16.mxu0 0
      %3276 = vmatmul.mubr.bf16.gmra.mrb[0].mxu0 %v3077
      %v3277 = vpop.f32.mrb[0].mxu0
      %v3278 = vadd.f32 0.0, %v3277
      %v3279 = vpop.f32.mrb[0].mxu0
      %v3280 = vpop.f32.mrb[0].mxu0
      %v3281 = vadd.f32 0.0, %v3280
      %v3282 = vpop.f32.mrb[0].mxu0
      %3283 = vmatprep.mubr.bf16.mxu0 0
      %3284 = vmatmul.mubr.bf16.gmra.mrb[0].mxu0 %v3078
      %v3285 = vpop.f32.mrb[0].mxu0
      %v3286 = vadd.f32 0.0, %v3285
      %v3287 = vpop.f32.mrb[0].mxu0
      %v3288 = vpop.f32.mrb[0].mxu0
      %v3289 = vadd.f32 0.0, %v3288
      %v3290 = vpop.f32.mrb[0].mxu0
      %3291 = vmatprep.mubr.bf16.mxu0 0
      %3292 = vmatmul.mubr.bf16.gmra.mrb[0].mxu0 %v3079
      %v3293 = vpop.f32.mrb[0].mxu0
      %v3294 = vadd.f32 0.0, %v3293
      %v3295 = vpop.f32.mrb[0].mxu0
      %v3296 = vpop.f32.mrb[0].mxu0
      %v3297 = vadd.f32 0.0, %v3296
      %v3298 = vpop.f32.mrb[0].mxu0
      %3299 = vmatprep.mubr.bf16.mxu0 0
      %3300 = vmatmul.mubr.bf16.gmra.mrb[0].mxu0 %v3080
      %v3301 = vpop.f32.mrb[0].mxu0
      %v3302 = vadd.f32 0.0, %v3301
      %v3303 = vpop.f32.mrb[0].mxu0
      %v3304 = vpop.f32.mrb[0].mxu0
      %v3305 = vadd.f32 0.0, %v3304
      %v3306 = vpop.f32.mrb[0].mxu0
      %3307 = vmatprep.mubr.bf16.mxu0 0
      %3308 = vmatmul.mubr.bf16.gmra.mrb[0].mxu0 %v3081
      %v3309 = vpop.f32.mrb[0].mxu0
      %v3310 = vadd.f32 0.0, %v3309
      %v3311 = vpop.f32.mrb[0].mxu0
      %v3312 = vpop.f32.mrb[0].mxu0
      %v3313 = vadd.f32 0.0, %v3312
      %v3314 = vpop.f32.mrb[0].mxu0
      %3315 = vdwg.mxu0
      %v3316 = vadd.f32 %v2997, %v3182
      %v3317 = vadd.f32 %v2998, %v3185
      %v3318 = vadd.f32 %v2999, %v3190
      %v3319 = vadd.f32 %v3000, %v3193
      %v3320 = vadd.f32 %v3001, %v3198
      %v3321 = vadd.f32 %v3002, %v3201
      %v3322 = vadd.f32 %v3003, %v3206
      %v3323 = vadd.f32 %v3004, %v3209
      %v3324 = vadd.f32 %v3005, %v3214
      %v3325 = vadd.f32 %v3006, %v3217
      %v3326 = vadd.f32 %v3007, %v3222
      %v3327 = vadd.f32 %v3008, %v3225
      %v3328 = vadd.f32 %v3009, %v3230
      %v3329 = vadd.f32 %v3010, %v3233
      %v3330 = vadd.f32 %v3011, %v3238
      %v3331 = vadd.f32 %v3012, %v3241
      %v3332 = vadd.f32 %v3013, %v3246
      %v3333 = vadd.f32 %v3014, %v3249
      %v3334 = vadd.f32 %v3015, %v3254
      %v3335 = vadd.f32 %v3016, %v3257
      %v3336 = vadd.f32 %v3017, %v3262
      %v3337 = vadd.f32 %v3018, %v3265
      %v3338 = vadd.f32 %v3019, %v3270
      %v3339 = vadd.f32 %v3020, %v3273
      %v3340 = vadd.f32 %v3021, %v3278
      %v3341 = vadd.f32 %v3022, %v3281
      %v3342 = vadd.f32 %v3023, %v3286
      %v3343 = vadd.f32 %v3024, %v3289
      %v3344 = vadd.f32 %v3025, %v3294
      %v3345 = vadd.f32 %v3026, %v3297
      %v3346 = vadd.f32 %v3027, %v3302
      %v3347 = vadd.f32 %v3028, %v3305
      %v3348 = vadd.f32 %v3029, %v3310
      %v3349 = vadd.f32 %v3030, %v3313
      %v3350 = vld [vmem:[%s3] sm:$0xff]
      %v3351 = vld [vmem:[%s3 + $0x8] sm:$0xff]
      %v3352 = vld [vmem:[%s3 + $0x10] sm:$0xff]
      %v3353 = vld [vmem:[%s3 + $0x18] sm:$0xff]
      %v3354 = vld [vmem:[%s3 + $0x20] sm:$0xff]
      %v3355 = vld [vmem:[%s3 + $0x28] sm:$0xff]
      %v3356 = vld [vmem:[%s3 + $0x30] sm:$0xff]
      %v3357 = vld [vmem:[%s3 + $0x38] sm:$0xff]
      %v3358 = vld [vmem:[%s3 + $0x40] sm:$0xff]
      %v3359 = vld [vmem:[%s3 + $0x48] sm:$0xff]
      %v3360 = vld [vmem:[%s3 + $0x50] sm:$0xff]
      %v3361 = vld [vmem:[%s3 + $0x58] sm:$0xff]
      %v3362 = vld [vmem:[%s3 + $0x60] sm:$0xff]
      %v3363 = vld [vmem:[%s3 + $0x68] sm:$0xff]
      %v3364 = vld [vmem:[%s3 + $0x70] sm:$0xff]
      %v3365 = vld [vmem:[%s3 + $0x78] sm:$0xff]
      %v3366 = vld [vmem:[%s3 + $0x80] sm:$0xff]
      %v3367 = vld [vmem:[%s3 + $0x88] sm:$0xff]
      %v3368 = vld [vmem:[%s3 + $0x90] sm:$0xff]
      %v3369 = vld [vmem:[%s3 + $0x98] sm:$0xff]
      %v3370 = vld [vmem:[%s3 + $0xa0] sm:$0xff]
      %v3371 = vld [vmem:[%s3 + $0xa8] sm:$0xff]
      %v3372 = vld [vmem:[%s3 + $0xb0] sm:$0xff]
      %v3373 = vld [vmem:[%s3 + $0xb8] sm:$0xff]
      %v3374 = vld [vmem:[%s2] sm:$0x7]
      %v3375 = vlaneseq
      %v3376 = vshrl.u32 %v3375, 7
      %v3377 = vsub.s32 0, %v3376
      %v3378 = vrot.slane %v3374, %v3377
      %vm3379 = vcmask 89088
      %v3381 = vsel %vm3379, %v3352, 0
      %v3384 = vsel %vm3379, %v3355, 0
      %v3387 = vsel %vm3379, %v3358, 0
      %v3390 = vsel %vm3379, %v3361, 0
      %v3393 = vsel %vm3379, %v3364, 0
      %v3396 = vsel %vm3379, %v3367, 0
      %v3399 = vsel %vm3379, %v3370, 0
      %v3402 = vsel %vm3379, %v3373, 0
      %vm3404 = vcmask 1042432
      %v3406 = vsel %vm3404, %v3349, 0
      %3408 = vmatprep.subr.mxu0 0.0
      %3409 = vmatpush1.msra.mxu0 %v3316
      %3410 = vmatprep.subr.mxu0 0.0
      %3411 = vmatpush1.msra.mxu0 %v3317
      %3412 = vmatprep.subr.mxu0 0.0
      %3413 = vmatpush1.msra.mxu0 %v3318
      %3414 = vmatprep.subr.mxu0 0.0
      %3415 = vmatpush1.msra.mxu0 %v3319
      %3416 = vmatprep.subr.mxu0 0.0
      %3417 = vmatpush1.msra.mxu0 %v3320
      %3418 = vmatprep.subr.mxu0 0.0
      %3419 = vmatpush1.msra.mxu0 %v3321
      %3420 = vmatprep.subr.mxu0 0.0
      %3421 = vmatpush1.msra.mxu0 %v3322
      %3422 = vmatprep.subr.mxu0 0.0
      %3423 = vmatpush1.msra.mxu0 %v3323
      %3424 = vmatprep.subr.mxu0 0.0
      %3425 = vmatpush1.msra.mxu0 %v3324
      %3426 = vmatprep.subr.mxu0 0.0
      %3427 = vmatpush1.msra.mxu0 %v3325
      %3428 = vmatprep.subr.mxu0 0.0
      %3429 = vmatpush1.msra.mxu0 %v3326
      %3430 = vmatprep.subr.mxu0 0.0
      %3431 = vmatpush1.msra.mxu0 %v3327
      %3432 = vmatprep.subr.mxu0 0.0
      %3433 = vmatpush1.msra.mxu0 %v3328
      %3434 = vmatprep.subr.mxu0 0.0
      %3435 = vmatpush1.msra.mxu0 %v3329
      %3436 = vmatprep.subr.mxu0 0.0
      %3437 = vmatpush1.msra.mxu0 %v3330
      %3438 = vmatprep.subr.mxu0 0.0
      %3439 = vmatpush1.msra.mxu0 %v3331
      %3440 = vmatprep.subr.mxu0 0.0
      %3441 = vmatpush1.msra.mxu0 %v3332
      %3442 = vmatprep.subr.mxu0 0.0
      %3443 = vmatpush1.msra.mxu0 %v3333
      %3444 = vmatprep.subr.mxu0 0.0
      %3445 = vmatpush1.msra.mxu0 %v3334
      %3446 = vmatprep.subr.mxu0 0.0
      %3447 = vmatpush1.msra.mxu0 %v3335
      %3448 = vmatprep.subr.mxu0 0.0
      %3449 = vmatpush1.msra.mxu0 %v3336
      %3450 = vmatprep.subr.mxu0 0.0
      %3451 = vmatpush1.msra.mxu0 %v3337
      %3452 = vmatprep.subr.mxu0 0.0
      %3453 = vmatpush1.msra.mxu0 %v3338
      %3454 = vmatprep.subr.mxu0 0.0
      %3455 = vmatpush1.msra.mxu0 %v3339
      %3456 = vmatprep.subr.mxu0 0.0
      %3457 = vmatpush1.msra.mxu0 %v3340
      %3458 = vmatprep.subr.mxu0 0.0
      %3459 = vmatpush1.msra.mxu0 %v3341
      %3460 = vmatprep.subr.mxu0 0.0
      %3461 = vmatpush1.msra.mxu0 %v3342
      %3462 = vmatprep.subr.mxu0 0.0
      %3463 = vmatpush1.msra.mxu0 %v3343
      %3464 = vmatprep.subr.mxu0 0.0
      %3465 = vmatpush1.msra.mxu0 %v3344
      %3466 = vmatprep.subr.mxu0 0.0
      %3467 = vmatpush1.msra.mxu0 %v3345
      %3468 = vmatprep.subr.mxu0 0.0
      %3469 = vmatpush1.msra.mxu0 %v3346
      %3470 = vmatprep.subr.mxu0 0.0
      %3471 = vmatpush1.msra.mxu0 %v3347
      %3472 = vmatprep.mubr.f32.mxu0 %v3351
      %3473 = vmatmul.mubr.f32.gmra.mrb[0].mxu0 %v3350
      %v3474 = vpop.f32.mrb[0].mxu0
      %v3475 = vadd.f32 %v3378, %v3474
      %v3476 = vpop.f32.mrb[0].mxu0
      %3477 = vmatprep.mubr.f32.mxu0 %v3354
      %3478 = vmatmul.mubr.f32.gmra.mrb[0].mxu0 %v3353
      %v3479 = vpop.f32.mrb[0].mxu0
      %v3480 = vadd.f32 %v3378, %v3479
      %v3481 = vpop.f32.mrb[0].mxu0
      %3482 = vmatprep.mubr.f32.mxu0 %v3357
      %3483 = vmatmul.mubr.f32.gmra.mrb[0].mxu0 %v3356
      %v3484 = vpop.f32.mrb[0].mxu0
      %v3485 = vadd.f32 %v3378, %v3484
      %v3486 = vpop.f32.mrb[0].mxu0
      %3487 = vmatprep.mubr.f32.mxu0 %v3360
      %3488 = vmatmul.mubr.f32.gmra.mrb[0].mxu0 %v3359
      %v3489 = vpop.f32.mrb[0].mxu0
      %v3490 = vadd.f32 %v3378, %v3489
      %v3491 = vpop.f32.mrb[0].mxu0
      %3492 = vmatprep.mubr.f32.mxu0 %v3363
      %3493 = vmatmul.mubr.f32.gmra.mrb[0].mxu0 %v3362
      %v3494 = vpop.f32.mrb[0].mxu0
      %v3495 = vadd.f32 %v3378, %v3494
      %v3496 = vpop.f32.mrb[0].mxu0
      %3497 = vmatprep.mubr.f32.mxu0 %v3366
      %3498 = vmatmul.mubr.f32.gmra.mrb[0].mxu0 %v3365
      %v3499 = vpop.f32.mrb[0].mxu0
      %v3500 = vadd.f32 %v3378, %v3499
      %v3501 = vpop.f32.mrb[0].mxu0
      %3502 = vmatprep.mubr.f32.mxu0 %v3369
      %3503 = vmatmul.mubr.f32.gmra.mrb[0].mxu0 %v3368
      %v3504 = vpop.f32.mrb[0].mxu0
      %v3505 = vadd.f32 %v3378, %v3504
      %v3506 = vpop.f32.mrb[0].mxu0
      %3507 = vmatprep.mubr.f32.mxu0 %v3372
      %3508 = vmatmul.mubr.f32.gmra.mrb[0].mxu0 %v3371
      %v3509 = vpop.f32.mrb[0].mxu0
      %v3510 = vadd.f32 %v3378, %v3509
      %v3511 = vpop.f32.mrb[0].mxu0
      %3512 = vdwg.mxu0
      %3513 = vmatprep.subr.mxu0 0.0
      %3514 = vmatpush1.msra.mxu0 %v3348
      %3515 = vmatprep.subr.mxu0 0.0
      %3516 = vmatpush1.msra.mxu0 %v3406
      %3517 = vmatprep.subr.mxu0 0.0
      %3518 = vmatpush1.msra.mxu0 0.0
      %3519 = vmatprep.subr.mxu0 0.0
      %3520 = vmatpush1.msra.mxu0 0.0
      %3521 = vmatprep.subr.mxu0 0.0
      %3522 = vmatpush1.msra.mxu0 0.0
      %3523 = vmatprep.subr.mxu0 0.0
      %3524 = vmatpush1.msra.mxu0 0.0
      %3525 = vmatprep.subr.mxu0 0.0
      %3526 = vmatpush1.msra.mxu0 0.0
      %3527 = vmatprep.subr.mxu0 0.0
      %3528 = vmatpush1.msra.mxu0 0.0
      %3529 = vmatprep.subr.mxu0 0.0
      %3530 = vmatpush1.msra.mxu0 0.0
      %3531 = vmatprep.subr.mxu0 0.0
      %3532 = vmatpush1.msra.mxu0 0.0
      %3533 = vmatprep.subr.mxu0 0.0
      %3534 = vmatpush1.msra.mxu0 0.0
      %3535 = vmatprep.subr.mxu0 0.0
      %3536 = vmatpush1.msra.mxu0 0.0
      %3537 = vmatprep.subr.mxu0 0.0
      %3538 = vmatpush1.msra.mxu0 0.0
      %3539 = vmatprep.subr.mxu0 0.0
      %3540 = vmatpush1.msra.mxu0 0.0
      %3541 = vmatprep.subr.mxu0 0.0
      %3542 = vmatpush1.msra.mxu0 0.0
      %3543 = vmatprep.subr.mxu0 0.0
      %3544 = vmatpush1.msra.mxu0 0.0
      %3545 = vmatprep.subr.mxu0 0.0
      %3546 = vmatpush1.msra.mxu0 0.0
      %3547 = vmatprep.subr.mxu0 0.0
      %3548 = vmatpush1.msra.mxu0 0.0
      %3549 = vmatprep.subr.mxu0 0.0
      %3550 = vmatpush1.msra.mxu0 0.0
      %3551 = vmatprep.subr.mxu0 0.0
      %3552 = vmatpush1.msra.mxu0 0.0
      %3553 = vmatprep.subr.mxu0 0.0
      %3554 = vmatpush1.msra.mxu0 0.0
      %3555 = vmatprep.subr.mxu0 0.0
      %3556 = vmatpush1.msra.mxu0 0.0
      %3557 = vmatprep.subr.mxu0 0.0
      %3558 = vmatpush1.msra.mxu0 0.0
      %3559 = vmatprep.subr.mxu0 0.0
      %3560 = vmatpush1.msra.mxu0 0.0
      %3561 = vmatprep.subr.mxu0 0.0
      %3562 = vmatpush1.msra.mxu0 0.0
      %3563 = vmatprep.subr.mxu0 0.0
      %3564 = vmatpush1.msra.mxu0 0.0
      %3565 = vmatprep.subr.mxu0 0.0
      %3566 = vmatpush1.msra.mxu0 0.0
      %3567 = vmatprep.subr.mxu0 0.0
      %3568 = vmatpush1.msra.mxu0 0.0
      %3569 = vmatprep.subr.mxu0 0.0
      %3570 = vmatpush1.msra.mxu0 0.0
      %3571 = vmatprep.subr.mxu0 0.0
      %3572 = vmatpush1.msra.mxu0 0.0
      %3573 = vmatprep.subr.mxu0 0.0
      %3574 = vmatpush1.msra.mxu0 0.0
      %3575 = vmatprep.subr.mxu0 0.0
      %3576 = vmatpush1.msra.mxu0 0.0
      %3577 = vmatprep.mubr.f32.mxu0 0.0
      %3578 = vmatmul.mubr.f32.gmra.mrb[0].mxu0 %v3381
      %v3579 = vpop.f32.mrb[0].mxu0
      %v3580 = vadd.f32 %v3475, %v3579
      %v3581 = vpop.f32.mrb[0].mxu0
      %3582 = vmatprep.mubr.f32.mxu0 0.0
      %3583 = vmatmul.mubr.f32.gmra.mrb[0].mxu0 %v3384
      %v3584 = vpop.f32.mrb[0].mxu0
      %v3585 = vadd.f32 %v3480, %v3584
      %v3586 = vpop.f32.mrb[0].mxu0
      %3587 = vmatprep.mubr.f32.mxu0 0.0
      %3588 = vmatmul.mubr.f32.gmra.mrb[0].mxu0 %v3387
      %v3589 = vpop.f32.mrb[0].mxu0
      %v3590 = vadd.f32 %v3485, %v3589
      %v3591 = vpop.f32.mrb[0].mxu0
      %3592 = vmatprep.mubr.f32.mxu0 0.0
      %3593 = vmatmul.mubr.f32.gmra.mrb[0].mxu0 %v3390
      %v3594 = vpop.f32.mrb[0].mxu0
      %v3595 = vadd.f32 %v3490, %v3594
      %v3596 = vpop.f32.mrb[0].mxu0
      %3597 = vmatprep.mubr.f32.mxu0 0.0
      %3598 = vmatmul.mubr.f32.gmra.mrb[0].mxu0 %v3393
      %v3599 = vpop.f32.mrb[0].mxu0
      %v3600 = vadd.f32 %v3495, %v3599
      %v3601 = vpop.f32.mrb[0].mxu0
      %3602 = vmatprep.mubr.f32.mxu0 0.0
      %3603 = vmatmul.mubr.f32.gmra.mrb[0].mxu0 %v3396
      %v3604 = vpop.f32.mrb[0].mxu0
      %v3605 = vadd.f32 %v3500, %v3604
      %v3606 = vpop.f32.mrb[0].mxu0
      %3607 = vmatprep.mubr.f32.mxu0 0.0
      %3608 = vmatmul.mubr.f32.gmra.mrb[0].mxu0 %v3399
      %v3609 = vpop.f32.mrb[0].mxu0
      %v3610 = vadd.f32 %v3505, %v3609
      %v3611 = vpop.f32.mrb[0].mxu0
      %3612 = vmatprep.mubr.f32.mxu0 0.0
      %3613 = vmatmul.mubr.f32.gmra.mrb[0].mxu0 %v3402
      %v3614 = vpop.f32.mrb[0].mxu0
      %v3615 = vadd.f32 %v3510, %v3614
      %v3616 = vpop.f32.mrb[0].mxu0
      %3617 = vdwg.mxu0
      %vm3618 = vcmp.ge.f32.partialorder %v3580, 0.0
      %vm3619 = vcmp.ge.f32.partialorder %v3585, 0.0
      %vm3620 = vcmp.ge.f32.partialorder %v3590, 0.0
      %vm3621 = vcmp.ge.f32.partialorder %v3595, 0.0
      %vm3622 = vcmp.ge.f32.partialorder %v3600, 0.0
      %vm3623 = vcmp.ge.f32.partialorder %v3605, 0.0
      %vm3624 = vcmp.ge.f32.partialorder %v3610, 0.0
      %vm3625 = vcmp.ge.f32.partialorder %v3615, 0.0
      %v3626 = vmul.f32 %v3580, 0.2
      %v3627 = vmul.f32 %v3585, 0.2
      %v3628 = vmul.f32 %v3590, 0.2
      %v3629 = vmul.f32 %v3595, 0.2
      %v3630 = vmul.f32 %v3600, 0.2
      %v3631 = vmul.f32 %v3605, 0.2
      %v3632 = vmul.f32 %v3610, 0.2
      %v3633 = vmul.f32 %v3615, 0.2
      %v3634 = vsel %vm3618, %v3580, %v3626
      %v3635 = vsel %vm3619, %v3585, %v3627
      %v3636 = vsel %vm3620, %v3590, %v3628
      %v3637 = vsel %vm3621, %v3595, %v3629
      %v3638 = vsel %vm3622, %v3600, %v3630
      %v3639 = vsel %vm3623, %v3605, %v3631
      %v3640 = vsel %vm3624, %v3610, %v3632
      %v3641 = vsel %vm3625, %v3615, %v3633
      %v3642 = vlaneseq
      %v3643 = vshrl.u32 %v3642, 7
      %v3644 = vsub.s32 1, %v3643
      %v3645 = vrot.slane %v3374, %v3644
      %v3646 = vmul.f32 %v3634, %v3645
      %v3647 = vmul.f32 %v3635, %v3645
      %v3648 = vmul.f32 %v3636, %v3645
      %v3649 = vmul.f32 %v3637, %v3645
      %v3650 = vmul.f32 %v3638, %v3645
      %v3651 = vmul.f32 %v3639, %v3645
      %v3652 = vmul.f32 %v3640, %v3645
      %v3653 = vmul.f32 %v3641, %v3645
      %v3654 = vlaneseq
      %v3655 = vshrl.u32 %v3654, 7
      %v3656 = vsub.s32 2, %v3655
      %v3657 = vrot.slane %v3374, %v3656
      %v3658 = vadd.f32 %v3646, %v3657
      %v3659 = vadd.f32 %v3647, %v3657
      %v3660 = vadd.f32 %v3648, %v3657
      %v3661 = vadd.f32 %v3649, %v3657
      %v3662 = vadd.f32 %v3650, %v3657
      %v3663 = vadd.f32 %v3651, %v3657
      %v3664 = vadd.f32 %v3652, %v3657
      %v3665 = vadd.f32 %v3653, %v3657
      %v3666 = vld [vmem:[%s4] sm:$0xff]
      %v3667 = vld [vmem:[%s4 + $0x8] sm:$0xff]
      %v3668 = vld [vmem:[%s4 + $0x10] sm:$0xff]
      %v3669 = vld [vmem:[%s4 + $0x18] sm:$0xff]
      %v3670 = vld [vmem:[%s4 + $0x20] sm:$0xff]
      %v3671 = vld [vmem:[%s4 + $0x28] sm:$0xff]
      %v3672 = vld [vmem:[%s4 + $0x30] sm:$0xff]
      %v3673 = vld [vmem:[%s4 + $0x38] sm:$0xff]
      %v3674 = vld [vmem:[%s4 + $0x40] sm:$0xff]
      %v3675 = vld [vmem:[%s4 + $0x48] sm:$0xff]
      %v3676 = vld [vmem:[%s4 + $0x50] sm:$0xff]
      %v3677 = vld [vmem:[%s4 + $0x58] sm:$0xff]
      %v3678 = vld [vmem:[%s4 + $0x60] sm:$0xf]
      %vm3679 = vcmask 523264
      %v3681 = vsel %vm3679, %v3666, 0
      %v3684 = vsel %vm3679, %v3667, 0
      %v3687 = vsel %vm3679, %v3668, 0
      %v3690 = vsel %vm3679, %v3669, 0
      %v3693 = vsel %vm3679, %v3670, 0
      %v3696 = vsel %vm3679, %v3671, 0
      %v3699 = vsel %vm3679, %v3672, 0
      %v3702 = vsel %vm3679, %v3673, 0
      %v3705 = vsel %vm3679, %v3674, 0
      %v3708 = vsel %vm3679, %v3675, 0
      %v3711 = vsel %vm3679, %v3676, 0
      %v3714 = vsel %vm3679, %v3677, 0
      %v3717 = vsel %vm3679, %v3678, 0
      %3719 = vmatprep.subr.mxu0 0.0
      %3720 = vmatpush1.msra.mxu0 %v3658
      %3721 = vmatprep.subr.mxu0 0.0
      %3722 = vmatpush1.msra.mxu0 %v3659
      %3723 = vmatprep.subr.mxu0 0.0
      %3724 = vmatpush1.msra.mxu0 %v3660
      %3725 = vmatprep.subr.mxu0 0.0
      %3726 = vmatpush1.msra.mxu0 %v3661
      %3727 = vmatprep.subr.mxu0 0.0
      %3728 = vmatpush1.msra.mxu0 %v3662
      %3729 = vmatprep.subr.mxu0 0.0
      %3730 = vmatpush1.msra.mxu0 %v3663
      %3731 = vmatprep.subr.mxu0 0.0
      %3732 = vmatpush1.msra.mxu0 %v3664
      %3733 = vmatprep.subr.mxu0 0.0
      %3734 = vmatpush1.msra.mxu0 %v3665
      %3735 = vmatprep.subr.mxu0 0.0
      %3736 = vmatpush1.msra.mxu0 0.0
      %3737 = vmatprep.subr.mxu0 0.0
      %3738 = vmatpush1.msra.mxu0 0.0
      %3739 = vmatprep.subr.mxu0 0.0
      %3740 = vmatpush1.msra.mxu0 0.0
      %3741 = vmatprep.subr.mxu0 0.0
      %3742 = vmatpush1.msra.mxu0 0.0
      %3743 = vmatprep.subr.mxu0 0.0
      %3744 = vmatpush1.msra.mxu0 0.0
      %3745 = vmatprep.subr.mxu0 0.0
      %3746 = vmatpush1.msra.mxu0 0.0
      %3747 = vmatprep.subr.mxu0 0.0
      %3748 = vmatpush1.msra.mxu0 0.0
      %3749 = vmatprep.subr.mxu0 0.0
      %3750 = vmatpush1.msra.mxu0 0.0
      %3751 = vmatprep.subr.mxu0 0.0
      %3752 = vmatpush1.msra.mxu0 0.0
      %3753 = vmatprep.subr.mxu0 0.0
      %3754 = vmatpush1.msra.mxu0 0.0
      %3755 = vmatprep.subr.mxu0 0.0
      %3756 = vmatpush1.msra.mxu0 0.0
      %3757 = vmatprep.subr.mxu0 0.0
      %3758 = vmatpush1.msra.mxu0 0.0
      %3759 = vmatprep.subr.mxu0 0.0
      %3760 = vmatpush1.msra.mxu0 0.0
      %3761 = vmatprep.subr.mxu0 0.0
      %3762 = vmatpush1.msra.mxu0 0.0
      %3763 = vmatprep.subr.mxu0 0.0
      %3764 = vmatpush1.msra.mxu0 0.0
      %3765 = vmatprep.subr.mxu0 0.0
      %3766 = vmatpush1.msra.mxu0 0.0
      %3767 = vmatprep.subr.mxu0 0.0
      %3768 = vmatpush1.msra.mxu0 0.0
      %3769 = vmatprep.subr.mxu0 0.0
      %3770 = vmatpush1.msra.mxu0 0.0
      %3771 = vmatprep.subr.mxu0 0.0
      %3772 = vmatpush1.msra.mxu0 0.0
      %3773 = vmatprep.subr.mxu0 0.0
      %3774 = vmatpush1.msra.mxu0 0.0
      %3775 = vmatprep.subr.mxu0 0.0
      %3776 = vmatpush1.msra.mxu0 0.0
      %3777 = vmatprep.subr.mxu0 0.0
      %3778 = vmatpush1.msra.mxu0 0.0
      %3779 = vmatprep.subr.mxu0 0.0
      %3780 = vmatpush1.msra.mxu0 0.0
      %3781 = vmatprep.subr.mxu0 0.0
      %3782 = vmatpush1.msra.mxu0 0.0
      %3783 = vmatprep.mubr.f32.mxu0 0.0
      %3784 = vmatmul.mubr.f32.gmra.mrb[0].mxu0 %v3681
      %v3785 = vpop.f32.mrb[0].mxu0
      %v3786 = vadd.f32 0.0, %v3785
      %v3787 = vpop.f32.mrb[0].mxu0
      %3788 = vmatprep.mubr.f32.mxu0 0.0
      %3789 = vmatmul.mubr.f32.gmra.mrb[0].mxu0 %v3684
      %v3790 = vpop.f32.mrb[0].mxu0
      %v3791 = vadd.f32 0.0, %v3790
      %v3792 = vpop.f32.mrb[0].mxu0
      %3793 = vmatprep.mubr.f32.mxu0 0.0
      %3794 = vmatmul.mubr.f32.gmra.mrb[0].mxu0 %v3687
      %v3795 = vpop.f32.mrb[0].mxu0
      %v3796 = vadd.f32 0.0, %v3795
      %v3797 = vpop.f32.mrb[0].mxu0
      %3798 = vmatprep.mubr.f32.mxu0 0.0
      %3799 = vmatmul.mubr.f32.gmra.mrb[0].mxu0 %v3690
      %v3800 = vpop.f32.mrb[0].mxu0
      %v3801 = vadd.f32 0.0, %v3800
      %v3802 = vpop.f32.mrb[0].mxu0
      %3803 = vmatprep.mubr.f32.mxu0 0.0
      %3804 = vmatmul.mubr.f32.gmra.mrb[0].mxu0 %v3693
      %v3805 = vpop.f32.mrb[0].mxu0
      %v3806 = vadd.f32 0.0, %v3805
      %v3807 = vpop.f32.mrb[0].mxu0
      %3808 = vmatprep.mubr.f32.mxu0 0.0
      %3809 = vmatmul.mubr.f32.gmra.mrb[0].mxu0 %v3696
      %v3810 = vpop.f32.mrb[0].mxu0
      %v3811 = vadd.f32 0.0, %v3810
      %v3812 = vpop.f32.mrb[0].mxu0
      %3813 = vmatprep.mubr.f32.mxu0 0.0
      %3814 = vmatmul.mubr.f32.gmra.mrb[0].mxu0 %v3699
      %v3815 = vpop.f32.mrb[0].mxu0
      %v3816 = vadd.f32 0.0, %v3815
      %v3817 = vpop.f32.mrb[0].mxu0
      %3818 = vmatprep.mubr.f32.mxu0 0.0
      %3819 = vmatmul.mubr.f32.gmra.mrb[0].mxu0 %v3702
      %v3820 = vpop.f32.mrb[0].mxu0
      %v3821 = vadd.f32 0.0, %v3820
      %v3822 = vpop.f32.mrb[0].mxu0
      %3823 = vmatprep.mubr.f32.mxu0 0.0
      %3824 = vmatmul.mubr.f32.gmra.mrb[0].mxu0 %v3705
      %v3825 = vpop.f32.mrb[0].mxu0
      %v3826 = vadd.f32 0.0, %v3825
      %v3827 = vpop.f32.mrb[0].mxu0
      %3828 = vmatprep.mubr.f32.mxu0 0.0
      %3829 = vmatmul.mubr.f32.gmra.mrb[0].mxu0 %v3708
      %v3830 = vpop.f32.mrb[0].mxu0
      %v3831 = vadd.f32 0.0, %v3830
      %v3832 = vpop.f32.mrb[0].mxu0
      %3833 = vmatprep.mubr.f32.mxu0 0.0
      %3834 = vmatmul.mubr.f32.gmra.mrb[0].mxu0 %v3711
      %v3835 = vpop.f32.mrb[0].mxu0
      %v3836 = vadd.f32 0.0, %v3835
      %v3837 = vpop.f32.mrb[0].mxu0
      %3838 = vmatprep.mubr.f32.mxu0 0.0
      %3839 = vmatmul.mubr.f32.gmra.mrb[0].mxu0 %v3714
      %v3840 = vpop.f32.mrb[0].mxu0
      %v3841 = vadd.f32 0.0, %v3840
      %v3842 = vpop.f32.mrb[0].mxu0
      %3843 = vmatprep.mubr.f32.mxu0 0.0
      %3844 = vmatmul.mubr.f32.gmra.mrb[0].mxu0 %v3717
      %v3845 = vpop.f32.mrb[0].mxu0
      %v3846 = vadd.f32 0.0, %v3845
      %v3847 = vpop.f32.mrb[0].mxu0
      %3848 = vdwg.mxu0
      %3849 = vst [vmem:[#allocation2] sm:$0xff] %v3786
      %3850 = vst [vmem:[#allocation2 + $0x8] sm:$0xff] %v3791
      %3851 = vst [vmem:[#allocation2 + $0x10] sm:$0xff] %v3796
      %3852 = vst [vmem:[#allocation2 + $0x18] sm:$0xff] %v3801
      %3853 = vst [vmem:[#allocation2 + $0x20] sm:$0xff] %v3806
      %3854 = vst [vmem:[#allocation2 + $0x28] sm:$0xff] %v3811
      %3855 = vst [vmem:[#allocation2 + $0x30] sm:$0xff] %v3816
      %3856 = vst [vmem:[#allocation2 + $0x38] sm:$0xff] %v3821
      %3857 = vst [vmem:[#allocation2 + $0x40] sm:$0xff] %v3826
      %3858 = vst [vmem:[#allocation2 + $0x48] sm:$0xff] %v3831
      %3859 = vst [vmem:[#allocation2 + $0x50] sm:$0xff] %v3836
      %3860 = vst [vmem:[#allocation2 + $0x58] sm:$0xff] %v3841
      %3861 = vst [vmem:[#allocation2 + $0x60] sm:$0xf] %v3846
      %v3862 = vld [vmem:[#allocation2] sm:$0xff]
      %v3863 = vld [vmem:[#allocation2 + $0x8] sm:$0xff]
      %v3864 = vld [vmem:[#allocation2 + $0x10] sm:$0xff]
      %v3865 = vld [vmem:[#allocation2 + $0x18] sm:$0xff]
      %v3866 = vld [vmem:[#allocation2 + $0x20] sm:$0xff]
      %v3867 = vld [vmem:[#allocation2 + $0x28] sm:$0xff]
      %v3868 = vld [vmem:[#allocation2 + $0x30] sm:$0xff]
      %v3869 = vld [vmem:[#allocation2 + $0x38] sm:$0xff]
      %v3870 = vld [vmem:[#allocation2 + $0x40] sm:$0x7]
      %v3871 = vpack.c.bf16 %v3863, %v3862
      %v3872 = vpack.c.bf16 %v3865, %v3864
      %v3873 = vpack.c.bf16 %v3867, %v3866
      %v3874 = vpack.c.bf16 %v3869, %v3868
      %v3875 = vpack.c.bf16 %v3870, %v3870
      %v3876 = vld [vmem:[%s5] sm:$0xf]
      %v3877 = vld [vmem:[%s5 + $0x4] sm:$0xf]
      %v3878 = vld [vmem:[%s5 + $0x8] sm:$0xf]
      %v3879 = vld [vmem:[%s5 + $0xc] sm:$0xf]
      %v3880 = vld [vmem:[%s5 + $0x10] sm:$0xf]
      %v3881 = vld [vmem:[%s5 + $0x14] sm:$0xf]
      %v3882 = vld [vmem:[%s5 + $0x18] sm:$0xf]
      %v3883 = vld [vmem:[%s5 + $0x1c] sm:$0xf]
      %v3884 = vld [vmem:[%s5 + $0x20] sm:$0xf]
      %v3885 = vld [vmem:[%s5 + $0x24] sm:$0xf]
      %v3886 = vld [vmem:[%s5 + $0x28] sm:$0xf]
      %v3887 = vld [vmem:[%s5 + $0x2c] sm:$0xf]
      %v3888 = vld [vmem:[%s5 + $0x30] sm:$0xf]
      %v3889 = vld [vmem:[%s5 + $0x34] sm:$0xf]
      %v3890 = vld [vmem:[%s5 + $0x38] sm:$0xf]
      %v3891 = vld [vmem:[%s5 + $0x3c] sm:$0xf]
      %v3892 = vld [vmem:[#allocation2 + $0x1] sm:$0xff]
      %v3893 = vld [vmem:[#allocation2 + $0x9] sm:$0xff]
      %v3894 = vld [vmem:[#allocation2 + $0x11] sm:$0xff]
      %v3895 = vld [vmem:[#allocation2 + $0x19] sm:$0xff]
      %v3896 = vld [vmem:[#allocation2 + $0x21] sm:$0xff]
      %v3897 = vld [vmem:[#allocation2 + $0x29] sm:$0xff]
      %v3898 = vld [vmem:[#allocation2 + $0x31] sm:$0xff]
      %v3899 = vld [vmem:[#allocation2 + $0x39] sm:$0xff]
      %v3900 = vld [vmem:[#allocation2 + $0x41] sm:$0x7]
      %v3901 = vpack.c.bf16 %v3893, %v3892
      %v3902 = vpack.c.bf16 %v3895, %v3894
      %v3903 = vpack.c.bf16 %v3897, %v3896
      %v3904 = vpack.c.bf16 %v3899, %v3898
      %v3905 = vpack.c.bf16 %v3900, %v3900
      %s3906 = scalar_lea.vmem %s5, 64
      %v3907 = vld [vmem:[%s3906] sm:$0xf]
      %v3908 = vld [vmem:[%s3906 + $0x4] sm:$0xf]
      %v3909 = vld [vmem:[%s3906 + $0x8] sm:$0xf]
      %v3910 = vld [vmem:[%s3906 + $0xc] sm:$0xf]
      %v3911 = vld [vmem:[%s3906 + $0x10] sm:$0xf]
      %v3912 = vld [vmem:[%s3906 + $0x14] sm:$0xf]
      %v3913 = vld [vmem:[%s3906 + $0x18] sm:$0xf]
      %v3914 = vld [vmem:[%s3906 + $0x1c] sm:$0xf]
      %v3915 = vld [vmem:[%s3906 + $0x20] sm:$0xf]
      %v3916 = vld [vmem:[%s3906 + $0x24] sm:$0xf]
      %v3917 = vld [vmem:[%s3906 + $0x28] sm:$0xf]
      %v3918 = vld [vmem:[%s3906 + $0x2c] sm:$0xf]
      %v3919 = vld [vmem:[%s3906 + $0x30] sm:$0xf]
      %v3920 = vld [vmem:[%s3906 + $0x34] sm:$0xf]
      %v3921 = vld [vmem:[%s3906 + $0x38] sm:$0xf]
      %v3922 = vld [vmem:[%s3906 + $0x3c] sm:$0xf]
      %v3939 = vunpack.c.l.b16 %v3907
      %v3940 = vunpack.c.l.b16 %v3908
      %v3941 = vunpack.c.l.b16 %v3909
      %v3942 = vunpack.c.l.b16 %v3910
      %v3943 = vunpack.c.l.b16 %v3911
      %v3944 = vunpack.c.l.b16 %v3912
      %v3945 = vunpack.c.l.b16 %v3913
      %v3946 = vunpack.c.l.b16 %v3914
      %v3947 = vunpack.c.l.b16 %v3915
      %v3948 = vunpack.c.l.b16 %v3916
      %v3949 = vunpack.c.l.b16 %v3917
      %v3950 = vunpack.c.l.b16 %v3918
      %v3951 = vunpack.c.l.b16 %v3919
      %v3952 = vunpack.c.l.b16 %v3920
      %v3953 = vunpack.c.l.b16 %v3921
      %v3954 = vunpack.c.l.b16 %v3922
      %v3955 = vpack.c.b16 %v3940, %v3939
      %v3956 = vpack.c.b16 %v3942, %v3941
      %v3957 = vpack.c.b16 %v3944, %v3943
      %v3958 = vpack.c.b16 %v3946, %v3945
      %v3959 = vpack.c.b16 %v3948, %v3947
      %v3960 = vpack.c.b16 %v3950, %v3949
      %v3961 = vpack.c.b16 %v3952, %v3951
      %v3962 = vpack.c.b16 %v3954, %v3953
      %3971 = vmatprep.subr.bf16.mxu0 0
      %3972 = vmatpush1.bf16.msra.mxu0 %v3955
      %3973 = vmatprep.subr.bf16.mxu0 0
      %3974 = vmatpush1.bf16.msra.mxu0 %v3956
      %3975 = vmatprep.subr.bf16.mxu0 0
      %3976 = vmatpush1.bf16.msra.mxu0 %v3957
      %3977 = vmatprep.subr.bf16.mxu0 0
      %3978 = vmatpush1.bf16.msra.mxu0 %v3958
      %3979 = vmatprep.subr.bf16.mxu0 0
      %3980 = vmatpush1.bf16.msra.mxu0 %v3959
      %3981 = vmatprep.subr.bf16.mxu0 0
      %3982 = vmatpush1.bf16.msra.mxu0 %v3960
      %3983 = vmatprep.subr.bf16.mxu0 0
      %3984 = vmatpush1.bf16.msra.mxu0 %v3961
      %3985 = vmatprep.subr.bf16.mxu0 0
      %3986 = vmatpush1.bf16.msra.mxu0 %v3962
      %3987 = vmatprep.subr.bf16.mxu0 0
      %3988 = vmatpush1.bf16.msra.mxu0 0
      %3989 = vmatprep.subr.bf16.mxu0 0
      %3990 = vmatpush1.bf16.msra.mxu0 0
      %3991 = vmatprep.subr.bf16.mxu0 0
      %3992 = vmatpush1.bf16.msra.mxu0 0
      %3993 = vmatprep.subr.bf16.mxu0 0
      %3994 = vmatpush1.bf16.msra.mxu0 0
      %3995 = vmatprep.subr.bf16.mxu0 0
      %3996 = vmatpush1.bf16.msra.mxu0 0
      %3997 = vmatprep.subr.bf16.mxu0 0
      %3998 = vmatpush1.bf16.msra.mxu0 0
      %3999 = vmatprep.subr.bf16.mxu0 0
      %4000 = vmatpush1.bf16.msra.mxu0 0
      %4001 = vmatprep.subr.bf16.mxu0 0
      %4002 = vmatpush1.bf16.msra.mxu0 0
      %4003 = vmatprep.mubr.bf16.mxu0 0
      %4004 = vmatmul.mubr.bf16.gmra.mrb[0].mxu0 %v3901
      %v4005 = vpop.f32.mrb[0].mxu0
      %v4006 = vadd.f32 0.0, %v4005
      %v4007 = vpop.f32.mrb[0].mxu0
      %v4008 = vpop.f32.mrb[0].mxu0
      %v4009 = vadd.f32 0.0, %v4008
      %v4010 = vpop.f32.mrb[0].mxu0
      %4011 = vmatprep.mubr.bf16.mxu0 0
      %4012 = vmatmul.mubr.bf16.gmra.mrb[0].mxu0 %v3902
      %v4013 = vpop.f32.mrb[0].mxu0
      %v4014 = vadd.f32 0.0, %v4013
      %v4015 = vpop.f32.mrb[0].mxu0
      %v4016 = vpop.f32.mrb[0].mxu0
      %v4017 = vadd.f32 0.0, %v4016
      %v4018 = vpop.f32.mrb[0].mxu0
      %4019 = vmatprep.mubr.bf16.mxu0 0
      %4020 = vmatmul.mubr.bf16.gmra.mrb[0].mxu0 %v3903
      %v4021 = vpop.f32.mrb[0].mxu0
      %v4022 = vadd.f32 0.0, %v4021
      %v4023 = vpop.f32.mrb[0].mxu0
      %v4024 = vpop.f32.mrb[0].mxu0
      %v4025 = vadd.f32 0.0, %v4024
      %v4026 = vpop.f32.mrb[0].mxu0
      %4027 = vmatprep.mubr.bf16.mxu0 0
      %4028 = vmatmul.mubr.bf16.gmra.mrb[0].mxu0 %v3904
      %v4029 = vpop.f32.mrb[0].mxu0
      %v4030 = vadd.f32 0.0, %v4029
      %v4031 = vpop.f32.mrb[0].mxu0
      %v4032 = vpop.f32.mrb[0].mxu0
      %v4033 = vadd.f32 0.0, %v4032
      %v4034 = vpop.f32.mrb[0].mxu0
      %4035 = vmatprep.mubr.bf16.mxu0 0
      %4036 = vmatmul.mubr.bf16.gmra.mrb[0].mxu0 %v3905
      %v4037 = vpop.f32.mrb[0].mxu0
      %v4038 = vadd.f32 0.0, %v4037
      %v4039 = vpop.f32.mrb[0].mxu0
      %v4040 = vpop.f32.mrb[0].mxu0
      %v4041 = vpop.f32.mrb[0].mxu0
      %4042 = vdwg.mxu0
      %v4059 = vunpack.c.l.b16 %v3876
      %v4060 = vunpack.c.l.b16 %v3877
      %v4061 = vunpack.c.l.b16 %v3878
      %v4062 = vunpack.c.l.b16 %v3879
      %v4063 = vunpack.c.l.b16 %v3880
      %v4064 = vunpack.c.l.b16 %v3881
      %v4065 = vunpack.c.l.b16 %v3882
      %v4066 = vunpack.c.l.b16 %v3883
      %v4067 = vunpack.c.l.b16 %v3884
      %v4068 = vunpack.c.l.b16 %v3885
      %v4069 = vunpack.c.l.b16 %v3886
      %v4070 = vunpack.c.l.b16 %v3887
      %v4071 = vunpack.c.l.b16 %v3888
      %v4072 = vunpack.c.l.b16 %v3889
      %v4073 = vunpack.c.l.b16 %v3890
      %v4074 = vunpack.c.l.b16 %v3891
      %v4075 = vpack.c.b16 %v4060, %v4059
      %v4076 = vpack.c.b16 %v4062, %v4061
      %v4077 = vpack.c.b16 %v4064, %v4063
      %v4078 = vpack.c.b16 %v4066, %v4065
      %v4079 = vpack.c.b16 %v4068, %v4067
      %v4080 = vpack.c.b16 %v4070, %v4069
      %v4081 = vpack.c.b16 %v4072, %v4071
      %v4082 = vpack.c.b16 %v4074, %v4073
      %4091 = vmatprep.subr.bf16.mxu0 0
      %4092 = vmatpush1.bf16.msra.mxu0 %v4075
      %4093 = vmatprep.subr.bf16.mxu0 0
      %4094 = vmatpush1.bf16.msra.mxu0 %v4076
      %4095 = vmatprep.subr.bf16.mxu0 0
      %4096 = vmatpush1.bf16.msra.mxu0 %v4077
      %4097 = vmatprep.subr.bf16.mxu0 0
      %4098 = vmatpush1.bf16.msra.mxu0 %v4078
      %4099 = vmatprep.subr.bf16.mxu0 0
      %4100 = vmatpush1.bf16.msra.mxu0 %v4079
      %4101 = vmatprep.subr.bf16.mxu0 0
      %4102 = vmatpush1.bf16.msra.mxu0 %v4080
      %4103 = vmatprep.subr.bf16.mxu0 0
      %4104 = vmatpush1.bf16.msra.mxu0 %v4081
      %4105 = vmatprep.subr.bf16.mxu0 0
      %4106 = vmatpush1.bf16.msra.mxu0 %v4082
      %4107 = vmatprep.subr.bf16.mxu0 0
      %4108 = vmatpush1.bf16.msra.mxu0 0
      %4109 = vmatprep.subr.bf16.mxu0 0
      %4110 = vmatpush1.bf16.msra.mxu0 0
      %4111 = vmatprep.subr.bf16.mxu0 0
      %4112 = vmatpush1.bf16.msra.mxu0 0
      %4113 = vmatprep.subr.bf16.mxu0 0
      %4114 = vmatpush1.bf16.msra.mxu0 0
      %4115 = vmatprep.subr.bf16.mxu0 0
      %4116 = vmatpush1.bf16.msra.mxu0 0
      %4117 = vmatprep.subr.bf16.mxu0 0
      %4118 = vmatpush1.bf16.msra.mxu0 0
      %4119 = vmatprep.subr.bf16.mxu0 0
      %4120 = vmatpush1.bf16.msra.mxu0 0
      %4121 = vmatprep.subr.bf16.mxu0 0
      %4122 = vmatpush1.bf16.msra.mxu0 0
      %4123 = vmatprep.mubr.bf16.mxu0 0
      %4124 = vmatmul.mubr.bf16.gmra.mrb[0].mxu0 %v3871
      %v4125 = vpop.f32.mrb[0].mxu0
      %v4126 = vadd.f32 %v4006, %v4125
      %v4127 = vpop.f32.mrb[0].mxu0
      %v4128 = vpop.f32.mrb[0].mxu0
      %v4129 = vadd.f32 %v4009, %v4128
      %v4130 = vpop.f32.mrb[0].mxu0
      %4131 = vmatprep.mubr.bf16.mxu0 0
      %4132 = vmatmul.mubr.bf16.gmra.mrb[0].mxu0 %v3872
      %v4133 = vpop.f32.mrb[0].mxu0
      %v4134 = vadd.f32 %v4014, %v4133
      %v4135 = vpop.f32.mrb[0].mxu0
      %v4136 = vpop.f32.mrb[0].mxu0
      %v4137 = vadd.f32 %v4017, %v4136
      %v4138 = vpop.f32.mrb[0].mxu0
      %4139 = vmatprep.mubr.bf16.mxu0 0
      %4140 = vmatmul.mubr.bf16.gmra.mrb[0].mxu0 %v3873
      %v4141 = vpop.f32.mrb[0].mxu0
      %v4142 = vadd.f32 %v4022, %v4141
      %v4143 = vpop.f32.mrb[0].mxu0
      %v4144 = vpop.f32.mrb[0].mxu0
      %v4145 = vadd.f32 %v4025, %v4144
      %v4146 = vpop.f32.mrb[0].mxu0
      %4147 = vmatprep.mubr.bf16.mxu0 0
      %4148 = vmatmul.mubr.bf16.gmra.mrb[0].mxu0 %v3874
      %v4149 = vpop.f32.mrb[0].mxu0
      %v4150 = vadd.f32 %v4030, %v4149
      %v4151 = vpop.f32.mrb[0].mxu0
      %v4152 = vpop.f32.mrb[0].mxu0
      %v4153 = vadd.f32 %v4033, %v4152
      %v4154 = vpop.f32.mrb[0].mxu0
      %4155 = vmatprep.mubr.bf16.mxu0 0
      %4156 = vmatmul.mubr.bf16.gmra.mrb[0].mxu0 %v3875
      %v4157 = vpop.f32.mrb[0].mxu0
      %v4158 = vadd.f32 %v4038, %v4157
      %v4159 = vpop.f32.mrb[0].mxu0
      %v4160 = vpop.f32.mrb[0].mxu0
      %v4161 = vpop.f32.mrb[0].mxu0
      %4162 = vdwg.mxu0
      %v4163 = vld [vmem:[#allocation2 + $0x2] sm:$0xff]
      %v4164 = vld [vmem:[#allocation2 + $0xa] sm:$0xff]
      %v4165 = vld [vmem:[#allocation2 + $0x12] sm:$0xff]
      %v4166 = vld [vmem:[#allocation2 + $0x1a] sm:$0xff]
      %v4167 = vld [vmem:[#allocation2 + $0x22] sm:$0xff]
      %v4168 = vld [vmem:[#allocation2 + $0x2a] sm:$0xff]
      %v4169 = vld [vmem:[#allocation2 + $0x32] sm:$0xff]
      %v4170 = vld [vmem:[#allocation2 + $0x3a] sm:$0xff]
      %v4171 = vld [vmem:[#allocation2 + $0x42] sm:$0x7]
      %v4172 = vpack.c.bf16 %v4164, %v4163
      %v4173 = vpack.c.bf16 %v4166, %v4165
      %v4174 = vpack.c.bf16 %v4168, %v4167
      %v4175 = vpack.c.bf16 %v4170, %v4169
      %v4176 = vpack.c.bf16 %v4171, %v4171
      %s4177 = scalar_lea.vmem %s5, 128
      %v4178 = vld [vmem:[%s4177] sm:$0xf]
      %v4179 = vld [vmem:[%s4177 + $0x4] sm:$0xf]
      %v4180 = vld [vmem:[%s4177 + $0x8] sm:$0xf]
      %v4181 = vld [vmem:[%s4177 + $0xc] sm:$0xf]
      %v4182 = vld [vmem:[%s4177 + $0x10] sm:$0xf]
      %v4183 = vld [vmem:[%s4177 + $0x14] sm:$0xf]
      %v4184 = vld [vmem:[%s4177 + $0x18] sm:$0xf]
      %v4185 = vld [vmem:[%s4177 + $0x1c] sm:$0xf]
      %v4186 = vld [vmem:[%s4177 + $0x20] sm:$0xf]
      %v4187 = vld [vmem:[%s4177 + $0x24] sm:$0xf]
      %v4188 = vld [vmem:[%s4177 + $0x28] sm:$0xf]
      %v4189 = vld [vmem:[%s4177 + $0x2c] sm:$0xf]
      %v4190 = vld [vmem:[%s4177 + $0x30] sm:$0xf]
      %v4191 = vld [vmem:[%s4177 + $0x34] sm:$0xf]
      %v4192 = vld [vmem:[%s4177 + $0x38] sm:$0xf]
      %v4193 = vld [vmem:[%s4177 + $0x3c] sm:$0xf]
      %v4210 = vunpack.c.l.b16 %v4178
      %v4211 = vunpack.c.l.b16 %v4179
      %v4212 = vunpack.c.l.b16 %v4180
      %v4213 = vunpack.c.l.b16 %v4181
      %v4214 = vunpack.c.l.b16 %v4182
      %v4215 = vunpack.c.l.b16 %v4183
      %v4216 = vunpack.c.l.b16 %v4184
      %v4217 = vunpack.c.l.b16 %v4185
      %v4218 = vunpack.c.l.b16 %v4186
      %v4219 = vunpack.c.l.b16 %v4187
      %v4220 = vunpack.c.l.b16 %v4188
      %v4221 = vunpack.c.l.b16 %v4189
      %v4222 = vunpack.c.l.b16 %v4190
      %v4223 = vunpack.c.l.b16 %v4191
      %v4224 = vunpack.c.l.b16 %v4192
      %v4225 = vunpack.c.l.b16 %v4193
      %v4226 = vpack.c.b16 %v4211, %v4210
      %v4227 = vpack.c.b16 %v4213, %v4212
      %v4228 = vpack.c.b16 %v4215, %v4214
      %v4229 = vpack.c.b16 %v4217, %v4216
      %v4230 = vpack.c.b16 %v4219, %v4218
      %v4231 = vpack.c.b16 %v4221, %v4220
      %v4232 = vpack.c.b16 %v4223, %v4222
      %v4233 = vpack.c.b16 %v4225, %v4224
      %4242 = vmatprep.subr.bf16.mxu0 0
      %4243 = vmatpush1.bf16.msra.mxu0 %v4226
      %4244 = vmatprep.subr.bf16.mxu0 0
      %4245 = vmatpush1.bf16.msra.mxu0 %v4227
      %4246 = vmatprep.subr.bf16.mxu0 0
      %4247 = vmatpush1.bf16.msra.mxu0 %v4228
      %4248 = vmatprep.subr.bf16.mxu0 0
      %4249 = vmatpush1.bf16.msra.mxu0 %v4229
      %4250 = vmatprep.subr.bf16.mxu0 0
      %4251 = vmatpush1.bf16.msra.mxu0 %v4230
      %4252 = vmatprep.subr.bf16.mxu0 0
      %4253 = vmatpush1.bf16.msra.mxu0 %v4231
      %4254 = vmatprep.subr.bf16.mxu0 0
      %4255 = vmatpush1.bf16.msra.mxu0 %v4232
      %4256 = vmatprep.subr.bf16.mxu0 0
      %4257 = vmatpush1.bf16.msra.mxu0 %v4233
      %4258 = vmatprep.subr.bf16.mxu0 0
      %4259 = vmatpush1.bf16.msra.mxu0 0
      %4260 = vmatprep.subr.bf16.mxu0 0
      %4261 = vmatpush1.bf16.msra.mxu0 0
      %4262 = vmatprep.subr.bf16.mxu0 0
      %4263 = vmatpush1.bf16.msra.mxu0 0
      %4264 = vmatprep.subr.bf16.mxu0 0
      %4265 = vmatpush1.bf16.msra.mxu0 0
      %4266 = vmatprep.subr.bf16.mxu0 0
      %4267 = vmatpush1.bf16.msra.mxu0 0
      %4268 = vmatprep.subr.bf16.mxu0 0
      %4269 = vmatpush1.bf16.msra.mxu0 0
      %4270 = vmatprep.subr.bf16.mxu0 0
      %4271 = vmatpush1.bf16.msra.mxu0 0
      %4272 = vmatprep.subr.bf16.mxu0 0
      %4273 = vmatpush1.bf16.msra.mxu0 0
      %4274 = vmatprep.mubr.bf16.mxu0 0
      %4275 = vmatmul.mubr.bf16.gmra.mrb[0].mxu0 %v4172
      %v4276 = vpop.f32.mrb[0].mxu0
      %v4277 = vadd.f32 0.0, %v4276
      %v4278 = vpop.f32.mrb[0].mxu0
      %v4279 = vpop.f32.mrb[0].mxu0
      %v4280 = vadd.f32 0.0, %v4279
      %v4281 = vpop.f32.mrb[0].mxu0
      %4282 = vmatprep.mubr.bf16.mxu0 0
      %4283 = vmatmul.mubr.bf16.gmra.mrb[0].mxu0 %v4173
      %v4284 = vpop.f32.mrb[0].mxu0
      %v4285 = vadd.f32 0.0, %v4284
      %v4286 = vpop.f32.mrb[0].mxu0
      %v4287 = vpop.f32.mrb[0].mxu0
      %v4288 = vadd.f32 0.0, %v4287
      %v4289 = vpop.f32.mrb[0].mxu0
      %4290 = vmatprep.mubr.bf16.mxu0 0
      %4291 = vmatmul.mubr.bf16.gmra.mrb[0].mxu0 %v4174
      %v4292 = vpop.f32.mrb[0].mxu0
      %v4293 = vadd.f32 0.0, %v4292
      %v4294 = vpop.f32.mrb[0].mxu0
      %v4295 = vpop.f32.mrb[0].mxu0
      %v4296 = vadd.f32 0.0, %v4295
      %v4297 = vpop.f32.mrb[0].mxu0
      %4298 = vmatprep.mubr.bf16.mxu0 0
      %4299 = vmatmul.mubr.bf16.gmra.mrb[0].mxu0 %v4175
      %v4300 = vpop.f32.mrb[0].mxu0
      %v4301 = vadd.f32 0.0, %v4300
      %v4302 = vpop.f32.mrb[0].mxu0
      %v4303 = vpop.f32.mrb[0].mxu0
      %v4304 = vadd.f32 0.0, %v4303
      %v4305 = vpop.f32.mrb[0].mxu0
      %4306 = vmatprep.mubr.bf16.mxu0 0
      %4307 = vmatmul.mubr.bf16.gmra.mrb[0].mxu0 %v4176
      %v4308 = vpop.f32.mrb[0].mxu0
      %v4309 = vadd.f32 0.0, %v4308
      %v4310 = vpop.f32.mrb[0].mxu0
      %v4311 = vpop.f32.mrb[0].mxu0
      %v4312 = vpop.f32.mrb[0].mxu0
      %4313 = vdwg.mxu0
      %v4314 = vadd.f32 %v4126, %v4277
      %v4315 = vadd.f32 %v4129, %v4280
      %v4316 = vadd.f32 %v4134, %v4285
      %v4317 = vadd.f32 %v4137, %v4288
      %v4318 = vadd.f32 %v4142, %v4293
      %v4319 = vadd.f32 %v4145, %v4296
      %v4320 = vadd.f32 %v4150, %v4301
      %v4321 = vadd.f32 %v4153, %v4304
      %v4322 = vadd.f32 %v4158, %v4309
      %v4323 = vld [vmem:[#allocation2 + $0xa] sm:$0xff]
      %v4324 = vld [vmem:[#allocation2 + $0x12] sm:$0xff]
      %v4325 = vld [vmem:[#allocation2 + $0x1a] sm:$0xff]
      %v4326 = vld [vmem:[#allocation2 + $0x22] sm:$0xff]
      %v4327 = vld [vmem:[#allocation2 + $0x2a] sm:$0xff]
      %v4328 = vld [vmem:[#allocation2 + $0x32] sm:$0xff]
      %v4329 = vld [vmem:[#allocation2 + $0x3a] sm:$0xff]
      %v4330 = vld [vmem:[#allocation2 + $0x42] sm:$0xff]
      %v4331 = vld [vmem:[#allocation2 + $0x4a] sm:$0x7]
      %v4332 = vpack.c.bf16 %v4324, %v4323
      %v4333 = vpack.c.bf16 %v4326, %v4325
      %v4334 = vpack.c.bf16 %v4328, %v4327
      %v4335 = vpack.c.bf16 %v4330, %v4329
      %v4336 = vpack.c.bf16 %v4331, %v4331
      %s4337 = scalar_lea.vmem %s5, 192
      %v4338 = vld [vmem:[%s4337] sm:$0xf]
      %v4339 = vld [vmem:[%s4337 + $0x4] sm:$0xf]
      %v4340 = vld [vmem:[%s4337 + $0x8] sm:$0xf]
      %v4341 = vld [vmem:[%s4337 + $0xc] sm:$0xf]
      %v4342 = vld [vmem:[%s4337 + $0x10] sm:$0xf]
      %v4343 = vld [vmem:[%s4337 + $0x14] sm:$0xf]
      %v4344 = vld [vmem:[%s4337 + $0x18] sm:$0xf]
      %v4345 = vld [vmem:[%s4337 + $0x1c] sm:$0xf]
      %v4346 = vld [vmem:[%s4337 + $0x20] sm:$0xf]
      %v4347 = vld [vmem:[%s4337 + $0x24] sm:$0xf]
      %v4348 = vld [vmem:[%s4337 + $0x28] sm:$0xf]
      %v4349 = vld [vmem:[%s4337 + $0x2c] sm:$0xf]
      %v4350 = vld [vmem:[%s4337 + $0x30] sm:$0xf]
      %v4351 = vld [vmem:[%s4337 + $0x34] sm:$0xf]
      %v4352 = vld [vmem:[%s4337 + $0x38] sm:$0xf]
      %v4353 = vld [vmem:[%s4337 + $0x3c] sm:$0xf]
      %v4370 = vunpack.c.l.b16 %v4338
      %v4371 = vunpack.c.l.b16 %v4339
      %v4372 = vunpack.c.l.b16 %v4340
      %v4373 = vunpack.c.l.b16 %v4341
      %v4374 = vunpack.c.l.b16 %v4342
      %v4375 = vunpack.c.l.b16 %v4343
      %v4376 = vunpack.c.l.b16 %v4344
      %v4377 = vunpack.c.l.b16 %v4345
      %v4378 = vunpack.c.l.b16 %v4346
      %v4379 = vunpack.c.l.b16 %v4347
      %v4380 = vunpack.c.l.b16 %v4348
      %v4381 = vunpack.c.l.b16 %v4349
      %v4382 = vunpack.c.l.b16 %v4350
      %v4383 = vunpack.c.l.b16 %v4351
      %v4384 = vunpack.c.l.b16 %v4352
      %v4385 = vunpack.c.l.b16 %v4353
      %v4386 = vpack.c.b16 %v4371, %v4370
      %v4387 = vpack.c.b16 %v4373, %v4372
      %v4388 = vpack.c.b16 %v4375, %v4374
      %v4389 = vpack.c.b16 %v4377, %v4376
      %v4390 = vpack.c.b16 %v4379, %v4378
      %v4391 = vpack.c.b16 %v4381, %v4380
      %v4392 = vpack.c.b16 %v4383, %v4382
      %v4393 = vpack.c.b16 %v4385, %v4384
      %4402 = vmatprep.subr.bf16.mxu0 0
      %4403 = vmatpush1.bf16.msra.mxu0 %v4386
      %4404 = vmatprep.subr.bf16.mxu0 0
      %4405 = vmatpush1.bf16.msra.mxu0 %v4387
      %4406 = vmatprep.subr.bf16.mxu0 0
      %4407 = vmatpush1.bf16.msra.mxu0 %v4388
      %4408 = vmatprep.subr.bf16.mxu0 0
      %4409 = vmatpush1.bf16.msra.mxu0 %v4389
      %4410 = vmatprep.subr.bf16.mxu0 0
      %4411 = vmatpush1.bf16.msra.mxu0 %v4390
      %4412 = vmatprep.subr.bf16.mxu0 0
      %4413 = vmatpush1.bf16.msra.mxu0 %v4391
      %4414 = vmatprep.subr.bf16.mxu0 0
      %4415 = vmatpush1.bf16.msra.mxu0 %v4392
      %4416 = vmatprep.subr.bf16.mxu0 0
      %4417 = vmatpush1.bf16.msra.mxu0 %v4393
      %4418 = vmatprep.subr.bf16.mxu0 0
      %4419 = vmatpush1.bf16.msra.mxu0 0
      %4420 = vmatprep.subr.bf16.mxu0 0
      %4421 = vmatpush1.bf16.msra.mxu0 0
      %4422 = vmatprep.subr.bf16.mxu0 0
      %4423 = vmatpush1.bf16.msra.mxu0 0
      %4424 = vmatprep.subr.bf16.mxu0 0
      %4425 = vmatpush1.bf16.msra.mxu0 0
      %4426 = vmatprep.subr.bf16.mxu0 0
      %4427 = vmatpush1.bf16.msra.mxu0 0
      %4428 = vmatprep.subr.bf16.mxu0 0
      %4429 = vmatpush1.bf16.msra.mxu0 0
      %4430 = vmatprep.subr.bf16.mxu0 0
      %4431 = vmatpush1.bf16.msra.mxu0 0
      %4432 = vmatprep.subr.bf16.mxu0 0
      %4433 = vmatpush1.bf16.msra.mxu0 0
      %4434 = vmatprep.mubr.bf16.mxu0 0
      %4435 = vmatmul.mubr.bf16.gmra.mrb[0].mxu0 %v4332
      %v4436 = vpop.f32.mrb[0].mxu0
      %v4437 = vadd.f32 0.0, %v4436
      %v4438 = vpop.f32.mrb[0].mxu0
      %v4439 = vpop.f32.mrb[0].mxu0
      %v4440 = vadd.f32 0.0, %v4439
      %v4441 = vpop.f32.mrb[0].mxu0
      %4442 = vmatprep.mubr.bf16.mxu0 0
      %4443 = vmatmul.mubr.bf16.gmra.mrb[0].mxu0 %v4333
      %v4444 = vpop.f32.mrb[0].mxu0
      %v4445 = vadd.f32 0.0, %v4444
      %v4446 = vpop.f32.mrb[0].mxu0
      %v4447 = vpop.f32.mrb[0].mxu0
      %v4448 = vadd.f32 0.0, %v4447
      %v4449 = vpop.f32.mrb[0].mxu0
      %4450 = vmatprep.mubr.bf16.mxu0 0
      %4451 = vmatmul.mubr.bf16.gmra.mrb[0].mxu0 %v4334
      %v4452 = vpop.f32.mrb[0].mxu0
      %v4453 = vadd.f32 0.0, %v4452
      %v4454 = vpop.f32.mrb[0].mxu0
      %v4455 = vpop.f32.mrb[0].mxu0
      %v4456 = vadd.f32 0.0, %v4455
      %v4457 = vpop.f32.mrb[0].mxu0
      %4458 = vmatprep.mubr.bf16.mxu0 0
      %4459 = vmatmul.mubr.bf16.gmra.mrb[0].mxu0 %v4335
      %v4460 = vpop.f32.mrb[0].mxu0
      %v4461 = vadd.f32 0.0, %v4460
      %v4462 = vpop.f32.mrb[0].mxu0
      %v4463 = vpop.f32.mrb[0].mxu0
      %v4464 = vadd.f32 0.0, %v4463
      %v4465 = vpop.f32.mrb[0].mxu0
      %4466 = vmatprep.mubr.bf16.mxu0 0
      %4467 = vmatmul.mubr.bf16.gmra.mrb[0].mxu0 %v4336
      %v4468 = vpop.f32.mrb[0].mxu0
      %v4469 = vadd.f32 0.0, %v4468
      %v4470 = vpop.f32.mrb[0].mxu0
      %v4471 = vpop.f32.mrb[0].mxu0
      %v4472 = vpop.f32.mrb[0].mxu0
      %4473 = vdwg.mxu0
      %v4474 = vadd.f32 %v4314, %v4437
      %v4475 = vadd.f32 %v4315, %v4440
      %v4476 = vadd.f32 %v4316, %v4445
      %v4477 = vadd.f32 %v4317, %v4448
      %v4478 = vadd.f32 %v4318, %v4453
      %v4479 = vadd.f32 %v4319, %v4456
      %v4480 = vadd.f32 %v4320, %v4461
      %v4481 = vadd.f32 %v4321, %v4464
      %v4482 = vadd.f32 %v4322, %v4469
      %v4483 = vld [vmem:[#allocation2 + $0xb] sm:$0xff]
      %v4484 = vld [vmem:[#allocation2 + $0x13] sm:$0xff]
      %v4485 = vld [vmem:[#allocation2 + $0x1b] sm:$0xff]
      %v4486 = vld [vmem:[#allocation2 + $0x23] sm:$0xff]
      %v4487 = vld [vmem:[#allocation2 + $0x2b] sm:$0xff]
      %v4488 = vld [vmem:[#allocation2 + $0x33] sm:$0xff]
      %v4489 = vld [vmem:[#allocation2 + $0x3b] sm:$0xff]
      %v4490 = vld [vmem:[#allocation2 + $0x43] sm:$0xff]
      %v4491 = vld [vmem:[#allocation2 + $0x4b] sm:$0x7]
      %v4492 = vpack.c.bf16 %v4484, %v4483
      %v4493 = vpack.c.bf16 %v4486, %v4485
      %v4494 = vpack.c.bf16 %v4488, %v4487
      %v4495 = vpack.c.bf16 %v4490, %v4489
      %v4496 = vpack.c.bf16 %v4491, %v4491
      %s4497 = scalar_lea.vmem %s5, 256
      %v4498 = vld [vmem:[%s4497] sm:$0xf]
      %v4499 = vld [vmem:[%s4497 + $0x4] sm:$0xf]
      %v4500 = vld [vmem:[%s4497 + $0x8] sm:$0xf]
      %v4501 = vld [vmem:[%s4497 + $0xc] sm:$0xf]
      %v4502 = vld [vmem:[%s4497 + $0x10] sm:$0xf]
      %v4503 = vld [vmem:[%s4497 + $0x14] sm:$0xf]
      %v4504 = vld [vmem:[%s4497 + $0x18] sm:$0xf]
      %v4505 = vld [vmem:[%s4497 + $0x1c] sm:$0xf]
      %v4506 = vld [vmem:[%s4497 + $0x20] sm:$0xf]
      %v4507 = vld [vmem:[%s4497 + $0x24] sm:$0xf]
      %v4508 = vld [vmem:[%s4497 + $0x28] sm:$0xf]
      %v4509 = vld [vmem:[%s4497 + $0x2c] sm:$0xf]
      %v4510 = vld [vmem:[%s4497 + $0x30] sm:$0xf]
      %v4511 = vld [vmem:[%s4497 + $0x34] sm:$0xf]
      %v4512 = vld [vmem:[%s4497 + $0x38] sm:$0xf]
      %v4513 = vld [vmem:[%s4497 + $0x3c] sm:$0xf]
      %v4530 = vunpack.c.l.b16 %v4498
      %v4531 = vunpack.c.l.b16 %v4499
      %v4532 = vunpack.c.l.b16 %v4500
      %v4533 = vunpack.c.l.b16 %v4501
      %v4534 = vunpack.c.l.b16 %v4502
      %v4535 = vunpack.c.l.b16 %v4503
      %v4536 = vunpack.c.l.b16 %v4504
      %v4537 = vunpack.c.l.b16 %v4505
      %v4538 = vunpack.c.l.b16 %v4506
      %v4539 = vunpack.c.l.b16 %v4507
      %v4540 = vunpack.c.l.b16 %v4508
      %v4541 = vunpack.c.l.b16 %v4509
      %v4542 = vunpack.c.l.b16 %v4510
      %v4543 = vunpack.c.l.b16 %v4511
      %v4544 = vunpack.c.l.b16 %v4512
      %v4545 = vunpack.c.l.b16 %v4513
      %v4546 = vpack.c.b16 %v4531, %v4530
      %v4547 = vpack.c.b16 %v4533, %v4532
      %v4548 = vpack.c.b16 %v4535, %v4534
      %v4549 = vpack.c.b16 %v4537, %v4536
      %v4550 = vpack.c.b16 %v4539, %v4538
      %v4551 = vpack.c.b16 %v4541, %v4540
      %v4552 = vpack.c.b16 %v4543, %v4542
      %v4553 = vpack.c.b16 %v4545, %v4544
      %4562 = vmatprep.subr.bf16.mxu0 0
      %4563 = vmatpush1.bf16.msra.mxu0 %v4546
      %4564 = vmatprep.subr.bf16.mxu0 0
      %4565 = vmatpush1.bf16.msra.mxu0 %v4547
      %4566 = vmatprep.subr.bf16.mxu0 0
      %4567 = vmatpush1.bf16.msra.mxu0 %v4548
      %4568 = vmatprep.subr.bf16.mxu0 0
      %4569 = vmatpush1.bf16.msra.mxu0 %v4549
      %4570 = vmatprep.subr.bf16.mxu0 0
      %4571 = vmatpush1.bf16.msra.mxu0 %v4550
      %4572 = vmatprep.subr.bf16.mxu0 0
      %4573 = vmatpush1.bf16.msra.mxu0 %v4551
      %4574 = vmatprep.subr.bf16.mxu0 0
      %4575 = vmatpush1.bf16.msra.mxu0 %v4552
      %4576 = vmatprep.subr.bf16.mxu0 0
      %4577 = vmatpush1.bf16.msra.mxu0 %v4553
      %4578 = vmatprep.subr.bf16.mxu0 0
      %4579 = vmatpush1.bf16.msra.mxu0 0
      %4580 = vmatprep.subr.bf16.mxu0 0
      %4581 = vmatpush1.bf16.msra.mxu0 0
      %4582 = vmatprep.subr.bf16.mxu0 0
      %4583 = vmatpush1.bf16.msra.mxu0 0
      %4584 = vmatprep.subr.bf16.mxu0 0
      %4585 = vmatpush1.bf16.msra.mxu0 0
      %4586 = vmatprep.subr.bf16.mxu0 0
      %4587 = vmatpush1.bf16.msra.mxu0 0
      %4588 = vmatprep.subr.bf16.mxu0 0
      %4589 = vmatpush1.bf16.msra.mxu0 0
      %4590 = vmatprep.subr.bf16.mxu0 0
      %4591 = vmatpush1.bf16.msra.mxu0 0
      %4592 = vmatprep.subr.bf16.mxu0 0
      %4593 = vmatpush1.bf16.msra.mxu0 0
      %4594 = vmatprep.mubr.bf16.mxu0 0
      %4595 = vmatmul.mubr.bf16.gmra.mrb[0].mxu0 %v4492
      %v4596 = vpop.f32.mrb[0].mxu0
      %v4597 = vadd.f32 0.0, %v4596
      %v4598 = vpop.f32.mrb[0].mxu0
      %v4599 = vpop.f32.mrb[0].mxu0
      %v4600 = vadd.f32 0.0, %v4599
      %v4601 = vpop.f32.mrb[0].mxu0
      %4602 = vmatprep.mubr.bf16.mxu0 0
      %4603 = vmatmul.mubr.bf16.gmra.mrb[0].mxu0 %v4493
      %v4604 = vpop.f32.mrb[0].mxu0
      %v4605 = vadd.f32 0.0, %v4604
      %v4606 = vpop.f32.mrb[0].mxu0
      %v4607 = vpop.f32.mrb[0].mxu0
      %v4608 = vadd.f32 0.0, %v4607
      %v4609 = vpop.f32.mrb[0].mxu0
      %4610 = vmatprep.mubr.bf16.mxu0 0
      %4611 = vmatmul.mubr.bf16.gmra.mrb[0].mxu0 %v4494
      %v4612 = vpop.f32.mrb[0].mxu0
      %v4613 = vadd.f32 0.0, %v4612
      %v4614 = vpop.f32.mrb[0].mxu0
      %v4615 = vpop.f32.mrb[0].mxu0
      %v4616 = vadd.f32 0.0, %v4615
      %v4617 = vpop.f32.mrb[0].mxu0
      %4618 = vmatprep.mubr.bf16.mxu0 0
      %4619 = vmatmul.mubr.bf16.gmra.mrb[0].mxu0 %v4495
      %v4620 = vpop.f32.mrb[0].mxu0
      %v4621 = vadd.f32 0.0, %v4620
      %v4622 = vpop.f32.mrb[0].mxu0
      %v4623 = vpop.f32.mrb[0].mxu0
      %v4624 = vadd.f32 0.0, %v4623
      %v4625 = vpop.f32.mrb[0].mxu0
      %4626 = vmatprep.mubr.bf16.mxu0 0
      %4627 = vmatmul.mubr.bf16.gmra.mrb[0].mxu0 %v4496
      %v4628 = vpop.f32.mrb[0].mxu0
      %v4629 = vadd.f32 0.0, %v4628
      %v4630 = vpop.f32.mrb[0].mxu0
      %v4631 = vpop.f32.mrb[0].mxu0
      %v4632 = vpop.f32.mrb[0].mxu0
      %4633 = vdwg.mxu0
      %v4634 = vadd.f32 %v4474, %v4597
      %v4635 = vadd.f32 %v4475, %v4600
      %v4636 = vadd.f32 %v4476, %v4605
      %v4637 = vadd.f32 %v4477, %v4608
      %v4638 = vadd.f32 %v4478, %v4613
      %v4639 = vadd.f32 %v4479, %v4616
      %v4640 = vadd.f32 %v4480, %v4621
      %v4641 = vadd.f32 %v4481, %v4624
      %v4642 = vadd.f32 %v4482, %v4629
      %v4643 = vld [vmem:[#allocation2 + $0xc] sm:$0xff]
      %v4644 = vld [vmem:[#allocation2 + $0x14] sm:$0xff]
      %v4645 = vld [vmem:[#allocation2 + $0x1c] sm:$0xff]
      %v4646 = vld [vmem:[#allocation2 + $0x24] sm:$0xff]
      %v4647 = vld [vmem:[#allocation2 + $0x2c] sm:$0xff]
      %v4648 = vld [vmem:[#allocation2 + $0x34] sm:$0xff]
      %v4649 = vld [vmem:[#allocation2 + $0x3c] sm:$0xff]
      %v4650 = vld [vmem:[#allocation2 + $0x44] sm:$0xff]
      %v4651 = vld [vmem:[#allocation2 + $0x4c] sm:$0x7]
      %v4652 = vpack.c.bf16 %v4644, %v4643
      %v4653 = vpack.c.bf16 %v4646, %v4645
      %v4654 = vpack.c.bf16 %v4648, %v4647
      %v4655 = vpack.c.bf16 %v4650, %v4649
      %v4656 = vpack.c.bf16 %v4651, %v4651
      %s4657 = scalar_lea.vmem %s5, 320
      %v4658 = vld [vmem:[%s4657] sm:$0xf]
      %v4659 = vld [vmem:[%s4657 + $0x4] sm:$0xf]
      %v4660 = vld [vmem:[%s4657 + $0x8] sm:$0xf]
      %v4661 = vld [vmem:[%s4657 + $0xc] sm:$0xf]
      %v4662 = vld [vmem:[%s4657 + $0x10] sm:$0xf]
      %v4663 = vld [vmem:[%s4657 + $0x14] sm:$0xf]
      %v4664 = vld [vmem:[%s4657 + $0x18] sm:$0xf]
      %v4665 = vld [vmem:[%s4657 + $0x1c] sm:$0xf]
      %v4666 = vld [vmem:[%s4657 + $0x20] sm:$0xf]
      %v4667 = vld [vmem:[%s4657 + $0x24] sm:$0xf]
      %v4668 = vld [vmem:[%s4657 + $0x28] sm:$0xf]
      %v4669 = vld [vmem:[%s4657 + $0x2c] sm:$0xf]
      %v4670 = vld [vmem:[%s4657 + $0x30] sm:$0xf]
      %v4671 = vld [vmem:[%s4657 + $0x34] sm:$0xf]
      %v4672 = vld [vmem:[%s4657 + $0x38] sm:$0xf]
      %v4673 = vld [vmem:[%s4657 + $0x3c] sm:$0xf]
      %v4690 = vunpack.c.l.b16 %v4658
      %v4691 = vunpack.c.l.b16 %v4659
      %v4692 = vunpack.c.l.b16 %v4660
      %v4693 = vunpack.c.l.b16 %v4661
      %v4694 = vunpack.c.l.b16 %v4662
      %v4695 = vunpack.c.l.b16 %v4663
      %v4696 = vunpack.c.l.b16 %v4664
      %v4697 = vunpack.c.l.b16 %v4665
      %v4698 = vunpack.c.l.b16 %v4666
      %v4699 = vunpack.c.l.b16 %v4667
      %v4700 = vunpack.c.l.b16 %v4668
      %v4701 = vunpack.c.l.b16 %v4669
      %v4702 = vunpack.c.l.b16 %v4670
      %v4703 = vunpack.c.l.b16 %v4671
      %v4704 = vunpack.c.l.b16 %v4672
      %v4705 = vunpack.c.l.b16 %v4673
      %v4706 = vpack.c.b16 %v4691, %v4690
      %v4707 = vpack.c.b16 %v4693, %v4692
      %v4708 = vpack.c.b16 %v4695, %v4694
      %v4709 = vpack.c.b16 %v4697, %v4696
      %v4710 = vpack.c.b16 %v4699, %v4698
      %v4711 = vpack.c.b16 %v4701, %v4700
      %v4712 = vpack.c.b16 %v4703, %v4702
      %v4713 = vpack.c.b16 %v4705, %v4704
      %4722 = vmatprep.subr.bf16.mxu0 0
      %4723 = vmatpush1.bf16.msra.mxu0 %v4706
      %4724 = vmatprep.subr.bf16.mxu0 0
      %4725 = vmatpush1.bf16.msra.mxu0 %v4707
      %4726 = vmatprep.subr.bf16.mxu0 0
      %4727 = vmatpush1.bf16.msra.mxu0 %v4708
      %4728 = vmatprep.subr.bf16.mxu0 0
      %4729 = vmatpush1.bf16.msra.mxu0 %v4709
      %4730 = vmatprep.subr.bf16.mxu0 0
      %4731 = vmatpush1.bf16.msra.mxu0 %v4710
      %4732 = vmatprep.subr.bf16.mxu0 0
      %4733 = vmatpush1.bf16.msra.mxu0 %v4711
      %4734 = vmatprep.subr.bf16.mxu0 0
      %4735 = vmatpush1.bf16.msra.mxu0 %v4712
      %4736 = vmatprep.subr.bf16.mxu0 0
      %4737 = vmatpush1.bf16.msra.mxu0 %v4713
      %4738 = vmatprep.subr.bf16.mxu0 0
      %4739 = vmatpush1.bf16.msra.mxu0 0
      %4740 = vmatprep.subr.bf16.mxu0 0
      %4741 = vmatpush1.bf16.msra.mxu0 0
      %4742 = vmatprep.subr.bf16.mxu0 0
      %4743 = vmatpush1.bf16.msra.mxu0 0
      %4744 = vmatprep.subr.bf16.mxu0 0
      %4745 = vmatpush1.bf16.msra.mxu0 0
      %4746 = vmatprep.subr.bf16.mxu0 0
      %4747 = vmatpush1.bf16.msra.mxu0 0
      %4748 = vmatprep.subr.bf16.mxu0 0
      %4749 = vmatpush1.bf16.msra.mxu0 0
      %4750 = vmatprep.subr.bf16.mxu0 0
      %4751 = vmatpush1.bf16.msra.mxu0 0
      %4752 = vmatprep.subr.bf16.mxu0 0
      %4753 = vmatpush1.bf16.msra.mxu0 0
      %4754 = vmatprep.mubr.bf16.mxu0 0
      %4755 = vmatmul.mubr.bf16.gmra.mrb[0].mxu0 %v4652
      %v4756 = vpop.f32.mrb[0].mxu0
      %v4757 = vadd.f32 0.0, %v4756
      %v4758 = vpop.f32.mrb[0].mxu0
      %v4759 = vpop.f32.mrb[0].mxu0
      %v4760 = vadd.f32 0.0, %v4759
      %v4761 = vpop.f32.mrb[0].mxu0
      %4762 = vmatprep.mubr.bf16.mxu0 0
      %4763 = vmatmul.mubr.bf16.gmra.mrb[0].mxu0 %v4653
      %v4764 = vpop.f32.mrb[0].mxu0
      %v4765 = vadd.f32 0.0, %v4764
      %v4766 = vpop.f32.mrb[0].mxu0
      %v4767 = vpop.f32.mrb[0].mxu0
      %v4768 = vadd.f32 0.0, %v4767
      %v4769 = vpop.f32.mrb[0].mxu0
      %4770 = vmatprep.mubr.bf16.mxu0 0
      %4771 = vmatmul.mubr.bf16.gmra.mrb[0].mxu0 %v4654
      %v4772 = vpop.f32.mrb[0].mxu0
      %v4773 = vadd.f32 0.0, %v4772
      %v4774 = vpop.f32.mrb[0].mxu0
      %v4775 = vpop.f32.mrb[0].mxu0
      %v4776 = vadd.f32 0.0, %v4775
      %v4777 = vpop.f32.mrb[0].mxu0
      %4778 = vmatprep.mubr.bf16.mxu0 0
      %4779 = vmatmul.mubr.bf16.gmra.mrb[0].mxu0 %v4655
      %v4780 = vpop.f32.mrb[0].mxu0
      %v4781 = vadd.f32 0.0, %v4780
      %v4782 = vpop.f32.mrb[0].mxu0
      %v4783 = vpop.f32.mrb[0].mxu0
      %v4784 = vadd.f32 0.0, %v4783
      %v4785 = vpop.f32.mrb[0].mxu0
      %4786 = vmatprep.mubr.bf16.mxu0 0
      %4787 = vmatmul.mubr.bf16.gmra.mrb[0].mxu0 %v4656
      %v4788 = vpop.f32.mrb[0].mxu0
      %v4789 = vadd.f32 0.0, %v4788
      %v4790 = vpop.f32.mrb[0].mxu0
      %v4791 = vpop.f32.mrb[0].mxu0
      %v4792 = vpop.f32.mrb[0].mxu0
      %4793 = vdwg.mxu0
      %v4794 = vadd.f32 %v4634, %v4757
      %v4795 = vadd.f32 %v4635, %v4760
      %v4796 = vadd.f32 %v4636, %v4765
      %v4797 = vadd.f32 %v4637, %v4768
      %v4798 = vadd.f32 %v4638, %v4773
      %v4799 = vadd.f32 %v4639, %v4776
      %v4800 = vadd.f32 %v4640, %v4781
      %v4801 = vadd.f32 %v4641, %v4784
      %v4802 = vadd.f32 %v4642, %v4789
      %v4803 = vld [vmem:[#allocation2 + $0x14] sm:$0xff]
      %v4804 = vld [vmem:[#allocation2 + $0x1c] sm:$0xff]
      %v4805 = vld [vmem:[#allocation2 + $0x24] sm:$0xff]
      %v4806 = vld [vmem:[#allocation2 + $0x2c] sm:$0xff]
      %v4807 = vld [vmem:[#allocation2 + $0x34] sm:$0xff]
      %v4808 = vld [vmem:[#allocation2 + $0x3c] sm:$0xff]
      %v4809 = vld [vmem:[#allocation2 + $0x44] sm:$0xff]
      %v4810 = vld [vmem:[#allocation2 + $0x4c] sm:$0xff]
      %v4811 = vld [vmem:[#allocation2 + $0x54] sm:$0x7]
      %v4812 = vpack.c.bf16 %v4804, %v4803
      %v4813 = vpack.c.bf16 %v4806, %v4805
      %v4814 = vpack.c.bf16 %v4808, %v4807
      %v4815 = vpack.c.bf16 %v4810, %v4809
      %v4816 = vpack.c.bf16 %v4811, %v4811
      %s4817 = scalar_lea.vmem %s5, 384
      %v4818 = vld [vmem:[%s4817] sm:$0xf]
      %v4819 = vld [vmem:[%s4817 + $0x4] sm:$0xf]
      %v4820 = vld [vmem:[%s4817 + $0x8] sm:$0xf]
      %v4821 = vld [vmem:[%s4817 + $0xc] sm:$0xf]
      %v4822 = vld [vmem:[%s4817 + $0x10] sm:$0xf]
      %v4823 = vld [vmem:[%s4817 + $0x14] sm:$0xf]
      %v4824 = vld [vmem:[%s4817 + $0x18] sm:$0xf]
      %v4825 = vld [vmem:[%s4817 + $0x1c] sm:$0xf]
      %v4826 = vld [vmem:[%s4817 + $0x20] sm:$0xf]
      %v4827 = vld [vmem:[%s4817 + $0x24] sm:$0xf]
      %v4828 = vld [vmem:[%s4817 + $0x28] sm:$0xf]
      %v4829 = vld [vmem:[%s4817 + $0x2c] sm:$0xf]
      %v4830 = vld [vmem:[%s4817 + $0x30] sm:$0xf]
      %v4831 = vld [vmem:[%s4817 + $0x34] sm:$0xf]
      %v4832 = vld [vmem:[%s4817 + $0x38] sm:$0xf]
      %v4833 = vld [vmem:[%s4817 + $0x3c] sm:$0xf]
      %v4850 = vunpack.c.l.b16 %v4818
      %v4851 = vunpack.c.l.b16 %v4819
      %v4852 = vunpack.c.l.b16 %v4820
      %v4853 = vunpack.c.l.b16 %v4821
      %v4854 = vunpack.c.l.b16 %v4822
      %v4855 = vunpack.c.l.b16 %v4823
      %v4856 = vunpack.c.l.b16 %v4824
      %v4857 = vunpack.c.l.b16 %v4825
      %v4858 = vunpack.c.l.b16 %v4826
      %v4859 = vunpack.c.l.b16 %v4827
      %v4860 = vunpack.c.l.b16 %v4828
      %v4861 = vunpack.c.l.b16 %v4829
      %v4862 = vunpack.c.l.b16 %v4830
      %v4863 = vunpack.c.l.b16 %v4831
      %v4864 = vunpack.c.l.b16 %v4832
      %v4865 = vunpack.c.l.b16 %v4833
      %v4866 = vpack.c.b16 %v4851, %v4850
      %v4867 = vpack.c.b16 %v4853, %v4852
      %v4868 = vpack.c.b16 %v4855, %v4854
      %v4869 = vpack.c.b16 %v4857, %v4856
      %v4870 = vpack.c.b16 %v4859, %v4858
      %v4871 = vpack.c.b16 %v4861, %v4860
      %v4872 = vpack.c.b16 %v4863, %v4862
      %v4873 = vpack.c.b16 %v4865, %v4864
      %4882 = vmatprep.subr.bf16.mxu0 0
      %4883 = vmatpush1.bf16.msra.mxu0 %v4866
      %4884 = vmatprep.subr.bf16.mxu0 0
      %4885 = vmatpush1.bf16.msra.mxu0 %v4867
      %4886 = vmatprep.subr.bf16.mxu0 0
      %4887 = vmatpush1.bf16.msra.mxu0 %v4868
      %4888 = vmatprep.subr.bf16.mxu0 0
      %4889 = vmatpush1.bf16.msra.mxu0 %v4869
      %4890 = vmatprep.subr.bf16.mxu0 0
      %4891 = vmatpush1.bf16.msra.mxu0 %v4870
      %4892 = vmatprep.subr.bf16.mxu0 0
      %4893 = vmatpush1.bf16.msra.mxu0 %v4871
      %4894 = vmatprep.subr.bf16.mxu0 0
      %4895 = vmatpush1.bf16.msra.mxu0 %v4872
      %4896 = vmatprep.subr.bf16.mxu0 0
      %4897 = vmatpush1.bf16.msra.mxu0 %v4873
      %4898 = vmatprep.subr.bf16.mxu0 0
      %4899 = vmatpush1.bf16.msra.mxu0 0
      %4900 = vmatprep.subr.bf16.mxu0 0
      %4901 = vmatpush1.bf16.msra.mxu0 0
      %4902 = vmatprep.subr.bf16.mxu0 0
      %4903 = vmatpush1.bf16.msra.mxu0 0
      %4904 = vmatprep.subr.bf16.mxu0 0
      %4905 = vmatpush1.bf16.msra.mxu0 0
      %4906 = vmatprep.subr.bf16.mxu0 0
      %4907 = vmatpush1.bf16.msra.mxu0 0
      %4908 = vmatprep.subr.bf16.mxu0 0
      %4909 = vmatpush1.bf16.msra.mxu0 0
      %4910 = vmatprep.subr.bf16.mxu0 0
      %4911 = vmatpush1.bf16.msra.mxu0 0
      %4912 = vmatprep.subr.bf16.mxu0 0
      %4913 = vmatpush1.bf16.msra.mxu0 0
      %4914 = vmatprep.mubr.bf16.mxu0 0
      %4915 = vmatmul.mubr.bf16.gmra.mrb[0].mxu0 %v4812
      %v4916 = vpop.f32.mrb[0].mxu0
      %v4917 = vadd.f32 0.0, %v4916
      %v4918 = vpop.f32.mrb[0].mxu0
      %v4919 = vpop.f32.mrb[0].mxu0
      %v4920 = vadd.f32 0.0, %v4919
      %v4921 = vpop.f32.mrb[0].mxu0
      %4922 = vmatprep.mubr.bf16.mxu0 0
      %4923 = vmatmul.mubr.bf16.gmra.mrb[0].mxu0 %v4813
      %v4924 = vpop.f32.mrb[0].mxu0
      %v4925 = vadd.f32 0.0, %v4924
      %v4926 = vpop.f32.mrb[0].mxu0
      %v4927 = vpop.f32.mrb[0].mxu0
      %v4928 = vadd.f32 0.0, %v4927
      %v4929 = vpop.f32.mrb[0].mxu0
      %4930 = vmatprep.mubr.bf16.mxu0 0
      %4931 = vmatmul.mubr.bf16.gmra.mrb[0].mxu0 %v4814
      %v4932 = vpop.f32.mrb[0].mxu0
      %v4933 = vadd.f32 0.0, %v4932
      %v4934 = vpop.f32.mrb[0].mxu0
      %v4935 = vpop.f32.mrb[0].mxu0
      %v4936 = vadd.f32 0.0, %v4935
      %v4937 = vpop.f32.mrb[0].mxu0
      %4938 = vmatprep.mubr.bf16.mxu0 0
      %4939 = vmatmul.mubr.bf16.gmra.mrb[0].mxu0 %v4815
      %v4940 = vpop.f32.mrb[0].mxu0
      %v4941 = vadd.f32 0.0, %v4940
      %v4942 = vpop.f32.mrb[0].mxu0
      %v4943 = vpop.f32.mrb[0].mxu0
      %v4944 = vadd.f32 0.0, %v4943
      %v4945 = vpop.f32.mrb[0].mxu0
      %4946 = vmatprep.mubr.bf16.mxu0 0
      %4947 = vmatmul.mubr.bf16.gmra.mrb[0].mxu0 %v4816
      %v4948 = vpop.f32.mrb[0].mxu0
      %v4949 = vadd.f32 0.0, %v4948
      %v4950 = vpop.f32.mrb[0].mxu0
      %v4951 = vpop.f32.mrb[0].mxu0
      %v4952 = vpop.f32.mrb[0].mxu0
      %4953 = vdwg.mxu0
      %v4954 = vadd.f32 %v4794, %v4917
      %v4955 = vadd.f32 %v4795, %v4920
      %v4956 = vadd.f32 %v4796, %v4925
      %v4957 = vadd.f32 %v4797, %v4928
      %v4958 = vadd.f32 %v4798, %v4933
      %v4959 = vadd.f32 %v4799, %v4936
      %v4960 = vadd.f32 %v4800, %v4941
      %v4961 = vadd.f32 %v4801, %v4944
      %v4962 = vadd.f32 %v4802, %v4949
      %v4963 = vld [vmem:[#allocation2 + $0x15] sm:$0xff]
      %v4964 = vld [vmem:[#allocation2 + $0x1d] sm:$0xff]
      %v4965 = vld [vmem:[#allocation2 + $0x25] sm:$0xff]
      %v4966 = vld [vmem:[#allocation2 + $0x2d] sm:$0xff]
      %v4967 = vld [vmem:[#allocation2 + $0x35] sm:$0xff]
      %v4968 = vld [vmem:[#allocation2 + $0x3d] sm:$0xff]
      %v4969 = vld [vmem:[#allocation2 + $0x45] sm:$0xff]
      %v4970 = vld [vmem:[#allocation2 + $0x4d] sm:$0xff]
      %v4971 = vld [vmem:[#allocation2 + $0x55] sm:$0x7]
      %v4972 = vpack.c.bf16 %v4964, %v4963
      %v4973 = vpack.c.bf16 %v4966, %v4965
      %v4974 = vpack.c.bf16 %v4968, %v4967
      %v4975 = vpack.c.bf16 %v4970, %v4969
      %v4976 = vpack.c.bf16 %v4971, %v4971
      %s4977 = scalar_lea.vmem %s5, 448
      %v4978 = vld [vmem:[%s4977] sm:$0xf]
      %v4979 = vld [vmem:[%s4977 + $0x4] sm:$0xf]
      %v4980 = vld [vmem:[%s4977 + $0x8] sm:$0xf]
      %v4981 = vld [vmem:[%s4977 + $0xc] sm:$0xf]
      %v4982 = vld [vmem:[%s4977 + $0x10] sm:$0xf]
      %v4983 = vld [vmem:[%s4977 + $0x14] sm:$0xf]
      %v4984 = vld [vmem:[%s4977 + $0x18] sm:$0xf]
      %v4985 = vld [vmem:[%s4977 + $0x1c] sm:$0xf]
      %v4986 = vld [vmem:[%s4977 + $0x20] sm:$0xf]
      %v4987 = vld [vmem:[%s4977 + $0x24] sm:$0xf]
      %v4988 = vld [vmem:[%s4977 + $0x28] sm:$0xf]
      %v4989 = vld [vmem:[%s4977 + $0x2c] sm:$0xf]
      %v4990 = vld [vmem:[%s4977 + $0x30] sm:$0xf]
      %v4991 = vld [vmem:[%s4977 + $0x34] sm:$0xf]
      %v4992 = vld [vmem:[%s4977 + $0x38] sm:$0xf]
      %v4993 = vld [vmem:[%s4977 + $0x3c] sm:$0xf]
      %v5010 = vunpack.c.l.b16 %v4978
      %v5011 = vunpack.c.l.b16 %v4979
      %v5012 = vunpack.c.l.b16 %v4980
      %v5013 = vunpack.c.l.b16 %v4981
      %v5014 = vunpack.c.l.b16 %v4982
      %v5015 = vunpack.c.l.b16 %v4983
      %v5016 = vunpack.c.l.b16 %v4984
      %v5017 = vunpack.c.l.b16 %v4985
      %v5018 = vunpack.c.l.b16 %v4986
      %v5019 = vunpack.c.l.b16 %v4987
      %v5020 = vunpack.c.l.b16 %v4988
      %v5021 = vunpack.c.l.b16 %v4989
      %v5022 = vunpack.c.l.b16 %v4990
      %v5023 = vunpack.c.l.b16 %v4991
      %v5024 = vunpack.c.l.b16 %v4992
      %v5025 = vunpack.c.l.b16 %v4993
      %v5026 = vpack.c.b16 %v5011, %v5010
      %v5027 = vpack.c.b16 %v5013, %v5012
      %v5028 = vpack.c.b16 %v5015, %v5014
      %v5029 = vpack.c.b16 %v5017, %v5016
      %v5030 = vpack.c.b16 %v5019, %v5018
      %v5031 = vpack.c.b16 %v5021, %v5020
      %v5032 = vpack.c.b16 %v5023, %v5022
      %v5033 = vpack.c.b16 %v5025, %v5024
      %5042 = vmatprep.subr.bf16.mxu0 0
      %5043 = vmatpush1.bf16.msra.mxu0 %v5026
      %5044 = vmatprep.subr.bf16.mxu0 0
      %5045 = vmatpush1.bf16.msra.mxu0 %v5027
      %5046 = vmatprep.subr.bf16.mxu0 0
      %5047 = vmatpush1.bf16.msra.mxu0 %v5028
      %5048 = vmatprep.subr.bf16.mxu0 0
      %5049 = vmatpush1.bf16.msra.mxu0 %v5029
      %5050 = vmatprep.subr.bf16.mxu0 0
      %5051 = vmatpush1.bf16.msra.mxu0 %v5030
      %5052 = vmatprep.subr.bf16.mxu0 0
      %5053 = vmatpush1.bf16.msra.mxu0 %v5031
      %5054 = vmatprep.subr.bf16.mxu0 0
      %5055 = vmatpush1.bf16.msra.mxu0 %v5032
      %5056 = vmatprep.subr.bf16.mxu0 0
      %5057 = vmatpush1.bf16.msra.mxu0 %v5033
      %5058 = vmatprep.subr.bf16.mxu0 0
      %5059 = vmatpush1.bf16.msra.mxu0 0
      %5060 = vmatprep.subr.bf16.mxu0 0
      %5061 = vmatpush1.bf16.msra.mxu0 0
      %5062 = vmatprep.subr.bf16.mxu0 0
      %5063 = vmatpush1.bf16.msra.mxu0 0
      %5064 = vmatprep.subr.bf16.mxu0 0
      %5065 = vmatpush1.bf16.msra.mxu0 0
      %5066 = vmatprep.subr.bf16.mxu0 0
      %5067 = vmatpush1.bf16.msra.mxu0 0
      %5068 = vmatprep.subr.bf16.mxu0 0
      %5069 = vmatpush1.bf16.msra.mxu0 0
      %5070 = vmatprep.subr.bf16.mxu0 0
      %5071 = vmatpush1.bf16.msra.mxu0 0
      %5072 = vmatprep.subr.bf16.mxu0 0
      %5073 = vmatpush1.bf16.msra.mxu0 0
      %5074 = vmatprep.mubr.bf16.mxu0 0
      %5075 = vmatmul.mubr.bf16.gmra.mrb[0].mxu0 %v4972
      %v5076 = vpop.f32.mrb[0].mxu0
      %v5077 = vadd.f32 0.0, %v5076
      %v5078 = vpop.f32.mrb[0].mxu0
      %v5079 = vpop.f32.mrb[0].mxu0
      %v5080 = vadd.f32 0.0, %v5079
      %v5081 = vpop.f32.mrb[0].mxu0
      %5082 = vmatprep.mubr.bf16.mxu0 0
      %5083 = vmatmul.mubr.bf16.gmra.mrb[0].mxu0 %v4973
      %v5084 = vpop.f32.mrb[0].mxu0
      %v5085 = vadd.f32 0.0, %v5084
      %v5086 = vpop.f32.mrb[0].mxu0
      %v5087 = vpop.f32.mrb[0].mxu0
      %v5088 = vadd.f32 0.0, %v5087
      %v5089 = vpop.f32.mrb[0].mxu0
      %5090 = vmatprep.mubr.bf16.mxu0 0
      %5091 = vmatmul.mubr.bf16.gmra.mrb[0].mxu0 %v4974
      %v5092 = vpop.f32.mrb[0].mxu0
      %v5093 = vadd.f32 0.0, %v5092
      %v5094 = vpop.f32.mrb[0].mxu0
      %v5095 = vpop.f32.mrb[0].mxu0
      %v5096 = vadd.f32 0.0, %v5095
      %v5097 = vpop.f32.mrb[0].mxu0
      %5098 = vmatprep.mubr.bf16.mxu0 0
      %5099 = vmatmul.mubr.bf16.gmra.mrb[0].mxu0 %v4975
      %v5100 = vpop.f32.mrb[0].mxu0
      %v5101 = vadd.f32 0.0, %v5100
      %v5102 = vpop.f32.mrb[0].mxu0
      %v5103 = vpop.f32.mrb[0].mxu0
      %v5104 = vadd.f32 0.0, %v5103
      %v5105 = vpop.f32.mrb[0].mxu0
      %5106 = vmatprep.mubr.bf16.mxu0 0
      %5107 = vmatmul.mubr.bf16.gmra.mrb[0].mxu0 %v4976
      %v5108 = vpop.f32.mrb[0].mxu0
      %v5109 = vadd.f32 0.0, %v5108
      %v5110 = vpop.f32.mrb[0].mxu0
      %v5111 = vpop.f32.mrb[0].mxu0
      %v5112 = vpop.f32.mrb[0].mxu0
      %5113 = vdwg.mxu0
      %v5114 = vadd.f32 %v4954, %v5077
      %v5115 = vadd.f32 %v4955, %v5080
      %v5116 = vadd.f32 %v4956, %v5085
      %v5117 = vadd.f32 %v4957, %v5088
      %v5118 = vadd.f32 %v4958, %v5093
      %v5119 = vadd.f32 %v4959, %v5096
      %v5120 = vadd.f32 %v4960, %v5101
      %v5121 = vadd.f32 %v4961, %v5104
      %v5122 = vadd.f32 %v4962, %v5109
      %v5123 = vld [vmem:[#allocation2 + $0x16] sm:$0xff]
      %v5124 = vld [vmem:[#allocation2 + $0x1e] sm:$0xff]
      %v5125 = vld [vmem:[#allocation2 + $0x26] sm:$0xff]
      %v5126 = vld [vmem:[#allocation2 + $0x2e] sm:$0xff]
      %v5127 = vld [vmem:[#allocation2 + $0x36] sm:$0xff]
      %v5128 = vld [vmem:[#allocation2 + $0x3e] sm:$0xff]
      %v5129 = vld [vmem:[#allocation2 + $0x46] sm:$0xff]
      %v5130 = vld [vmem:[#allocation2 + $0x4e] sm:$0xff]
      %v5131 = vld [vmem:[#allocation2 + $0x56] sm:$0x7]
      %v5132 = vpack.c.bf16 %v5124, %v5123
      %v5133 = vpack.c.bf16 %v5126, %v5125
      %v5134 = vpack.c.bf16 %v5128, %v5127
      %v5135 = vpack.c.bf16 %v5130, %v5129
      %v5136 = vpack.c.bf16 %v5131, %v5131
      %s5137 = scalar_lea.vmem %s5, 512
      %v5138 = vld [vmem:[%s5137] sm:$0xf]
      %v5139 = vld [vmem:[%s5137 + $0x4] sm:$0xf]
      %v5140 = vld [vmem:[%s5137 + $0x8] sm:$0xf]
      %v5141 = vld [vmem:[%s5137 + $0xc] sm:$0xf]
      %v5142 = vld [vmem:[%s5137 + $0x10] sm:$0xf]
      %v5143 = vld [vmem:[%s5137 + $0x14] sm:$0xf]
      %v5144 = vld [vmem:[%s5137 + $0x18] sm:$0xf]
      %v5145 = vld [vmem:[%s5137 + $0x1c] sm:$0xf]
      %v5146 = vld [vmem:[%s5137 + $0x20] sm:$0xf]
      %v5147 = vld [vmem:[%s5137 + $0x24] sm:$0xf]
      %v5148 = vld [vmem:[%s5137 + $0x28] sm:$0xf]
      %v5149 = vld [vmem:[%s5137 + $0x2c] sm:$0xf]
      %v5150 = vld [vmem:[%s5137 + $0x30] sm:$0xf]
      %v5151 = vld [vmem:[%s5137 + $0x34] sm:$0xf]
      %v5152 = vld [vmem:[%s5137 + $0x38] sm:$0xf]
      %v5153 = vld [vmem:[%s5137 + $0x3c] sm:$0xf]
      %v5170 = vunpack.c.l.b16 %v5138
      %v5171 = vunpack.c.l.b16 %v5139
      %v5172 = vunpack.c.l.b16 %v5140
      %v5173 = vunpack.c.l.b16 %v5141
      %v5174 = vunpack.c.l.b16 %v5142
      %v5175 = vunpack.c.l.b16 %v5143
      %v5176 = vunpack.c.l.b16 %v5144
      %v5177 = vunpack.c.l.b16 %v5145
      %v5178 = vunpack.c.l.b16 %v5146
      %v5179 = vunpack.c.l.b16 %v5147
      %v5180 = vunpack.c.l.b16 %v5148
      %v5181 = vunpack.c.l.b16 %v5149
      %v5182 = vunpack.c.l.b16 %v5150
      %v5183 = vunpack.c.l.b16 %v5151
      %v5184 = vunpack.c.l.b16 %v5152
      %v5185 = vunpack.c.l.b16 %v5153
      %v5186 = vpack.c.b16 %v5171, %v5170
      %v5187 = vpack.c.b16 %v5173, %v5172
      %v5188 = vpack.c.b16 %v5175, %v5174
      %v5189 = vpack.c.b16 %v5177, %v5176
      %v5190 = vpack.c.b16 %v5179, %v5178
      %v5191 = vpack.c.b16 %v5181, %v5180
      %v5192 = vpack.c.b16 %v5183, %v5182
      %v5193 = vpack.c.b16 %v5185, %v5184
      %5202 = vmatprep.subr.bf16.mxu0 0
      %5203 = vmatpush1.bf16.msra.mxu0 %v5186
      %5204 = vmatprep.subr.bf16.mxu0 0
      %5205 = vmatpush1.bf16.msra.mxu0 %v5187
      %5206 = vmatprep.subr.bf16.mxu0 0
      %5207 = vmatpush1.bf16.msra.mxu0 %v5188
      %5208 = vmatprep.subr.bf16.mxu0 0
      %5209 = vmatpush1.bf16.msra.mxu0 %v5189
      %5210 = vmatprep.subr.bf16.mxu0 0
      %5211 = vmatpush1.bf16.msra.mxu0 %v5190
      %5212 = vmatprep.subr.bf16.mxu0 0
      %5213 = vmatpush1.bf16.msra.mxu0 %v5191
      %5214 = vmatprep.subr.bf16.mxu0 0
      %5215 = vmatpush1.bf16.msra.mxu0 %v5192
      %5216 = vmatprep.subr.bf16.mxu0 0
      %5217 = vmatpush1.bf16.msra.mxu0 %v5193
      %5218 = vmatprep.subr.bf16.mxu0 0
      %5219 = vmatpush1.bf16.msra.mxu0 0
      %5220 = vmatprep.subr.bf16.mxu0 0
      %5221 = vmatpush1.bf16.msra.mxu0 0
      %5222 = vmatprep.subr.bf16.mxu0 0
      %5223 = vmatpush1.bf16.msra.mxu0 0
      %5224 = vmatprep.subr.bf16.mxu0 0
      %5225 = vmatpush1.bf16.msra.mxu0 0
      %5226 = vmatprep.subr.bf16.mxu0 0
      %5227 = vmatpush1.bf16.msra.mxu0 0
      %5228 = vmatprep.subr.bf16.mxu0 0
      %5229 = vmatpush1.bf16.msra.mxu0 0
      %5230 = vmatprep.subr.bf16.mxu0 0
      %5231 = vmatpush1.bf16.msra.mxu0 0
      %5232 = vmatprep.subr.bf16.mxu0 0
      %5233 = vmatpush1.bf16.msra.mxu0 0
      %5234 = vmatprep.mubr.bf16.mxu0 0
      %5235 = vmatmul.mubr.bf16.gmra.mrb[0].mxu0 %v5132
      %v5236 = vpop.f32.mrb[0].mxu0
      %v5237 = vadd.f32 0.0, %v5236
      %v5238 = vpop.f32.mrb[0].mxu0
      %v5239 = vpop.f32.mrb[0].mxu0
      %v5240 = vadd.f32 0.0, %v5239
      %v5241 = vpop.f32.mrb[0].mxu0
      %5242 = vmatprep.mubr.bf16.mxu0 0
      %5243 = vmatmul.mubr.bf16.gmra.mrb[0].mxu0 %v5133
      %v5244 = vpop.f32.mrb[0].mxu0
      %v5245 = vadd.f32 0.0, %v5244
      %v5246 = vpop.f32.mrb[0].mxu0
      %v5247 = vpop.f32.mrb[0].mxu0
      %v5248 = vadd.f32 0.0, %v5247
      %v5249 = vpop.f32.mrb[0].mxu0
      %5250 = vmatprep.mubr.bf16.mxu0 0
      %5251 = vmatmul.mubr.bf16.gmra.mrb[0].mxu0 %v5134
      %v5252 = vpop.f32.mrb[0].mxu0
      %v5253 = vadd.f32 0.0, %v5252
      %v5254 = vpop.f32.mrb[0].mxu0
      %v5255 = vpop.f32.mrb[0].mxu0
      %v5256 = vadd.f32 0.0, %v5255
      %v5257 = vpop.f32.mrb[0].mxu0
      %5258 = vmatprep.mubr.bf16.mxu0 0
      %5259 = vmatmul.mubr.bf16.gmra.mrb[0].mxu0 %v5135
      %v5260 = vpop.f32.mrb[0].mxu0
      %v5261 = vadd.f32 0.0, %v5260
      %v5262 = vpop.f32.mrb[0].mxu0
      %v5263 = vpop.f32.mrb[0].mxu0
      %v5264 = vadd.f32 0.0, %v5263
      %v5265 = vpop.f32.mrb[0].mxu0
      %5266 = vmatprep.mubr.bf16.mxu0 0
      %5267 = vmatmul.mubr.bf16.gmra.mrb[0].mxu0 %v5136
      %v5268 = vpop.f32.mrb[0].mxu0
      %v5269 = vadd.f32 0.0, %v5268
      %v5270 = vpop.f32.mrb[0].mxu0
      %v5271 = vpop.f32.mrb[0].mxu0
      %v5272 = vpop.f32.mrb[0].mxu0
      %5273 = vdwg.mxu0
      %v5274 = vadd.f32 %v5114, %v5237
      %v5275 = vadd.f32 %v5115, %v5240
      %v5276 = vadd.f32 %v5116, %v5245
      %v5277 = vadd.f32 %v5117, %v5248
      %v5278 = vadd.f32 %v5118, %v5253
      %v5279 = vadd.f32 %v5119, %v5256
      %v5280 = vadd.f32 %v5120, %v5261
      %v5281 = vadd.f32 %v5121, %v5264
      %v5282 = vadd.f32 %v5122, %v5269
      %v5283 = vld [vmem:[%s7] sm:$0xff]
      %v5284 = vld [vmem:[%s7 + $0x8] sm:$0xff]
      %v5285 = vld [vmem:[%s6] sm:$0x7]
      %v5286 = vlaneseq
      %v5287 = vshrl.u32 %v5286, 7
      %v5288 = vsub.s32 0, %v5287
      %v5289 = vrot.slane %v5285, %v5288
      %vm5290 = vcmask 547840
      %v5292 = vsel %vm5290, %v5283, 0
      %v5295 = vsel %vm5290, %v5284, 0
      %v5298 = vsel %vm3404, %v5282, 0
      %5300 = vmatprep.subr.mxu0 0.0
      %5301 = vmatpush1.msra.mxu0 %v5274
      %5302 = vmatprep.subr.mxu0 0.0
      %5303 = vmatpush1.msra.mxu0 %v5275
      %5304 = vmatprep.subr.mxu0 0.0
      %5305 = vmatpush1.msra.mxu0 %v5276
      %5306 = vmatprep.subr.mxu0 0.0
      %5307 = vmatpush1.msra.mxu0 %v5277
      %5308 = vmatprep.subr.mxu0 0.0
      %5309 = vmatpush1.msra.mxu0 %v5278
      %5310 = vmatprep.subr.mxu0 0.0
      %5311 = vmatpush1.msra.mxu0 %v5279
      %5312 = vmatprep.subr.mxu0 0.0
      %5313 = vmatpush1.msra.mxu0 %v5280
      %5314 = vmatprep.subr.mxu0 0.0
      %5315 = vmatpush1.msra.mxu0 %v5281
      %5316 = vmatprep.subr.mxu0 0.0
      %5317 = vmatpush1.msra.mxu0 %v5298
      %5318 = vmatprep.subr.mxu0 0.0
      %5319 = vmatpush1.msra.mxu0 0.0
      %5320 = vmatprep.subr.mxu0 0.0
      %5321 = vmatpush1.msra.mxu0 0.0
      %5322 = vmatprep.subr.mxu0 0.0
      %5323 = vmatpush1.msra.mxu0 0.0
      %5324 = vmatprep.subr.mxu0 0.0
      %5325 = vmatpush1.msra.mxu0 0.0
      %5326 = vmatprep.subr.mxu0 0.0
      %5327 = vmatpush1.msra.mxu0 0.0
      %5328 = vmatprep.subr.mxu0 0.0
      %5329 = vmatpush1.msra.mxu0 0.0
      %5330 = vmatprep.subr.mxu0 0.0
      %5331 = vmatpush1.msra.mxu0 0.0
      %5332 = vmatprep.subr.mxu0 0.0
      %5333 = vmatpush1.msra.mxu0 0.0
      %5334 = vmatprep.subr.mxu0 0.0
      %5335 = vmatpush1.msra.mxu0 0.0
      %5336 = vmatprep.subr.mxu0 0.0
      %5337 = vmatpush1.msra.mxu0 0.0
      %5338 = vmatprep.subr.mxu0 0.0
      %5339 = vmatpush1.msra.mxu0 0.0
      %5340 = vmatprep.subr.mxu0 0.0
      %5341 = vmatpush1.msra.mxu0 0.0
      %5342 = vmatprep.subr.mxu0 0.0
      %5343 = vmatpush1.msra.mxu0 0.0
      %5344 = vmatprep.subr.mxu0 0.0
      %5345 = vmatpush1.msra.mxu0 0.0
      %5346 = vmatprep.subr.mxu0 0.0
      %5347 = vmatpush1.msra.mxu0 0.0
      %5348 = vmatprep.subr.mxu0 0.0
      %5349 = vmatpush1.msra.mxu0 0.0
      %5350 = vmatprep.subr.mxu0 0.0
      %5351 = vmatpush1.msra.mxu0 0.0
      %5352 = vmatprep.subr.mxu0 0.0
      %5353 = vmatpush1.msra.mxu0 0.0
      %5354 = vmatprep.subr.mxu0 0.0
      %5355 = vmatpush1.msra.mxu0 0.0
      %5356 = vmatprep.subr.mxu0 0.0
      %5357 = vmatpush1.msra.mxu0 0.0
      %5358 = vmatprep.subr.mxu0 0.0
      %5359 = vmatpush1.msra.mxu0 0.0
      %5360 = vmatprep.subr.mxu0 0.0
      %5361 = vmatpush1.msra.mxu0 0.0
      %5362 = vmatprep.subr.mxu0 0.0
      %5363 = vmatpush1.msra.mxu0 0.0
      %5364 = vmatprep.mubr.f32.mxu0 0.0
      %5365 = vmatmul.mubr.f32.gmra.mrb[0].mxu0 %v5292
      %v5366 = vpop.f32.mrb[0].mxu0
      %v5367 = vadd.f32 %v5289, %v5366
      %v5368 = vpop.f32.mrb[0].mxu0
      %5369 = vmatprep.mubr.f32.mxu0 0.0
      %5370 = vmatmul.mubr.f32.gmra.mrb[0].mxu0 %v5295
      %v5371 = vpop.f32.mrb[0].mxu0
      %v5372 = vadd.f32 %v5289, %v5371
      %v5373 = vpop.f32.mrb[0].mxu0
      %5374 = vdwg.mxu0
      %vm5375 = vcmp.ge.f32.partialorder %v5367, 0.0
      %vm5376 = vcmp.ge.f32.partialorder %v5372, 0.0
      %v5377 = vmul.f32 %v5367, 0.2
      %v5378 = vmul.f32 %v5372, 0.2
      %v5379 = vsel %vm5375, %v5367, %v5377
      %v5380 = vsel %vm5376, %v5372, %v5378
      %v5381 = vlaneseq
      %v5382 = vshrl.u32 %v5381, 7
      %v5383 = vsub.s32 1, %v5382
      %v5384 = vrot.slane %v5285, %v5383
      %v5385 = vmul.f32 %v5379, %v5384
      %v5386 = vmul.f32 %v5380, %v5384
      %v5387 = vlaneseq
      %v5388 = vshrl.u32 %v5387, 7
      %v5389 = vsub.s32 2, %v5388
      %v5390 = vrot.slane %v5285, %v5389
      %v5391 = vadd.f32 %v5385, %v5390
      %v5392 = vadd.f32 %v5386, %v5390
      %v5393 = vld [vmem:[%s8] sm:$0xff]
      %v5394 = vld [vmem:[%s8 + $0x8] sm:$0xff]
      %v5395 = vld [vmem:[%s8 + $0x10] sm:$0xff]
      %v5396 = vld [vmem:[%s8 + $0x18] sm:$0xff]
      %v5397 = vld [vmem:[%s8 + $0x20] sm:$0xf]
      %vm5398 = vcmask 130048
      %v5400 = vsel %vm5398, %v5393, 0
      %v5403 = vsel %vm5398, %v5394, 0
      %v5406 = vsel %vm5398, %v5395, 0
      %v5409 = vsel %vm5398, %v5396, 0
      %v5412 = vsel %vm5398, %v5397, 0
      %5414 = vmatprep.subr.mxu0 0.0
      %5415 = vmatpush1.msra.mxu0 %v5391
      %5416 = vmatprep.subr.mxu0 0.0
      %5417 = vmatpush1.msra.mxu0 %v5392
      %5418 = vmatprep.subr.mxu0 0.0
      %5419 = vmatpush1.msra.mxu0 0.0
      %5420 = vmatprep.subr.mxu0 0.0
      %5421 = vmatpush1.msra.mxu0 0.0
      %5422 = vmatprep.subr.mxu0 0.0
      %5423 = vmatpush1.msra.mxu0 0.0
      %5424 = vmatprep.subr.mxu0 0.0
      %5425 = vmatpush1.msra.mxu0 0.0
      %5426 = vmatprep.subr.mxu0 0.0
      %5427 = vmatpush1.msra.mxu0 0.0
      %5428 = vmatprep.subr.mxu0 0.0
      %5429 = vmatpush1.msra.mxu0 0.0
      %5430 = vmatprep.subr.mxu0 0.0
      %5431 = vmatpush1.msra.mxu0 0.0
      %5432 = vmatprep.subr.mxu0 0.0
      %5433 = vmatpush1.msra.mxu0 0.0
      %5434 = vmatprep.subr.mxu0 0.0
      %5435 = vmatpush1.msra.mxu0 0.0
      %5436 = vmatprep.subr.mxu0 0.0
      %5437 = vmatpush1.msra.mxu0 0.0
      %5438 = vmatprep.subr.mxu0 0.0
      %5439 = vmatpush1.msra.mxu0 0.0
      %5440 = vmatprep.subr.mxu0 0.0
      %5441 = vmatpush1.msra.mxu0 0.0
      %5442 = vmatprep.subr.mxu0 0.0
      %5443 = vmatpush1.msra.mxu0 0.0
      %5444 = vmatprep.subr.mxu0 0.0
      %5445 = vmatpush1.msra.mxu0 0.0
      %5446 = vmatprep.subr.mxu0 0.0
      %5447 = vmatpush1.msra.mxu0 0.0
      %5448 = vmatprep.subr.mxu0 0.0
      %5449 = vmatpush1.msra.mxu0 0.0
      %5450 = vmatprep.subr.mxu0 0.0
      %5451 = vmatpush1.msra.mxu0 0.0
      %5452 = vmatprep.subr.mxu0 0.0
      %5453 = vmatpush1.msra.mxu0 0.0
      %5454 = vmatprep.subr.mxu0 0.0
      %5455 = vmatpush1.msra.mxu0 0.0
      %5456 = vmatprep.subr.mxu0 0.0
      %5457 = vmatpush1.msra.mxu0 0.0
      %5458 = vmatprep.subr.mxu0 0.0
      %5459 = vmatpush1.msra.mxu0 0.0
      %5460 = vmatprep.subr.mxu0 0.0
      %5461 = vmatpush1.msra.mxu0 0.0
      %5462 = vmatprep.subr.mxu0 0.0
      %5463 = vmatpush1.msra.mxu0 0.0
      %5464 = vmatprep.subr.mxu0 0.0
      %5465 = vmatpush1.msra.mxu0 0.0
      %5466 = vmatprep.subr.mxu0 0.0
      %5467 = vmatpush1.msra.mxu0 0.0
      %5468 = vmatprep.subr.mxu0 0.0
      %5469 = vmatpush1.msra.mxu0 0.0
      %5470 = vmatprep.subr.mxu0 0.0
      %5471 = vmatpush1.msra.mxu0 0.0
      %5472 = vmatprep.subr.mxu0 0.0
      %5473 = vmatpush1.msra.mxu0 0.0
      %5474 = vmatprep.subr.mxu0 0.0
      %5475 = vmatpush1.msra.mxu0 0.0
      %5476 = vmatprep.subr.mxu0 0.0
      %5477 = vmatpush1.msra.mxu0 0.0
      %5478 = vmatprep.mubr.f32.mxu0 0.0
      %5479 = vmatmul.mubr.f32.gmra.mrb[0].mxu0 %v5400
      %v5480 = vpop.f32.mrb[0].mxu0
      %v5481 = vadd.f32 0.0, %v5480
      %v5482 = vpop.f32.mrb[0].mxu0
      %5483 = vmatprep.mubr.f32.mxu0 0.0
      %5484 = vmatmul.mubr.f32.gmra.mrb[0].mxu0 %v5403
      %v5485 = vpop.f32.mrb[0].mxu0
      %v5486 = vadd.f32 0.0, %v5485
      %v5487 = vpop.f32.mrb[0].mxu0
      %5488 = vmatprep.mubr.f32.mxu0 0.0
      %5489 = vmatmul.mubr.f32.gmra.mrb[0].mxu0 %v5406
      %v5490 = vpop.f32.mrb[0].mxu0
      %v5491 = vadd.f32 0.0, %v5490
      %v5492 = vpop.f32.mrb[0].mxu0
      %5493 = vmatprep.mubr.f32.mxu0 0.0
      %5494 = vmatmul.mubr.f32.gmra.mrb[0].mxu0 %v5409
      %v5495 = vpop.f32.mrb[0].mxu0
      %v5496 = vadd.f32 0.0, %v5495
      %v5497 = vpop.f32.mrb[0].mxu0
      %5498 = vmatprep.mubr.f32.mxu0 0.0
      %5499 = vmatmul.mubr.f32.gmra.mrb[0].mxu0 %v5412
      %v5500 = vpop.f32.mrb[0].mxu0
      %v5501 = vadd.f32 0.0, %v5500
      %v5502 = vpop.f32.mrb[0].mxu0
      %5503 = vdwg.mxu0
      %5504 = vst [vmem:[#allocation3] sm:$0xff] %v5481
      %5505 = vst [vmem:[#allocation3 + $0x8] sm:$0xff] %v5486
      %5506 = vst [vmem:[#allocation3 + $0x10] sm:$0xff] %v5491
      %5507 = vst [vmem:[#allocation3 + $0x18] sm:$0xff] %v5496
      %5508 = vst [vmem:[#allocation3 + $0x20] sm:$0xf] %v5501
      %v5509 = vld [vmem:[#allocation3] sm:$0xff]
      %v5510 = vld [vmem:[#allocation3 + $0x8] sm:$0x7f]
      %v5511 = vpack.c.bf16 %v5510, %v5509
      %v5512 = vld [vmem:[%s9] sm:$0xf]
      %v5513 = vld [vmem:[%s9 + $0x4] sm:$0xf]
      %v5514 = vld [vmem:[%s9 + $0x8] sm:$0xf]
      %v5515 = vld [vmem:[%s9 + $0xc] sm:$0xf]
      %v5516 = vld [vmem:[%s9 + $0x10] sm:$0xf]
      %v5517 = vld [vmem:[%s9 + $0x14] sm:$0xf]
      %v5518 = vld [vmem:[%s9 + $0x18] sm:$0xf]
      %v5519 = vld [vmem:[%s9 + $0x1c] sm:$0xf]
      %v5520 = vld [vmem:[%s9 + $0x20] sm:$0xf]
      %v5521 = vld [vmem:[%s9 + $0x24] sm:$0xf]
      %v5522 = vld [vmem:[%s9 + $0x28] sm:$0xf]
      %v5523 = vld [vmem:[%s9 + $0x2c] sm:$0xf]
      %v5524 = vld [vmem:[%s9 + $0x30] sm:$0xf]
      %v5525 = vld [vmem:[%s9 + $0x34] sm:$0xf]
      %v5526 = vld [vmem:[%s9 + $0x38] sm:$0xf]
      %v5527 = vld [vmem:[%s9 + $0x3c] sm:$0xf]
      %v5528 = vld [vmem:[#allocation3 + $0x1] sm:$0xff]
      %v5529 = vld [vmem:[#allocation3 + $0x9] sm:$0x7f]
      %v5530 = vpack.c.bf16 %v5529, %v5528
      %s5531 = scalar_lea.vmem %s9, 64
      %v5532 = vld [vmem:[%s5531] sm:$0xf]
      %v5533 = vld [vmem:[%s5531 + $0x4] sm:$0xf]
      %v5534 = vld [vmem:[%s5531 + $0x8] sm:$0xf]
      %v5535 = vld [vmem:[%s5531 + $0xc] sm:$0xf]
      %v5536 = vld [vmem:[%s5531 + $0x10] sm:$0xf]
      %v5537 = vld [vmem:[%s5531 + $0x14] sm:$0xf]
      %v5538 = vld [vmem:[%s5531 + $0x18] sm:$0xf]
      %v5539 = vld [vmem:[%s5531 + $0x1c] sm:$0xf]
      %v5540 = vld [vmem:[%s5531 + $0x20] sm:$0xf]
      %v5541 = vld [vmem:[%s5531 + $0x24] sm:$0xf]
      %v5542 = vld [vmem:[%s5531 + $0x28] sm:$0xf]
      %v5543 = vld [vmem:[%s5531 + $0x2c] sm:$0xf]
      %v5544 = vld [vmem:[%s5531 + $0x30] sm:$0xf]
      %v5545 = vld [vmem:[%s5531 + $0x34] sm:$0xf]
      %v5546 = vld [vmem:[%s5531 + $0x38] sm:$0xf]
      %v5547 = vld [vmem:[%s5531 + $0x3c] sm:$0xf]
      %v5564 = vunpack.c.l.b16 %v5532
      %v5565 = vunpack.c.l.b16 %v5533
      %v5566 = vunpack.c.l.b16 %v5534
      %v5567 = vunpack.c.l.b16 %v5535
      %v5568 = vunpack.c.l.b16 %v5536
      %v5569 = vunpack.c.l.b16 %v5537
      %v5570 = vunpack.c.l.b16 %v5538
      %v5571 = vunpack.c.l.b16 %v5539
      %v5572 = vunpack.c.l.b16 %v5540
      %v5573 = vunpack.c.l.b16 %v5541
      %v5574 = vunpack.c.l.b16 %v5542
      %v5575 = vunpack.c.l.b16 %v5543
      %v5576 = vunpack.c.l.b16 %v5544
      %v5577 = vunpack.c.l.b16 %v5545
      %v5578 = vunpack.c.l.b16 %v5546
      %v5579 = vunpack.c.l.b16 %v5547
      %v5580 = vpack.c.b16 %v5565, %v5564
      %v5581 = vpack.c.b16 %v5567, %v5566
      %v5582 = vpack.c.b16 %v5569, %v5568
      %v5583 = vpack.c.b16 %v5571, %v5570
      %v5584 = vpack.c.b16 %v5573, %v5572
      %v5585 = vpack.c.b16 %v5575, %v5574
      %v5586 = vpack.c.b16 %v5577, %v5576
      %v5587 = vpack.c.b16 %v5579, %v5578
      %5596 = vmatprep.subr.bf16.mxu0 0
      %5597 = vmatpush1.bf16.msra.mxu0 %v5580
      %5598 = vmatprep.subr.bf16.mxu0 0
      %5599 = vmatpush1.bf16.msra.mxu0 %v5581
      %5600 = vmatprep.subr.bf16.mxu0 0
      %5601 = vmatpush1.bf16.msra.mxu0 %v5582
      %5602 = vmatprep.subr.bf16.mxu0 0
      %5603 = vmatpush1.bf16.msra.mxu0 %v5583
      %5604 = vmatprep.subr.bf16.mxu0 0
      %5605 = vmatpush1.bf16.msra.mxu0 %v5584
      %5606 = vmatprep.subr.bf16.mxu0 0
      %5607 = vmatpush1.bf16.msra.mxu0 %v5585
      %5608 = vmatprep.subr.bf16.mxu0 0
      %5609 = vmatpush1.bf16.msra.mxu0 %v5586
      %5610 = vmatprep.subr.bf16.mxu0 0
      %5611 = vmatpush1.bf16.msra.mxu0 %v5587
      %5612 = vmatprep.subr.bf16.mxu0 0
      %5613 = vmatpush1.bf16.msra.mxu0 0
      %5614 = vmatprep.subr.bf16.mxu0 0
      %5615 = vmatpush1.bf16.msra.mxu0 0
      %5616 = vmatprep.subr.bf16.mxu0 0
      %5617 = vmatpush1.bf16.msra.mxu0 0
      %5618 = vmatprep.subr.bf16.mxu0 0
      %5619 = vmatpush1.bf16.msra.mxu0 0
      %5620 = vmatprep.subr.bf16.mxu0 0
      %5621 = vmatpush1.bf16.msra.mxu0 0
      %5622 = vmatprep.subr.bf16.mxu0 0
      %5623 = vmatpush1.bf16.msra.mxu0 0
      %5624 = vmatprep.subr.bf16.mxu0 0
      %5625 = vmatpush1.bf16.msra.mxu0 0
      %5626 = vmatprep.subr.bf16.mxu0 0
      %5627 = vmatpush1.bf16.msra.mxu0 0
      %5628 = vmatprep.mubr.bf16.mxu0 0
      %5629 = vmatmul.mubr.bf16.gmra.mrb[0].mxu0 %v5530
      %v5630 = vpop.f32.mrb[0].mxu0
      %v5631 = vadd.f32 0.0, %v5630
      %v5632 = vpop.f32.mrb[0].mxu0
      %v5633 = vpop.f32.mrb[0].mxu0
      %v5634 = vadd.f32 0.0, %v5633
      %v5635 = vpop.f32.mrb[0].mxu0
      %5636 = vdwg.mxu0
      %v5653 = vunpack.c.l.b16 %v5512
      %v5654 = vunpack.c.l.b16 %v5513
      %v5655 = vunpack.c.l.b16 %v5514
      %v5656 = vunpack.c.l.b16 %v5515
      %v5657 = vunpack.c.l.b16 %v5516
      %v5658 = vunpack.c.l.b16 %v5517
      %v5659 = vunpack.c.l.b16 %v5518
      %v5660 = vunpack.c.l.b16 %v5519
      %v5661 = vunpack.c.l.b16 %v5520
      %v5662 = vunpack.c.l.b16 %v5521
      %v5663 = vunpack.c.l.b16 %v5522
      %v5664 = vunpack.c.l.b16 %v5523
      %v5665 = vunpack.c.l.b16 %v5524
      %v5666 = vunpack.c.l.b16 %v5525
      %v5667 = vunpack.c.l.b16 %v5526
      %v5668 = vunpack.c.l.b16 %v5527
      %v5669 = vpack.c.b16 %v5654, %v5653
      %v5670 = vpack.c.b16 %v5656, %v5655
      %v5671 = vpack.c.b16 %v5658, %v5657
      %v5672 = vpack.c.b16 %v5660, %v5659
      %v5673 = vpack.c.b16 %v5662, %v5661
      %v5674 = vpack.c.b16 %v5664, %v5663
      %v5675 = vpack.c.b16 %v5666, %v5665
      %v5676 = vpack.c.b16 %v5668, %v5667
      %5685 = vmatprep.subr.bf16.mxu0 0
      %5686 = vmatpush1.bf16.msra.mxu0 %v5669
      %5687 = vmatprep.subr.bf16.mxu0 0
      %5688 = vmatpush1.bf16.msra.mxu0 %v5670
      %5689 = vmatprep.subr.bf16.mxu0 0
      %5690 = vmatpush1.bf16.msra.mxu0 %v5671
      %5691 = vmatprep.subr.bf16.mxu0 0
      %5692 = vmatpush1.bf16.msra.mxu0 %v5672
      %5693 = vmatprep.subr.bf16.mxu0 0
      %5694 = vmatpush1.bf16.msra.mxu0 %v5673
      %5695 = vmatprep.subr.bf16.mxu0 0
      %5696 = vmatpush1.bf16.msra.mxu0 %v5674
      %5697 = vmatprep.subr.bf16.mxu0 0
      %5698 = vmatpush1.bf16.msra.mxu0 %v5675
      %5699 = vmatprep.subr.bf16.mxu0 0
      %5700 = vmatpush1.bf16.msra.mxu0 %v5676
      %5701 = vmatprep.subr.bf16.mxu0 0
      %5702 = vmatpush1.bf16.msra.mxu0 0
      %5703 = vmatprep.subr.bf16.mxu0 0
      %5704 = vmatpush1.bf16.msra.mxu0 0
      %5705 = vmatprep.subr.bf16.mxu0 0
      %5706 = vmatpush1.bf16.msra.mxu0 0
      %5707 = vmatprep.subr.bf16.mxu0 0
      %5708 = vmatpush1.bf16.msra.mxu0 0
      %5709 = vmatprep.subr.bf16.mxu0 0
      %5710 = vmatpush1.bf16.msra.mxu0 0
      %5711 = vmatprep.subr.bf16.mxu0 0
      %5712 = vmatpush1.bf16.msra.mxu0 0
      %5713 = vmatprep.subr.bf16.mxu0 0
      %5714 = vmatpush1.bf16.msra.mxu0 0
      %5715 = vmatprep.subr.bf16.mxu0 0
      %5716 = vmatpush1.bf16.msra.mxu0 0
      %5717 = vmatprep.mubr.bf16.mxu0 0
      %5718 = vmatmul.mubr.bf16.gmra.mrb[0].mxu0 %v5511
      %v5719 = vpop.f32.mrb[0].mxu0
      %v5720 = vadd.f32 %v5631, %v5719
      %v5721 = vpop.f32.mrb[0].mxu0
      %v5722 = vpop.f32.mrb[0].mxu0
      %v5723 = vadd.f32 %v5634, %v5722
      %v5724 = vpop.f32.mrb[0].mxu0
      %5725 = vdwg.mxu0
      %v5726 = vld [vmem:[#allocation3 + $0x2] sm:$0xff]
      %v5727 = vld [vmem:[#allocation3 + $0xa] sm:$0x7f]
      %v5728 = vpack.c.bf16 %v5727, %v5726
      %s5729 = scalar_lea.vmem %s9, 128
      %v5730 = vld [vmem:[%s5729] sm:$0xf]
      %v5731 = vld [vmem:[%s5729 + $0x4] sm:$0xf]
      %v5732 = vld [vmem:[%s5729 + $0x8] sm:$0xf]
      %v5733 = vld [vmem:[%s5729 + $0xc] sm:$0xf]
      %v5734 = vld [vmem:[%s5729 + $0x10] sm:$0xf]
      %v5735 = vld [vmem:[%s5729 + $0x14] sm:$0xf]
      %v5736 = vld [vmem:[%s5729 + $0x18] sm:$0xf]
      %v5737 = vld [vmem:[%s5729 + $0x1c] sm:$0xf]
      %v5738 = vld [vmem:[%s5729 + $0x20] sm:$0xf]
      %v5739 = vld [vmem:[%s5729 + $0x24] sm:$0xf]
      %v5740 = vld [vmem:[%s5729 + $0x28] sm:$0xf]
      %v5741 = vld [vmem:[%s5729 + $0x2c] sm:$0xf]
      %v5742 = vld [vmem:[%s5729 + $0x30] sm:$0xf]
      %v5743 = vld [vmem:[%s5729 + $0x34] sm:$0xf]
      %v5744 = vld [vmem:[%s5729 + $0x38] sm:$0xf]
      %v5745 = vld [vmem:[%s5729 + $0x3c] sm:$0xf]
      %v5762 = vunpack.c.l.b16 %v5730
      %v5763 = vunpack.c.l.b16 %v5731
      %v5764 = vunpack.c.l.b16 %v5732
      %v5765 = vunpack.c.l.b16 %v5733
      %v5766 = vunpack.c.l.b16 %v5734
      %v5767 = vunpack.c.l.b16 %v5735
      %v5768 = vunpack.c.l.b16 %v5736
      %v5769 = vunpack.c.l.b16 %v5737
      %v5770 = vunpack.c.l.b16 %v5738
      %v5771 = vunpack.c.l.b16 %v5739
      %v5772 = vunpack.c.l.b16 %v5740
      %v5773 = vunpack.c.l.b16 %v5741
      %v5774 = vunpack.c.l.b16 %v5742
      %v5775 = vunpack.c.l.b16 %v5743
      %v5776 = vunpack.c.l.b16 %v5744
      %v5777 = vunpack.c.l.b16 %v5745
      %v5778 = vpack.c.b16 %v5763, %v5762
      %v5779 = vpack.c.b16 %v5765, %v5764
      %v5780 = vpack.c.b16 %v5767, %v5766
      %v5781 = vpack.c.b16 %v5769, %v5768
      %v5782 = vpack.c.b16 %v5771, %v5770
      %v5783 = vpack.c.b16 %v5773, %v5772
      %v5784 = vpack.c.b16 %v5775, %v5774
      %v5785 = vpack.c.b16 %v5777, %v5776
      %5794 = vmatprep.subr.bf16.mxu0 0
      %5795 = vmatpush1.bf16.msra.mxu0 %v5778
      %5796 = vmatprep.subr.bf16.mxu0 0
      %5797 = vmatpush1.bf16.msra.mxu0 %v5779
      %5798 = vmatprep.subr.bf16.mxu0 0
      %5799 = vmatpush1.bf16.msra.mxu0 %v5780
      %5800 = vmatprep.subr.bf16.mxu0 0
      %5801 = vmatpush1.bf16.msra.mxu0 %v5781
      %5802 = vmatprep.subr.bf16.mxu0 0
      %5803 = vmatpush1.bf16.msra.mxu0 %v5782
      %5804 = vmatprep.subr.bf16.mxu0 0
      %5805 = vmatpush1.bf16.msra.mxu0 %v5783
      %5806 = vmatprep.subr.bf16.mxu0 0
      %5807 = vmatpush1.bf16.msra.mxu0 %v5784
      %5808 = vmatprep.subr.bf16.mxu0 0
      %5809 = vmatpush1.bf16.msra.mxu0 %v5785
      %5810 = vmatprep.subr.bf16.mxu0 0
      %5811 = vmatpush1.bf16.msra.mxu0 0
      %5812 = vmatprep.subr.bf16.mxu0 0
      %5813 = vmatpush1.bf16.msra.mxu0 0
      %5814 = vmatprep.subr.bf16.mxu0 0
      %5815 = vmatpush1.bf16.msra.mxu0 0
      %5816 = vmatprep.subr.bf16.mxu0 0
      %5817 = vmatpush1.bf16.msra.mxu0 0
      %5818 = vmatprep.subr.bf16.mxu0 0
      %5819 = vmatpush1.bf16.msra.mxu0 0
      %5820 = vmatprep.subr.bf16.mxu0 0
      %5821 = vmatpush1.bf16.msra.mxu0 0
      %5822 = vmatprep.subr.bf16.mxu0 0
      %5823 = vmatpush1.bf16.msra.mxu0 0
      %5824 = vmatprep.subr.bf16.mxu0 0
      %5825 = vmatpush1.bf16.msra.mxu0 0
      %5826 = vmatprep.mubr.bf16.mxu0 0
      %5827 = vmatmul.mubr.bf16.gmra.mrb[0].mxu0 %v5728
      %v5828 = vpop.f32.mrb[0].mxu0
      %v5829 = vadd.f32 0.0, %v5828
      %v5830 = vpop.f32.mrb[0].mxu0
      %v5831 = vpop.f32.mrb[0].mxu0
      %v5832 = vadd.f32 0.0, %v5831
      %v5833 = vpop.f32.mrb[0].mxu0
      %5834 = vdwg.mxu0
      %v5835 = vadd.f32 %v5720, %v5829
      %v5836 = vadd.f32 %v5723, %v5832
      %v5837 = vld [vmem:[#allocation3 + $0x6] sm:$0xff]
      %v5838 = vld [vmem:[#allocation3 + $0xe] sm:$0x7f]
      %v5839 = vpack.c.bf16 %v5838, %v5837
      %s5840 = scalar_lea.vmem %s9, 192
      %v5841 = vld [vmem:[%s5840] sm:$0xf]
      %v5842 = vld [vmem:[%s5840 + $0x4] sm:$0xf]
      %v5843 = vld [vmem:[%s5840 + $0x8] sm:$0xf]
      %v5844 = vld [vmem:[%s5840 + $0xc] sm:$0xf]
      %v5845 = vld [vmem:[%s5840 + $0x10] sm:$0xf]
      %v5846 = vld [vmem:[%s5840 + $0x14] sm:$0xf]
      %v5847 = vld [vmem:[%s5840 + $0x18] sm:$0xf]
      %v5848 = vld [vmem:[%s5840 + $0x1c] sm:$0xf]
      %v5849 = vld [vmem:[%s5840 + $0x20] sm:$0xf]
      %v5850 = vld [vmem:[%s5840 + $0x24] sm:$0xf]
      %v5851 = vld [vmem:[%s5840 + $0x28] sm:$0xf]
      %v5852 = vld [vmem:[%s5840 + $0x2c] sm:$0xf]
      %v5853 = vld [vmem:[%s5840 + $0x30] sm:$0xf]
      %v5854 = vld [vmem:[%s5840 + $0x34] sm:$0xf]
      %v5855 = vld [vmem:[%s5840 + $0x38] sm:$0xf]
      %v5856 = vld [vmem:[%s5840 + $0x3c] sm:$0xf]
      %v5873 = vunpack.c.l.b16 %v5841
      %v5874 = vunpack.c.l.b16 %v5842
      %v5875 = vunpack.c.l.b16 %v5843
      %v5876 = vunpack.c.l.b16 %v5844
      %v5877 = vunpack.c.l.b16 %v5845
      %v5878 = vunpack.c.l.b16 %v5846
      %v5879 = vunpack.c.l.b16 %v5847
      %v5880 = vunpack.c.l.b16 %v5848
      %v5881 = vunpack.c.l.b16 %v5849
      %v5882 = vunpack.c.l.b16 %v5850
      %v5883 = vunpack.c.l.b16 %v5851
      %v5884 = vunpack.c.l.b16 %v5852
      %v5885 = vunpack.c.l.b16 %v5853
      %v5886 = vunpack.c.l.b16 %v5854
      %v5887 = vunpack.c.l.b16 %v5855
      %v5888 = vunpack.c.l.b16 %v5856
      %v5889 = vpack.c.b16 %v5874, %v5873
      %v5890 = vpack.c.b16 %v5876, %v5875
      %v5891 = vpack.c.b16 %v5878, %v5877
      %v5892 = vpack.c.b16 %v5880, %v5879
      %v5893 = vpack.c.b16 %v5882, %v5881
      %v5894 = vpack.c.b16 %v5884, %v5883
      %v5895 = vpack.c.b16 %v5886, %v5885
      %v5896 = vpack.c.b16 %v5888, %v5887
      %5905 = vmatprep.subr.bf16.mxu0 0
      %5906 = vmatpush1.bf16.msra.mxu0 %v5889
      %5907 = vmatprep.subr.bf16.mxu0 0
      %5908 = vmatpush1.bf16.msra.mxu0 %v5890
      %5909 = vmatprep.subr.bf16.mxu0 0
      %5910 = vmatpush1.bf16.msra.mxu0 %v5891
      %5911 = vmatprep.subr.bf16.mxu0 0
      %5912 = vmatpush1.bf16.msra.mxu0 %v5892
      %5913 = vmatprep.subr.bf16.mxu0 0
      %5914 = vmatpush1.bf16.msra.mxu0 %v5893
      %5915 = vmatprep.subr.bf16.mxu0 0
      %5916 = vmatpush1.bf16.msra.mxu0 %v5894
      %5917 = vmatprep.subr.bf16.mxu0 0
      %5918 = vmatpush1.bf16.msra.mxu0 %v5895
      %5919 = vmatprep.subr.bf16.mxu0 0
      %5920 = vmatpush1.bf16.msra.mxu0 %v5896
      %5921 = vmatprep.subr.bf16.mxu0 0
      %5922 = vmatpush1.bf16.msra.mxu0 0
      %5923 = vmatprep.subr.bf16.mxu0 0
      %5924 = vmatpush1.bf16.msra.mxu0 0
      %5925 = vmatprep.subr.bf16.mxu0 0
      %5926 = vmatpush1.bf16.msra.mxu0 0
      %5927 = vmatprep.subr.bf16.mxu0 0
      %5928 = vmatpush1.bf16.msra.mxu0 0
      %5929 = vmatprep.subr.bf16.mxu0 0
      %5930 = vmatpush1.bf16.msra.mxu0 0
      %5931 = vmatprep.subr.bf16.mxu0 0
      %5932 = vmatpush1.bf16.msra.mxu0 0
      %5933 = vmatprep.subr.bf16.mxu0 0
      %5934 = vmatpush1.bf16.msra.mxu0 0
      %5935 = vmatprep.subr.bf16.mxu0 0
      %5936 = vmatpush1.bf16.msra.mxu0 0
      %5937 = vmatprep.mubr.bf16.mxu0 0
      %5938 = vmatmul.mubr.bf16.gmra.mrb[0].mxu0 %v5839
      %v5939 = vpop.f32.mrb[0].mxu0
      %v5940 = vadd.f32 0.0, %v5939
      %v5941 = vpop.f32.mrb[0].mxu0
      %v5942 = vpop.f32.mrb[0].mxu0
      %v5943 = vadd.f32 0.0, %v5942
      %v5944 = vpop.f32.mrb[0].mxu0
      %5945 = vdwg.mxu0
      %v5946 = vadd.f32 %v5835, %v5940
      %v5947 = vadd.f32 %v5836, %v5943
      %v5948 = vld [vmem:[#allocation3 + $0x7] sm:$0xff]
      %v5949 = vld [vmem:[#allocation3 + $0xf] sm:$0x7f]
      %v5950 = vpack.c.bf16 %v5949, %v5948
      %s5951 = scalar_lea.vmem %s9, 256
      %v5952 = vld [vmem:[%s5951] sm:$0xf]
      %v5953 = vld [vmem:[%s5951 + $0x4] sm:$0xf]
      %v5954 = vld [vmem:[%s5951 + $0x8] sm:$0xf]
      %v5955 = vld [vmem:[%s5951 + $0xc] sm:$0xf]
      %v5956 = vld [vmem:[%s5951 + $0x10] sm:$0xf]
      %v5957 = vld [vmem:[%s5951 + $0x14] sm:$0xf]
      %v5958 = vld [vmem:[%s5951 + $0x18] sm:$0xf]
      %v5959 = vld [vmem:[%s5951 + $0x1c] sm:$0xf]
      %v5960 = vld [vmem:[%s5951 + $0x20] sm:$0xf]
      %v5961 = vld [vmem:[%s5951 + $0x24] sm:$0xf]
      %v5962 = vld [vmem:[%s5951 + $0x28] sm:$0xf]
      %v5963 = vld [vmem:[%s5951 + $0x2c] sm:$0xf]
      %v5964 = vld [vmem:[%s5951 + $0x30] sm:$0xf]
      %v5965 = vld [vmem:[%s5951 + $0x34] sm:$0xf]
      %v5966 = vld [vmem:[%s5951 + $0x38] sm:$0xf]
      %v5967 = vld [vmem:[%s5951 + $0x3c] sm:$0xf]
      %v5984 = vunpack.c.l.b16 %v5952
      %v5985 = vunpack.c.l.b16 %v5953
      %v5986 = vunpack.c.l.b16 %v5954
      %v5987 = vunpack.c.l.b16 %v5955
      %v5988 = vunpack.c.l.b16 %v5956
      %v5989 = vunpack.c.l.b16 %v5957
      %v5990 = vunpack.c.l.b16 %v5958
      %v5991 = vunpack.c.l.b16 %v5959
      %v5992 = vunpack.c.l.b16 %v5960
      %v5993 = vunpack.c.l.b16 %v5961
      %v5994 = vunpack.c.l.b16 %v5962
      %v5995 = vunpack.c.l.b16 %v5963
      %v5996 = vunpack.c.l.b16 %v5964
      %v5997 = vunpack.c.l.b16 %v5965
      %v5998 = vunpack.c.l.b16 %v5966
      %v5999 = vunpack.c.l.b16 %v5967
      %v6000 = vpack.c.b16 %v5985, %v5984
      %v6001 = vpack.c.b16 %v5987, %v5986
      %v6002 = vpack.c.b16 %v5989, %v5988
      %v6003 = vpack.c.b16 %v5991, %v5990
      %v6004 = vpack.c.b16 %v5993, %v5992
      %v6005 = vpack.c.b16 %v5995, %v5994
      %v6006 = vpack.c.b16 %v5997, %v5996
      %v6007 = vpack.c.b16 %v5999, %v5998
      %6016 = vmatprep.subr.bf16.mxu0 0
      %6017 = vmatpush1.bf16.msra.mxu0 %v6000
      %6018 = vmatprep.subr.bf16.mxu0 0
      %6019 = vmatpush1.bf16.msra.mxu0 %v6001
      %6020 = vmatprep.subr.bf16.mxu0 0
      %6021 = vmatpush1.bf16.msra.mxu0 %v6002
      %6022 = vmatprep.subr.bf16.mxu0 0
      %6023 = vmatpush1.bf16.msra.mxu0 %v6003
      %6024 = vmatprep.subr.bf16.mxu0 0
      %6025 = vmatpush1.bf16.msra.mxu0 %v6004
      %6026 = vmatprep.subr.bf16.mxu0 0
      %6027 = vmatpush1.bf16.msra.mxu0 %v6005
      %6028 = vmatprep.subr.bf16.mxu0 0
      %6029 = vmatpush1.bf16.msra.mxu0 %v6006
      %6030 = vmatprep.subr.bf16.mxu0 0
      %6031 = vmatpush1.bf16.msra.mxu0 %v6007
      %6032 = vmatprep.subr.bf16.mxu0 0
      %6033 = vmatpush1.bf16.msra.mxu0 0
      %6034 = vmatprep.subr.bf16.mxu0 0
      %6035 = vmatpush1.bf16.msra.mxu0 0
      %6036 = vmatprep.subr.bf16.mxu0 0
      %6037 = vmatpush1.bf16.msra.mxu0 0
      %6038 = vmatprep.subr.bf16.mxu0 0
      %6039 = vmatpush1.bf16.msra.mxu0 0
      %6040 = vmatprep.subr.bf16.mxu0 0
      %6041 = vmatpush1.bf16.msra.mxu0 0
      %6042 = vmatprep.subr.bf16.mxu0 0
      %6043 = vmatpush1.bf16.msra.mxu0 0
      %6044 = vmatprep.subr.bf16.mxu0 0
      %6045 = vmatpush1.bf16.msra.mxu0 0
      %6046 = vmatprep.subr.bf16.mxu0 0
      %6047 = vmatpush1.bf16.msra.mxu0 0
      %6048 = vmatprep.mubr.bf16.mxu0 0
      %6049 = vmatmul.mubr.bf16.gmra.mrb[0].mxu0 %v5950
      %v6050 = vpop.f32.mrb[0].mxu0
      %v6051 = vadd.f32 0.0, %v6050
      %v6052 = vpop.f32.mrb[0].mxu0
      %v6053 = vpop.f32.mrb[0].mxu0
      %v6054 = vadd.f32 0.0, %v6053
      %v6055 = vpop.f32.mrb[0].mxu0
      %6056 = vdwg.mxu0
      %v6057 = vadd.f32 %v5946, %v6051
      %v6058 = vadd.f32 %v5947, %v6054
      %v6059 = vld [vmem:[#allocation3 + $0x8] sm:$0xff]
      %v6060 = vld [vmem:[#allocation3 + $0x10] sm:$0x7f]
      %v6061 = vpack.c.bf16 %v6060, %v6059
      %s6062 = scalar_lea.vmem %s9, 320
      %v6063 = vld [vmem:[%s6062] sm:$0xf]
      %v6064 = vld [vmem:[%s6062 + $0x4] sm:$0xf]
      %v6065 = vld [vmem:[%s6062 + $0x8] sm:$0xf]
      %v6066 = vld [vmem:[%s6062 + $0xc] sm:$0xf]
      %v6067 = vld [vmem:[%s6062 + $0x10] sm:$0xf]
      %v6068 = vld [vmem:[%s6062 + $0x14] sm:$0xf]
      %v6069 = vld [vmem:[%s6062 + $0x18] sm:$0xf]
      %v6070 = vld [vmem:[%s6062 + $0x1c] sm:$0xf]
      %v6071 = vld [vmem:[%s6062 + $0x20] sm:$0xf]
      %v6072 = vld [vmem:[%s6062 + $0x24] sm:$0xf]
      %v6073 = vld [vmem:[%s6062 + $0x28] sm:$0xf]
      %v6074 = vld [vmem:[%s6062 + $0x2c] sm:$0xf]
      %v6075 = vld [vmem:[%s6062 + $0x30] sm:$0xf]
      %v6076 = vld [vmem:[%s6062 + $0x34] sm:$0xf]
      %v6077 = vld [vmem:[%s6062 + $0x38] sm:$0xf]
      %v6078 = vld [vmem:[%s6062 + $0x3c] sm:$0xf]
      %v6095 = vunpack.c.l.b16 %v6063
      %v6096 = vunpack.c.l.b16 %v6064
      %v6097 = vunpack.c.l.b16 %v6065
      %v6098 = vunpack.c.l.b16 %v6066
      %v6099 = vunpack.c.l.b16 %v6067
      %v6100 = vunpack.c.l.b16 %v6068
      %v6101 = vunpack.c.l.b16 %v6069
      %v6102 = vunpack.c.l.b16 %v6070
      %v6103 = vunpack.c.l.b16 %v6071
      %v6104 = vunpack.c.l.b16 %v6072
      %v6105 = vunpack.c.l.b16 %v6073
      %v6106 = vunpack.c.l.b16 %v6074
      %v6107 = vunpack.c.l.b16 %v6075
      %v6108 = vunpack.c.l.b16 %v6076
      %v6109 = vunpack.c.l.b16 %v6077
      %v6110 = vunpack.c.l.b16 %v6078
      %v6111 = vpack.c.b16 %v6096, %v6095
      %v6112 = vpack.c.b16 %v6098, %v6097
      %v6113 = vpack.c.b16 %v6100, %v6099
      %v6114 = vpack.c.b16 %v6102, %v6101
      %v6115 = vpack.c.b16 %v6104, %v6103
      %v6116 = vpack.c.b16 %v6106, %v6105
      %v6117 = vpack.c.b16 %v6108, %v6107
      %v6118 = vpack.c.b16 %v6110, %v6109
      %6127 = vmatprep.subr.bf16.mxu0 0
      %6128 = vmatpush1.bf16.msra.mxu0 %v6111
      %6129 = vmatprep.subr.bf16.mxu0 0
      %6130 = vmatpush1.bf16.msra.mxu0 %v6112
      %6131 = vmatprep.subr.bf16.mxu0 0
      %6132 = vmatpush1.bf16.msra.mxu0 %v6113
      %6133 = vmatprep.subr.bf16.mxu0 0
      %6134 = vmatpush1.bf16.msra.mxu0 %v6114
      %6135 = vmatprep.subr.bf16.mxu0 0
      %6136 = vmatpush1.bf16.msra.mxu0 %v6115
      %6137 = vmatprep.subr.bf16.mxu0 0
      %6138 = vmatpush1.bf16.msra.mxu0 %v6116
      %6139 = vmatprep.subr.bf16.mxu0 0
      %6140 = vmatpush1.bf16.msra.mxu0 %v6117
      %6141 = vmatprep.subr.bf16.mxu0 0
      %6142 = vmatpush1.bf16.msra.mxu0 %v6118
      %6143 = vmatprep.subr.bf16.mxu0 0
      %6144 = vmatpush1.bf16.msra.mxu0 0
      %6145 = vmatprep.subr.bf16.mxu0 0
      %6146 = vmatpush1.bf16.msra.mxu0 0
      %6147 = vmatprep.subr.bf16.mxu0 0
      %6148 = vmatpush1.bf16.msra.mxu0 0
      %6149 = vmatprep.subr.bf16.mxu0 0
      %6150 = vmatpush1.bf16.msra.mxu0 0
      %6151 = vmatprep.subr.bf16.mxu0 0
      %6152 = vmatpush1.bf16.msra.mxu0 0
      %6153 = vmatprep.subr.bf16.mxu0 0
      %6154 = vmatpush1.bf16.msra.mxu0 0
      %6155 = vmatprep.subr.bf16.mxu0 0
      %6156 = vmatpush1.bf16.msra.mxu0 0
      %6157 = vmatprep.subr.bf16.mxu0 0
      %6158 = vmatpush1.bf16.msra.mxu0 0
      %6159 = vmatprep.mubr.bf16.mxu0 0
      %6160 = vmatmul.mubr.bf16.gmra.mrb[0].mxu0 %v6061
      %v6161 = vpop.f32.mrb[0].mxu0
      %v6162 = vadd.f32 0.0, %v6161
      %v6163 = vpop.f32.mrb[0].mxu0
      %v6164 = vpop.f32.mrb[0].mxu0
      %v6165 = vadd.f32 0.0, %v6164
      %v6166 = vpop.f32.mrb[0].mxu0
      %6167 = vdwg.mxu0
      %v6168 = vadd.f32 %v6057, %v6162
      %v6169 = vadd.f32 %v6058, %v6165
      %v6170 = vld [vmem:[#allocation3 + $0xc] sm:$0xff]
      %v6171 = vld [vmem:[#allocation3 + $0x14] sm:$0x7f]
      %v6172 = vpack.c.bf16 %v6171, %v6170
      %s6173 = scalar_lea.vmem %s9, 384
      %v6174 = vld [vmem:[%s6173] sm:$0xf]
      %v6175 = vld [vmem:[%s6173 + $0x4] sm:$0xf]
      %v6176 = vld [vmem:[%s6173 + $0x8] sm:$0xf]
      %v6177 = vld [vmem:[%s6173 + $0xc] sm:$0xf]
      %v6178 = vld [vmem:[%s6173 + $0x10] sm:$0xf]
      %v6179 = vld [vmem:[%s6173 + $0x14] sm:$0xf]
      %v6180 = vld [vmem:[%s6173 + $0x18] sm:$0xf]
      %v6181 = vld [vmem:[%s6173 + $0x1c] sm:$0xf]
      %v6182 = vld [vmem:[%s6173 + $0x20] sm:$0xf]
      %v6183 = vld [vmem:[%s6173 + $0x24] sm:$0xf]
      %v6184 = vld [vmem:[%s6173 + $0x28] sm:$0xf]
      %v6185 = vld [vmem:[%s6173 + $0x2c] sm:$0xf]
      %v6186 = vld [vmem:[%s6173 + $0x30] sm:$0xf]
      %v6187 = vld [vmem:[%s6173 + $0x34] sm:$0xf]
      %v6188 = vld [vmem:[%s6173 + $0x38] sm:$0xf]
      %v6189 = vld [vmem:[%s6173 + $0x3c] sm:$0xf]
      %v6206 = vunpack.c.l.b16 %v6174
      %v6207 = vunpack.c.l.b16 %v6175
      %v6208 = vunpack.c.l.b16 %v6176
      %v6209 = vunpack.c.l.b16 %v6177
      %v6210 = vunpack.c.l.b16 %v6178
      %v6211 = vunpack.c.l.b16 %v6179
      %v6212 = vunpack.c.l.b16 %v6180
      %v6213 = vunpack.c.l.b16 %v6181
      %v6214 = vunpack.c.l.b16 %v6182
      %v6215 = vunpack.c.l.b16 %v6183
      %v6216 = vunpack.c.l.b16 %v6184
      %v6217 = vunpack.c.l.b16 %v6185
      %v6218 = vunpack.c.l.b16 %v6186
      %v6219 = vunpack.c.l.b16 %v6187
      %v6220 = vunpack.c.l.b16 %v6188
      %v6221 = vunpack.c.l.b16 %v6189
      %v6222 = vpack.c.b16 %v6207, %v6206
      %v6223 = vpack.c.b16 %v6209, %v6208
      %v6224 = vpack.c.b16 %v6211, %v6210
      %v6225 = vpack.c.b16 %v6213, %v6212
      %v6226 = vpack.c.b16 %v6215, %v6214
      %v6227 = vpack.c.b16 %v6217, %v6216
      %v6228 = vpack.c.b16 %v6219, %v6218
      %v6229 = vpack.c.b16 %v6221, %v6220
      %6238 = vmatprep.subr.bf16.mxu0 0
      %6239 = vmatpush1.bf16.msra.mxu0 %v6222
      %6240 = vmatprep.subr.bf16.mxu0 0
      %6241 = vmatpush1.bf16.msra.mxu0 %v6223
      %6242 = vmatprep.subr.bf16.mxu0 0
      %6243 = vmatpush1.bf16.msra.mxu0 %v6224
      %6244 = vmatprep.subr.bf16.mxu0 0
      %6245 = vmatpush1.bf16.msra.mxu0 %v6225
      %6246 = vmatprep.subr.bf16.mxu0 0
      %6247 = vmatpush1.bf16.msra.mxu0 %v6226
      %6248 = vmatprep.subr.bf16.mxu0 0
      %6249 = vmatpush1.bf16.msra.mxu0 %v6227
      %6250 = vmatprep.subr.bf16.mxu0 0
      %6251 = vmatpush1.bf16.msra.mxu0 %v6228
      %6252 = vmatprep.subr.bf16.mxu0 0
      %6253 = vmatpush1.bf16.msra.mxu0 %v6229
      %6254 = vmatprep.subr.bf16.mxu0 0
      %6255 = vmatpush1.bf16.msra.mxu0 0
      %6256 = vmatprep.subr.bf16.mxu0 0
      %6257 = vmatpush1.bf16.msra.mxu0 0
      %6258 = vmatprep.subr.bf16.mxu0 0
      %6259 = vmatpush1.bf16.msra.mxu0 0
      %6260 = vmatprep.subr.bf16.mxu0 0
      %6261 = vmatpush1.bf16.msra.mxu0 0
      %6262 = vmatprep.subr.bf16.mxu0 0
      %6263 = vmatpush1.bf16.msra.mxu0 0
      %6264 = vmatprep.subr.bf16.mxu0 0
      %6265 = vmatpush1.bf16.msra.mxu0 0
      %6266 = vmatprep.subr.bf16.mxu0 0
      %6267 = vmatpush1.bf16.msra.mxu0 0
      %6268 = vmatprep.subr.bf16.mxu0 0
      %6269 = vmatpush1.bf16.msra.mxu0 0
      %6270 = vmatprep.mubr.bf16.mxu0 0
      %6271 = vmatmul.mubr.bf16.gmra.mrb[0].mxu0 %v6172
      %v6272 = vpop.f32.mrb[0].mxu0
      %v6273 = vadd.f32 0.0, %v6272
      %v6274 = vpop.f32.mrb[0].mxu0
      %v6275 = vpop.f32.mrb[0].mxu0
      %v6276 = vadd.f32 0.0, %v6275
      %v6277 = vpop.f32.mrb[0].mxu0
      %6278 = vdwg.mxu0
      %v6279 = vadd.f32 %v6168, %v6273
      %v6280 = vadd.f32 %v6169, %v6276
      %v6281 = vld [vmem:[#allocation3 + $0xd] sm:$0xff]
      %v6282 = vld [vmem:[#allocation3 + $0x15] sm:$0x7f]
      %v6283 = vpack.c.bf16 %v6282, %v6281
      %s6284 = scalar_lea.vmem %s9, 448
      %v6285 = vld [vmem:[%s6284] sm:$0xf]
      %v6286 = vld [vmem:[%s6284 + $0x4] sm:$0xf]
      %v6287 = vld [vmem:[%s6284 + $0x8] sm:$0xf]
      %v6288 = vld [vmem:[%s6284 + $0xc] sm:$0xf]
      %v6289 = vld [vmem:[%s6284 + $0x10] sm:$0xf]
      %v6290 = vld [vmem:[%s6284 + $0x14] sm:$0xf]
      %v6291 = vld [vmem:[%s6284 + $0x18] sm:$0xf]
      %v6292 = vld [vmem:[%s6284 + $0x1c] sm:$0xf]
      %v6293 = vld [vmem:[%s6284 + $0x20] sm:$0xf]
      %v6294 = vld [vmem:[%s6284 + $0x24] sm:$0xf]
      %v6295 = vld [vmem:[%s6284 + $0x28] sm:$0xf]
      %v6296 = vld [vmem:[%s6284 + $0x2c] sm:$0xf]
      %v6297 = vld [vmem:[%s6284 + $0x30] sm:$0xf]
      %v6298 = vld [vmem:[%s6284 + $0x34] sm:$0xf]
      %v6299 = vld [vmem:[%s6284 + $0x38] sm:$0xf]
      %v6300 = vld [vmem:[%s6284 + $0x3c] sm:$0xf]
      %v6317 = vunpack.c.l.b16 %v6285
      %v6318 = vunpack.c.l.b16 %v6286
      %v6319 = vunpack.c.l.b16 %v6287
      %v6320 = vunpack.c.l.b16 %v6288
      %v6321 = vunpack.c.l.b16 %v6289
      %v6322 = vunpack.c.l.b16 %v6290
      %v6323 = vunpack.c.l.b16 %v6291
      %v6324 = vunpack.c.l.b16 %v6292
      %v6325 = vunpack.c.l.b16 %v6293
      %v6326 = vunpack.c.l.b16 %v6294
      %v6327 = vunpack.c.l.b16 %v6295
      %v6328 = vunpack.c.l.b16 %v6296
      %v6329 = vunpack.c.l.b16 %v6297
      %v6330 = vunpack.c.l.b16 %v6298
      %v6331 = vunpack.c.l.b16 %v6299
      %v6332 = vunpack.c.l.b16 %v6300
      %v6333 = vpack.c.b16 %v6318, %v6317
      %v6334 = vpack.c.b16 %v6320, %v6319
      %v6335 = vpack.c.b16 %v6322, %v6321
      %v6336 = vpack.c.b16 %v6324, %v6323
      %v6337 = vpack.c.b16 %v6326, %v6325
      %v6338 = vpack.c.b16 %v6328, %v6327
      %v6339 = vpack.c.b16 %v6330, %v6329
      %v6340 = vpack.c.b16 %v6332, %v6331
      %6349 = vmatprep.subr.bf16.mxu0 0
      %6350 = vmatpush1.bf16.msra.mxu0 %v6333
      %6351 = vmatprep.subr.bf16.mxu0 0
      %6352 = vmatpush1.bf16.msra.mxu0 %v6334
      %6353 = vmatprep.subr.bf16.mxu0 0
      %6354 = vmatpush1.bf16.msra.mxu0 %v6335
      %6355 = vmatprep.subr.bf16.mxu0 0
      %6356 = vmatpush1.bf16.msra.mxu0 %v6336
      %6357 = vmatprep.subr.bf16.mxu0 0
      %6358 = vmatpush1.bf16.msra.mxu0 %v6337
      %6359 = vmatprep.subr.bf16.mxu0 0
      %6360 = vmatpush1.bf16.msra.mxu0 %v6338
      %6361 = vmatprep.subr.bf16.mxu0 0
      %6362 = vmatpush1.bf16.msra.mxu0 %v6339
      %6363 = vmatprep.subr.bf16.mxu0 0
      %6364 = vmatpush1.bf16.msra.mxu0 %v6340
      %6365 = vmatprep.subr.bf16.mxu0 0
      %6366 = vmatpush1.bf16.msra.mxu0 0
      %6367 = vmatprep.subr.bf16.mxu0 0
      %6368 = vmatpush1.bf16.msra.mxu0 0
      %6369 = vmatprep.subr.bf16.mxu0 0
      %6370 = vmatpush1.bf16.msra.mxu0 0
      %6371 = vmatprep.subr.bf16.mxu0 0
      %6372 = vmatpush1.bf16.msra.mxu0 0
      %6373 = vmatprep.subr.bf16.mxu0 0
      %6374 = vmatpush1.bf16.msra.mxu0 0
      %6375 = vmatprep.subr.bf16.mxu0 0
      %6376 = vmatpush1.bf16.msra.mxu0 0
      %6377 = vmatprep.subr.bf16.mxu0 0
      %6378 = vmatpush1.bf16.msra.mxu0 0
      %6379 = vmatprep.subr.bf16.mxu0 0
      %6380 = vmatpush1.bf16.msra.mxu0 0
      %6381 = vmatprep.mubr.bf16.mxu0 0
      %6382 = vmatmul.mubr.bf16.gmra.mrb[0].mxu0 %v6283
      %v6383 = vpop.f32.mrb[0].mxu0
      %v6384 = vadd.f32 0.0, %v6383
      %v6385 = vpop.f32.mrb[0].mxu0
      %v6386 = vpop.f32.mrb[0].mxu0
      %v6387 = vadd.f32 0.0, %v6386
      %v6388 = vpop.f32.mrb[0].mxu0
      %6389 = vdwg.mxu0
      %v6390 = vadd.f32 %v6279, %v6384
      %v6391 = vadd.f32 %v6280, %v6387
      %v6392 = vld [vmem:[#allocation3 + $0xe] sm:$0xff]
      %v6393 = vld [vmem:[#allocation3 + $0x16] sm:$0x7f]
      %v6394 = vpack.c.bf16 %v6393, %v6392
      %s6395 = scalar_lea.vmem %s9, 512
      %v6396 = vld [vmem:[%s6395] sm:$0xf]
      %v6397 = vld [vmem:[%s6395 + $0x4] sm:$0xf]
      %v6398 = vld [vmem:[%s6395 + $0x8] sm:$0xf]
      %v6399 = vld [vmem:[%s6395 + $0xc] sm:$0xf]
      %v6400 = vld [vmem:[%s6395 + $0x10] sm:$0xf]
      %v6401 = vld [vmem:[%s6395 + $0x14] sm:$0xf]
      %v6402 = vld [vmem:[%s6395 + $0x18] sm:$0xf]
      %v6403 = vld [vmem:[%s6395 + $0x1c] sm:$0xf]
      %v6404 = vld [vmem:[%s6395 + $0x20] sm:$0xf]
      %v6405 = vld [vmem:[%s6395 + $0x24] sm:$0xf]
      %v6406 = vld [vmem:[%s6395 + $0x28] sm:$0xf]
      %v6407 = vld [vmem:[%s6395 + $0x2c] sm:$0xf]
      %v6408 = vld [vmem:[%s6395 + $0x30] sm:$0xf]
      %v6409 = vld [vmem:[%s6395 + $0x34] sm:$0xf]
      %v6410 = vld [vmem:[%s6395 + $0x38] sm:$0xf]
      %v6411 = vld [vmem:[%s6395 + $0x3c] sm:$0xf]
      %v6428 = vunpack.c.l.b16 %v6396
      %v6429 = vunpack.c.l.b16 %v6397
      %v6430 = vunpack.c.l.b16 %v6398
      %v6431 = vunpack.c.l.b16 %v6399
      %v6432 = vunpack.c.l.b16 %v6400
      %v6433 = vunpack.c.l.b16 %v6401
      %v6434 = vunpack.c.l.b16 %v6402
      %v6435 = vunpack.c.l.b16 %v6403
      %v6436 = vunpack.c.l.b16 %v6404
      %v6437 = vunpack.c.l.b16 %v6405
      %v6438 = vunpack.c.l.b16 %v6406
      %v6439 = vunpack.c.l.b16 %v6407
      %v6440 = vunpack.c.l.b16 %v6408
      %v6441 = vunpack.c.l.b16 %v6409
      %v6442 = vunpack.c.l.b16 %v6410
      %v6443 = vunpack.c.l.b16 %v6411
      %v6444 = vpack.c.b16 %v6429, %v6428
      %v6445 = vpack.c.b16 %v6431, %v6430
      %v6446 = vpack.c.b16 %v6433, %v6432
      %v6447 = vpack.c.b16 %v6435, %v6434
      %v6448 = vpack.c.b16 %v6437, %v6436
      %v6449 = vpack.c.b16 %v6439, %v6438
      %v6450 = vpack.c.b16 %v6441, %v6440
      %v6451 = vpack.c.b16 %v6443, %v6442
      %6460 = vmatprep.subr.bf16.mxu0 0
      %6461 = vmatpush1.bf16.msra.mxu0 %v6444
      %6462 = vmatprep.subr.bf16.mxu0 0
      %6463 = vmatpush1.bf16.msra.mxu0 %v6445
      %6464 = vmatprep.subr.bf16.mxu0 0
      %6465 = vmatpush1.bf16.msra.mxu0 %v6446
      %6466 = vmatprep.subr.bf16.mxu0 0
      %6467 = vmatpush1.bf16.msra.mxu0 %v6447
      %6468 = vmatprep.subr.bf16.mxu0 0
      %6469 = vmatpush1.bf16.msra.mxu0 %v6448
      %6470 = vmatprep.subr.bf16.mxu0 0
      %6471 = vmatpush1.bf16.msra.mxu0 %v6449
      %6472 = vmatprep.subr.bf16.mxu0 0
      %6473 = vmatpush1.bf16.msra.mxu0 %v6450
      %6474 = vmatprep.subr.bf16.mxu0 0
      %6475 = vmatpush1.bf16.msra.mxu0 %v6451
      %6476 = vmatprep.subr.bf16.mxu0 0
      %6477 = vmatpush1.bf16.msra.mxu0 0
      %6478 = vmatprep.subr.bf16.mxu0 0
      %6479 = vmatpush1.bf16.msra.mxu0 0
      %6480 = vmatprep.subr.bf16.mxu0 0
      %6481 = vmatpush1.bf16.msra.mxu0 0
      %6482 = vmatprep.subr.bf16.mxu0 0
      %6483 = vmatpush1.bf16.msra.mxu0 0
      %6484 = vmatprep.subr.bf16.mxu0 0
      %6485 = vmatpush1.bf16.msra.mxu0 0
      %6486 = vmatprep.subr.bf16.mxu0 0
      %6487 = vmatpush1.bf16.msra.mxu0 0
      %6488 = vmatprep.subr.bf16.mxu0 0
      %6489 = vmatpush1.bf16.msra.mxu0 0
      %6490 = vmatprep.subr.bf16.mxu0 0
      %6491 = vmatpush1.bf16.msra.mxu0 0
      %6492 = vmatprep.mubr.bf16.mxu0 0
      %6493 = vmatmul.mubr.bf16.gmra.mrb[0].mxu0 %v6394
      %v6494 = vpop.f32.mrb[0].mxu0
      %v6495 = vadd.f32 0.0, %v6494
      %v6496 = vpop.f32.mrb[0].mxu0
      %v6497 = vpop.f32.mrb[0].mxu0
      %v6498 = vadd.f32 0.0, %v6497
      %v6499 = vpop.f32.mrb[0].mxu0
      %6500 = vdwg.mxu0
      %v6501 = vadd.f32 %v6390, %v6495
      %v6502 = vadd.f32 %v6391, %v6498
      %v6503 = vld [vmem:[%s11] sm:$0xf]
      %v6504 = vld [vmem:[%s10] sm:$0x7]
      %v6505 = vlaneseq
      %v6506 = vshrl.u32 %v6505, 7
      %v6507 = vsub.s32 0, %v6506
      %v6508 = vrot.slane %v6504, %v6507
      %vm6509 = vcmask 121856
      %v6511 = vsel %vm6509, %v6503, 0
      %vm6513 = vcmask 1046528
      %v6515 = vsel %vm6513, %v6502, 0
      %6517 = vmatprep.subr.mxu0 0.0
      %6518 = vmatpush1.msra.mxu0 %v6501
      %6519 = vmatprep.subr.mxu0 0.0
      %6520 = vmatpush1.msra.mxu0 %v6515
      %6521 = vmatprep.subr.mxu0 0.0
      %6522 = vmatpush1.msra.mxu0 0.0
      %6523 = vmatprep.subr.mxu0 0.0
      %6524 = vmatpush1.msra.mxu0 0.0
      %6525 = vmatprep.subr.mxu0 0.0
      %6526 = vmatpush1.msra.mxu0 0.0
      %6527 = vmatprep.subr.mxu0 0.0
      %6528 = vmatpush1.msra.mxu0 0.0
      %6529 = vmatprep.subr.mxu0 0.0
      %6530 = vmatpush1.msra.mxu0 0.0
      %6531 = vmatprep.subr.mxu0 0.0
      %6532 = vmatpush1.msra.mxu0 0.0
      %6533 = vmatprep.subr.mxu0 0.0
      %6534 = vmatpush1.msra.mxu0 0.0
      %6535 = vmatprep.subr.mxu0 0.0
      %6536 = vmatpush1.msra.mxu0 0.0
      %6537 = vmatprep.subr.mxu0 0.0
      %6538 = vmatpush1.msra.mxu0 0.0
      %6539 = vmatprep.subr.mxu0 0.0
      %6540 = vmatpush1.msra.mxu0 0.0
      %6541 = vmatprep.subr.mxu0 0.0
      %6542 = vmatpush1.msra.mxu0 0.0
      %6543 = vmatprep.subr.mxu0 0.0
      %6544 = vmatpush1.msra.mxu0 0.0
      %6545 = vmatprep.subr.mxu0 0.0
      %6546 = vmatpush1.msra.mxu0 0.0
      %6547 = vmatprep.subr.mxu0 0.0
      %6548 = vmatpush1.msra.mxu0 0.0
      %6549 = vmatprep.subr.mxu0 0.0
      %6550 = vmatpush1.msra.mxu0 0.0
      %6551 = vmatprep.subr.mxu0 0.0
      %6552 = vmatpush1.msra.mxu0 0.0
      %6553 = vmatprep.subr.mxu0 0.0
      %6554 = vmatpush1.msra.mxu0 0.0
      %6555 = vmatprep.subr.mxu0 0.0
      %6556 = vmatpush1.msra.mxu0 0.0
      %6557 = vmatprep.subr.mxu0 0.0
      %6558 = vmatpush1.msra.mxu0 0.0
      %6559 = vmatprep.subr.mxu0 0.0
      %6560 = vmatpush1.msra.mxu0 0.0
      %6561 = vmatprep.subr.mxu0 0.0
      %6562 = vmatpush1.msra.mxu0 0.0
      %6563 = vmatprep.subr.mxu0 0.0
      %6564 = vmatpush1.msra.mxu0 0.0
      %6565 = vmatprep.subr.mxu0 0.0
      %6566 = vmatpush1.msra.mxu0 0.0
      %6567 = vmatprep.subr.mxu0 0.0
      %6568 = vmatpush1.msra.mxu0 0.0
      %6569 = vmatprep.subr.mxu0 0.0
      %6570 = vmatpush1.msra.mxu0 0.0
      %6571 = vmatprep.subr.mxu0 0.0
      %6572 = vmatpush1.msra.mxu0 0.0
      %6573 = vmatprep.subr.mxu0 0.0
      %6574 = vmatpush1.msra.mxu0 0.0
      %6575 = vmatprep.subr.mxu0 0.0
      %6576 = vmatpush1.msra.mxu0 0.0
      %6577 = vmatprep.subr.mxu0 0.0
      %6578 = vmatpush1.msra.mxu0 0.0
      %6579 = vmatprep.subr.mxu0 0.0
      %6580 = vmatpush1.msra.mxu0 0.0
      %6581 = vmatprep.mubr.f32.mxu0 0.0
      %6582 = vmatmul.mubr.f32.gmra.mrb[0].mxu0 %v6511
      %v6583 = vpop.f32.mrb[0].mxu0
      %v6584 = vadd.f32 %v6508, %v6583
      %v6585 = vpop.f32.mrb[0].mxu0
      %6586 = vdwg.mxu0
      %vm6587 = vcmp.ge.f32.partialorder %v6584, 0.0
      %v6588 = vmul.f32 %v6584, 0.2
      %v6589 = vsel %vm6587, %v6584, %v6588
      %v6590 = vlaneseq
      %v6591 = vshrl.u32 %v6590, 7
      %v6592 = vsub.s32 1, %v6591
      %v6593 = vrot.slane %v6504, %v6592
      %v6594 = vmul.f32 %v6589, %v6593
      %v6595 = vlaneseq
      %v6596 = vshrl.u32 %v6595, 7
      %v6597 = vsub.s32 2, %v6596
      %v6598 = vrot.slane %v6504, %v6597
      %v6599 = vadd.f32 %v6594, %v6598
      %v6600 = vld [vmem:[%s12] sm:$0xff]
      %v6601 = vld [vmem:[%s12 + $0x8] sm:$0xff]
      %vm6602 = vcmask 31744
      %v6604 = vsel %vm6602, %v6600, 0
      %v6607 = vsel %vm6602, %v6601, 0
      %vm6609 = vcmask 1043456
      %v6611 = vsel %vm6609, %v6599, 0
      %6613 = vmatprep.subr.mxu0 0.0
      %6614 = vmatpush1.msra.mxu0 %v6611
      %6615 = vmatprep.subr.mxu0 0.0
      %6616 = vmatpush1.msra.mxu0 0.0
      %6617 = vmatprep.subr.mxu0 0.0
      %6618 = vmatpush1.msra.mxu0 0.0
      %6619 = vmatprep.subr.mxu0 0.0
      %6620 = vmatpush1.msra.mxu0 0.0
      %6621 = vmatprep.subr.mxu0 0.0
      %6622 = vmatpush1.msra.mxu0 0.0
      %6623 = vmatprep.subr.mxu0 0.0
      %6624 = vmatpush1.msra.mxu0 0.0
      %6625 = vmatprep.subr.mxu0 0.0
      %6626 = vmatpush1.msra.mxu0 0.0
      %6627 = vmatprep.subr.mxu0 0.0
      %6628 = vmatpush1.msra.mxu0 0.0
      %6629 = vmatprep.subr.mxu0 0.0
      %6630 = vmatpush1.msra.mxu0 0.0
      %6631 = vmatprep.subr.mxu0 0.0
      %6632 = vmatpush1.msra.mxu0 0.0
      %6633 = vmatprep.subr.mxu0 0.0
      %6634 = vmatpush1.msra.mxu0 0.0
      %6635 = vmatprep.subr.mxu0 0.0
      %6636 = vmatpush1.msra.mxu0 0.0
      %6637 = vmatprep.subr.mxu0 0.0
      %6638 = vmatpush1.msra.mxu0 0.0
      %6639 = vmatprep.subr.mxu0 0.0
      %6640 = vmatpush1.msra.mxu0 0.0
      %6641 = vmatprep.subr.mxu0 0.0
      %6642 = vmatpush1.msra.mxu0 0.0
      %6643 = vmatprep.subr.mxu0 0.0
      %6644 = vmatpush1.msra.mxu0 0.0
      %6645 = vmatprep.subr.mxu0 0.0
      %6646 = vmatpush1.msra.mxu0 0.0
      %6647 = vmatprep.subr.mxu0 0.0
      %6648 = vmatpush1.msra.mxu0 0.0
      %6649 = vmatprep.subr.mxu0 0.0
      %6650 = vmatpush1.msra.mxu0 0.0
      %6651 = vmatprep.subr.mxu0 0.0
      %6652 = vmatpush1.msra.mxu0 0.0
      %6653 = vmatprep.subr.mxu0 0.0
      %6654 = vmatpush1.msra.mxu0 0.0
      %6655 = vmatprep.subr.mxu0 0.0
      %6656 = vmatpush1.msra.mxu0 0.0
      %6657 = vmatprep.subr.mxu0 0.0
      %6658 = vmatpush1.msra.mxu0 0.0
      %6659 = vmatprep.subr.mxu0 0.0
      %6660 = vmatpush1.msra.mxu0 0.0
      %6661 = vmatprep.subr.mxu0 0.0
      %6662 = vmatpush1.msra.mxu0 0.0
      %6663 = vmatprep.subr.mxu0 0.0
      %6664 = vmatpush1.msra.mxu0 0.0
      %6665 = vmatprep.subr.mxu0 0.0
      %6666 = vmatpush1.msra.mxu0 0.0
      %6667 = vmatprep.subr.mxu0 0.0
      %6668 = vmatpush1.msra.mxu0 0.0
      %6669 = vmatprep.subr.mxu0 0.0
      %6670 = vmatpush1.msra.mxu0 0.0
      %6671 = vmatprep.subr.mxu0 0.0
      %6672 = vmatpush1.msra.mxu0 0.0
      %6673 = vmatprep.subr.mxu0 0.0
      %6674 = vmatpush1.msra.mxu0 0.0
      %6675 = vmatprep.subr.mxu0 0.0
      %6676 = vmatpush1.msra.mxu0 0.0
      %6677 = vmatprep.mubr.f32.mxu0 0.0
      %6678 = vmatmul.mubr.f32.gmra.mrb[0].mxu0 %v6604
      %v6679 = vpop.f32.mrb[0].mxu0
      %v6680 = vadd.f32 0.0, %v6679
      %v6681 = vpop.f32.mrb[0].mxu0
      %6682 = vmatprep.mubr.f32.mxu0 0.0
      %6683 = vmatmul.mubr.f32.gmra.mrb[0].mxu0 %v6607
      %v6684 = vpop.f32.mrb[0].mxu0
      %v6685 = vadd.f32 0.0, %v6684
      %v6686 = vpop.f32.mrb[0].mxu0
      %6687 = vdwg.mxu0
      %6688 = vst [vmem:[#allocation4] sm:$0xff] %v6680
      %6689 = vst [vmem:[#allocation4 + $0x8] sm:$0xff] %v6685
      %v6690 = vld [vmem:[#allocation4] sm:$0x1]
      %v6691 = vpack.c.bf16 %v6690, %v6690
      %v6692 = vld [vmem:[%s13] sm:$0xf]
      %v6693 = vld [vmem:[%s13 + $0x4] sm:$0xf]
      %v6694 = vld [vmem:[%s13 + $0x8] sm:$0xf]
      %v6695 = vld [vmem:[%s13 + $0xc] sm:$0xf]
      %v6696 = vld [vmem:[%s13 + $0x10] sm:$0xf]
      %v6697 = vld [vmem:[%s13 + $0x14] sm:$0xf]
      %v6698 = vld [vmem:[%s13 + $0x18] sm:$0xf]
      %v6699 = vld [vmem:[%s13 + $0x1c] sm:$0xf]
      %v6700 = vld [vmem:[%s13 + $0x20] sm:$0xf]
      %v6701 = vld [vmem:[%s13 + $0x24] sm:$0xf]
      %v6702 = vld [vmem:[%s13 + $0x28] sm:$0xf]
      %v6703 = vld [vmem:[%s13 + $0x2c] sm:$0xf]
      %v6704 = vld [vmem:[%s13 + $0x30] sm:$0xf]
      %v6705 = vld [vmem:[%s13 + $0x34] sm:$0xf]
      %v6706 = vld [vmem:[%s13 + $0x38] sm:$0xf]
      %v6707 = vld [vmem:[%s13 + $0x3c] sm:$0xf]
      %v6708 = vld [vmem:[#allocation4 + $0x1] sm:$0x1]
      %v6709 = vpack.c.bf16 %v6708, %v6708
      %s6710 = scalar_lea.vmem %s13, 64
      %v6711 = vld [vmem:[%s6710] sm:$0xf]
      %v6712 = vld [vmem:[%s6710 + $0x4] sm:$0xf]
      %v6713 = vld [vmem:[%s6710 + $0x8] sm:$0xf]
      %v6714 = vld [vmem:[%s6710 + $0xc] sm:$0xf]
      %v6715 = vld [vmem:[%s6710 + $0x10] sm:$0xf]
      %v6716 = vld [vmem:[%s6710 + $0x14] sm:$0xf]
      %v6717 = vld [vmem:[%s6710 + $0x18] sm:$0xf]
      %v6718 = vld [vmem:[%s6710 + $0x1c] sm:$0xf]
      %v6719 = vld [vmem:[%s6710 + $0x20] sm:$0xf]
      %v6720 = vld [vmem:[%s6710 + $0x24] sm:$0xf]
      %v6721 = vld [vmem:[%s6710 + $0x28] sm:$0xf]
      %v6722 = vld [vmem:[%s6710 + $0x2c] sm:$0xf]
      %v6723 = vld [vmem:[%s6710 + $0x30] sm:$0xf]
      %v6724 = vld [vmem:[%s6710 + $0x34] sm:$0xf]
      %v6725 = vld [vmem:[%s6710 + $0x38] sm:$0xf]
      %v6726 = vld [vmem:[%s6710 + $0x3c] sm:$0xf]
      %v6743 = vunpack.c.l.b16 %v6711
      %v6744 = vunpack.c.l.b16 %v6712
      %v6745 = vunpack.c.l.b16 %v6713
      %v6746 = vunpack.c.l.b16 %v6714
      %v6747 = vunpack.c.l.b16 %v6715
      %v6748 = vunpack.c.l.b16 %v6716
      %v6749 = vunpack.c.l.b16 %v6717
      %v6750 = vunpack.c.l.b16 %v6718
      %v6751 = vunpack.c.l.b16 %v6719
      %v6752 = vunpack.c.l.b16 %v6720
      %v6753 = vunpack.c.l.b16 %v6721
      %v6754 = vunpack.c.l.b16 %v6722
      %v6755 = vunpack.c.l.b16 %v6723
      %v6756 = vunpack.c.l.b16 %v6724
      %v6757 = vunpack.c.l.b16 %v6725
      %v6758 = vunpack.c.l.b16 %v6726
      %v6759 = vpack.c.b16 %v6744, %v6743
      %v6760 = vpack.c.b16 %v6746, %v6745
      %v6761 = vpack.c.b16 %v6748, %v6747
      %v6762 = vpack.c.b16 %v6750, %v6749
      %v6763 = vpack.c.b16 %v6752, %v6751
      %v6764 = vpack.c.b16 %v6754, %v6753
      %v6765 = vpack.c.b16 %v6756, %v6755
      %v6766 = vpack.c.b16 %v6758, %v6757
      %6775 = vmatprep.subr.bf16.mxu0 0
      %6776 = vmatpush1.bf16.msra.mxu0 %v6759
      %6777 = vmatprep.subr.bf16.mxu0 0
      %6778 = vmatpush1.bf16.msra.mxu0 %v6760
      %6779 = vmatprep.subr.bf16.mxu0 0
      %6780 = vmatpush1.bf16.msra.mxu0 %v6761
      %6781 = vmatprep.subr.bf16.mxu0 0
      %6782 = vmatpush1.bf16.msra.mxu0 %v6762
      %6783 = vmatprep.subr.bf16.mxu0 0
      %6784 = vmatpush1.bf16.msra.mxu0 %v6763
      %6785 = vmatprep.subr.bf16.mxu0 0
      %6786 = vmatpush1.bf16.msra.mxu0 %v6764
      %6787 = vmatprep.subr.bf16.mxu0 0
      %6788 = vmatpush1.bf16.msra.mxu0 %v6765
      %6789 = vmatprep.subr.bf16.mxu0 0
      %6790 = vmatpush1.bf16.msra.mxu0 %v6766
      %6791 = vmatprep.subr.bf16.mxu0 0
      %6792 = vmatpush1.bf16.msra.mxu0 0
      %6793 = vmatprep.subr.bf16.mxu0 0
      %6794 = vmatpush1.bf16.msra.mxu0 0
      %6795 = vmatprep.subr.bf16.mxu0 0
      %6796 = vmatpush1.bf16.msra.mxu0 0
      %6797 = vmatprep.subr.bf16.mxu0 0
      %6798 = vmatpush1.bf16.msra.mxu0 0
      %6799 = vmatprep.subr.bf16.mxu0 0
      %6800 = vmatpush1.bf16.msra.mxu0 0
      %6801 = vmatprep.subr.bf16.mxu0 0
      %6802 = vmatpush1.bf16.msra.mxu0 0
      %6803 = vmatprep.subr.bf16.mxu0 0
      %6804 = vmatpush1.bf16.msra.mxu0 0
      %6805 = vmatprep.subr.bf16.mxu0 0
      %6806 = vmatpush1.bf16.msra.mxu0 0
      %6807 = vmatprep.mubr.bf16.mxu0 0
      %6808 = vmatmul.mubr.bf16.gmra.mrb[0].mxu0 %v6709
      %v6809 = vpop.f32.mrb[0].mxu0
      %v6810 = vadd.f32 0.0, %v6809
      %v6811 = vpop.f32.mrb[0].mxu0
      %v6812 = vpop.f32.mrb[0].mxu0
      %v6813 = vpop.f32.mrb[0].mxu0
      %6814 = vdwg.mxu0
      %v6831 = vunpack.c.l.b16 %v6692
      %v6832 = vunpack.c.l.b16 %v6693
      %v6833 = vunpack.c.l.b16 %v6694
      %v6834 = vunpack.c.l.b16 %v6695
      %v6835 = vunpack.c.l.b16 %v6696
      %v6836 = vunpack.c.l.b16 %v6697
      %v6837 = vunpack.c.l.b16 %v6698
      %v6838 = vunpack.c.l.b16 %v6699
      %v6839 = vunpack.c.l.b16 %v6700
      %v6840 = vunpack.c.l.b16 %v6701
      %v6841 = vunpack.c.l.b16 %v6702
      %v6842 = vunpack.c.l.b16 %v6703
      %v6843 = vunpack.c.l.b16 %v6704
      %v6844 = vunpack.c.l.b16 %v6705
      %v6845 = vunpack.c.l.b16 %v6706
      %v6846 = vunpack.c.l.b16 %v6707
      %v6847 = vpack.c.b16 %v6832, %v6831
      %v6848 = vpack.c.b16 %v6834, %v6833
      %v6849 = vpack.c.b16 %v6836, %v6835
      %v6850 = vpack.c.b16 %v6838, %v6837
      %v6851 = vpack.c.b16 %v6840, %v6839
      %v6852 = vpack.c.b16 %v6842, %v6841
      %v6853 = vpack.c.b16 %v6844, %v6843
      %v6854 = vpack.c.b16 %v6846, %v6845
      %6863 = vmatprep.subr.bf16.mxu0 0
      %6864 = vmatpush1.bf16.msra.mxu0 %v6847
      %6865 = vmatprep.subr.bf16.mxu0 0
      %6866 = vmatpush1.bf16.msra.mxu0 %v6848
      %6867 = vmatprep.subr.bf16.mxu0 0
      %6868 = vmatpush1.bf16.msra.mxu0 %v6849
      %6869 = vmatprep.subr.bf16.mxu0 0
      %6870 = vmatpush1.bf16.msra.mxu0 %v6850
      %6871 = vmatprep.subr.bf16.mxu0 0
      %6872 = vmatpush1.bf16.msra.mxu0 %v6851
      %6873 = vmatprep.subr.bf16.mxu0 0
      %6874 = vmatpush1.bf16.msra.mxu0 %v6852
      %6875 = vmatprep.subr.bf16.mxu0 0
      %6876 = vmatpush1.bf16.msra.mxu0 %v6853
      %6877 = vmatprep.subr.bf16.mxu0 0
      %6878 = vmatpush1.bf16.msra.mxu0 %v6854
      %6879 = vmatprep.subr.bf16.mxu0 0
      %6880 = vmatpush1.bf16.msra.mxu0 0
      %6881 = vmatprep.subr.bf16.mxu0 0
      %6882 = vmatpush1.bf16.msra.mxu0 0
      %6883 = vmatprep.subr.bf16.mxu0 0
      %6884 = vmatpush1.bf16.msra.mxu0 0
      %6885 = vmatprep.subr.bf16.mxu0 0
      %6886 = vmatpush1.bf16.msra.mxu0 0
      %6887 = vmatprep.subr.bf16.mxu0 0
      %6888 = vmatpush1.bf16.msra.mxu0 0
      %6889 = vmatprep.subr.bf16.mxu0 0
      %6890 = vmatpush1.bf16.msra.mxu0 0
      %6891 = vmatprep.subr.bf16.mxu0 0
      %6892 = vmatpush1.bf16.msra.mxu0 0
      %6893 = vmatprep.subr.bf16.mxu0 0
      %6894 = vmatpush1.bf16.msra.mxu0 0
      %6895 = vmatprep.mubr.bf16.mxu0 0
      %6896 = vmatmul.mubr.bf16.gmra.mrb[0].mxu0 %v6691
      %v6897 = vpop.f32.mrb[0].mxu0
      %v6898 = vadd.f32 %v6810, %v6897
      %v6899 = vpop.f32.mrb[0].mxu0
      %v6900 = vpop.f32.mrb[0].mxu0
      %v6901 = vpop.f32.mrb[0].mxu0
      %6902 = vdwg.mxu0
      %v6903 = vld [vmem:[#allocation4 + $0x2] sm:$0x1]
      %v6904 = vpack.c.bf16 %v6903, %v6903
      %s6905 = scalar_lea.vmem %s13, 128
      %v6906 = vld [vmem:[%s6905] sm:$0xf]
      %v6907 = vld [vmem:[%s6905 + $0x4] sm:$0xf]
      %v6908 = vld [vmem:[%s6905 + $0x8] sm:$0xf]
      %v6909 = vld [vmem:[%s6905 + $0xc] sm:$0xf]
      %v6910 = vld [vmem:[%s6905 + $0x10] sm:$0xf]
      %v6911 = vld [vmem:[%s6905 + $0x14] sm:$0xf]
      %v6912 = vld [vmem:[%s6905 + $0x18] sm:$0xf]
      %v6913 = vld [vmem:[%s6905 + $0x1c] sm:$0xf]
      %v6914 = vld [vmem:[%s6905 + $0x20] sm:$0xf]
      %v6915 = vld [vmem:[%s6905 + $0x24] sm:$0xf]
      %v6916 = vld [vmem:[%s6905 + $0x28] sm:$0xf]
      %v6917 = vld [vmem:[%s6905 + $0x2c] sm:$0xf]
      %v6918 = vld [vmem:[%s6905 + $0x30] sm:$0xf]
      %v6919 = vld [vmem:[%s6905 + $0x34] sm:$0xf]
      %v6920 = vld [vmem:[%s6905 + $0x38] sm:$0xf]
      %v6921 = vld [vmem:[%s6905 + $0x3c] sm:$0xf]
      %v6938 = vunpack.c.l.b16 %v6906
      %v6939 = vunpack.c.l.b16 %v6907
      %v6940 = vunpack.c.l.b16 %v6908
      %v6941 = vunpack.c.l.b16 %v6909
      %v6942 = vunpack.c.l.b16 %v6910
      %v6943 = vunpack.c.l.b16 %v6911
      %v6944 = vunpack.c.l.b16 %v6912
      %v6945 = vunpack.c.l.b16 %v6913
      %v6946 = vunpack.c.l.b16 %v6914
      %v6947 = vunpack.c.l.b16 %v6915
      %v6948 = vunpack.c.l.b16 %v6916
      %v6949 = vunpack.c.l.b16 %v6917
      %v6950 = vunpack.c.l.b16 %v6918
      %v6951 = vunpack.c.l.b16 %v6919
      %v6952 = vunpack.c.l.b16 %v6920
      %v6953 = vunpack.c.l.b16 %v6921
      %v6954 = vpack.c.b16 %v6939, %v6938
      %v6955 = vpack.c.b16 %v6941, %v6940
      %v6956 = vpack.c.b16 %v6943, %v6942
      %v6957 = vpack.c.b16 %v6945, %v6944
      %v6958 = vpack.c.b16 %v6947, %v6946
      %v6959 = vpack.c.b16 %v6949, %v6948
      %v6960 = vpack.c.b16 %v6951, %v6950
      %v6961 = vpack.c.b16 %v6953, %v6952
      %6970 = vmatprep.subr.bf16.mxu0 0
      %6971 = vmatpush1.bf16.msra.mxu0 %v6954
      %6972 = vmatprep.subr.bf16.mxu0 0
      %6973 = vmatpush1.bf16.msra.mxu0 %v6955
      %6974 = vmatprep.subr.bf16.mxu0 0
      %6975 = vmatpush1.bf16.msra.mxu0 %v6956
      %6976 = vmatprep.subr.bf16.mxu0 0
      %6977 = vmatpush1.bf16.msra.mxu0 %v6957
      %6978 = vmatprep.subr.bf16.mxu0 0
      %6979 = vmatpush1.bf16.msra.mxu0 %v6958
      %6980 = vmatprep.subr.bf16.mxu0 0
      %6981 = vmatpush1.bf16.msra.mxu0 %v6959
      %6982 = vmatprep.subr.bf16.mxu0 0
      %6983 = vmatpush1.bf16.msra.mxu0 %v6960
      %6984 = vmatprep.subr.bf16.mxu0 0
      %6985 = vmatpush1.bf16.msra.mxu0 %v6961
      %6986 = vmatprep.subr.bf16.mxu0 0
      %6987 = vmatpush1.bf16.msra.mxu0 0
      %6988 = vmatprep.subr.bf16.mxu0 0
      %6989 = vmatpush1.bf16.msra.mxu0 0
      %6990 = vmatprep.subr.bf16.mxu0 0
      %6991 = vmatpush1.bf16.msra.mxu0 0
      %6992 = vmatprep.subr.bf16.mxu0 0
      %6993 = vmatpush1.bf16.msra.mxu0 0
      %6994 = vmatprep.subr.bf16.mxu0 0
      %6995 = vmatpush1.bf16.msra.mxu0 0
      %6996 = vmatprep.subr.bf16.mxu0 0
      %6997 = vmatpush1.bf16.msra.mxu0 0
      %6998 = vmatprep.subr.bf16.mxu0 0
      %6999 = vmatpush1.bf16.msra.mxu0 0
      %7000 = vmatprep.subr.bf16.mxu0 0
      %7001 = vmatpush1.bf16.msra.mxu0 0
      %7002 = vmatprep.mubr.bf16.mxu0 0
      %7003 = vmatmul.mubr.bf16.gmra.mrb[0].mxu0 %v6904
      %v7004 = vpop.f32.mrb[0].mxu0
      %v7005 = vadd.f32 0.0, %v7004
      %v7006 = vpop.f32.mrb[0].mxu0
      %v7007 = vpop.f32.mrb[0].mxu0
      %v7008 = vpop.f32.mrb[0].mxu0
      %7009 = vdwg.mxu0
      %v7010 = vadd.f32 %v6898, %v7005
      %v7011 = vld [vmem:[#allocation4 + $0x4] sm:$0x1]
      %v7012 = vpack.c.bf16 %v7011, %v7011
      %s7013 = scalar_lea.vmem %s13, 192
      %v7014 = vld [vmem:[%s7013] sm:$0xf]
      %v7015 = vld [vmem:[%s7013 + $0x4] sm:$0xf]
      %v7016 = vld [vmem:[%s7013 + $0x8] sm:$0xf]
      %v7017 = vld [vmem:[%s7013 + $0xc] sm:$0xf]
      %v7018 = vld [vmem:[%s7013 + $0x10] sm:$0xf]
      %v7019 = vld [vmem:[%s7013 + $0x14] sm:$0xf]
      %v7020 = vld [vmem:[%s7013 + $0x18] sm:$0xf]
      %v7021 = vld [vmem:[%s7013 + $0x1c] sm:$0xf]
      %v7022 = vld [vmem:[%s7013 + $0x20] sm:$0xf]
      %v7023 = vld [vmem:[%s7013 + $0x24] sm:$0xf]
      %v7024 = vld [vmem:[%s7013 + $0x28] sm:$0xf]
      %v7025 = vld [vmem:[%s7013 + $0x2c] sm:$0xf]
      %v7026 = vld [vmem:[%s7013 + $0x30] sm:$0xf]
      %v7027 = vld [vmem:[%s7013 + $0x34] sm:$0xf]
      %v7028 = vld [vmem:[%s7013 + $0x38] sm:$0xf]
      %v7029 = vld [vmem:[%s7013 + $0x3c] sm:$0xf]
      %v7046 = vunpack.c.l.b16 %v7014
      %v7047 = vunpack.c.l.b16 %v7015
      %v7048 = vunpack.c.l.b16 %v7016
      %v7049 = vunpack.c.l.b16 %v7017
      %v7050 = vunpack.c.l.b16 %v7018
      %v7051 = vunpack.c.l.b16 %v7019
      %v7052 = vunpack.c.l.b16 %v7020
      %v7053 = vunpack.c.l.b16 %v7021
      %v7054 = vunpack.c.l.b16 %v7022
      %v7055 = vunpack.c.l.b16 %v7023
      %v7056 = vunpack.c.l.b16 %v7024
      %v7057 = vunpack.c.l.b16 %v7025
      %v7058 = vunpack.c.l.b16 %v7026
      %v7059 = vunpack.c.l.b16 %v7027
      %v7060 = vunpack.c.l.b16 %v7028
      %v7061 = vunpack.c.l.b16 %v7029
      %v7062 = vpack.c.b16 %v7047, %v7046
      %v7063 = vpack.c.b16 %v7049, %v7048
      %v7064 = vpack.c.b16 %v7051, %v7050
      %v7065 = vpack.c.b16 %v7053, %v7052
      %v7066 = vpack.c.b16 %v7055, %v7054
      %v7067 = vpack.c.b16 %v7057, %v7056
      %v7068 = vpack.c.b16 %v7059, %v7058
      %v7069 = vpack.c.b16 %v7061, %v7060
      %7078 = vmatprep.subr.bf16.mxu0 0
      %7079 = vmatpush1.bf16.msra.mxu0 %v7062
      %7080 = vmatprep.subr.bf16.mxu0 0
      %7081 = vmatpush1.bf16.msra.mxu0 %v7063
      %7082 = vmatprep.subr.bf16.mxu0 0
      %7083 = vmatpush1.bf16.msra.mxu0 %v7064
      %7084 = vmatprep.subr.bf16.mxu0 0
      %7085 = vmatpush1.bf16.msra.mxu0 %v7065
      %7086 = vmatprep.subr.bf16.mxu0 0
      %7087 = vmatpush1.bf16.msra.mxu0 %v7066
      %7088 = vmatprep.subr.bf16.mxu0 0
      %7089 = vmatpush1.bf16.msra.mxu0 %v7067
      %7090 = vmatprep.subr.bf16.mxu0 0
      %7091 = vmatpush1.bf16.msra.mxu0 %v7068
      %7092 = vmatprep.subr.bf16.mxu0 0
      %7093 = vmatpush1.bf16.msra.mxu0 %v7069
      %7094 = vmatprep.subr.bf16.mxu0 0
      %7095 = vmatpush1.bf16.msra.mxu0 0
      %7096 = vmatprep.subr.bf16.mxu0 0
      %7097 = vmatpush1.bf16.msra.mxu0 0
      %7098 = vmatprep.subr.bf16.mxu0 0
      %7099 = vmatpush1.bf16.msra.mxu0 0
      %7100 = vmatprep.subr.bf16.mxu0 0
      %7101 = vmatpush1.bf16.msra.mxu0 0
      %7102 = vmatprep.subr.bf16.mxu0 0
      %7103 = vmatpush1.bf16.msra.mxu0 0
      %7104 = vmatprep.subr.bf16.mxu0 0
      %7105 = vmatpush1.bf16.msra.mxu0 0
      %7106 = vmatprep.subr.bf16.mxu0 0
      %7107 = vmatpush1.bf16.msra.mxu0 0
      %7108 = vmatprep.subr.bf16.mxu0 0
      %7109 = vmatpush1.bf16.msra.mxu0 0
      %7110 = vmatprep.mubr.bf16.mxu0 0
      %7111 = vmatmul.mubr.bf16.gmra.mrb[0].mxu0 %v7012
      %v7112 = vpop.f32.mrb[0].mxu0
      %v7113 = vadd.f32 0.0, %v7112
      %v7114 = vpop.f32.mrb[0].mxu0
      %v7115 = vpop.f32.mrb[0].mxu0
      %v7116 = vpop.f32.mrb[0].mxu0
      %7117 = vdwg.mxu0
      %v7118 = vadd.f32 %v7010, %v7113
      %v7119 = vld [vmem:[#allocation4 + $0x5] sm:$0x1]
      %v7120 = vpack.c.bf16 %v7119, %v7119
      %s7121 = scalar_lea.vmem %s13, 256
      %v7122 = vld [vmem:[%s7121] sm:$0xf]
      %v7123 = vld [vmem:[%s7121 + $0x4] sm:$0xf]
      %v7124 = vld [vmem:[%s7121 + $0x8] sm:$0xf]
      %v7125 = vld [vmem:[%s7121 + $0xc] sm:$0xf]
      %v7126 = vld [vmem:[%s7121 + $0x10] sm:$0xf]
      %v7127 = vld [vmem:[%s7121 + $0x14] sm:$0xf]
      %v7128 = vld [vmem:[%s7121 + $0x18] sm:$0xf]
      %v7129 = vld [vmem:[%s7121 + $0x1c] sm:$0xf]
      %v7130 = vld [vmem:[%s7121 + $0x20] sm:$0xf]
      %v7131 = vld [vmem:[%s7121 + $0x24] sm:$0xf]
      %v7132 = vld [vmem:[%s7121 + $0x28] sm:$0xf]
      %v7133 = vld [vmem:[%s7121 + $0x2c] sm:$0xf]
      %v7134 = vld [vmem:[%s7121 + $0x30] sm:$0xf]
      %v7135 = vld [vmem:[%s7121 + $0x34] sm:$0xf]
      %v7136 = vld [vmem:[%s7121 + $0x38] sm:$0xf]
      %v7137 = vld [vmem:[%s7121 + $0x3c] sm:$0xf]
      %v7154 = vunpack.c.l.b16 %v7122
      %v7155 = vunpack.c.l.b16 %v7123
      %v7156 = vunpack.c.l.b16 %v7124
      %v7157 = vunpack.c.l.b16 %v7125
      %v7158 = vunpack.c.l.b16 %v7126
      %v7159 = vunpack.c.l.b16 %v7127
      %v7160 = vunpack.c.l.b16 %v7128
      %v7161 = vunpack.c.l.b16 %v7129
      %v7162 = vunpack.c.l.b16 %v7130
      %v7163 = vunpack.c.l.b16 %v7131
      %v7164 = vunpack.c.l.b16 %v7132
      %v7165 = vunpack.c.l.b16 %v7133
      %v7166 = vunpack.c.l.b16 %v7134
      %v7167 = vunpack.c.l.b16 %v7135
      %v7168 = vunpack.c.l.b16 %v7136
      %v7169 = vunpack.c.l.b16 %v7137
      %v7170 = vpack.c.b16 %v7155, %v7154
      %v7171 = vpack.c.b16 %v7157, %v7156
      %v7172 = vpack.c.b16 %v7159, %v7158
      %v7173 = vpack.c.b16 %v7161, %v7160
      %v7174 = vpack.c.b16 %v7163, %v7162
      %v7175 = vpack.c.b16 %v7165, %v7164
      %v7176 = vpack.c.b16 %v7167, %v7166
      %v7177 = vpack.c.b16 %v7169, %v7168
      %7186 = vmatprep.subr.bf16.mxu0 0
      %7187 = vmatpush1.bf16.msra.mxu0 %v7170
      %7188 = vmatprep.subr.bf16.mxu0 0
      %7189 = vmatpush1.bf16.msra.mxu0 %v7171
      %7190 = vmatprep.subr.bf16.mxu0 0
      %7191 = vmatpush1.bf16.msra.mxu0 %v7172
      %7192 = vmatprep.subr.bf16.mxu0 0
      %7193 = vmatpush1.bf16.msra.mxu0 %v7173
      %7194 = vmatprep.subr.bf16.mxu0 0
      %7195 = vmatpush1.bf16.msra.mxu0 %v7174
      %7196 = vmatprep.subr.bf16.mxu0 0
      %7197 = vmatpush1.bf16.msra.mxu0 %v7175
      %7198 = vmatprep.subr.bf16.mxu0 0
      %7199 = vmatpush1.bf16.msra.mxu0 %v7176
      %7200 = vmatprep.subr.bf16.mxu0 0
      %7201 = vmatpush1.bf16.msra.mxu0 %v7177
      %7202 = vmatprep.subr.bf16.mxu0 0
      %7203 = vmatpush1.bf16.msra.mxu0 0
      %7204 = vmatprep.subr.bf16.mxu0 0
      %7205 = vmatpush1.bf16.msra.mxu0 0
      %7206 = vmatprep.subr.bf16.mxu0 0
      %7207 = vmatpush1.bf16.msra.mxu0 0
      %7208 = vmatprep.subr.bf16.mxu0 0
      %7209 = vmatpush1.bf16.msra.mxu0 0
      %7210 = vmatprep.subr.bf16.mxu0 0
      %7211 = vmatpush1.bf16.msra.mxu0 0
      %7212 = vmatprep.subr.bf16.mxu0 0
      %7213 = vmatpush1.bf16.msra.mxu0 0
      %7214 = vmatprep.subr.bf16.mxu0 0
      %7215 = vmatpush1.bf16.msra.mxu0 0
      %7216 = vmatprep.subr.bf16.mxu0 0
      %7217 = vmatpush1.bf16.msra.mxu0 0
      %7218 = vmatprep.mubr.bf16.mxu0 0
      %7219 = vmatmul.mubr.bf16.gmra.mrb[0].mxu0 %v7120
      %v7220 = vpop.f32.mrb[0].mxu0
      %v7221 = vadd.f32 0.0, %v7220
      %v7222 = vpop.f32.mrb[0].mxu0
      %v7223 = vpop.f32.mrb[0].mxu0
      %v7224 = vpop.f32.mrb[0].mxu0
      %7225 = vdwg.mxu0
      %v7226 = vadd.f32 %v7118, %v7221
      %v7227 = vld [vmem:[#allocation4 + $0x6] sm:$0x1]
      %v7228 = vpack.c.bf16 %v7227, %v7227
      %s7229 = scalar_lea.vmem %s13, 320
      %v7230 = vld [vmem:[%s7229] sm:$0xf]
      %v7231 = vld [vmem:[%s7229 + $0x4] sm:$0xf]
      %v7232 = vld [vmem:[%s7229 + $0x8] sm:$0xf]
      %v7233 = vld [vmem:[%s7229 + $0xc] sm:$0xf]
      %v7234 = vld [vmem:[%s7229 + $0x10] sm:$0xf]
      %v7235 = vld [vmem:[%s7229 + $0x14] sm:$0xf]
      %v7236 = vld [vmem:[%s7229 + $0x18] sm:$0xf]
      %v7237 = vld [vmem:[%s7229 + $0x1c] sm:$0xf]
      %v7238 = vld [vmem:[%s7229 + $0x20] sm:$0xf]
      %v7239 = vld [vmem:[%s7229 + $0x24] sm:$0xf]
      %v7240 = vld [vmem:[%s7229 + $0x28] sm:$0xf]
      %v7241 = vld [vmem:[%s7229 + $0x2c] sm:$0xf]
      %v7242 = vld [vmem:[%s7229 + $0x30] sm:$0xf]
      %v7243 = vld [vmem:[%s7229 + $0x34] sm:$0xf]
      %v7244 = vld [vmem:[%s7229 + $0x38] sm:$0xf]
      %v7245 = vld [vmem:[%s7229 + $0x3c] sm:$0xf]
      %v7262 = vunpack.c.l.b16 %v7230
      %v7263 = vunpack.c.l.b16 %v7231
      %v7264 = vunpack.c.l.b16 %v7232
      %v7265 = vunpack.c.l.b16 %v7233
      %v7266 = vunpack.c.l.b16 %v7234
      %v7267 = vunpack.c.l.b16 %v7235
      %v7268 = vunpack.c.l.b16 %v7236
      %v7269 = vunpack.c.l.b16 %v7237
      %v7270 = vunpack.c.l.b16 %v7238
      %v7271 = vunpack.c.l.b16 %v7239
      %v7272 = vunpack.c.l.b16 %v7240
      %v7273 = vunpack.c.l.b16 %v7241
      %v7274 = vunpack.c.l.b16 %v7242
      %v7275 = vunpack.c.l.b16 %v7243
      %v7276 = vunpack.c.l.b16 %v7244
      %v7277 = vunpack.c.l.b16 %v7245
      %v7278 = vpack.c.b16 %v7263, %v7262
      %v7279 = vpack.c.b16 %v7265, %v7264
      %v7280 = vpack.c.b16 %v7267, %v7266
      %v7281 = vpack.c.b16 %v7269, %v7268
      %v7282 = vpack.c.b16 %v7271, %v7270
      %v7283 = vpack.c.b16 %v7273, %v7272
      %v7284 = vpack.c.b16 %v7275, %v7274
      %v7285 = vpack.c.b16 %v7277, %v7276
      %7294 = vmatprep.subr.bf16.mxu0 0
      %7295 = vmatpush1.bf16.msra.mxu0 %v7278
      %7296 = vmatprep.subr.bf16.mxu0 0
      %7297 = vmatpush1.bf16.msra.mxu0 %v7279
      %7298 = vmatprep.subr.bf16.mxu0 0
      %7299 = vmatpush1.bf16.msra.mxu0 %v7280
      %7300 = vmatprep.subr.bf16.mxu0 0
      %7301 = vmatpush1.bf16.msra.mxu0 %v7281
      %7302 = vmatprep.subr.bf16.mxu0 0
      %7303 = vmatpush1.bf16.msra.mxu0 %v7282
      %7304 = vmatprep.subr.bf16.mxu0 0
      %7305 = vmatpush1.bf16.msra.mxu0 %v7283
      %7306 = vmatprep.subr.bf16.mxu0 0
      %7307 = vmatpush1.bf16.msra.mxu0 %v7284
      %7308 = vmatprep.subr.bf16.mxu0 0
      %7309 = vmatpush1.bf16.msra.mxu0 %v7285
      %7310 = vmatprep.subr.bf16.mxu0 0
      %7311 = vmatpush1.bf16.msra.mxu0 0
      %7312 = vmatprep.subr.bf16.mxu0 0
      %7313 = vmatpush1.bf16.msra.mxu0 0
      %7314 = vmatprep.subr.bf16.mxu0 0
      %7315 = vmatpush1.bf16.msra.mxu0 0
      %7316 = vmatprep.subr.bf16.mxu0 0
      %7317 = vmatpush1.bf16.msra.mxu0 0
      %7318 = vmatprep.subr.bf16.mxu0 0
      %7319 = vmatpush1.bf16.msra.mxu0 0
      %7320 = vmatprep.subr.bf16.mxu0 0
      %7321 = vmatpush1.bf16.msra.mxu0 0
      %7322 = vmatprep.subr.bf16.mxu0 0
      %7323 = vmatpush1.bf16.msra.mxu0 0
      %7324 = vmatprep.subr.bf16.mxu0 0
      %7325 = vmatpush1.bf16.msra.mxu0 0
      %7326 = vmatprep.mubr.bf16.mxu0 0
      %7327 = vmatmul.mubr.bf16.gmra.mrb[0].mxu0 %v7228
      %v7328 = vpop.f32.mrb[0].mxu0
      %v7329 = vadd.f32 0.0, %v7328
      %v7330 = vpop.f32.mrb[0].mxu0
      %v7331 = vpop.f32.mrb[0].mxu0
      %v7332 = vpop.f32.mrb[0].mxu0
      %7333 = vdwg.mxu0
      %v7334 = vadd.f32 %v7226, %v7329
      %v7335 = vld [vmem:[#allocation4 + $0x8] sm:$0x1]
      %v7336 = vpack.c.bf16 %v7335, %v7335
      %s7337 = scalar_lea.vmem %s13, 384
      %v7338 = vld [vmem:[%s7337] sm:$0xf]
      %v7339 = vld [vmem:[%s7337 + $0x4] sm:$0xf]
      %v7340 = vld [vmem:[%s7337 + $0x8] sm:$0xf]
      %v7341 = vld [vmem:[%s7337 + $0xc] sm:$0xf]
      %v7342 = vld [vmem:[%s7337 + $0x10] sm:$0xf]
      %v7343 = vld [vmem:[%s7337 + $0x14] sm:$0xf]
      %v7344 = vld [vmem:[%s7337 + $0x18] sm:$0xf]
      %v7345 = vld [vmem:[%s7337 + $0x1c] sm:$0xf]
      %v7346 = vld [vmem:[%s7337 + $0x20] sm:$0xf]
      %v7347 = vld [vmem:[%s7337 + $0x24] sm:$0xf]
      %v7348 = vld [vmem:[%s7337 + $0x28] sm:$0xf]
      %v7349 = vld [vmem:[%s7337 + $0x2c] sm:$0xf]
      %v7350 = vld [vmem:[%s7337 + $0x30] sm:$0xf]
      %v7351 = vld [vmem:[%s7337 + $0x34] sm:$0xf]
      %v7352 = vld [vmem:[%s7337 + $0x38] sm:$0xf]
      %v7353 = vld [vmem:[%s7337 + $0x3c] sm:$0xf]
      %v7370 = vunpack.c.l.b16 %v7338
      %v7371 = vunpack.c.l.b16 %v7339
      %v7372 = vunpack.c.l.b16 %v7340
      %v7373 = vunpack.c.l.b16 %v7341
      %v7374 = vunpack.c.l.b16 %v7342
      %v7375 = vunpack.c.l.b16 %v7343
      %v7376 = vunpack.c.l.b16 %v7344
      %v7377 = vunpack.c.l.b16 %v7345
      %v7378 = vunpack.c.l.b16 %v7346
      %v7379 = vunpack.c.l.b16 %v7347
      %v7380 = vunpack.c.l.b16 %v7348
      %v7381 = vunpack.c.l.b16 %v7349
      %v7382 = vunpack.c.l.b16 %v7350
      %v7383 = vunpack.c.l.b16 %v7351
      %v7384 = vunpack.c.l.b16 %v7352
      %v7385 = vunpack.c.l.b16 %v7353
      %v7386 = vpack.c.b16 %v7371, %v7370
      %v7387 = vpack.c.b16 %v7373, %v7372
      %v7388 = vpack.c.b16 %v7375, %v7374
      %v7389 = vpack.c.b16 %v7377, %v7376
      %v7390 = vpack.c.b16 %v7379, %v7378
      %v7391 = vpack.c.b16 %v7381, %v7380
      %v7392 = vpack.c.b16 %v7383, %v7382
      %v7393 = vpack.c.b16 %v7385, %v7384
      %7402 = vmatprep.subr.bf16.mxu0 0
      %7403 = vmatpush1.bf16.msra.mxu0 %v7386
      %7404 = vmatprep.subr.bf16.mxu0 0
      %7405 = vmatpush1.bf16.msra.mxu0 %v7387
      %7406 = vmatprep.subr.bf16.mxu0 0
      %7407 = vmatpush1.bf16.msra.mxu0 %v7388
      %7408 = vmatprep.subr.bf16.mxu0 0
      %7409 = vmatpush1.bf16.msra.mxu0 %v7389
      %7410 = vmatprep.subr.bf16.mxu0 0
      %7411 = vmatpush1.bf16.msra.mxu0 %v7390
      %7412 = vmatprep.subr.bf16.mxu0 0
      %7413 = vmatpush1.bf16.msra.mxu0 %v7391
      %7414 = vmatprep.subr.bf16.mxu0 0
      %7415 = vmatpush1.bf16.msra.mxu0 %v7392
      %7416 = vmatprep.subr.bf16.mxu0 0
      %7417 = vmatpush1.bf16.msra.mxu0 %v7393
      %7418 = vmatprep.subr.bf16.mxu0 0
      %7419 = vmatpush1.bf16.msra.mxu0 0
      %7420 = vmatprep.subr.bf16.mxu0 0
      %7421 = vmatpush1.bf16.msra.mxu0 0
      %7422 = vmatprep.subr.bf16.mxu0 0
      %7423 = vmatpush1.bf16.msra.mxu0 0
      %7424 = vmatprep.subr.bf16.mxu0 0
      %7425 = vmatpush1.bf16.msra.mxu0 0
      %7426 = vmatprep.subr.bf16.mxu0 0
      %7427 = vmatpush1.bf16.msra.mxu0 0
      %7428 = vmatprep.subr.bf16.mxu0 0
      %7429 = vmatpush1.bf16.msra.mxu0 0
      %7430 = vmatprep.subr.bf16.mxu0 0
      %7431 = vmatpush1.bf16.msra.mxu0 0
      %7432 = vmatprep.subr.bf16.mxu0 0
      %7433 = vmatpush1.bf16.msra.mxu0 0
      %7434 = vmatprep.mubr.bf16.mxu0 0
      %7435 = vmatmul.mubr.bf16.gmra.mrb[0].mxu0 %v7336
      %v7436 = vpop.f32.mrb[0].mxu0
      %v7437 = vadd.f32 0.0, %v7436
      %v7438 = vpop.f32.mrb[0].mxu0
      %v7439 = vpop.f32.mrb[0].mxu0
      %v7440 = vpop.f32.mrb[0].mxu0
      %7441 = vdwg.mxu0
      %v7442 = vadd.f32 %v7334, %v7437
      %v7443 = vld [vmem:[#allocation4 + $0x9] sm:$0x1]
      %v7444 = vpack.c.bf16 %v7443, %v7443
      %s7445 = scalar_lea.vmem %s13, 448
      %v7446 = vld [vmem:[%s7445] sm:$0xf]
      %v7447 = vld [vmem:[%s7445 + $0x4] sm:$0xf]
      %v7448 = vld [vmem:[%s7445 + $0x8] sm:$0xf]
      %v7449 = vld [vmem:[%s7445 + $0xc] sm:$0xf]
      %v7450 = vld [vmem:[%s7445 + $0x10] sm:$0xf]
      %v7451 = vld [vmem:[%s7445 + $0x14] sm:$0xf]
      %v7452 = vld [vmem:[%s7445 + $0x18] sm:$0xf]
      %v7453 = vld [vmem:[%s7445 + $0x1c] sm:$0xf]
      %v7454 = vld [vmem:[%s7445 + $0x20] sm:$0xf]
      %v7455 = vld [vmem:[%s7445 + $0x24] sm:$0xf]
      %v7456 = vld [vmem:[%s7445 + $0x28] sm:$0xf]
      %v7457 = vld [vmem:[%s7445 + $0x2c] sm:$0xf]
      %v7458 = vld [vmem:[%s7445 + $0x30] sm:$0xf]
      %v7459 = vld [vmem:[%s7445 + $0x34] sm:$0xf]
      %v7460 = vld [vmem:[%s7445 + $0x38] sm:$0xf]
      %v7461 = vld [vmem:[%s7445 + $0x3c] sm:$0xf]
      %v7478 = vunpack.c.l.b16 %v7446
      %v7479 = vunpack.c.l.b16 %v7447
      %v7480 = vunpack.c.l.b16 %v7448
      %v7481 = vunpack.c.l.b16 %v7449
      %v7482 = vunpack.c.l.b16 %v7450
      %v7483 = vunpack.c.l.b16 %v7451
      %v7484 = vunpack.c.l.b16 %v7452
      %v7485 = vunpack.c.l.b16 %v7453
      %v7486 = vunpack.c.l.b16 %v7454
      %v7487 = vunpack.c.l.b16 %v7455
      %v7488 = vunpack.c.l.b16 %v7456
      %v7489 = vunpack.c.l.b16 %v7457
      %v7490 = vunpack.c.l.b16 %v7458
      %v7491 = vunpack.c.l.b16 %v7459
      %v7492 = vunpack.c.l.b16 %v7460
      %v7493 = vunpack.c.l.b16 %v7461
      %v7494 = vpack.c.b16 %v7479, %v7478
      %v7495 = vpack.c.b16 %v7481, %v7480
      %v7496 = vpack.c.b16 %v7483, %v7482
      %v7497 = vpack.c.b16 %v7485, %v7484
      %v7498 = vpack.c.b16 %v7487, %v7486
      %v7499 = vpack.c.b16 %v7489, %v7488
      %v7500 = vpack.c.b16 %v7491, %v7490
      %v7501 = vpack.c.b16 %v7493, %v7492
      %7510 = vmatprep.subr.bf16.mxu0 0
      %7511 = vmatpush1.bf16.msra.mxu0 %v7494
      %7512 = vmatprep.subr.bf16.mxu0 0
      %7513 = vmatpush1.bf16.msra.mxu0 %v7495
      %7514 = vmatprep.subr.bf16.mxu0 0
      %7515 = vmatpush1.bf16.msra.mxu0 %v7496
      %7516 = vmatprep.subr.bf16.mxu0 0
      %7517 = vmatpush1.bf16.msra.mxu0 %v7497
      %7518 = vmatprep.subr.bf16.mxu0 0
      %7519 = vmatpush1.bf16.msra.mxu0 %v7498
      %7520 = vmatprep.subr.bf16.mxu0 0
      %7521 = vmatpush1.bf16.msra.mxu0 %v7499
      %7522 = vmatprep.subr.bf16.mxu0 0
      %7523 = vmatpush1.bf16.msra.mxu0 %v7500
      %7524 = vmatprep.subr.bf16.mxu0 0
      %7525 = vmatpush1.bf16.msra.mxu0 %v7501
      %7526 = vmatprep.subr.bf16.mxu0 0
      %7527 = vmatpush1.bf16.msra.mxu0 0
      %7528 = vmatprep.subr.bf16.mxu0 0
      %7529 = vmatpush1.bf16.msra.mxu0 0
      %7530 = vmatprep.subr.bf16.mxu0 0
      %7531 = vmatpush1.bf16.msra.mxu0 0
      %7532 = vmatprep.subr.bf16.mxu0 0
      %7533 = vmatpush1.bf16.msra.mxu0 0
      %7534 = vmatprep.subr.bf16.mxu0 0
      %7535 = vmatpush1.bf16.msra.mxu0 0
      %7536 = vmatprep.subr.bf16.mxu0 0
      %7537 = vmatpush1.bf16.msra.mxu0 0
      %7538 = vmatprep.subr.bf16.mxu0 0
      %7539 = vmatpush1.bf16.msra.mxu0 0
      %7540 = vmatprep.subr.bf16.mxu0 0
      %7541 = vmatpush1.bf16.msra.mxu0 0
      %7542 = vmatprep.mubr.bf16.mxu0 0
      %7543 = vmatmul.mubr.bf16.gmra.mrb[0].mxu0 %v7444
      %v7544 = vpop.f32.mrb[0].mxu0
      %v7545 = vadd.f32 0.0, %v7544
      %v7546 = vpop.f32.mrb[0].mxu0
      %v7547 = vpop.f32.mrb[0].mxu0
      %v7548 = vpop.f32.mrb[0].mxu0
      %7549 = vdwg.mxu0
      %v7550 = vadd.f32 %v7442, %v7545
      %v7551 = vld [vmem:[#allocation4 + $0xa] sm:$0x1]
      %v7552 = vpack.c.bf16 %v7551, %v7551
      %s7553 = scalar_lea.vmem %s13, 512
      %v7554 = vld [vmem:[%s7553] sm:$0xf]
      %v7555 = vld [vmem:[%s7553 + $0x4] sm:$0xf]
      %v7556 = vld [vmem:[%s7553 + $0x8] sm:$0xf]
      %v7557 = vld [vmem:[%s7553 + $0xc] sm:$0xf]
      %v7558 = vld [vmem:[%s7553 + $0x10] sm:$0xf]
      %v7559 = vld [vmem:[%s7553 + $0x14] sm:$0xf]
      %v7560 = vld [vmem:[%s7553 + $0x18] sm:$0xf]
      %v7561 = vld [vmem:[%s7553 + $0x1c] sm:$0xf]
      %v7562 = vld [vmem:[%s7553 + $0x20] sm:$0xf]
      %v7563 = vld [vmem:[%s7553 + $0x24] sm:$0xf]
      %v7564 = vld [vmem:[%s7553 + $0x28] sm:$0xf]
      %v7565 = vld [vmem:[%s7553 + $0x2c] sm:$0xf]
      %v7566 = vld [vmem:[%s7553 + $0x30] sm:$0xf]
      %v7567 = vld [vmem:[%s7553 + $0x34] sm:$0xf]
      %v7568 = vld [vmem:[%s7553 + $0x38] sm:$0xf]
      %v7569 = vld [vmem:[%s7553 + $0x3c] sm:$0xf]
      %v7586 = vunpack.c.l.b16 %v7554
      %v7587 = vunpack.c.l.b16 %v7555
      %v7588 = vunpack.c.l.b16 %v7556
      %v7589 = vunpack.c.l.b16 %v7557
      %v7590 = vunpack.c.l.b16 %v7558
      %v7591 = vunpack.c.l.b16 %v7559
      %v7592 = vunpack.c.l.b16 %v7560
      %v7593 = vunpack.c.l.b16 %v7561
      %v7594 = vunpack.c.l.b16 %v7562
      %v7595 = vunpack.c.l.b16 %v7563
      %v7596 = vunpack.c.l.b16 %v7564
      %v7597 = vunpack.c.l.b16 %v7565
      %v7598 = vunpack.c.l.b16 %v7566
      %v7599 = vunpack.c.l.b16 %v7567
      %v7600 = vunpack.c.l.b16 %v7568
      %v7601 = vunpack.c.l.b16 %v7569
      %v7602 = vpack.c.b16 %v7587, %v7586
      %v7603 = vpack.c.b16 %v7589, %v7588
      %v7604 = vpack.c.b16 %v7591, %v7590
      %v7605 = vpack.c.b16 %v7593, %v7592
      %v7606 = vpack.c.b16 %v7595, %v7594
      %v7607 = vpack.c.b16 %v7597, %v7596
      %v7608 = vpack.c.b16 %v7599, %v7598
      %v7609 = vpack.c.b16 %v7601, %v7600
      %7618 = vmatprep.subr.bf16.mxu0 0
      %7619 = vmatpush1.bf16.msra.mxu0 %v7602
      %7620 = vmatprep.subr.bf16.mxu0 0
      %7621 = vmatpush1.bf16.msra.mxu0 %v7603
      %7622 = vmatprep.subr.bf16.mxu0 0
      %7623 = vmatpush1.bf16.msra.mxu0 %v7604
      %7624 = vmatprep.subr.bf16.mxu0 0
      %7625 = vmatpush1.bf16.msra.mxu0 %v7605
      %7626 = vmatprep.subr.bf16.mxu0 0
      %7627 = vmatpush1.bf16.msra.mxu0 %v7606
      %7628 = vmatprep.subr.bf16.mxu0 0
      %7629 = vmatpush1.bf16.msra.mxu0 %v7607
      %7630 = vmatprep.subr.bf16.mxu0 0
      %7631 = vmatpush1.bf16.msra.mxu0 %v7608
      %7632 = vmatprep.subr.bf16.mxu0 0
      %7633 = vmatpush1.bf16.msra.mxu0 %v7609
      %7634 = vmatprep.subr.bf16.mxu0 0
      %7635 = vmatpush1.bf16.msra.mxu0 0
      %7636 = vmatprep.subr.bf16.mxu0 0
      %7637 = vmatpush1.bf16.msra.mxu0 0
      %7638 = vmatprep.subr.bf16.mxu0 0
      %7639 = vmatpush1.bf16.msra.mxu0 0
      %7640 = vmatprep.subr.bf16.mxu0 0
      %7641 = vmatpush1.bf16.msra.mxu0 0
      %7642 = vmatprep.subr.bf16.mxu0 0
      %7643 = vmatpush1.bf16.msra.mxu0 0
      %7644 = vmatprep.subr.bf16.mxu0 0
      %7645 = vmatpush1.bf16.msra.mxu0 0
      %7646 = vmatprep.subr.bf16.mxu0 0
      %7647 = vmatpush1.bf16.msra.mxu0 0
      %7648 = vmatprep.subr.bf16.mxu0 0
      %7649 = vmatpush1.bf16.msra.mxu0 0
      %7650 = vmatprep.mubr.bf16.mxu0 0
      %7651 = vmatmul.mubr.bf16.gmra.mrb[0].mxu0 %v7552
      %v7652 = vpop.f32.mrb[0].mxu0
      %v7653 = vadd.f32 0.0, %v7652
      %v7654 = vpop.f32.mrb[0].mxu0
      %v7655 = vpop.f32.mrb[0].mxu0
      %v7656 = vpop.f32.mrb[0].mxu0
      %7657 = vdwg.mxu0
      %v7658 = vadd.f32 %v7550, %v7653
      %v7659 = vld [vmem:[%s14] sm:$0x7]
      %v7660 = vadd.f32 %v7658, %v7659
      %vm7661 = vcmp.ge.f32.partialorder %v7660, 0.0
      %v7662 = vmul.f32 %v7660, 0.2
      %v7663 = vsel %vm7661, %v7660, %v7662
      %v7665 = vrot.slane %v7659, 1
      %v7667 = vmul.f32 %v7663, %v7665
      %v7668 = vrot.slane %v7659, 2
      %v7670 = vadd.f32 %v7667, %v7668
      %v7671 = vld [vmem:[%s15] sm:$0x1]
      %v7672 = vmul.f32 %v7670, %v7671
      %vm7673 = vcmask 1040384
      %v7674 = vsel %vm7673, %v7672, 0.0
      %7675 = vadd.xlane.f32.xlu0 %v7674
      %v7676 = vpop.xlane.xlu0 %7675
      %v7677 = vadd.f32 %v7676, 0.0
      %v7678 = vld [vmem:[#allocation5] sm:$0x1]
      %v7679 = vadd.f32 %v7677, %v7678
      %v7680 = vxor.u32 %v7679, 2147483648
      %v7681 = vmul.f32 %v7680, 1.442695
      %v7682 = vpow.pop %v7681
      %v7683 = vadd.f32 %v7682, 1.0
      %v7684 = vrcp.pop %v7683
      %v7685 = vmul.f32 1.0, %v7684
      %vm7686 = vcmask 0
      %7687 = vst.msk [vmem:[%s546] sm:$0x1] %vm7686, %v7685
      %p7688 = scmp.lt.s32.totalorder %s30, 1
      %s7689 = scalar_select %p7688, %s30, 1
      %s7690 = scalar_lea.vmem %s17, %s7689
      // Predicated region
      $region89: #{discriminator_forward.1} parent=87 // pred_check
        %p7691 = pneg %p410
      $region90: #{discriminator_forward.1} parent=87 // pred_check_branch
        %7693 = sbr.rel (%p7691) target = $region92
      $region91: #{discriminator_forward.1} parent=87 // pred_region
        _
      $region92: #{discriminator_forward.1} parent=87 // pred_fallthru
        _
    $region88: #{discriminator_forward.1} parent=5 // pred_fallthru
      _
    %p7694 = scmp.le.s32.totalorder 2, %s25
    // Predicated region
    $region93: #{discriminator_forward.1} parent=5 // pred_check
      %p7695 = pneg %p7694
    $region94: #{discriminator_forward.1} parent=5 // pred_check_branch
      %7697 = sbr.rel (%p7695) target = $region96
    $region95: #{discriminator_forward.1} parent=5 // pred_region
      %s7698 = ssub.s32 %s25, 2
      // Predicated region
      $region97: #{discriminator_forward.1} parent=95 // pred_check
        %p7699 = pneg %p416
      $region98: #{discriminator_forward.1} parent=95 // pred_check_branch
        %7701 = sbr.rel (%p7699) target = $region100
      $region99: #{discriminator_forward.1} parent=95 // pred_region
        %p7702 = scmp.lt.s32.totalorder %s31, 1
        %s7703 = scalar_select %p7702, %s31, 1
        %s7704 = scalar_lea.vmem %s17, %s7703
      $region100: #{discriminator_forward.1} parent=95 // pred_fallthru
        _
    $region96: #{discriminator_forward.1} parent=5 // pred_fallthru
      _
  $region6: #{discriminator_forward.1} parent=0 // loop_footer
    %s29 = sadd.s32 1, %s25
  $region7: #{discriminator_forward.1} parent=0 // loop_footer_branch
    %24 = sbr.rel target = $region3
  $region8: #{discriminator_forward.1} parent=0 // loop_exit
    _

</llo_original>
